<compile_context>
chip_gen: v6e
topology: v6e:2x2x1
jax: 0.10.0
libtpu: 0.0.40
codegen_flags: <defaults>
</compile_context>

<pallas_src>
import functools

import jax
import jax.numpy as jnp
from jax.experimental import pallas as pl
from jax.experimental.pallas import tpu as pltpu

C_PAD = 128   # lane-dense channel padding for all matmuls / stores


def _pick_chunk_h(H, W):
    """Rows per matmul chunk: 128-row LHS on v5e, 256-row on v6e/v7x; divides H."""
    try:
        kind = jax.devices()[0].device_kind.lower()
    except Exception:
        kind = ""
    target_m = 128 if "v5" in kind else 256
    ch = max(1, min(H, max(1, target_m // max(W, 1))))
    while H % ch:
        ch -= 1
    return ch


# ---------------------------------------------------------------------------
# Fused backbone kernel: conv1+ReLU+GAP -> conv2+ReLU+GAP -> fc (per image)
# ---------------------------------------------------------------------------

def _fused_backbone_kernel(x_ref, w1_ref, b1_ref, w2_ref, b2_ref, wf_ref, bf_ref,
                           p1_ref, p2_ref, fc_ref, h1p_ref, *, H, W, chunk_h):
    """Per-image fused forward.

    x_ref  : (1, H+2, W+2, C_PAD) bf16  spatially pre-padded NHWC image
    w*_ref : (9, C_PAD, C_PAD)    bf16  3x3 taps flattened, (Cin, Cout) per tap
    b*_ref : (1, C_PAD)           f32
    wf_ref : (C_PAD, C_PAD)       bf16  linear head
    p1_ref : (1, 1, C_PAD)        f32   GAP(conv1 out)             (hook "conv1")
    p2_ref : (1, 1, C_PAD)        f32   GAP(conv2 out) == tokens   (hook "tokens")
    fc_ref : (1, 1, C_PAD)        f32   linear-head logits         (hook "fc")
    h1p_ref: (H+2, W+2, C_PAD)    bf16  VMEM staging of padded conv1 output
    """
    C = C_PAD
    M = chunk_h * W
    inv_hw = 1.0 / float(H * W)

    # Zero only the 1-pixel halo border of the staging buffer (interior is fully
    # overwritten below); the border is conv2's zero padding.
    h1p_ref[0:1, :, :] = jnp.zeros((1, W + 2, C), jnp.bfloat16)
    h1p_ref[H + 1:H + 2, :, :] = jnp.zeros((1, W + 2, C), jnp.bfloat16)
    h1p_ref[:, 0:1, :] = jnp.zeros((H + 2, 1, C), jnp.bfloat16)
    h1p_ref[:, W + 1:W + 2, :] = jnp.zeros((H + 2, 1, C), jnp.bfloat16)

    # Hoisted bias loads (the (1,C)->(M,C) broadcast in the add is a cheap splat).
    b1 = b1_ref[...]
    b2 = b2_ref[...]

    def conv_chunk(read_cols, w_ref, b_val):
        # 3x3 conv for `chunk_h` output rows. Only the 3 column-shifted slabs are
        # materialized; the 3 row shifts are contiguous sublane-range slices.
        # Straight `acc + dot` chain so MXU partials stay in the MRF/MRB.
        acc = None
        for dj in range(3):
            col = read_cols(dj).reshape((chunk_h + 2) * W, C)       # bf16 slab
            for di in range(3):
                patch = col[di * W:di * W + M, :]
                t = jnp.dot(patch, w_ref[di * 3 + dj],
                            preferred_element_type=jnp.float32)
                acc = t if acc is None else acc + t
        return jnp.maximum(acc + b_val, 0.0)

    # TODO(synk): at much larger H, switch these static Python chunk loops to
    #             lax.fori_loop(..., unroll=small) to bound vreg live ranges.

    # ---- conv1 + ReLU; fused GAP epilogue; h1 staged (bf16) in VMEM only ------
    col_sum1 = jnp.zeros((1, C), jnp.float32)
    for r0 in range(0, H, chunk_h):
        act = conv_chunk(
            lambda dj, r0=r0: x_ref[0, r0:r0 + chunk_h + 2, dj:dj + W, :],
            w1_ref, b1)
        col_sum1 = col_sum1 + jnp.sum(act, axis=0, keepdims=True)
        h1p_ref[r0 + 1:r0 + 1 + chunk_h, 1:W + 1, :] = (
            act.astype(jnp.bfloat16).reshape(chunk_h, W, C))
    p1_ref[...] = (col_sum1 * inv_hw).reshape(1, 1, C)

    # ---- conv2 + ReLU; h2 is never materialized, only its GAP -----------------
    col_sum2 = jnp.zeros((1, C), jnp.float32)
    for r0 in range(0, H, chunk_h):
        act = conv_chunk(
            lambda dj, r0=r0: h1p_ref[r0:r0 + chunk_h + 2, dj:dj + W, :],
            w2_ref, b2)
        col_sum2 = col_sum2 + jnp.sum(act, axis=0, keepdims=True)
    pooled2 = col_sum2 * inv_hw            # == GAP(h2) == mean over tokens of h2
    p2_ref[...] = pooled2.reshape(1, 1, C)

    # ---- fused linear head (the 2-D "fc" hook) ---------------------------------
    logits = jnp.dot(pooled2.astype(jnp.bfloat16), wf_ref[...],
                     preferred_element_type=jnp.float32) + bf_ref[...]
    fc_ref[...] = logits.reshape(1, 1, C)


def _fused_backbone_call(xp, kp, H, W, chunk_h):
    N = xp.shape[0]
    flops = 2 * N * (2 * H * W * 9 + 1) * C_PAD * C_PAD
    bytes_accessed = int(xp.size * 2 + kp["w1"].size * 2 + kp["w2"].size * 2 +
                         kp["wf"].size * 2 + 3 * C_PAD * 4 + 3 * N * C_PAD * 4)
    kernel = functools.partial(_fused_backbone_kernel, H=H, W=W, chunk_h=chunk_h)
    out_sds = jax.ShapeDtypeStruct((N, 1, C_PAD), jnp.float32)
    # TODO(synk): for N==1 (or odd N) on v7x megacore, add a second parallel grid
    #             axis (row-split with partial GAP sums) so both TensorCores work.
    return pl.pallas_call(
        kernel,
        out_shape=(out_sds, out_sds, out_sds),
        grid=(N,),
        in_specs=[
            pl.BlockSpec((1, H + 2, W + 2, C_PAD), lambda n: (n, 0, 0, 0)),
            pl.BlockSpec((9, C_PAD, C_PAD), lambda n: (0, 0, 0)),
            pl.BlockSpec((1, C_PAD), lambda n: (0, 0)),
            pl.BlockSpec((9, C_PAD, C_PAD), lambda n: (0, 0, 0)),
            pl.BlockSpec((1, C_PAD), lambda n: (0, 0)),
            pl.BlockSpec((C_PAD, C_PAD), lambda n: (0, 0)),
            pl.BlockSpec((1, C_PAD), lambda n: (0, 0)),
        ],
        out_specs=(
            pl.BlockSpec((1, 1, C_PAD), lambda n: (n, 0, 0)),
            pl.BlockSpec((1, 1, C_PAD), lambda n: (n, 0, 0)),
            pl.BlockSpec((1, 1, C_PAD), lambda n: (n, 0, 0)),
        ),
        scratch_shapes=[pltpu.VMEM((H + 2, W + 2, C_PAD), jnp.bfloat16)],
        compiler_params=pltpu.CompilerParams(
            dimension_semantics=("parallel",),
            vmem_limit_bytes=32 * 1024 * 1024),
        cost_estimate=pl.CostEstimate(flops=flops, transcendentals=0,
                                      bytes_accessed=bytes_accessed),
    )(xp, kp["w1"], kp["b1"], kp["w2"], kp["b2"], kp["wf"], kp["bf"])


# ---------------------------------------------------------------------------
# Standalone Pallas pooling (fallback path of avg_pool_feature)
# ---------------------------------------------------------------------------

def _row_mean_kernel(x_ref, o_ref):
    o_ref[...] = jnp.mean(x_ref[...].astype(jnp.float32), axis=1, keepdims=True)


def mean_over_axis1(x):
    """(N, L, D) -> (N, D) f32 mean over axis 1; lane-dense D, one image per step."""
    N, L, D = x.shape
    Dp = ((D + 127) // 128) * 128
    xp = jnp.pad(x, ((0, 0), (0, 0), (0, Dp - D))) if Dp != D else x
    # TODO(synk): for very large L, tile L on a second grid axis with an in-kernel
    #             accumulator instead of one full-L block.
    out = pl.pallas_call(
        _row_mean_kernel,
        out_shape=jax.ShapeDtypeStruct((N, 1, Dp), jnp.float32),
        grid=(N,),
        in_specs=[pl.BlockSpec((1, L, Dp), lambda n: (n, 0, 0))],
        out_specs=pl.BlockSpec((1, 1, Dp), lambda n: (n, 0, 0)),
        compiler_params=pltpu.CompilerParams(dimension_semantics=("parallel",)),
    )(xp)
    return out[:, 0, :D]


# ---------------------------------------------------------------------------
# Synthetic backbone parameters (PyTorch layout) + kernel-layout preparation
# ---------------------------------------------------------------------------

def init_backbone_params():
    k = jax.random.PRNGKey(1)
    k1, k2, k3, k4, k5, k6 = jax.random.split(k, 6)
    return {
        "conv1_w": 0.1 * jax.random.normal(k1, (8, 4, 3, 3), jnp.float32),   # (Cout,Cin,3,3)
        "conv1_b": 0.1 * jax.random.normal(k2, (8,), jnp.float32),
        "conv2_w": 0.1 * jax.random.normal(k3, (16, 8, 3, 3), jnp.float32),
        "conv2_b": 0.1 * jax.random.normal(k4, (16,), jnp.float32),
        "fc_w":    0.1 * jax.random.normal(k5, (16, 32), jnp.float32),
        "fc_b":    0.1 * jax.random.normal(k6, (32,), jnp.float32),
    }


def prepare_kernel_params(params):
    """Pad channels to C_PAD (lane-dense) and cast matmul weights to bf16."""
    def conv_taps(w_oihw):
        cout, cin, kh, kw = w_oihw.shape
        w = jnp.transpose(w_oihw, (2, 3, 1, 0)).reshape(kh * kw, cin, cout)
        w = jnp.pad(w, ((0, 0), (0, C_PAD - cin), (0, C_PAD - cout)))
        return w.astype(jnp.bfloat16)

    def pad_bias(b):
        return jnp.pad(b, (0, C_PAD - b.shape[0])).reshape(1, C_PAD).astype(jnp.float32)

    fc_w = params["fc_w"]
    return {
        "w1": conv_taps(params["conv1_w"]),
        "b1": pad_bias(params["conv1_b"]),
        "w2": conv_taps(params["conv2_w"]),
        "b2": pad_bias(params["conv2_b"]),
        "wf": jnp.pad(fc_w, ((0, C_PAD - fc_w.shape[0]),
                             (0, C_PAD - fc_w.shape[1]))).astype(jnp.bfloat16),
        "bf": pad_bias(params["fc_b"]),
        "c1": params["conv1_w"].shape[0],
        "c2": params["conv2_w"].shape[0],
        "cf": fc_w.shape[1],
    }


def backbone_forward(kp, x_nhwc, capture):
    """Fused synthetic backbone; `capture(name, tensor)` emulates forward hooks.

    Hooked intermediates are delivered already average-pooled (pooling is fused
    into the Pallas kernel epilogue), numerically identical to pooling the raw
    4-D conv output / 3-D token output / 2-D logits of the PyTorch module.
    """
    N, H, W, cin = x_nhwc.shape
    chunk_h = _pick_chunk_h(H, W)
    # bf16 pad (spatial + channel): the MXU sees bf16 operands anyway, so this
    # halves the input HBM DMA and removes every in-kernel input cast.
    xp = jnp.pad(x_nhwc.astype(jnp.bfloat16),
                 ((0, 0), (1, 1), (1, 1), (0, C_PAD - cin)))
    p1, p2, fc = _fused_backbone_call(xp, kp, H, W, chunk_h)
    p1 = p1[:, 0, :kp["c1"]]        # GAP(conv1 out)               -- 4-D hook
    p2 = p2[:, 0, :kp["c2"]]        # mean over tokens == GAP(h2)  -- 3-D hook
    logits = fc[:, 0, :kp["cf"]]    # linear head                  -- 2-D hook
    capture("conv1", p1)
    capture("tokens", p2)
    capture("fc", logits)
    return logits


# ---------------------------------------------------------------------------
# FeatureExtractor (mirrors the PyTorch module semantics)
# ---------------------------------------------------------------------------

class FeatureExtractorPallas:
    """JAX/Pallas port of FeatureExtractor: hooks -> avg_pool_feature -> dict."""

    def __init__(self, params, hook_layers, return_dict=True):
        self.return_dict = return_dict
        if isinstance(hook_layers, list):
            self.hook_layers = hook_layers
            self.hook_layers_dict = {k: k for k in hook_layers}
        elif isinstance(hook_layers, dict):
            self.hook_layers = [k for k in hook_layers]
            self.hook_layers_dict = hook_layers
        else:
            raise TypeError("hook_layers must be a list or dict")
        self.kernel_params = prepare_kernel_params(params)
        self.features = []

    def avg_pool_feature(self, o):
        # NOTE: module-boundary layout is channels-last, so 4-D == (N, H, W, C).
        if o.ndim == 4:
            n, h, w, c = o.shape
            return mean_over_axis1(o.reshape(n, h * w, c))
        elif o.ndim == 3:
            return mean_over_axis1(o)
        elif o.ndim == 2:
            return o
        raise ValueError(f"unsupported feature rank: {o.shape}")

    def __call__(self, x):
        self.features = []

        def capture(name, tensor):
            if name in self.hook_layers:
                self.features.append(self.avg_pool_feature(tensor))

        _ = backbone_forward(self.kernel_params, x, capture)
        assert len(self.features) == len(self.hook_layers), \
            ("Something's wrong.", len(self.features), len(self.hook_layers))
        if self.return_dict:
            d = {self.hook_layers_dict[k]: feat
                 for k, feat in zip(self.hook_layers, self.features)}
            self.features = []
            return d
        feats = self.features
        self.features = []
        return feats


# ---------------------------------------------------------------------------
# Pure-JAX reference (mirrors the kernel's bf16 MXU feeds, f32 accumulation)
# ---------------------------------------------------------------------------

def reference_forward(params, x_nhwc):
    def b16(a):
        return a.astype(jnp.bfloat16).astype(jnp.float32)

    def conv3x3_relu(x, w_oihw, b):
        cout = w_oihw.shape[0]
        w = jnp.transpose(w_oihw, (2, 3, 1, 0))          # (3, 3, Cin, Cout)
        n, h, wd, _ = x.shape
        xp = jnp.pad(x, ((0, 0), (1, 1), (1, 1), (0, 0)))
        acc = jnp.zeros((n, h, wd, cout), jnp.float32)
        for di in range(3):
            for dj in range(3):
                acc = acc + jnp.einsum(
                    "nhwc,cd->nhwd",
                    b16(xp[:, di:di + h, dj:dj + wd, :]), b16(w[di, dj]),
                    precision=jax.lax.Precision.HIGHEST)
        return jax.nn.relu(acc + b)

    h1 = conv3x3_relu(x_nhwc, params["conv1_w"], params["conv1_b"])
    p1 = jnp.mean(h1, axis=(1, 2))
    h2 = conv3x3_relu(h1, params["conv2_w"], params["conv2_b"])
    p2 = jnp.mean(h2, axis=(1, 2))
    logits = jnp.dot(b16(p2), b16(params["fc_w"]),
                     precision=jax.lax.Precision.HIGHEST) + params["fc_b"]
    return p1, p2, logits, h1


# ---------------------------------------------------------------------------
# Main
# ---------------------------------------------------------------------------

if __name__ == "__main__":
    N, Cin, H, W = 2, 4, 16, 16
    x_nchw = jax.random.normal(jax.random.PRNGKey(0), (N, Cin, H, W), jnp.float32)
    x = jnp.transpose(x_nchw, (0, 2, 3, 1))      # channels-last module boundary

    params = init_backbone_params()
    extractor = FeatureExtractorPallas(params, ["conv1", "tokens", "fc"],
                                       return_dict=True)
    feats = extractor(x)
    feats = {k: jax.block_until_ready(v) for k, v in feats.items()}

    # Shapes match the PyTorch avg_pool_feature contract.
    assert feats["conv1"].shape == (N, 8)
    assert feats["tokens"].shape == (N, 16)
    assert feats["fc"].shape == (N, 32)

    # Cross-check the fused kernel against a pure-JAX reference.
    ref_p1, ref_p2, ref_logits, ref_h1 = reference_forward(params, x)
    assert jnp.allclose(feats["conv1"], ref_p1, atol=5e-3, rtol=5e-3)
    assert jnp.allclose(feats["tokens"], ref_p2, atol=5e-3, rtol=5e-3)
    assert jnp.allclose(feats["fc"], ref_logits, atol=5e-3, rtol=5e-3)

    # Exercise the standalone Pallas pooling path on a raw 4-D hook output.
    pooled_check = jax.block_until_ready(extractor.avg_pool_feature(ref_h1))
    assert pooled_check.shape == (N, 8)
    assert jnp.allclose(pooled_check, ref_p1, atol=5e-3, rtol=5e-3)

    print("KERNEL_OK")
</pallas_src>

<mosaic_0001>
module attributes {stable_mosaic.version = 11 : i64} {
  func.func @_fused_backbone_kernel(%arg0: i32, %arg1: memref<1x18x18x128xbf16, #tpu.memory_space<vmem>>, %arg2: memref<9x128x128xbf16, #tpu.memory_space<vmem>>, %arg3: memref<1x128xf32, #tpu.memory_space<vmem>>, %arg4: memref<9x128x128xbf16, #tpu.memory_space<vmem>>, %arg5: memref<1x128xf32, #tpu.memory_space<vmem>>, %arg6: memref<128x128xbf16, #tpu.memory_space<vmem>>, %arg7: memref<1x128xf32, #tpu.memory_space<vmem>>, %arg8: memref<1x1x128xf32, #tpu.memory_space<vmem>>, %arg9: memref<1x1x128xf32, #tpu.memory_space<vmem>>, %arg10: memref<1x1x128xf32, #tpu.memory_space<vmem>>, %arg11: memref<18x18x128xbf16, #tpu.memory_space<vmem>>) attributes {dimension_semantics = [#tpu.dimension_semantics<parallel>], iteration_bounds = array<i64: 2>, scalar_prefetch = 0 : i64, scratch_operands = 1 : i64, tpu.core_type = #tpu.core_type<tc>, window_params = [{transform_indices = @transform_0, window_bounds = array<i64: 1, 18, 18, 128>}, {pipeline_mode = #tpu.pipeline_mode<synchronous>, transform_indices = @transform_1, window_bounds = array<i64: 9, 128, 128>}, {pipeline_mode = #tpu.pipeline_mode<synchronous>, transform_indices = @transform_2, window_bounds = array<i64: 1, 128>}, {pipeline_mode = #tpu.pipeline_mode<synchronous>, transform_indices = @transform_3, window_bounds = array<i64: 9, 128, 128>}, {pipeline_mode = #tpu.pipeline_mode<synchronous>, transform_indices = @transform_4, window_bounds = array<i64: 1, 128>}, {pipeline_mode = #tpu.pipeline_mode<synchronous>, transform_indices = @transform_5, window_bounds = array<i64: 128, 128>}, {pipeline_mode = #tpu.pipeline_mode<synchronous>, transform_indices = @transform_6, window_bounds = array<i64: 1, 128>}, {transform_indices = @transform_7, window_bounds = array<i64: 1, 1, 128>}, {transform_indices = @transform_8, window_bounds = array<i64: 1, 1, 128>}, {transform_indices = @transform_9, window_bounds = array<i64: 1, 1, 128>}]} {
    %cst = arith.constant 0.000000e+00 : bf16
    %0 = vector.broadcast %cst : bf16 to vector<1x18x128xbf16>
    %c0 = arith.constant 0 : index
    %c0_0 = arith.constant 0 : index
    %c0_1 = arith.constant 0 : index
    %1 = vector.load %arg11[%c0, %c0_0, %c0_1] : memref<18x18x128xbf16, #tpu.memory_space<vmem>>, vector<1x18x128xbf16>
    tpu.vector_store %arg11[%c0, %c0_0, %c0_1], %0 {strides = array<i32>} : memref<18x18x128xbf16, #tpu.memory_space<vmem>>, vector<1x18x128xbf16>,
    %cst_2 = arith.constant 0.000000e+00 : bf16
    %2 = vector.broadcast %cst_2 : bf16 to vector<1x18x128xbf16>
    %c17 = arith.constant 17 : index
    %c0_3 = arith.constant 0 : index
    %c0_4 = arith.constant 0 : index
    %3 = vector.load %arg11[%c17, %c0_3, %c0_4] : memref<18x18x128xbf16, #tpu.memory_space<vmem>>, vector<1x18x128xbf16>
    tpu.vector_store %arg11[%c17, %c0_3, %c0_4], %2 {strides = array<i32>} : memref<18x18x128xbf16, #tpu.memory_space<vmem>>, vector<1x18x128xbf16>,
    %cst_5 = arith.constant 0.000000e+00 : bf16
    %4 = vector.broadcast %cst_5 : bf16 to vector<18x1x128xbf16>
    %c0_6 = arith.constant 0 : index
    %c0_7 = arith.constant 0 : index
    %c0_8 = arith.constant 0 : index
    %5 = vector.load %arg11[%c0_6, %c0_7, %c0_8] : memref<18x18x128xbf16, #tpu.memory_space<vmem>>, vector<18x1x128xbf16>
    tpu.vector_store %arg11[%c0_6, %c0_7, %c0_8], %4 {strides = array<i32>} : memref<18x18x128xbf16, #tpu.memory_space<vmem>>, vector<18x1x128xbf16>,
    %cst_9 = arith.constant 0.000000e+00 : bf16
    %6 = vector.broadcast %cst_9 : bf16 to vector<18x1x128xbf16>
    %c0_10 = arith.constant 0 : index
    %c17_11 = arith.constant 17 : index
    %c0_12 = arith.constant 0 : index
    %7 = vector.load %arg11[%c0_10, %c17_11, %c0_12] : memref<18x18x128xbf16, #tpu.memory_space<vmem>>, vector<18x1x128xbf16>
    tpu.vector_store %arg11[%c0_10, %c17_11, %c0_12], %6 {strides = array<i32>} : memref<18x18x128xbf16, #tpu.memory_space<vmem>>, vector<18x1x128xbf16>,
    %c0_13 = arith.constant 0 : index
    %c0_14 = arith.constant 0 : index
    %8 = vector.load %arg3[%c0_13, %c0_14] : memref<1x128xf32, #tpu.memory_space<vmem>>, vector<1x128xf32>
    %c0_15 = arith.constant 0 : index
    %c0_16 = arith.constant 0 : index
    %9 = vector.load %arg5[%c0_15, %c0_16] : memref<1x128xf32, #tpu.memory_space<vmem>>, vector<1x128xf32>
    %cst_17 = arith.constant 0.000000e+00 : f32
    %10 = vector.broadcast %cst_17 : f32 to vector<1x128xf32>
    %c0_18 = arith.constant 0 : index
    %c0_19 = arith.constant 0 : index
    %c0_20 = arith.constant 0 : index
    %c0_21 = arith.constant 0 : index
    %11 = vector.load %arg1[%c0_18, %c0_19, %c0_20, %c0_21] : memref<1x18x18x128xbf16, #tpu.memory_space<vmem>>, vector<1x18x16x128xbf16>
    %12 = vector.shape_cast %11 : vector<1x18x16x128xbf16> to vector<18x16x128xbf16>
    %13 = vector.shape_cast %12 : vector<18x16x128xbf16> to vector<288x128xbf16>
    %14 = vector.extract_strided_slice %13 {offsets = [0, 0], sizes = [256, 128], strides = [1, 1]} : vector<288x128xbf16> to vector<256x128xbf16>
    %c0_22 = arith.constant 0 : index
    %c0_23 = arith.constant 0 : index
    %c0_24 = arith.constant 0 : index
    %15 = vector.load %arg2[%c0_22, %c0_23, %c0_24] : memref<9x128x128xbf16, #tpu.memory_space<vmem>>, vector<1x128x128xbf16>
    %16 = vector.shape_cast %15 : vector<1x128x128xbf16> to vector<128x128xbf16>
    %cst_25 = arith.constant dense<0.000000e+00> : vector<256x128xf32>
    %17 = tpu.matmul %14, %16, %cst_25 {dimension_numbers = #tpu.dot_dimension_numbers<[1], [0], [0], [1], [0, 0, 1, 1], [], []>} : vector<256x128xbf16>, vector<128x128xbf16>, vector<256x128xf32> -> vector<256x128xf32>
    %18 = vector.extract_strided_slice %13 {offsets = [16, 0], sizes = [256, 128], strides = [1, 1]} : vector<288x128xbf16> to vector<256x128xbf16>
    %c3 = arith.constant 3 : index
    %c0_26 = arith.constant 0 : index
    %c0_27 = arith.constant 0 : index
    %19 = vector.load %arg2[%c3, %c0_26, %c0_27] : memref<9x128x128xbf16, #tpu.memory_space<vmem>>, vector<1x128x128xbf16>
    %20 = vector.shape_cast %19 : vector<1x128x128xbf16> to vector<128x128xbf16>
    %cst_28 = arith.constant dense<0.000000e+00> : vector<256x128xf32>
    %21 = tpu.matmul %18, %20, %cst_28 {dimension_numbers = #tpu.dot_dimension_numbers<[1], [0], [0], [1], [0, 0, 1, 1], [], []>} : vector<256x128xbf16>, vector<128x128xbf16>, vector<256x128xf32> -> vector<256x128xf32>
    %22 = arith.addf %17, %21 : vector<256x128xf32>
    %23 = vector.extract_strided_slice %13 {offsets = [32, 0], sizes = [256, 128], strides = [1, 1]} : vector<288x128xbf16> to vector<256x128xbf16>
    %c6 = arith.constant 6 : index
    %c0_29 = arith.constant 0 : index
    %c0_30 = arith.constant 0 : index
    %24 = vector.load %arg2[%c6, %c0_29, %c0_30] : memref<9x128x128xbf16, #tpu.memory_space<vmem>>, vector<1x128x128xbf16>
    %25 = vector.shape_cast %24 : vector<1x128x128xbf16> to vector<128x128xbf16>
    %cst_31 = arith.constant dense<0.000000e+00> : vector<256x128xf32>
    %26 = tpu.matmul %23, %25, %cst_31 {dimension_numbers = #tpu.dot_dimension_numbers<[1], [0], [0], [1], [0, 0, 1, 1], [], []>} : vector<256x128xbf16>, vector<128x128xbf16>, vector<256x128xf32> -> vector<256x128xf32>
    %27 = arith.addf %22, %26 : vector<256x128xf32>
    %c0_32 = arith.constant 0 : index
    %c0_33 = arith.constant 0 : index
    %c1 = arith.constant 1 : index
    %c0_34 = arith.constant 0 : index
    %28 = vector.load %arg1[%c0_32, %c0_33, %c1, %c0_34] : memref<1x18x18x128xbf16, #tpu.memory_space<vmem>>, vector<1x18x16x128xbf16>
    %29 = vector.shape_cast %28 : vector<1x18x16x128xbf16> to vector<18x16x128xbf16>
    %30 = vector.shape_cast %29 : vector<18x16x128xbf16> to vector<288x128xbf16>
    %31 = vector.extract_strided_slice %30 {offsets = [0, 0], sizes = [256, 128], strides = [1, 1]} : vector<288x128xbf16> to vector<256x128xbf16>
    %c1_35 = arith.constant 1 : index
    %c0_36 = arith.constant 0 : index
    %c0_37 = arith.constant 0 : index
    %32 = vector.load %arg2[%c1_35, %c0_36, %c0_37] : memref<9x128x128xbf16, #tpu.memory_space<vmem>>, vector<1x128x128xbf16>
    %33 = vector.shape_cast %32 : vector<1x128x128xbf16> to vector<128x128xbf16>
    %cst_38 = arith.constant dense<0.000000e+00> : vector<256x128xf32>
    %34 = tpu.matmul %31, %33, %cst_38 {dimension_numbers = #tpu.dot_dimension_numbers<[1], [0], [0], [1], [0, 0, 1, 1], [], []>} : vector<256x128xbf16>, vector<128x128xbf16>, vector<256x128xf32> -> vector<256x128xf32>
    %35 = arith.addf %27, %34 : vector<256x128xf32>
    %36 = vector.extract_strided_slice %30 {offsets = [16, 0], sizes = [256, 128], strides = [1, 1]} : vector<288x128xbf16> to vector<256x128xbf16>
    %c4 = arith.constant 4 : index
    %c0_39 = arith.constant 0 : index
    %c0_40 = arith.constant 0 : index
    %37 = vector.load %arg2[%c4, %c0_39, %c0_40] : memref<9x128x128xbf16, #tpu.memory_space<vmem>>, vector<1x128x128xbf16>
    %38 = vector.shape_cast %37 : vector<1x128x128xbf16> to vector<128x128xbf16>
    %cst_41 = arith.constant dense<0.000000e+00> : vector<256x128xf32>
    %39 = tpu.matmul %36, %38, %cst_41 {dimension_numbers = #tpu.dot_dimension_numbers<[1], [0], [0], [1], [0, 0, 1, 1], [], []>} : vector<256x128xbf16>, vector<128x128xbf16>, vector<256x128xf32> -> vector<256x128xf32>
    %40 = arith.addf %35, %39 : vector<256x128xf32>
    %41 = vector.extract_strided_slice %30 {offsets = [32, 0], sizes = [256, 128], strides = [1, 1]} : vector<288x128xbf16> to vector<256x128xbf16>
    %c7 = arith.constant 7 : index
    %c0_42 = arith.constant 0 : index
    %c0_43 = arith.constant 0 : index
    %42 = vector.load %arg2[%c7, %c0_42, %c0_43] : memref<9x128x128xbf16, #tpu.memory_space<vmem>>, vector<1x128x128xbf16>
    %43 = vector.shape_cast %42 : vector<1x128x128xbf16> to vector<128x128xbf16>
    %cst_44 = arith.constant dense<0.000000e+00> : vector<256x128xf32>
    %44 = tpu.matmul %41, %43, %cst_44 {dimension_numbers = #tpu.dot_dimension_numbers<[1], [0], [0], [1], [0, 0, 1, 1], [], []>} : vector<256x128xbf16>, vector<128x128xbf16>, vector<256x128xf32> -> vector<256x128xf32>
    %45 = arith.addf %40, %44 : vector<256x128xf32>
    %c0_45 = arith.constant 0 : index
    %c0_46 = arith.constant 0 : index
    %c2 = arith.constant 2 : index
    %c0_47 = arith.constant 0 : index
    %46 = vector.load %arg1[%c0_45, %c0_46, %c2, %c0_47] : memref<1x18x18x128xbf16, #tpu.memory_space<vmem>>, vector<1x18x16x128xbf16>
    %47 = vector.shape_cast %46 : vector<1x18x16x128xbf16> to vector<18x16x128xbf16>
    %48 = vector.shape_cast %47 : vector<18x16x128xbf16> to vector<288x128xbf16>
    %49 = vector.extract_strided_slice %48 {offsets = [0, 0], sizes = [256, 128], strides = [1, 1]} : vector<288x128xbf16> to vector<256x128xbf16>
    %c2_48 = arith.constant 2 : index
    %c0_49 = arith.constant 0 : index
    %c0_50 = arith.constant 0 : index
    %50 = vector.load %arg2[%c2_48, %c0_49, %c0_50] : memref<9x128x128xbf16, #tpu.memory_space<vmem>>, vector<1x128x128xbf16>
    %51 = vector.shape_cast %50 : vector<1x128x128xbf16> to vector<128x128xbf16>
    %cst_51 = arith.constant dense<0.000000e+00> : vector<256x128xf32>
    %52 = tpu.matmul %49, %51, %cst_51 {dimension_numbers = #tpu.dot_dimension_numbers<[1], [0], [0], [1], [0, 0, 1, 1], [], []>} : vector<256x128xbf16>, vector<128x128xbf16>, vector<256x128xf32> -> vector<256x128xf32>
    %53 = arith.addf %45, %52 : vector<256x128xf32>
    %54 = vector.extract_strided_slice %48 {offsets = [16, 0], sizes = [256, 128], strides = [1, 1]} : vector<288x128xbf16> to vector<256x128xbf16>
    %c5 = arith.constant 5 : index
    %c0_52 = arith.constant 0 : index
    %c0_53 = arith.constant 0 : index
    %55 = vector.load %arg2[%c5, %c0_52, %c0_53] : memref<9x128x128xbf16, #tpu.memory_space<vmem>>, vector<1x128x128xbf16>
    %56 = vector.shape_cast %55 : vector<1x128x128xbf16> to vector<128x128xbf16>
    %cst_54 = arith.constant dense<0.000000e+00> : vector<256x128xf32>
    %57 = tpu.matmul %54, %56, %cst_54 {dimension_numbers = #tpu.dot_dimension_numbers<[1], [0], [0], [1], [0, 0, 1, 1], [], []>} : vector<256x128xbf16>, vector<128x128xbf16>, vector<256x128xf32> -> vector<256x128xf32>
    %58 = arith.addf %53, %57 : vector<256x128xf32>
    %59 = vector.extract_strided_slice %48 {offsets = [32, 0], sizes = [256, 128], strides = [1, 1]} : vector<288x128xbf16> to vector<256x128xbf16>
    %c8 = arith.constant 8 : index
    %c0_55 = arith.constant 0 : index
    %c0_56 = arith.constant 0 : index
    %60 = vector.load %arg2[%c8, %c0_55, %c0_56] : memref<9x128x128xbf16, #tpu.memory_space<vmem>>, vector<1x128x128xbf16>
    %61 = vector.shape_cast %60 : vector<1x128x128xbf16> to vector<128x128xbf16>
    %cst_57 = arith.constant dense<0.000000e+00> : vector<256x128xf32>
    %62 = tpu.matmul %59, %61, %cst_57 {dimension_numbers = #tpu.dot_dimension_numbers<[1], [0], [0], [1], [0, 0, 1, 1], [], []>} : vector<256x128xbf16>, vector<128x128xbf16>, vector<256x128xf32> -> vector<256x128xf32>
    %63 = arith.addf %58, %62 : vector<256x128xf32>
    %64 = vector.broadcast %8 : vector<1x128xf32> to vector<256x128xf32>
    %65 = arith.addf %63, %64 : vector<256x128xf32>
    %cst_58 = arith.constant 0.000000e+00 : f32
    %66 = vector.broadcast %cst_58 : f32 to vector<256x128xf32>
    %67 = arith.maximumf %65, %66 : vector<256x128xf32>
    %cst_59 = arith.constant dense<0.000000e+00> : vector<128xf32>
    %68 = vector.multi_reduction <add>, %67, %cst_59 [0] : vector<256x128xf32> to vector<128xf32>
    %69 = vector.shape_cast %68 : vector<128xf32> to vector<1x128xf32>
    %70 = arith.addf %10, %69 : vector<1x128xf32>
    %71 = arith.truncf %67 : vector<256x128xf32> to vector<256x128xbf16>
    %72 = vector.shape_cast %71 : vector<256x128xbf16> to vector<16x16x128xbf16>
    %c1_60 = arith.constant 1 : index
    %c1_61 = arith.constant 1 : index
    %c0_62 = arith.constant 0 : index
    %73 = vector.load %arg11[%c1_60, %c1_61, %c0_62] : memref<18x18x128xbf16, #tpu.memory_space<vmem>>, vector<16x16x128xbf16>
    tpu.vector_store %arg11[%c1_60, %c1_61, %c0_62], %72 {strides = array<i32>} : memref<18x18x128xbf16, #tpu.memory_space<vmem>>, vector<16x16x128xbf16>,
    %cst_63 = arith.constant 3.906250e-03 : f32
    %74 = vector.broadcast %cst_63 : f32 to vector<1x128xf32>
    %75 = arith.mulf %70, %74 : vector<1x128xf32>
    %76 = vector.shape_cast %75 : vector<1x128xf32> to vector<1x1x128xf32>
    %c0_64 = arith.constant 0 : index
    %c0_65 = arith.constant 0 : index
    %c0_66 = arith.constant 0 : index
    %77 = vector.load %arg8[%c0_64, %c0_65, %c0_66] : memref<1x1x128xf32, #tpu.memory_space<vmem>>, vector<1x1x128xf32>
    tpu.vector_store %arg8[%c0_64, %c0_65, %c0_66], %76 {strides = array<i32>} : memref<1x1x128xf32, #tpu.memory_space<vmem>>, vector<1x1x128xf32>,
    %cst_67 = arith.constant 0.000000e+00 : f32
    %78 = vector.broadcast %cst_67 : f32 to vector<1x128xf32>
    %c0_68 = arith.constant 0 : index
    %c0_69 = arith.constant 0 : index
    %c0_70 = arith.constant 0 : index
    %79 = vector.load %arg11[%c0_68, %c0_69, %c0_70] : memref<18x18x128xbf16, #tpu.memory_space<vmem>>, vector<18x16x128xbf16>
    %80 = vector.shape_cast %79 : vector<18x16x128xbf16> to vector<288x128xbf16>
    %81 = vector.extract_strided_slice %80 {offsets = [0, 0], sizes = [256, 128], strides = [1, 1]} : vector<288x128xbf16> to vector<256x128xbf16>
    %c0_71 = arith.constant 0 : index
    %c0_72 = arith.constant 0 : index
    %c0_73 = arith.constant 0 : index
    %82 = vector.load %arg4[%c0_71, %c0_72, %c0_73] : memref<9x128x128xbf16, #tpu.memory_space<vmem>>, vector<1x128x128xbf16>
    %83 = vector.shape_cast %82 : vector<1x128x128xbf16> to vector<128x128xbf16>
    %cst_74 = arith.constant dense<0.000000e+00> : vector<256x128xf32>
    %84 = tpu.matmul %81, %83, %cst_74 {dimension_numbers = #tpu.dot_dimension_numbers<[1], [0], [0], [1], [0, 0, 1, 1], [], []>} : vector<256x128xbf16>, vector<128x128xbf16>, vector<256x128xf32> -> vector<256x128xf32>
    %85 = vector.extract_strided_slice %80 {offsets = [16, 0], sizes = [256, 128], strides = [1, 1]} : vector<288x128xbf16> to vector<256x128xbf16>
    %c3_75 = arith.constant 3 : index
    %c0_76 = arith.constant 0 : index
    %c0_77 = arith.constant 0 : index
    %86 = vector.load %arg4[%c3_75, %c0_76, %c0_77] : memref<9x128x128xbf16, #tpu.memory_space<vmem>>, vector<1x128x128xbf16>
    %87 = vector.shape_cast %86 : vector<1x128x128xbf16> to vector<128x128xbf16>
    %cst_78 = arith.constant dense<0.000000e+00> : vector<256x128xf32>
    %88 = tpu.matmul %85, %87, %cst_78 {dimension_numbers = #tpu.dot_dimension_numbers<[1], [0], [0], [1], [0, 0, 1, 1], [], []>} : vector<256x128xbf16>, vector<128x128xbf16>, vector<256x128xf32> -> vector<256x128xf32>
    %89 = arith.addf %84, %88 : vector<256x128xf32>
    %90 = vector.extract_strided_slice %80 {offsets = [32, 0], sizes = [256, 128], strides = [1, 1]} : vector<288x128xbf16> to vector<256x128xbf16>
    %c6_79 = arith.constant 6 : index
    %c0_80 = arith.constant 0 : index
    %c0_81 = arith.constant 0 : index
    %91 = vector.load %arg4[%c6_79, %c0_80, %c0_81] : memref<9x128x128xbf16, #tpu.memory_space<vmem>>, vector<1x128x128xbf16>
    %92 = vector.shape_cast %91 : vector<1x128x128xbf16> to vector<128x128xbf16>
    %cst_82 = arith.constant dense<0.000000e+00> : vector<256x128xf32>
    %93 = tpu.matmul %90, %92, %cst_82 {dimension_numbers = #tpu.dot_dimension_numbers<[1], [0], [0], [1], [0, 0, 1, 1], [], []>} : vector<256x128xbf16>, vector<128x128xbf16>, vector<256x128xf32> -> vector<256x128xf32>
    %94 = arith.addf %89, %93 : vector<256x128xf32>
    %c0_83 = arith.constant 0 : index
    %c1_84 = arith.constant 1 : index
    %c0_85 = arith.constant 0 : index
    %95 = vector.load %arg11[%c0_83, %c1_84, %c0_85] : memref<18x18x128xbf16, #tpu.memory_space<vmem>>, vector<18x16x128xbf16>
    %96 = vector.shape_cast %95 : vector<18x16x128xbf16> to vector<288x128xbf16>
    %97 = vector.extract_strided_slice %96 {offsets = [0, 0], sizes = [256, 128], strides = [1, 1]} : vector<288x128xbf16> to vector<256x128xbf16>
    %c1_86 = arith.constant 1 : index
    %c0_87 = arith.constant 0 : index
    %c0_88 = arith.constant 0 : index
    %98 = vector.load %arg4[%c1_86, %c0_87, %c0_88] : memref<9x128x128xbf16, #tpu.memory_space<vmem>>, vector<1x128x128xbf16>
    %99 = vector.shape_cast %98 : vector<1x128x128xbf16> to vector<128x128xbf16>
    %cst_89 = arith.constant dense<0.000000e+00> : vector<256x128xf32>
    %100 = tpu.matmul %97, %99, %cst_89 {dimension_numbers = #tpu.dot_dimension_numbers<[1], [0], [0], [1], [0, 0, 1, 1], [], []>} : vector<256x128xbf16>, vector<128x128xbf16>, vector<256x128xf32> -> vector<256x128xf32>
    %101 = arith.addf %94, %100 : vector<256x128xf32>
    %102 = vector.extract_strided_slice %96 {offsets = [16, 0], sizes = [256, 128], strides = [1, 1]} : vector<288x128xbf16> to vector<256x128xbf16>
    %c4_90 = arith.constant 4 : index
    %c0_91 = arith.constant 0 : index
    %c0_92 = arith.constant 0 : index
    %103 = vector.load %arg4[%c4_90, %c0_91, %c0_92] : memref<9x128x128xbf16, #tpu.memory_space<vmem>>, vector<1x128x128xbf16>
    %104 = vector.shape_cast %103 : vector<1x128x128xbf16> to vector<128x128xbf16>
    %cst_93 = arith.constant dense<0.000000e+00> : vector<256x128xf32>
    %105 = tpu.matmul %102, %104, %cst_93 {dimension_numbers = #tpu.dot_dimension_numbers<[1], [0], [0], [1], [0, 0, 1, 1], [], []>} : vector<256x128xbf16>, vector<128x128xbf16>, vector<256x128xf32> -> vector<256x128xf32>
    %106 = arith.addf %101, %105 : vector<256x128xf32>
    %107 = vector.extract_strided_slice %96 {offsets = [32, 0], sizes = [256, 128], strides = [1, 1]} : vector<288x128xbf16> to vector<256x128xbf16>
    %c7_94 = arith.constant 7 : index
    %c0_95 = arith.constant 0 : index
    %c0_96 = arith.constant 0 : index
    %108 = vector.load %arg4[%c7_94, %c0_95, %c0_96] : memref<9x128x128xbf16, #tpu.memory_space<vmem>>, vector<1x128x128xbf16>
    %109 = vector.shape_cast %108 : vector<1x128x128xbf16> to vector<128x128xbf16>
    %cst_97 = arith.constant dense<0.000000e+00> : vector<256x128xf32>
    %110 = tpu.matmul %107, %109, %cst_97 {dimension_numbers = #tpu.dot_dimension_numbers<[1], [0], [0], [1], [0, 0, 1, 1], [], []>} : vector<256x128xbf16>, vector<128x128xbf16>, vector<256x128xf32> -> vector<256x128xf32>
    %111 = arith.addf %106, %110 : vector<256x128xf32>
    %c0_98 = arith.constant 0 : index
    %c2_99 = arith.constant 2 : index
    %c0_100 = arith.constant 0 : index
    %112 = vector.load %arg11[%c0_98, %c2_99, %c0_100] : memref<18x18x128xbf16, #tpu.memory_space<vmem>>, vector<18x16x128xbf16>
    %113 = vector.shape_cast %112 : vector<18x16x128xbf16> to vector<288x128xbf16>
    %114 = vector.extract_strided_slice %113 {offsets = [0, 0], sizes = [256, 128], strides = [1, 1]} : vector<288x128xbf16> to vector<256x128xbf16>
    %c2_101 = arith.constant 2 : index
    %c0_102 = arith.constant 0 : index
    %c0_103 = arith.constant 0 : index
    %115 = vector.load %arg4[%c2_101, %c0_102, %c0_103] : memref<9x128x128xbf16, #tpu.memory_space<vmem>>, vector<1x128x128xbf16>
    %116 = vector.shape_cast %115 : vector<1x128x128xbf16> to vector<128x128xbf16>
    %cst_104 = arith.constant dense<0.000000e+00> : vector<256x128xf32>
    %117 = tpu.matmul %114, %116, %cst_104 {dimension_numbers = #tpu.dot_dimension_numbers<[1], [0], [0], [1], [0, 0, 1, 1], [], []>} : vector<256x128xbf16>, vector<128x128xbf16>, vector<256x128xf32> -> vector<256x128xf32>
    %118 = arith.addf %111, %117 : vector<256x128xf32>
    %119 = vector.extract_strided_slice %113 {offsets = [16, 0], sizes = [256, 128], strides = [1, 1]} : vector<288x128xbf16> to vector<256x128xbf16>
    %c5_105 = arith.constant 5 : index
    %c0_106 = arith.constant 0 : index
    %c0_107 = arith.constant 0 : index
    %120 = vector.load %arg4[%c5_105, %c0_106, %c0_107] : memref<9x128x128xbf16, #tpu.memory_space<vmem>>, vector<1x128x128xbf16>
    %121 = vector.shape_cast %120 : vector<1x128x128xbf16> to vector<128x128xbf16>
    %cst_108 = arith.constant dense<0.000000e+00> : vector<256x128xf32>
    %122 = tpu.matmul %119, %121, %cst_108 {dimension_numbers = #tpu.dot_dimension_numbers<[1], [0], [0], [1], [0, 0, 1, 1], [], []>} : vector<256x128xbf16>, vector<128x128xbf16>, vector<256x128xf32> -> vector<256x128xf32>
    %123 = arith.addf %118, %122 : vector<256x128xf32>
    %124 = vector.extract_strided_slice %113 {offsets = [32, 0], sizes = [256, 128], strides = [1, 1]} : vector<288x128xbf16> to vector<256x128xbf16>
    %c8_109 = arith.constant 8 : index
    %c0_110 = arith.constant 0 : index
    %c0_111 = arith.constant 0 : index
    %125 = vector.load %arg4[%c8_109, %c0_110, %c0_111] : memref<9x128x128xbf16, #tpu.memory_space<vmem>>, vector<1x128x128xbf16>
    %126 = vector.shape_cast %125 : vector<1x128x128xbf16> to vector<128x128xbf16>
    %cst_112 = arith.constant dense<0.000000e+00> : vector<256x128xf32>
    %127 = tpu.matmul %124, %126, %cst_112 {dimension_numbers = #tpu.dot_dimension_numbers<[1], [0], [0], [1], [0, 0, 1, 1], [], []>} : vector<256x128xbf16>, vector<128x128xbf16>, vector<256x128xf32> -> vector<256x128xf32>
    %128 = arith.addf %123, %127 : vector<256x128xf32>
    %129 = vector.broadcast %9 : vector<1x128xf32> to vector<256x128xf32>
    %130 = arith.addf %128, %129 : vector<256x128xf32>
    %cst_113 = arith.constant 0.000000e+00 : f32
    %131 = vector.broadcast %cst_113 : f32 to vector<256x128xf32>
    %132 = arith.maximumf %130, %131 : vector<256x128xf32>
    %cst_114 = arith.constant dense<0.000000e+00> : vector<128xf32>
    %133 = vector.multi_reduction <add>, %132, %cst_114 [0] : vector<256x128xf32> to vector<128xf32>
    %134 = vector.shape_cast %133 : vector<128xf32> to vector<1x128xf32>
    %135 = arith.addf %78, %134 : vector<1x128xf32>
    %cst_115 = arith.constant 3.906250e-03 : f32
    %136 = vector.broadcast %cst_115 : f32 to vector<1x128xf32>
    %137 = arith.mulf %135, %136 : vector<1x128xf32>
    %138 = vector.shape_cast %137 : vector<1x128xf32> to vector<1x1x128xf32>
    %c0_116 = arith.constant 0 : index
    %c0_117 = arith.constant 0 : index
    %c0_118 = arith.constant 0 : index
    %139 = vector.load %arg9[%c0_116, %c0_117, %c0_118] : memref<1x1x128xf32, #tpu.memory_space<vmem>>, vector<1x1x128xf32>
    tpu.vector_store %arg9[%c0_116, %c0_117, %c0_118], %138 {strides = array<i32>} : memref<1x1x128xf32, #tpu.memory_space<vmem>>, vector<1x1x128xf32>,
    %140 = arith.truncf %137 : vector<1x128xf32> to vector<1x128xbf16>
    %c0_119 = arith.constant 0 : index
    %c0_120 = arith.constant 0 : index
    %141 = vector.load %arg6[%c0_119, %c0_120] : memref<128x128xbf16, #tpu.memory_space<vmem>>, vector<128x128xbf16>
    %cst_121 = arith.constant dense<0.000000e+00> : vector<1x128xf32>
    %142 = tpu.matmul %140, %141, %cst_121 {dimension_numbers = #tpu.dot_dimension_numbers<[1], [0], [0], [1], [0, 0, 1, 1], [], []>} : vector<1x128xbf16>, vector<128x128xbf16>, vector<1x128xf32> -> vector<1x128xf32>
    %c0_122 = arith.constant 0 : index
    %c0_123 = arith.constant 0 : index
    %143 = vector.load %arg7[%c0_122, %c0_123] : memref<1x128xf32, #tpu.memory_space<vmem>>, vector<1x128xf32>
    %144 = arith.addf %142, %143 : vector<1x128xf32>
    %145 = vector.shape_cast %144 : vector<1x128xf32> to vector<1x1x128xf32>
    %c0_124 = arith.constant 0 : index
    %c0_125 = arith.constant 0 : index
    %c0_126 = arith.constant 0 : index
    %146 = vector.load %arg10[%c0_124, %c0_125, %c0_126] : memref<1x1x128xf32, #tpu.memory_space<vmem>>, vector<1x1x128xf32>
    tpu.vector_store %arg10[%c0_124, %c0_125, %c0_126], %145 {strides = array<i32>} : memref<1x1x128xf32, #tpu.memory_space<vmem>>, vector<1x1x128xf32>,
    return
  }
  func.func @transform_0(%arg0: i32) -> (i32, i32, i32, i32) {
    %c0_i32 = arith.constant 0 : i32
    %c0_i32_0 = arith.constant 0 : i32
    %c0_i32_1 = arith.constant 0 : i32
    %c0_i32_2 = arith.constant 0 : i32
    return %arg0, %c0_i32, %c0_i32_0, %c0_i32_1 : i32, i32, i32, i32
  }
  func.func @transform_1(%arg0: i32) -> (i32, i32, i32) {
    %c0_i32 = arith.constant 0 : i32
    %c0_i32_0 = arith.constant 0 : i32
    %c0_i32_1 = arith.constant 0 : i32
    %c0_i32_2 = arith.constant 0 : i32
    return %c0_i32, %c0_i32_0, %c0_i32_1 : i32, i32, i32
  }
  func.func @transform_2(%arg0: i32) -> (i32, i32) {
    %c0_i32 = arith.constant 0 : i32
    %c0_i32_0 = arith.constant 0 : i32
    %c0_i32_1 = arith.constant 0 : i32
    return %c0_i32, %c0_i32_0 : i32, i32
  }
  func.func @transform_3(%arg0: i32) -> (i32, i32, i32) {
    %c0_i32 = arith.constant 0 : i32
    %c0_i32_0 = arith.constant 0 : i32
    %c0_i32_1 = arith.constant 0 : i32
    %c0_i32_2 = arith.constant 0 : i32
    return %c0_i32, %c0_i32_0, %c0_i32_1 : i32, i32, i32
  }
  func.func @transform_4(%arg0: i32) -> (i32, i32) {
    %c0_i32 = arith.constant 0 : i32
    %c0_i32_0 = arith.constant 0 : i32
    %c0_i32_1 = arith.constant 0 : i32
    return %c0_i32, %c0_i32_0 : i32, i32
  }
  func.func @transform_5(%arg0: i32) -> (i32, i32) {
    %c0_i32 = arith.constant 0 : i32
    %c0_i32_0 = arith.constant 0 : i32
    %c0_i32_1 = arith.constant 0 : i32
    return %c0_i32, %c0_i32_0 : i32, i32
  }
  func.func @transform_6(%arg0: i32) -> (i32, i32) {
    %c0_i32 = arith.constant 0 : i32
    %c0_i32_0 = arith.constant 0 : i32
    %c0_i32_1 = arith.constant 0 : i32
    return %c0_i32, %c0_i32_0 : i32, i32
  }
  func.func @transform_7(%arg0: i32) -> (i32, i32, i32) {
    %c0_i32 = arith.constant 0 : i32
    %c0_i32_0 = arith.constant 0 : i32
    %c0_i32_1 = arith.constant 0 : i32
    return %arg0, %c0_i32, %c0_i32_0 : i32, i32, i32
  }
  func.func @transform_8(%arg0: i32) -> (i32, i32, i32) {
    %c0_i32 = arith.constant 0 : i32
    %c0_i32_0 = arith.constant 0 : i32
    %c0_i32_1 = arith.constant 0 : i32
    return %arg0, %c0_i32, %c0_i32_0 : i32, i32, i32
  }
  func.func @transform_9(%arg0: i32) -> (i32, i32, i32) {
    %c0_i32 = arith.constant 0 : i32
    %c0_i32_0 = arith.constant 0 : i32
    %c0_i32_1 = arith.constant 0 : i32
    return %arg0, %c0_i32, %c0_i32_0 : i32, i32, i32
  }
}

</mosaic_0001>

<llo_original>
// kernel: tpu_custom_call.1
$region0: #{tpu_custom_call.1}
  #allocation0 [shape = 'u32[]', space=smem, size = 0x4, offset = 0x4, fixed_abs, tag = 'smem constant byte address 0x4 - core index']
  #allocation1 [shape = 'u32[144,128]{1,0:T(1,128)}', space=vmem, size = 0x12000, scoped, tag = 'internal scratch']
  #allocation2 [shape = 'bf16[18,18,128]{2,1,0:T(8,128)(2,1)}', space=vmem, size = 0x1b000, scoped, tag = 'scratch operand']
  %s0 = inlined_call_operand.vmem [shape: bf16[2,18,18,128], index: 0, kind: input, shape index: {}]
  %s1 = inlined_call_operand.vmem [shape: bf16[9,128,128], index: 1, kind: input, shape index: {}]
  %s2 = inlined_call_operand.vmem [shape: f32[1,128], index: 2, kind: input, shape index: {}]
  %s3 = inlined_call_operand.hbm [shape: bf16[9,128,128], index: 3, kind: input, shape index: {}]
  %s4 = inlined_call_operand.vmem [shape: f32[1,128], index: 4, kind: input, shape index: {}]
  %s5 = inlined_call_operand.vmem [shape: bf16[128,128], index: 5, kind: input, shape index: {}]
  %s6 = inlined_call_operand.vmem [shape: f32[1,128], index: 6, kind: input, shape index: {}]
  %s7 = inlined_call_operand.hbm [shape: f32[2,1,128], index: 7, kind: output, shape index: {0}]
  %s8 = inlined_call_operand.hbm [shape: f32[2,1,128], index: 8, kind: output, shape index: {1}]
  %s9 = inlined_call_operand.hbm [shape: f32[2,1,128], index: 9, kind: output, shape index: {2}]
  %10 = xla_tuple %s7, %s8, %s9
  %s11 = sld [smem:[#allocation0]]
  $region81: #{tpu_custom_call.1} parent=0
    _
  %s13 = ssub.s32 1, %s11
  %s14 = scalar_select 0, %s13, %s11
  $region1: #{tpu_custom_call.1} parent=0
    #allocation3 [shape = 'u8[294912]{0}', space=vmem, size = 0x48000, scoped, tag = 'input window, operand 3, single buffered']
    #allocation4 [shape = 's32[2]{0}', space=sflag, size = 0x8, scoped, tag = 'scoped memory for tpu_custom_call.1']
    #allocation5 [shape = 's32[2]{0}', space=sflag, size = 0x8, scoped, tag = 'scoped memory for tpu_custom_call.1']
    #allocation6 [shape = 'u8[1024]{0}', space=vmem, size = 0x400, scoped, tag = 'output window, operand 0']
    #allocation7 [shape = 'u8[1024]{0}', space=vmem, size = 0x400, scoped, tag = 'output window, operand 1']
    #allocation8 [shape = 's32[2]{0}', space=sflag, size = 0x8, scoped, tag = 'scoped memory for tpu_custom_call.1']
    #allocation9 [shape = 'u8[1024]{0}', space=vmem, size = 0x400, scoped, tag = 'output window, operand 2']
    %15 = vsyncpa [#allocation4], 0
    %16 = vsyncpa [#allocation5], 0
    %s17 = scalar_lea.sflag [#allocation5], 1
    %18 = vsyncpa %s17, 0
    %19 = vsyncpa [#allocation8], 0
    %s20 = scalar_lea.sflag [#allocation8], 1
    %21 = vsyncpa %s20, 0
    loop: start=0, step=1, limit=4
    $region2: #{tpu_custom_call.1} parent=1 // loop_pre_header
      _
    $region3: #{tpu_custom_call.1} parent=1 // loop_header
      %s23 = sphi 0, %s27
      %p24 = scmp.ge.s32.totalorder %s23, 4
      %s33 = sphi 0, %s35
      %s36 = sphi 0, %s33
      %s37 = sphi 0, %s36
      %s53 = sphi 0, %s37
      %s57 = sphi 0, %s57
      %s59 = sphi 0, %s57
      %s60 = sphi 0, %s59
      %s74 = sphi 0, %s60
      %s78 = sphi 0, %s78
      %s80 = sphi 0, %s78
      %s81 = sphi 0, %s80
      %s95 = sphi 0, %s81
      %s99 = sphi 0, %s99
      %s101 = sphi 0, %s99
      %s102 = sphi 0, %s101
      %s116 = sphi 0, %s102
      %s120 = sphi 0, %s120
      %s122 = sphi 0, %s120
      %s123 = sphi 0, %s122
      %s137 = sphi 0, %s123
      %s141 = sphi 0, %s141
      %s143 = sphi 0, %s141
      %s144 = sphi 0, %s143
      %s158 = sphi 0, %s144
      %s162 = sphi 0, %s162
      %s164 = sphi 0, %s162
      %s165 = sphi 0, %s164
      %s179 = sphi 0, %s165
      %s185 = sphi 0, %s187
      %s188 = sphi 0, %s185
      %s189 = sphi 0, %s188
      %s205 = sphi 0, %s189
      %s211 = sphi 0, %s213
      %s214 = sphi 0, %s211
      %s215 = sphi 0, %s214
      %s231 = sphi 0, %s215
      %s237 = sphi 0, %s239
      %s240 = sphi 0, %s237
      %s241 = sphi 0, %s240
      %s257 = sphi 0, %s241
    $region4: #{tpu_custom_call.1} parent=1 // loop_header_branch
      %26 = sbr.rel (%p24) target = $region8
    $region5: #{tpu_custom_call.1} parent=1 // loop_body
      %s28 = ssub.s32 %s23, 1
      %s29 = ssub.s32 %s23, 2
      %s30 = sadd.s32 %s23, 1
      %s31 = ssub.s32 %s23, %s30
      %p32 = scmp.eq.s32.totalorder %s31, 0
      %s34 = sadd.s32 %s33, 1
      %s35 = scalar_select %p32, %s33, %s34
      %p38 = pneg %p32
      %p39 = scmp.eq.s32.totalorder %s23, 1
      %p40 = por %p38, %p39
      %p41 = scmp.ne.s32.totalorder %s33, %s36
      %p42 = scmp.eq.s32.totalorder %s23, 0
      %p43 = por %p41, %p42
      %p44 = scmp.ne.s32.totalorder %s33, %s36
      %p45 = scmp.eq.s32.totalorder %s28, 1
      %p46 = por %p44, %p45
      %p47 = scmp.ne.s32.totalorder %s36, %s37
      %p48 = scmp.eq.s32.totalorder %s28, 0
      %p49 = por %p47, %p48
      %p50 = scmp.ne.s32.totalorder %s36, %s37
      %p51 = scmp.eq.s32.totalorder %s29, 1
      %p52 = por %p50, %p51
      %p54 = scmp.ne.s32.totalorder %s37, %s53
      %p55 = scmp.eq.s32.totalorder %s29, 0
      %p56 = por %p54, %p55
      %s58 = sadd.s32 %s57, 1
      %p61 = scmp.eq.s32.totalorder %s23, 1
      %p62 = scmp.ne.s32.totalorder %s57, %s59
      %p63 = scmp.eq.s32.totalorder %s23, 0
      %p64 = por %p62, %p63
      %p65 = scmp.ne.s32.totalorder %s57, %s59
      %p66 = scmp.eq.s32.totalorder %s28, 1
      %p67 = por %p65, %p66
      %p68 = scmp.ne.s32.totalorder %s59, %s60
      %p69 = scmp.eq.s32.totalorder %s28, 0
      %p70 = por %p68, %p69
      %p71 = scmp.ne.s32.totalorder %s59, %s60
      %p72 = scmp.eq.s32.totalorder %s29, 1
      %p73 = por %p71, %p72
      %p75 = scmp.ne.s32.totalorder %s60, %s74
      %p76 = scmp.eq.s32.totalorder %s29, 0
      %p77 = por %p75, %p76
      %s79 = sadd.s32 %s78, 1
      %p82 = scmp.eq.s32.totalorder %s23, 1
      %p83 = scmp.ne.s32.totalorder %s78, %s80
      %p84 = scmp.eq.s32.totalorder %s23, 0
      %p85 = por %p83, %p84
      %p86 = scmp.ne.s32.totalorder %s78, %s80
      %p87 = scmp.eq.s32.totalorder %s28, 1
      %p88 = por %p86, %p87
      %p89 = scmp.ne.s32.totalorder %s80, %s81
      %p90 = scmp.eq.s32.totalorder %s28, 0
      %p91 = por %p89, %p90
      %p92 = scmp.ne.s32.totalorder %s80, %s81
      %p93 = scmp.eq.s32.totalorder %s29, 1
      %p94 = por %p92, %p93
      %p96 = scmp.ne.s32.totalorder %s81, %s95
      %p97 = scmp.eq.s32.totalorder %s29, 0
      %p98 = por %p96, %p97
      %s100 = sadd.s32 %s99, 1
      %p103 = scmp.eq.s32.totalorder %s23, 1
      %p104 = scmp.ne.s32.totalorder %s99, %s101
      %p105 = scmp.eq.s32.totalorder %s23, 0
      %p106 = por %p104, %p105
      %p107 = scmp.ne.s32.totalorder %s99, %s101
      %p108 = scmp.eq.s32.totalorder %s28, 1
      %p109 = por %p107, %p108
      %p110 = scmp.ne.s32.totalorder %s101, %s102
      %p111 = scmp.eq.s32.totalorder %s28, 0
      %p112 = por %p110, %p111
      %p113 = scmp.ne.s32.totalorder %s101, %s102
      %p114 = scmp.eq.s32.totalorder %s29, 1
      %p115 = por %p113, %p114
      %p117 = scmp.ne.s32.totalorder %s102, %s116
      %p118 = scmp.eq.s32.totalorder %s29, 0
      %p119 = por %p117, %p118
      %s121 = sadd.s32 %s120, 1
      %p124 = scmp.eq.s32.totalorder %s23, 1
      %p125 = scmp.ne.s32.totalorder %s120, %s122
      %p126 = scmp.eq.s32.totalorder %s23, 0
      %p127 = por %p125, %p126
      %p128 = scmp.ne.s32.totalorder %s120, %s122
      %p129 = scmp.eq.s32.totalorder %s28, 1
      %p130 = por %p128, %p129
      %p131 = scmp.ne.s32.totalorder %s122, %s123
      %p132 = scmp.eq.s32.totalorder %s28, 0
      %p133 = por %p131, %p132
      %p134 = scmp.ne.s32.totalorder %s122, %s123
      %p135 = scmp.eq.s32.totalorder %s29, 1
      %p136 = por %p134, %p135
      %p138 = scmp.ne.s32.totalorder %s123, %s137
      %p139 = scmp.eq.s32.totalorder %s29, 0
      %p140 = por %p138, %p139
      %s142 = sadd.s32 %s141, 1
      %p145 = scmp.eq.s32.totalorder %s23, 1
      %p146 = scmp.ne.s32.totalorder %s141, %s143
      %p147 = scmp.eq.s32.totalorder %s23, 0
      %p148 = por %p146, %p147
      %p149 = scmp.ne.s32.totalorder %s141, %s143
      %p150 = scmp.eq.s32.totalorder %s28, 1
      %p151 = por %p149, %p150
      %p152 = scmp.ne.s32.totalorder %s143, %s144
      %p153 = scmp.eq.s32.totalorder %s28, 0
      %p154 = por %p152, %p153
      %p155 = scmp.ne.s32.totalorder %s143, %s144
      %p156 = scmp.eq.s32.totalorder %s29, 1
      %p157 = por %p155, %p156
      %p159 = scmp.ne.s32.totalorder %s144, %s158
      %p160 = scmp.eq.s32.totalorder %s29, 0
      %p161 = por %p159, %p160
      %s163 = sadd.s32 %s162, 1
      %p166 = scmp.eq.s32.totalorder %s23, 1
      %p167 = scmp.ne.s32.totalorder %s162, %s164
      %p168 = scmp.eq.s32.totalorder %s23, 0
      %p169 = por %p167, %p168
      %p170 = scmp.ne.s32.totalorder %s162, %s164
      %p171 = scmp.eq.s32.totalorder %s28, 1
      %p172 = por %p170, %p171
      %p173 = scmp.ne.s32.totalorder %s164, %s165
      %p174 = scmp.eq.s32.totalorder %s28, 0
      %p175 = por %p173, %p174
      %p176 = scmp.ne.s32.totalorder %s164, %s165
      %p177 = scmp.eq.s32.totalorder %s29, 1
      %p178 = por %p176, %p177
      %p180 = scmp.ne.s32.totalorder %s165, %s179
      %p181 = scmp.eq.s32.totalorder %s29, 0
      %p182 = por %p180, %p181
      %s183 = ssub.s32 %s23, %s30
      %p184 = scmp.eq.s32.totalorder %s183, 0
      %s186 = sadd.s32 %s185, 1
      %s187 = scalar_select %p184, %s185, %s186
      %p190 = pneg %p184
      %p191 = scmp.eq.s32.totalorder %s23, 1
      %p192 = por %p190, %p191
      %p193 = scmp.ne.s32.totalorder %s185, %s188
      %p194 = scmp.eq.s32.totalorder %s23, 0
      %p195 = por %p193, %p194
      %p196 = scmp.ne.s32.totalorder %s185, %s188
      %p197 = scmp.eq.s32.totalorder %s28, 1
      %p198 = por %p196, %p197
      %p199 = scmp.ne.s32.totalorder %s188, %s189
      %p200 = scmp.eq.s32.totalorder %s28, 0
      %p201 = por %p199, %p200
      %p202 = scmp.ne.s32.totalorder %s188, %s189
      %p203 = scmp.eq.s32.totalorder %s29, 1
      %p204 = por %p202, %p203
      %p206 = scmp.ne.s32.totalorder %s189, %s205
      %p207 = scmp.eq.s32.totalorder %s29, 0
      %p208 = por %p206, %p207
      %s209 = ssub.s32 %s23, %s30
      %p210 = scmp.eq.s32.totalorder %s209, 0
      %s212 = sadd.s32 %s211, 1
      %s213 = scalar_select %p210, %s211, %s212
      %p216 = pneg %p210
      %p217 = scmp.eq.s32.totalorder %s23, 1
      %p218 = por %p216, %p217
      %p219 = scmp.ne.s32.totalorder %s211, %s214
      %p220 = scmp.eq.s32.totalorder %s23, 0
      %p221 = por %p219, %p220
      %p222 = scmp.ne.s32.totalorder %s211, %s214
      %p223 = scmp.eq.s32.totalorder %s28, 1
      %p224 = por %p222, %p223
      %p225 = scmp.ne.s32.totalorder %s214, %s215
      %p226 = scmp.eq.s32.totalorder %s28, 0
      %p227 = por %p225, %p226
      %p228 = scmp.ne.s32.totalorder %s214, %s215
      %p229 = scmp.eq.s32.totalorder %s29, 1
      %p230 = por %p228, %p229
      %p232 = scmp.ne.s32.totalorder %s215, %s231
      %p233 = scmp.eq.s32.totalorder %s29, 0
      %p234 = por %p232, %p233
      %s235 = ssub.s32 %s23, %s30
      %p236 = scmp.eq.s32.totalorder %s235, 0
      %s238 = sadd.s32 %s237, 1
      %s239 = scalar_select %p236, %s237, %s238
      %p242 = pneg %p236
      %p243 = scmp.eq.s32.totalorder %s23, 1
      %p244 = por %p242, %p243
      %p245 = scmp.ne.s32.totalorder %s237, %s240
      %p246 = scmp.eq.s32.totalorder %s23, 0
      %p247 = por %p245, %p246
      %p248 = scmp.ne.s32.totalorder %s237, %s240
      %p249 = scmp.eq.s32.totalorder %s28, 1
      %p250 = por %p248, %p249
      %p251 = scmp.ne.s32.totalorder %s240, %s241
      %p252 = scmp.eq.s32.totalorder %s28, 0
      %p253 = por %p251, %p252
      %p254 = scmp.ne.s32.totalorder %s240, %s241
      %p255 = scmp.eq.s32.totalorder %s29, 1
      %p256 = por %p254, %p255
      %p258 = scmp.ne.s32.totalorder %s241, %s257
      %p259 = scmp.eq.s32.totalorder %s29, 0
      %p260 = por %p258, %p259
      %p261 = scmp.le.s32.totalorder 1, %s23
      %p262 = scmp.lt.s32.totalorder %s23, 3
      %p263 = pnand %p261, %p262
      %p264 = pneg %p263
      // Predicated region
      $region9: #{tpu_custom_call.1} parent=5 // pred_check
        _
      $region10: #{tpu_custom_call.1} parent=5 // pred_check_branch
        %266 = sbr.rel (%p263) target = $region12
      $region11: #{tpu_custom_call.1} parent=5 // pred_region
        %s267 = ssub.s32 %s23, 1
        // Predicated region
        $region13: #{tpu_custom_call.1} parent=11 // pred_check
          %p268 = pneg %p70
        $region14: #{tpu_custom_call.1} parent=11 // pred_check_branch
          %270 = sbr.rel (%p268) target = $region16
        $region15: #{tpu_custom_call.1} parent=11 // pred_region
          _
        $region16: #{tpu_custom_call.1} parent=11 // pred_fallthru
          _
        // Predicated region
        $region17: #{tpu_custom_call.1} parent=11 // pred_check
          %p271 = pneg %p91
        $region18: #{tpu_custom_call.1} parent=11 // pred_check_branch
          %273 = sbr.rel (%p271) target = $region20
        $region19: #{tpu_custom_call.1} parent=11 // pred_region
          _
        $region20: #{tpu_custom_call.1} parent=11 // pred_fallthru
          _
        // Predicated region
        $region21: #{tpu_custom_call.1} parent=11 // pred_check
          %p274 = pneg %p112
        $region22: #{tpu_custom_call.1} parent=11 // pred_check_branch
          %276 = sbr.rel (%p274) target = $region24
        $region23: #{tpu_custom_call.1} parent=11 // pred_region
          %s278 = ssub.s32 9216, 9216
          %279 = vsyncadd [#allocation4], %s278
          %s280 = sshll.u32 [#allocation3], 4
          %s281 = int_to_ptr.vmem [resolvable:$true] %s280
          %286 = dma.hbm_to_vmem [thread:$0]  %s3, 9216, %s281, [#allocation4], 64, 64, 4
        $region24: #{tpu_custom_call.1} parent=11 // pred_fallthru
          _
        // Predicated region
        $region25: #{tpu_custom_call.1} parent=11 // pred_check
          %p287 = pneg %p133
        $region26: #{tpu_custom_call.1} parent=11 // pred_check_branch
          %289 = sbr.rel (%p287) target = $region28
        $region27: #{tpu_custom_call.1} parent=11 // pred_region
          _
        $region28: #{tpu_custom_call.1} parent=11 // pred_fallthru
          _
        // Predicated region
        $region29: #{tpu_custom_call.1} parent=11 // pred_check
          %p290 = pneg %p154
        $region30: #{tpu_custom_call.1} parent=11 // pred_check_branch
          %292 = sbr.rel (%p290) target = $region32
        $region31: #{tpu_custom_call.1} parent=11 // pred_region
          _
        $region32: #{tpu_custom_call.1} parent=11 // pred_fallthru
          _
        // Predicated region
        $region33: #{tpu_custom_call.1} parent=11 // pred_check
          %p293 = pneg %p175
        $region34: #{tpu_custom_call.1} parent=11 // pred_check_branch
          %295 = sbr.rel (%p293) target = $region36
        $region35: #{tpu_custom_call.1} parent=11 // pred_region
          _
        $region36: #{tpu_custom_call.1} parent=11 // pred_fallthru
          _
      $region12: #{tpu_custom_call.1} parent=5 // pred_fallthru
        _
      %p296 = scmp.lt.s32.totalorder %s23, 2
      // Predicated region
      $region37: #{tpu_custom_call.1} parent=5 // pred_check
        %p297 = pneg %p296
      $region38: #{tpu_custom_call.1} parent=5 // pred_check_branch
        %299 = sbr.rel (%p297) target = $region40
      $region39: #{tpu_custom_call.1} parent=5 // pred_region
        // Predicated region
        $region41: #{tpu_custom_call.1} parent=39 // pred_check
          %p300 = pneg %p43
        $region42: #{tpu_custom_call.1} parent=39 // pred_check_branch
          %302 = sbr.rel (%p300) target = $region44
        $region43: #{tpu_custom_call.1} parent=39 // pred_region
          %p303 = scmp.lt.s32.totalorder %s23, 1
          %s304 = scalar_select %p303, %s23, 1
          %s305 = smul.addr %s304, 54
          %s306 = smul.addr %s305, 4
          %s307 = scalar_lea.vmem %s0, %s306
        $region44: #{tpu_custom_call.1} parent=39 // pred_fallthru
          _
      $region40: #{tpu_custom_call.1} parent=5 // pred_fallthru
        _
      %p308 = scmp.le.s32.totalorder 1, %s23
      %p309 = scmp.lt.s32.totalorder %s23, 3
      %p310 = pnand %p308, %p309
      %p311 = pneg %p310
      // Predicated region
      $region45: #{tpu_custom_call.1} parent=5 // pred_check
        _
      $region46: #{tpu_custom_call.1} parent=5 // pred_check_branch
        %313 = sbr.rel (%p310) target = $region48
      $region47: #{tpu_custom_call.1} parent=5 // pred_region
        %s314 = ssub.s32 %s23, 1
        // Predicated region
        $region49: #{tpu_custom_call.1} parent=47 // pred_check
          %p315 = pneg %p112
        $region50: #{tpu_custom_call.1} parent=47 // pred_check_branch
          %317 = sbr.rel (%p315) target = $region52
        $region51: #{tpu_custom_call.1} parent=47 // pred_region
          %318 = dma.done [#allocation4], 9216
        $region52: #{tpu_custom_call.1} parent=47 // pred_fallthru
          _
        %p319 = scmp.lt.s32.totalorder %s28, 1
        %s320 = scalar_select %p319, %s28, 1
        %s321 = smul.addr %s320, 54
        %s322 = smul.addr %s321, 4
        %s323 = scalar_lea.vmem %s0, %s322
        %p324 = pneg %p49
        %p325 = pneg %p46
        %p326 = pneg %p70
        %p327 = pneg %p67
        %p328 = pneg %p91
        %p329 = pneg %p88
        %p330 = pneg %p112
        %p331 = pneg %p109
        %p332 = pneg %p133
        %p333 = pneg %p130
        %p334 = pneg %p154
        %p335 = pneg %p151
        %p336 = pneg %p175
        %p337 = pneg %p172
        %p338 = pneg %p201
        %p339 = pneg %p198
        %s340 = sand.u32 %s188, 1
        %s341 = scalar_lea.sflag [#allocation5], %s340
        %s342 = sand.u32 %s188, 1
        %s343 = scalar_lea.vmem [#allocation6], %s342
        %p344 = pneg %p227
        %p345 = pneg %p224
        %s346 = sand.u32 %s28, 1
        %s347 = scalar_lea.sflag [#allocation8], %s346
        %s348 = sand.u32 %s214, 1
        %s349 = scalar_lea.vmem [#allocation7], %s348
        %p350 = pneg %p253
        %p351 = pneg %p250
        %s352 = sand.u32 %s28, 1
        %s353 = scalar_lea.sflag [#allocation8], %s352
        %s354 = sand.u32 %s240, 1
        %s355 = scalar_lea.vmem [#allocation9], %s354
        %p356 = scmp.lt.s32.totalorder %s28, 1
        %s357 = scalar_select %p356, %s28, 1
        %s358 = smul.addr %s357, 54
        %s359 = smul.addr %s358, 4
        %s360 = scalar_lea.vmem %s0, %s359
        %362 = vst [vmem:[#allocation2] sm:$0xf] 0
        %363 = vst [vmem:[#allocation2 + $0x4] sm:$0xf] 0
        %364 = vst [vmem:[#allocation2 + $0x8] sm:$0x1] 0
        %s365 = scalar_lea.vmem [#allocation2], 204
        %366 = vst [vmem:[%s365] sm:$0xf] 0
        %367 = vst [vmem:[%s365 + $0x4] sm:$0xf] 0
        %368 = vst [vmem:[%s365 + $0x8] sm:$0x1] 0
        %vm369 = vcmask 1040384
        %vm370 = vsmask.f32 256
        %vm371 = vmand %vm369, %vm370
        %v372 = vld [vmem:[#allocation2] sm:$0x1]
        %v373 = vsel %vm371, 0, %v372
        %374 = vst [vmem:[#allocation2] sm:$0x1] %v373
        %v375 = vld [vmem:[#allocation2 + $0xc] sm:$0x1]
        %v376 = vsel %vm371, 0, %v375
        %377 = vst [vmem:[#allocation2 + $0xc] sm:$0x1] %v376
        %v378 = vld [vmem:[#allocation2 + $0x18] sm:$0x1]
        %v379 = vsel %vm371, 0, %v378
        %380 = vst [vmem:[#allocation2 + $0x18] sm:$0x1] %v379
        %v381 = vld [vmem:[#allocation2 + $0x24] sm:$0x1]
        %v382 = vsel %vm371, 0, %v381
        %383 = vst [vmem:[#allocation2 + $0x24] sm:$0x1] %v382
        %v384 = vld [vmem:[#allocation2 + $0x30] sm:$0x1]
        %v385 = vsel %vm371, 0, %v384
        %386 = vst [vmem:[#allocation2 + $0x30] sm:$0x1] %v385
        %v387 = vld [vmem:[#allocation2 + $0x3c] sm:$0x1]
        %v388 = vsel %vm371, 0, %v387
        %389 = vst [vmem:[#allocation2 + $0x3c] sm:$0x1] %v388
        %v390 = vld [vmem:[#allocation2 + $0x48] sm:$0x1]
        %v391 = vsel %vm371, 0, %v390
        %392 = vst [vmem:[#allocation2 + $0x48] sm:$0x1] %v391
        %v393 = vld [vmem:[#allocation2 + $0x54] sm:$0x1]
        %v394 = vsel %vm371, 0, %v393
        %395 = vst [vmem:[#allocation2 + $0x54] sm:$0x1] %v394
        %v396 = vld [vmem:[#allocation2 + $0x60] sm:$0x1]
        %v397 = vsel %vm371, 0, %v396
        %398 = vst [vmem:[#allocation2 + $0x60] sm:$0x1] %v397
        %v399 = vld [vmem:[#allocation2 + $0x6c] sm:$0x1]
        %v400 = vsel %vm371, 0, %v399
        %401 = vst [vmem:[#allocation2 + $0x6c] sm:$0x1] %v400
        %v402 = vld [vmem:[#allocation2 + $0x78] sm:$0x1]
        %v403 = vsel %vm371, 0, %v402
        %404 = vst [vmem:[#allocation2 + $0x78] sm:$0x1] %v403
        %v405 = vld [vmem:[#allocation2 + $0x84] sm:$0x1]
        %v406 = vsel %vm371, 0, %v405
        %407 = vst [vmem:[#allocation2 + $0x84] sm:$0x1] %v406
        %v408 = vld [vmem:[#allocation2 + $0x90] sm:$0x1]
        %v409 = vsel %vm371, 0, %v408
        %410 = vst [vmem:[#allocation2 + $0x90] sm:$0x1] %v409
        %v411 = vld [vmem:[#allocation2 + $0x9c] sm:$0x1]
        %v412 = vsel %vm371, 0, %v411
        %413 = vst [vmem:[#allocation2 + $0x9c] sm:$0x1] %v412
        %v414 = vld [vmem:[#allocation2 + $0xa8] sm:$0x1]
        %v415 = vsel %vm371, 0, %v414
        %416 = vst [vmem:[#allocation2 + $0xa8] sm:$0x1] %v415
        %v417 = vld [vmem:[#allocation2 + $0xb4] sm:$0x1]
        %v418 = vsel %vm371, 0, %v417
        %419 = vst [vmem:[#allocation2 + $0xb4] sm:$0x1] %v418
        %v420 = vld [vmem:[#allocation2 + $0xc0] sm:$0x1]
        %v421 = vsel %vm371, 0, %v420
        %422 = vst [vmem:[#allocation2 + $0xc0] sm:$0x1] %v421
        %v423 = vld [vmem:[#allocation2 + $0xcc] sm:$0x1]
        %v424 = vsel %vm371, 0, %v423
        %425 = vst [vmem:[#allocation2 + $0xcc] sm:$0x1] %v424
        %vm426 = vsmask.f32 7938
        %vm427 = vmand %vm369, %vm426
        %v428 = vld [vmem:[#allocation2 + $0x8] sm:$0x1]
        %v429 = vsel %vm427, 0, %v428
        %430 = vst [vmem:[#allocation2 + $0x8] sm:$0x1] %v429
        %v431 = vld [vmem:[#allocation2 + $0x14] sm:$0x1]
        %v432 = vsel %vm427, 0, %v431
        %433 = vst [vmem:[#allocation2 + $0x14] sm:$0x1] %v432
        %v434 = vld [vmem:[#allocation2 + $0x20] sm:$0x1]
        %v435 = vsel %vm427, 0, %v434
        %436 = vst [vmem:[#allocation2 + $0x20] sm:$0x1] %v435
        %v437 = vld [vmem:[#allocation2 + $0x2c] sm:$0x1]
        %v438 = vsel %vm427, 0, %v437
        %439 = vst [vmem:[#allocation2 + $0x2c] sm:$0x1] %v438
        %v440 = vld [vmem:[#allocation2 + $0x38] sm:$0x1]
        %v441 = vsel %vm427, 0, %v440
        %442 = vst [vmem:[#allocation2 + $0x38] sm:$0x1] %v441
        %v443 = vld [vmem:[#allocation2 + $0x44] sm:$0x1]
        %v444 = vsel %vm427, 0, %v443
        %445 = vst [vmem:[#allocation2 + $0x44] sm:$0x1] %v444
        %v446 = vld [vmem:[#allocation2 + $0x50] sm:$0x1]
        %v447 = vsel %vm427, 0, %v446
        %448 = vst [vmem:[#allocation2 + $0x50] sm:$0x1] %v447
        %v449 = vld [vmem:[#allocation2 + $0x5c] sm:$0x1]
        %v450 = vsel %vm427, 0, %v449
        %451 = vst [vmem:[#allocation2 + $0x5c] sm:$0x1] %v450
        %v452 = vld [vmem:[#allocation2 + $0x68] sm:$0x1]
        %v453 = vsel %vm427, 0, %v452
        %454 = vst [vmem:[#allocation2 + $0x68] sm:$0x1] %v453
        %v455 = vld [vmem:[#allocation2 + $0x74] sm:$0x1]
        %v456 = vsel %vm427, 0, %v455
        %457 = vst [vmem:[#allocation2 + $0x74] sm:$0x1] %v456
        %v458 = vld [vmem:[#allocation2 + $0x80] sm:$0x1]
        %v459 = vsel %vm427, 0, %v458
        %460 = vst [vmem:[#allocation2 + $0x80] sm:$0x1] %v459
        %v461 = vld [vmem:[#allocation2 + $0x8c] sm:$0x1]
        %v462 = vsel %vm427, 0, %v461
        %463 = vst [vmem:[#allocation2 + $0x8c] sm:$0x1] %v462
        %v464 = vld [vmem:[#allocation2 + $0x98] sm:$0x1]
        %v465 = vsel %vm427, 0, %v464
        %466 = vst [vmem:[#allocation2 + $0x98] sm:$0x1] %v465
        %v467 = vld [vmem:[#allocation2 + $0xa4] sm:$0x1]
        %v468 = vsel %vm427, 0, %v467
        %469 = vst [vmem:[#allocation2 + $0xa4] sm:$0x1] %v468
        %v470 = vld [vmem:[#allocation2 + $0xb0] sm:$0x1]
        %v471 = vsel %vm427, 0, %v470
        %472 = vst [vmem:[#allocation2 + $0xb0] sm:$0x1] %v471
        %v473 = vld [vmem:[#allocation2 + $0xbc] sm:$0x1]
        %v474 = vsel %vm427, 0, %v473
        %475 = vst [vmem:[#allocation2 + $0xbc] sm:$0x1] %v474
        %v476 = vld [vmem:[#allocation2 + $0xc8] sm:$0x1]
        %v477 = vsel %vm427, 0, %v476
        %478 = vst [vmem:[#allocation2 + $0xc8] sm:$0x1] %v477
        %v479 = vld [vmem:[#allocation2 + $0xd4] sm:$0x1]
        %v480 = vsel %vm427, 0, %v479
        %481 = vst [vmem:[#allocation2 + $0xd4] sm:$0x1] %v480
        %v482 = vld [vmem:[%s2] sm:$0x1]
        %v483 = vld [vmem:[%s4] sm:$0x1]
        %v484 = vld [vmem:[%s360] sm:$0xf]
        %v485 = vld [vmem:[%s360 + $0x4] sm:$0xf]
        %v486 = vld [vmem:[%s360 + $0xc] sm:$0xf]
        %v487 = vld [vmem:[%s360 + $0x10] sm:$0xf]
        %v488 = vld [vmem:[%s360 + $0x18] sm:$0xf]
        %v489 = vld [vmem:[%s360 + $0x1c] sm:$0xf]
        %v490 = vld [vmem:[%s360 + $0x24] sm:$0xf]
        %v491 = vld [vmem:[%s360 + $0x28] sm:$0xf]
        %v492 = vld [vmem:[%s360 + $0x30] sm:$0xf]
        %v493 = vld [vmem:[%s360 + $0x34] sm:$0xf]
        %v494 = vld [vmem:[%s360 + $0x3c] sm:$0xf]
        %v495 = vld [vmem:[%s360 + $0x40] sm:$0xf]
        %v496 = vld [vmem:[%s360 + $0x48] sm:$0xf]
        %v497 = vld [vmem:[%s360 + $0x4c] sm:$0xf]
        %v498 = vld [vmem:[%s360 + $0x54] sm:$0xf]
        %v499 = vld [vmem:[%s360 + $0x58] sm:$0xf]
        %v500 = vld [vmem:[%s360 + $0x60] sm:$0xf]
        %v501 = vld [vmem:[%s360 + $0x64] sm:$0xf]
        %v502 = vld [vmem:[%s360 + $0x6c] sm:$0xf]
        %v503 = vld [vmem:[%s360 + $0x70] sm:$0xf]
        %v504 = vld [vmem:[%s360 + $0x78] sm:$0xf]
        %v505 = vld [vmem:[%s360 + $0x7c] sm:$0xf]
        %v506 = vld [vmem:[%s360 + $0x84] sm:$0xf]
        %v507 = vld [vmem:[%s360 + $0x88] sm:$0xf]
        %v508 = vld [vmem:[%s360 + $0x90] sm:$0xf]
        %v509 = vld [vmem:[%s360 + $0x94] sm:$0xf]
        %v510 = vld [vmem:[%s360 + $0x9c] sm:$0xf]
        %v511 = vld [vmem:[%s360 + $0xa0] sm:$0xf]
        %v512 = vld [vmem:[%s360 + $0xa8] sm:$0xf]
        %v513 = vld [vmem:[%s360 + $0xac] sm:$0xf]
        %v514 = vld [vmem:[%s360 + $0xb4] sm:$0xf]
        %v515 = vld [vmem:[%s360 + $0xb8] sm:$0xf]
        %v516 = vld [vmem:[%s360 + $0xc0] sm:$0xf]
        %v517 = vld [vmem:[%s360 + $0xc4] sm:$0xf]
        %v518 = vld [vmem:[%s360 + $0xcc] sm:$0xf]
        %v519 = vld [vmem:[%s360 + $0xd0] sm:$0xf]
        %v520 = vld [vmem:[%s1] sm:$0xf]
        %v521 = vld [vmem:[%s1 + $0x4] sm:$0xf]
        %v522 = vld [vmem:[%s1 + $0x8] sm:$0xf]
        %v523 = vld [vmem:[%s1 + $0xc] sm:$0xf]
        %v524 = vld [vmem:[%s1 + $0x10] sm:$0xf]
        %v525 = vld [vmem:[%s1 + $0x14] sm:$0xf]
        %v526 = vld [vmem:[%s1 + $0x18] sm:$0xf]
        %v527 = vld [vmem:[%s1 + $0x1c] sm:$0xf]
        %v528 = vld [vmem:[%s1 + $0x20] sm:$0xf]
        %v529 = vld [vmem:[%s1 + $0x24] sm:$0xf]
        %v530 = vld [vmem:[%s1 + $0x28] sm:$0xf]
        %v531 = vld [vmem:[%s1 + $0x2c] sm:$0xf]
        %v532 = vld [vmem:[%s1 + $0x30] sm:$0xf]
        %v533 = vld [vmem:[%s1 + $0x34] sm:$0xf]
        %v534 = vld [vmem:[%s1 + $0x38] sm:$0xf]
        %v535 = vld [vmem:[%s1 + $0x3c] sm:$0xf]
        %s536 = scalar_lea.vmem %s1, 192
        %v537 = vld [vmem:[%s536] sm:$0xf]
        %v538 = vld [vmem:[%s536 + $0x4] sm:$0xf]
        %v539 = vld [vmem:[%s536 + $0x8] sm:$0xf]
        %v540 = vld [vmem:[%s536 + $0xc] sm:$0xf]
        %v541 = vld [vmem:[%s536 + $0x10] sm:$0xf]
        %v542 = vld [vmem:[%s536 + $0x14] sm:$0xf]
        %v543 = vld [vmem:[%s536 + $0x18] sm:$0xf]
        %v544 = vld [vmem:[%s536 + $0x1c] sm:$0xf]
        %v545 = vld [vmem:[%s536 + $0x20] sm:$0xf]
        %v546 = vld [vmem:[%s536 + $0x24] sm:$0xf]
        %v547 = vld [vmem:[%s536 + $0x28] sm:$0xf]
        %v548 = vld [vmem:[%s536 + $0x2c] sm:$0xf]
        %v549 = vld [vmem:[%s536 + $0x30] sm:$0xf]
        %v550 = vld [vmem:[%s536 + $0x34] sm:$0xf]
        %v551 = vld [vmem:[%s536 + $0x38] sm:$0xf]
        %v552 = vld [vmem:[%s536 + $0x3c] sm:$0xf]
        %v585 = vunpack.c.l.b16 %v486
        %v586 = vunpack.c.l.b16 %v487
        %v587 = vunpack.c.l.b16 %v488
        %v588 = vunpack.c.l.b16 %v489
        %v589 = vunpack.c.l.b16 %v490
        %v590 = vunpack.c.l.b16 %v491
        %v591 = vunpack.c.l.b16 %v492
        %v592 = vunpack.c.l.b16 %v493
        %v593 = vunpack.c.l.b16 %v494
        %v594 = vunpack.c.l.b16 %v495
        %v595 = vunpack.c.l.b16 %v496
        %v596 = vunpack.c.l.b16 %v497
        %v597 = vunpack.c.l.b16 %v498
        %v598 = vunpack.c.l.b16 %v499
        %v599 = vunpack.c.l.b16 %v500
        %v600 = vunpack.c.l.b16 %v501
        %v601 = vunpack.c.l.b16 %v502
        %v602 = vunpack.c.l.b16 %v503
        %v603 = vunpack.c.l.b16 %v504
        %v604 = vunpack.c.l.b16 %v505
        %v605 = vunpack.c.l.b16 %v506
        %v606 = vunpack.c.l.b16 %v507
        %v607 = vunpack.c.l.b16 %v508
        %v608 = vunpack.c.l.b16 %v509
        %v609 = vunpack.c.l.b16 %v510
        %v610 = vunpack.c.l.b16 %v511
        %v611 = vunpack.c.l.b16 %v512
        %v612 = vunpack.c.l.b16 %v513
        %v613 = vunpack.c.l.b16 %v514
        %v614 = vunpack.c.l.b16 %v515
        %v615 = vunpack.c.l.b16 %v516
        %v616 = vunpack.c.l.b16 %v517
        %v617 = vpack.c.b16 %v586, %v585
        %v618 = vpack.c.b16 %v588, %v587
        %v619 = vpack.c.b16 %v590, %v589
        %v620 = vpack.c.b16 %v592, %v591
        %v621 = vpack.c.b16 %v594, %v593
        %v622 = vpack.c.b16 %v596, %v595
        %v623 = vpack.c.b16 %v598, %v597
        %v624 = vpack.c.b16 %v600, %v599
        %v625 = vpack.c.b16 %v602, %v601
        %v626 = vpack.c.b16 %v604, %v603
        %v627 = vpack.c.b16 %v606, %v605
        %v628 = vpack.c.b16 %v608, %v607
        %v629 = vpack.c.b16 %v610, %v609
        %v630 = vpack.c.b16 %v612, %v611
        %v631 = vpack.c.b16 %v614, %v613
        %v632 = vpack.c.b16 %v616, %v615
        %v665 = vunpack.c.l.b16 %v537
        %v666 = vunpack.c.l.b16 %v538
        %v667 = vunpack.c.l.b16 %v539
        %v668 = vunpack.c.l.b16 %v540
        %v669 = vunpack.c.l.b16 %v541
        %v670 = vunpack.c.l.b16 %v542
        %v671 = vunpack.c.l.b16 %v543
        %v672 = vunpack.c.l.b16 %v544
        %v673 = vunpack.c.l.b16 %v545
        %v674 = vunpack.c.l.b16 %v546
        %v675 = vunpack.c.l.b16 %v547
        %v676 = vunpack.c.l.b16 %v548
        %v677 = vunpack.c.l.b16 %v549
        %v678 = vunpack.c.l.b16 %v550
        %v679 = vunpack.c.l.b16 %v551
        %v680 = vunpack.c.l.b16 %v552
        %v681 = vpack.c.b16 %v666, %v665
        %v682 = vpack.c.b16 %v668, %v667
        %v683 = vpack.c.b16 %v670, %v669
        %v684 = vpack.c.b16 %v672, %v671
        %v685 = vpack.c.b16 %v674, %v673
        %v686 = vpack.c.b16 %v676, %v675
        %v687 = vpack.c.b16 %v678, %v677
        %v688 = vpack.c.b16 %v680, %v679
        %697 = vmatprep.subr.bf16.mxu0 0
        %698 = vmatpush1.bf16.msra.mxu0 %v688
        %699 = vmatprep.subr.bf16.mxu0 0
        %700 = vmatpush1.bf16.msra.mxu0 %v687
        %701 = vmatprep.subr.bf16.mxu0 0
        %702 = vmatpush1.bf16.msra.mxu0 %v686
        %703 = vmatprep.subr.bf16.mxu0 0
        %704 = vmatpush1.bf16.msra.mxu0 %v685
        %705 = vmatprep.subr.bf16.mxu0 0
        %706 = vmatpush1.bf16.msra.mxu0 %v684
        %707 = vmatprep.subr.bf16.mxu0 0
        %708 = vmatpush1.bf16.msra.mxu0 %v683
        %709 = vmatprep.subr.bf16.mxu0 0
        %710 = vmatpush1.bf16.msra.mxu0 %v682
        %711 = vmatprep.subr.bf16.mxu0 0
        %712 = vmatpush1.bf16.msra.mxu0 %v681
        %713 = vmatprep.subr.bf16.mxu0 0
        %714 = vmatpush2.bf16.msra.mxu0 0
        %715 = vmatprep.subr.bf16.mxu0 0
        %716 = vmatpush2.bf16.msra.mxu0 0
        %717 = vmatprep.subr.bf16.mxu0 0
        %718 = vmatpush2.bf16.msra.mxu0 0
        %719 = vmatprep.subr.bf16.mxu0 0
        %720 = vmatpush2.bf16.msra.mxu0 0
        %721 = vmatprep.subr.bf16.mxu0 0
        %722 = vmatpush2.bf16.msra.mxu0 0
        %723 = vmatprep.subr.bf16.mxu0 0
        %724 = vmatpush2.bf16.msra.mxu0 0
        %725 = vmatprep.subr.bf16.mxu0 0
        %726 = vmatpush2.bf16.msra.mxu0 0
        %727 = vmatprep.subr.bf16.mxu0 0
        %728 = vmatpush2.bf16.msra.mxu0 0
        %729 = vmatprep.mubr.bf16.mxu0 0
        %730 = vmatmul.mubr.bf16.gmra.mxu0 %v617
        %v731 = vpop.f32.mrf.mxu0
        %v732 = vadd.f32 0.0, %v731
        %v733 = vpop.f32.mrf.mxu0
        %v734 = vpop.f32.mrf.mxu0
        %v735 = vadd.f32 0.0, %v734
        %v736 = vpop.f32.mrf.mxu0
        %737 = vmatprep.mubr.bf16.mxu0 0
        %738 = vmatmul.mubr.bf16.gmra.mxu0 %v618
        %v739 = vpop.f32.mrf.mxu0
        %v740 = vadd.f32 0.0, %v739
        %v741 = vpop.f32.mrf.mxu0
        %v742 = vpop.f32.mrf.mxu0
        %v743 = vadd.f32 0.0, %v742
        %v744 = vpop.f32.mrf.mxu0
        %745 = vmatprep.mubr.bf16.mxu0 0
        %746 = vmatmul.mubr.bf16.gmra.mxu0 %v619
        %v747 = vpop.f32.mrf.mxu0
        %v748 = vadd.f32 0.0, %v747
        %v749 = vpop.f32.mrf.mxu0
        %v750 = vpop.f32.mrf.mxu0
        %v751 = vadd.f32 0.0, %v750
        %v752 = vpop.f32.mrf.mxu0
        %753 = vmatprep.mubr.bf16.mxu0 0
        %754 = vmatmul.mubr.bf16.gmra.mxu0 %v620
        %v755 = vpop.f32.mrf.mxu0
        %v756 = vadd.f32 0.0, %v755
        %v757 = vpop.f32.mrf.mxu0
        %v758 = vpop.f32.mrf.mxu0
        %v759 = vadd.f32 0.0, %v758
        %v760 = vpop.f32.mrf.mxu0
        %761 = vmatprep.mubr.bf16.mxu0 0
        %762 = vmatmul.mubr.bf16.gmra.mxu0 %v621
        %v763 = vpop.f32.mrf.mxu0
        %v764 = vadd.f32 0.0, %v763
        %v765 = vpop.f32.mrf.mxu0
        %v766 = vpop.f32.mrf.mxu0
        %v767 = vadd.f32 0.0, %v766
        %v768 = vpop.f32.mrf.mxu0
        %769 = vmatprep.mubr.bf16.mxu0 0
        %770 = vmatmul.mubr.bf16.gmra.mxu0 %v622
        %v771 = vpop.f32.mrf.mxu0
        %v772 = vadd.f32 0.0, %v771
        %v773 = vpop.f32.mrf.mxu0
        %v774 = vpop.f32.mrf.mxu0
        %v775 = vadd.f32 0.0, %v774
        %v776 = vpop.f32.mrf.mxu0
        %777 = vmatprep.mubr.bf16.mxu0 0
        %778 = vmatmul.mubr.bf16.gmra.mxu0 %v623
        %v779 = vpop.f32.mrf.mxu0
        %v780 = vadd.f32 0.0, %v779
        %v781 = vpop.f32.mrf.mxu0
        %v782 = vpop.f32.mrf.mxu0
        %v783 = vadd.f32 0.0, %v782
        %v784 = vpop.f32.mrf.mxu0
        %785 = vmatprep.mubr.bf16.mxu0 0
        %786 = vmatmul.mubr.bf16.gmra.mxu0 %v624
        %v787 = vpop.f32.mrf.mxu0
        %v788 = vadd.f32 0.0, %v787
        %v789 = vpop.f32.mrf.mxu0
        %v790 = vpop.f32.mrf.mxu0
        %v791 = vadd.f32 0.0, %v790
        %v792 = vpop.f32.mrf.mxu0
        %793 = vmatprep.mubr.bf16.mxu0 0
        %794 = vmatmul.mubr.bf16.gmra.mxu0 %v625
        %v795 = vpop.f32.mrf.mxu0
        %v796 = vadd.f32 0.0, %v795
        %v797 = vpop.f32.mrf.mxu0
        %v798 = vpop.f32.mrf.mxu0
        %v799 = vadd.f32 0.0, %v798
        %v800 = vpop.f32.mrf.mxu0
        %801 = vmatprep.mubr.bf16.mxu0 0
        %802 = vmatmul.mubr.bf16.gmra.mxu0 %v626
        %v803 = vpop.f32.mrf.mxu0
        %v804 = vadd.f32 0.0, %v803
        %v805 = vpop.f32.mrf.mxu0
        %v806 = vpop.f32.mrf.mxu0
        %v807 = vadd.f32 0.0, %v806
        %v808 = vpop.f32.mrf.mxu0
        %809 = vmatprep.mubr.bf16.mxu0 0
        %810 = vmatmul.mubr.bf16.gmra.mxu0 %v627
        %v811 = vpop.f32.mrf.mxu0
        %v812 = vadd.f32 0.0, %v811
        %v813 = vpop.f32.mrf.mxu0
        %v814 = vpop.f32.mrf.mxu0
        %v815 = vadd.f32 0.0, %v814
        %v816 = vpop.f32.mrf.mxu0
        %817 = vmatprep.mubr.bf16.mxu0 0
        %818 = vmatmul.mubr.bf16.gmra.mxu0 %v628
        %v819 = vpop.f32.mrf.mxu0
        %v820 = vadd.f32 0.0, %v819
        %v821 = vpop.f32.mrf.mxu0
        %v822 = vpop.f32.mrf.mxu0
        %v823 = vadd.f32 0.0, %v822
        %v824 = vpop.f32.mrf.mxu0
        %825 = vmatprep.mubr.bf16.mxu0 0
        %826 = vmatmul.mubr.bf16.gmra.mxu0 %v629
        %v827 = vpop.f32.mrf.mxu0
        %v828 = vadd.f32 0.0, %v827
        %v829 = vpop.f32.mrf.mxu0
        %v830 = vpop.f32.mrf.mxu0
        %v831 = vadd.f32 0.0, %v830
        %v832 = vpop.f32.mrf.mxu0
        %833 = vmatprep.mubr.bf16.mxu0 0
        %834 = vmatmul.mubr.bf16.gmra.mxu0 %v630
        %v835 = vpop.f32.mrf.mxu0
        %v836 = vadd.f32 0.0, %v835
        %v837 = vpop.f32.mrf.mxu0
        %v838 = vpop.f32.mrf.mxu0
        %v839 = vadd.f32 0.0, %v838
        %v840 = vpop.f32.mrf.mxu0
        %841 = vmatprep.mubr.bf16.mxu0 0
        %842 = vmatmul.mubr.bf16.gmra.mxu0 %v631
        %v843 = vpop.f32.mrf.mxu0
        %v844 = vadd.f32 0.0, %v843
        %v845 = vpop.f32.mrf.mxu0
        %v846 = vpop.f32.mrf.mxu0
        %v847 = vadd.f32 0.0, %v846
        %v848 = vpop.f32.mrf.mxu0
        %849 = vmatprep.mubr.bf16.mxu0 0
        %850 = vmatmul.mubr.bf16.gmra.mxu0 %v632
        %v851 = vpop.f32.mrf.mxu0
        %v852 = vadd.f32 0.0, %v851
        %v853 = vpop.f32.mrf.mxu0
        %v854 = vpop.f32.mrf.mxu0
        %v855 = vadd.f32 0.0, %v854
        %v856 = vpop.f32.mrf.mxu0
        %857 = vdwg.mxu0
        %v860 = vunpack.c.l.b16 %v484
        %v861 = vunpack.c.l.b16 %v485
        %v862 = vpack.c.b16 %v861, %v860
        %v880 = vunpack.c.l.b16 %v520
        %v881 = vunpack.c.l.b16 %v521
        %v882 = vunpack.c.l.b16 %v522
        %v883 = vunpack.c.l.b16 %v523
        %v884 = vunpack.c.l.b16 %v524
        %v885 = vunpack.c.l.b16 %v525
        %v886 = vunpack.c.l.b16 %v526
        %v887 = vunpack.c.l.b16 %v527
        %v888 = vunpack.c.l.b16 %v528
        %v889 = vunpack.c.l.b16 %v529
        %v890 = vunpack.c.l.b16 %v530
        %v891 = vunpack.c.l.b16 %v531
        %v892 = vunpack.c.l.b16 %v532
        %v893 = vunpack.c.l.b16 %v533
        %v894 = vunpack.c.l.b16 %v534
        %v895 = vunpack.c.l.b16 %v535
        %v896 = vpack.c.b16 %v881, %v880
        %v897 = vpack.c.b16 %v883, %v882
        %v898 = vpack.c.b16 %v885, %v884
        %v899 = vpack.c.b16 %v887, %v886
        %v900 = vpack.c.b16 %v889, %v888
        %v901 = vpack.c.b16 %v891, %v890
        %v902 = vpack.c.b16 %v893, %v892
        %v903 = vpack.c.b16 %v895, %v894
        %912 = vmatprep.subr.bf16.mxu0 0
        %913 = vmatpush1.bf16.msra.mxu0 %v903
        %914 = vmatprep.subr.bf16.mxu0 0
        %915 = vmatpush1.bf16.msra.mxu0 %v902
        %916 = vmatprep.subr.bf16.mxu0 0
        %917 = vmatpush1.bf16.msra.mxu0 %v901
        %918 = vmatprep.subr.bf16.mxu0 0
        %919 = vmatpush1.bf16.msra.mxu0 %v900
        %920 = vmatprep.subr.bf16.mxu0 0
        %921 = vmatpush1.bf16.msra.mxu0 %v899
        %922 = vmatprep.subr.bf16.mxu0 0
        %923 = vmatpush1.bf16.msra.mxu0 %v898
        %924 = vmatprep.subr.bf16.mxu0 0
        %925 = vmatpush1.bf16.msra.mxu0 %v897
        %926 = vmatprep.subr.bf16.mxu0 0
        %927 = vmatpush1.bf16.msra.mxu0 %v896
        %928 = vmatprep.subr.bf16.mxu0 0
        %929 = vmatpush2.bf16.msra.mxu0 0
        %930 = vmatprep.subr.bf16.mxu0 0
        %931 = vmatpush2.bf16.msra.mxu0 0
        %932 = vmatprep.subr.bf16.mxu0 0
        %933 = vmatpush2.bf16.msra.mxu0 0
        %934 = vmatprep.subr.bf16.mxu0 0
        %935 = vmatpush2.bf16.msra.mxu0 0
        %936 = vmatprep.subr.bf16.mxu0 0
        %937 = vmatpush2.bf16.msra.mxu0 0
        %938 = vmatprep.subr.bf16.mxu0 0
        %939 = vmatpush2.bf16.msra.mxu0 0
        %940 = vmatprep.subr.bf16.mxu0 0
        %941 = vmatpush2.bf16.msra.mxu0 0
        %942 = vmatprep.subr.bf16.mxu0 0
        %943 = vmatpush2.bf16.msra.mxu0 0
        %944 = vmatprep.mubr.bf16.mxu0 0
        %945 = vmatmul.mubr.bf16.gmra.mxu0 %v862
        %v946 = vpop.f32.mrf.mxu0
        %v947 = vadd.f32 %v732, %v946
        %v948 = vpop.f32.mrf.mxu0
        %v949 = vpop.f32.mrf.mxu0
        %v950 = vadd.f32 %v735, %v949
        %v951 = vpop.f32.mrf.mxu0
        %952 = vmatprep.mubr.bf16.mxu0 0
        %953 = vmatmul.mubr.bf16.gmra.mxu0 %v617
        %v954 = vpop.f32.mrf.mxu0
        %v955 = vadd.f32 %v740, %v954
        %v956 = vpop.f32.mrf.mxu0
        %v957 = vpop.f32.mrf.mxu0
        %v958 = vadd.f32 %v743, %v957
        %v959 = vpop.f32.mrf.mxu0
        %960 = vmatprep.mubr.bf16.mxu0 0
        %961 = vmatmul.mubr.bf16.gmra.mxu0 %v618
        %v962 = vpop.f32.mrf.mxu0
        %v963 = vadd.f32 %v748, %v962
        %v964 = vpop.f32.mrf.mxu0
        %v965 = vpop.f32.mrf.mxu0
        %v966 = vadd.f32 %v751, %v965
        %v967 = vpop.f32.mrf.mxu0
        %968 = vmatprep.mubr.bf16.mxu0 0
        %969 = vmatmul.mubr.bf16.gmra.mxu0 %v619
        %v970 = vpop.f32.mrf.mxu0
        %v971 = vadd.f32 %v756, %v970
        %v972 = vpop.f32.mrf.mxu0
        %v973 = vpop.f32.mrf.mxu0
        %v974 = vadd.f32 %v759, %v973
        %v975 = vpop.f32.mrf.mxu0
        %976 = vmatprep.mubr.bf16.mxu0 0
        %977 = vmatmul.mubr.bf16.gmra.mxu0 %v620
        %v978 = vpop.f32.mrf.mxu0
        %v979 = vadd.f32 %v764, %v978
        %v980 = vpop.f32.mrf.mxu0
        %v981 = vpop.f32.mrf.mxu0
        %v982 = vadd.f32 %v767, %v981
        %v983 = vpop.f32.mrf.mxu0
        %984 = vmatprep.mubr.bf16.mxu0 0
        %985 = vmatmul.mubr.bf16.gmra.mxu0 %v621
        %v986 = vpop.f32.mrf.mxu0
        %v987 = vadd.f32 %v772, %v986
        %v988 = vpop.f32.mrf.mxu0
        %v989 = vpop.f32.mrf.mxu0
        %v990 = vadd.f32 %v775, %v989
        %v991 = vpop.f32.mrf.mxu0
        %992 = vmatprep.mubr.bf16.mxu0 0
        %993 = vmatmul.mubr.bf16.gmra.mxu0 %v622
        %v994 = vpop.f32.mrf.mxu0
        %v995 = vadd.f32 %v780, %v994
        %v996 = vpop.f32.mrf.mxu0
        %v997 = vpop.f32.mrf.mxu0
        %v998 = vadd.f32 %v783, %v997
        %v999 = vpop.f32.mrf.mxu0
        %1000 = vmatprep.mubr.bf16.mxu0 0
        %1001 = vmatmul.mubr.bf16.gmra.mxu0 %v623
        %v1002 = vpop.f32.mrf.mxu0
        %v1003 = vadd.f32 %v788, %v1002
        %v1004 = vpop.f32.mrf.mxu0
        %v1005 = vpop.f32.mrf.mxu0
        %v1006 = vadd.f32 %v791, %v1005
        %v1007 = vpop.f32.mrf.mxu0
        %1008 = vmatprep.mubr.bf16.mxu0 0
        %1009 = vmatmul.mubr.bf16.gmra.mxu0 %v624
        %v1010 = vpop.f32.mrf.mxu0
        %v1011 = vadd.f32 %v796, %v1010
        %v1012 = vpop.f32.mrf.mxu0
        %v1013 = vpop.f32.mrf.mxu0
        %v1014 = vadd.f32 %v799, %v1013
        %v1015 = vpop.f32.mrf.mxu0
        %1016 = vmatprep.mubr.bf16.mxu0 0
        %1017 = vmatmul.mubr.bf16.gmra.mxu0 %v625
        %v1018 = vpop.f32.mrf.mxu0
        %v1019 = vadd.f32 %v804, %v1018
        %v1020 = vpop.f32.mrf.mxu0
        %v1021 = vpop.f32.mrf.mxu0
        %v1022 = vadd.f32 %v807, %v1021
        %v1023 = vpop.f32.mrf.mxu0
        %1024 = vmatprep.mubr.bf16.mxu0 0
        %1025 = vmatmul.mubr.bf16.gmra.mxu0 %v626
        %v1026 = vpop.f32.mrf.mxu0
        %v1027 = vadd.f32 %v812, %v1026
        %v1028 = vpop.f32.mrf.mxu0
        %v1029 = vpop.f32.mrf.mxu0
        %v1030 = vadd.f32 %v815, %v1029
        %v1031 = vpop.f32.mrf.mxu0
        %1032 = vmatprep.mubr.bf16.mxu0 0
        %1033 = vmatmul.mubr.bf16.gmra.mxu0 %v627
        %v1034 = vpop.f32.mrf.mxu0
        %v1035 = vadd.f32 %v820, %v1034
        %v1036 = vpop.f32.mrf.mxu0
        %v1037 = vpop.f32.mrf.mxu0
        %v1038 = vadd.f32 %v823, %v1037
        %v1039 = vpop.f32.mrf.mxu0
        %1040 = vmatprep.mubr.bf16.mxu0 0
        %1041 = vmatmul.mubr.bf16.gmra.mxu0 %v628
        %v1042 = vpop.f32.mrf.mxu0
        %v1043 = vadd.f32 %v828, %v1042
        %v1044 = vpop.f32.mrf.mxu0
        %v1045 = vpop.f32.mrf.mxu0
        %v1046 = vadd.f32 %v831, %v1045
        %v1047 = vpop.f32.mrf.mxu0
        %1048 = vmatprep.mubr.bf16.mxu0 0
        %1049 = vmatmul.mubr.bf16.gmra.mxu0 %v629
        %v1050 = vpop.f32.mrf.mxu0
        %v1051 = vadd.f32 %v836, %v1050
        %v1052 = vpop.f32.mrf.mxu0
        %v1053 = vpop.f32.mrf.mxu0
        %v1054 = vadd.f32 %v839, %v1053
        %v1055 = vpop.f32.mrf.mxu0
        %1056 = vmatprep.mubr.bf16.mxu0 0
        %1057 = vmatmul.mubr.bf16.gmra.mxu0 %v630
        %v1058 = vpop.f32.mrf.mxu0
        %v1059 = vadd.f32 %v844, %v1058
        %v1060 = vpop.f32.mrf.mxu0
        %v1061 = vpop.f32.mrf.mxu0
        %v1062 = vadd.f32 %v847, %v1061
        %v1063 = vpop.f32.mrf.mxu0
        %1064 = vmatprep.mubr.bf16.mxu0 0
        %1065 = vmatmul.mubr.bf16.gmra.mxu0 %v631
        %v1066 = vpop.f32.mrf.mxu0
        %v1067 = vadd.f32 %v852, %v1066
        %v1068 = vpop.f32.mrf.mxu0
        %v1069 = vpop.f32.mrf.mxu0
        %v1070 = vadd.f32 %v855, %v1069
        %v1071 = vpop.f32.mrf.mxu0
        %1072 = vdwg.mxu0
        %s1073 = scalar_lea.vmem %s1, 384
        %v1074 = vld [vmem:[%s1073] sm:$0xf]
        %v1075 = vld [vmem:[%s1073 + $0x4] sm:$0xf]
        %v1076 = vld [vmem:[%s1073 + $0x8] sm:$0xf]
        %v1077 = vld [vmem:[%s1073 + $0xc] sm:$0xf]
        %v1078 = vld [vmem:[%s1073 + $0x10] sm:$0xf]
        %v1079 = vld [vmem:[%s1073 + $0x14] sm:$0xf]
        %v1080 = vld [vmem:[%s1073 + $0x18] sm:$0xf]
        %v1081 = vld [vmem:[%s1073 + $0x1c] sm:$0xf]
        %v1082 = vld [vmem:[%s1073 + $0x20] sm:$0xf]
        %v1083 = vld [vmem:[%s1073 + $0x24] sm:$0xf]
        %v1084 = vld [vmem:[%s1073 + $0x28] sm:$0xf]
        %v1085 = vld [vmem:[%s1073 + $0x2c] sm:$0xf]
        %v1086 = vld [vmem:[%s1073 + $0x30] sm:$0xf]
        %v1087 = vld [vmem:[%s1073 + $0x34] sm:$0xf]
        %v1088 = vld [vmem:[%s1073 + $0x38] sm:$0xf]
        %v1089 = vld [vmem:[%s1073 + $0x3c] sm:$0xf]
        %v1092 = vunpack.c.l.b16 %v518
        %v1093 = vunpack.c.l.b16 %v519
        %v1094 = vpack.c.b16 %v1093, %v1092
        %v1112 = vunpack.c.l.b16 %v1074
        %v1113 = vunpack.c.l.b16 %v1075
        %v1114 = vunpack.c.l.b16 %v1076
        %v1115 = vunpack.c.l.b16 %v1077
        %v1116 = vunpack.c.l.b16 %v1078
        %v1117 = vunpack.c.l.b16 %v1079
        %v1118 = vunpack.c.l.b16 %v1080
        %v1119 = vunpack.c.l.b16 %v1081
        %v1120 = vunpack.c.l.b16 %v1082
        %v1121 = vunpack.c.l.b16 %v1083
        %v1122 = vunpack.c.l.b16 %v1084
        %v1123 = vunpack.c.l.b16 %v1085
        %v1124 = vunpack.c.l.b16 %v1086
        %v1125 = vunpack.c.l.b16 %v1087
        %v1126 = vunpack.c.l.b16 %v1088
        %v1127 = vunpack.c.l.b16 %v1089
        %v1128 = vpack.c.b16 %v1113, %v1112
        %v1129 = vpack.c.b16 %v1115, %v1114
        %v1130 = vpack.c.b16 %v1117, %v1116
        %v1131 = vpack.c.b16 %v1119, %v1118
        %v1132 = vpack.c.b16 %v1121, %v1120
        %v1133 = vpack.c.b16 %v1123, %v1122
        %v1134 = vpack.c.b16 %v1125, %v1124
        %v1135 = vpack.c.b16 %v1127, %v1126
        %1144 = vmatprep.subr.bf16.mxu0 0
        %1145 = vmatpush1.bf16.msra.mxu0 %v1135
        %1146 = vmatprep.subr.bf16.mxu0 0
        %1147 = vmatpush1.bf16.msra.mxu0 %v1134
        %1148 = vmatprep.subr.bf16.mxu0 0
        %1149 = vmatpush1.bf16.msra.mxu0 %v1133
        %1150 = vmatprep.subr.bf16.mxu0 0
        %1151 = vmatpush1.bf16.msra.mxu0 %v1132
        %1152 = vmatprep.subr.bf16.mxu0 0
        %1153 = vmatpush1.bf16.msra.mxu0 %v1131
        %1154 = vmatprep.subr.bf16.mxu0 0
        %1155 = vmatpush1.bf16.msra.mxu0 %v1130
        %1156 = vmatprep.subr.bf16.mxu0 0
        %1157 = vmatpush1.bf16.msra.mxu0 %v1129
        %1158 = vmatprep.subr.bf16.mxu0 0
        %1159 = vmatpush1.bf16.msra.mxu0 %v1128
        %1160 = vmatprep.subr.bf16.mxu0 0
        %1161 = vmatpush2.bf16.msra.mxu0 0
        %1162 = vmatprep.subr.bf16.mxu0 0
        %1163 = vmatpush2.bf16.msra.mxu0 0
        %1164 = vmatprep.subr.bf16.mxu0 0
        %1165 = vmatpush2.bf16.msra.mxu0 0
        %1166 = vmatprep.subr.bf16.mxu0 0
        %1167 = vmatpush2.bf16.msra.mxu0 0
        %1168 = vmatprep.subr.bf16.mxu0 0
        %1169 = vmatpush2.bf16.msra.mxu0 0
        %1170 = vmatprep.subr.bf16.mxu0 0
        %1171 = vmatpush2.bf16.msra.mxu0 0
        %1172 = vmatprep.subr.bf16.mxu0 0
        %1173 = vmatpush2.bf16.msra.mxu0 0
        %1174 = vmatprep.subr.bf16.mxu0 0
        %1175 = vmatpush2.bf16.msra.mxu0 0
        %1176 = vmatprep.mubr.bf16.mxu0 0
        %1177 = vmatmul.mubr.bf16.gmra.mxu0 %v618
        %v1178 = vpop.f32.mrf.mxu0
        %v1179 = vadd.f32 0.0, %v1178
        %v1180 = vpop.f32.mrf.mxu0
        %v1181 = vpop.f32.mrf.mxu0
        %v1182 = vadd.f32 0.0, %v1181
        %v1183 = vpop.f32.mrf.mxu0
        %1184 = vmatprep.mubr.bf16.mxu0 0
        %1185 = vmatmul.mubr.bf16.gmra.mxu0 %v619
        %v1186 = vpop.f32.mrf.mxu0
        %v1187 = vadd.f32 0.0, %v1186
        %v1188 = vpop.f32.mrf.mxu0
        %v1189 = vpop.f32.mrf.mxu0
        %v1190 = vadd.f32 0.0, %v1189
        %v1191 = vpop.f32.mrf.mxu0
        %1192 = vmatprep.mubr.bf16.mxu0 0
        %1193 = vmatmul.mubr.bf16.gmra.mxu0 %v620
        %v1194 = vpop.f32.mrf.mxu0
        %v1195 = vadd.f32 0.0, %v1194
        %v1196 = vpop.f32.mrf.mxu0
        %v1197 = vpop.f32.mrf.mxu0
        %v1198 = vadd.f32 0.0, %v1197
        %v1199 = vpop.f32.mrf.mxu0
        %1200 = vmatprep.mubr.bf16.mxu0 0
        %1201 = vmatmul.mubr.bf16.gmra.mxu0 %v621
        %v1202 = vpop.f32.mrf.mxu0
        %v1203 = vadd.f32 0.0, %v1202
        %v1204 = vpop.f32.mrf.mxu0
        %v1205 = vpop.f32.mrf.mxu0
        %v1206 = vadd.f32 0.0, %v1205
        %v1207 = vpop.f32.mrf.mxu0
        %1208 = vmatprep.mubr.bf16.mxu0 0
        %1209 = vmatmul.mubr.bf16.gmra.mxu0 %v622
        %v1210 = vpop.f32.mrf.mxu0
        %v1211 = vadd.f32 0.0, %v1210
        %v1212 = vpop.f32.mrf.mxu0
        %v1213 = vpop.f32.mrf.mxu0
        %v1214 = vadd.f32 0.0, %v1213
        %v1215 = vpop.f32.mrf.mxu0
        %1216 = vmatprep.mubr.bf16.mxu0 0
        %1217 = vmatmul.mubr.bf16.gmra.mxu0 %v623
        %v1218 = vpop.f32.mrf.mxu0
        %v1219 = vadd.f32 0.0, %v1218
        %v1220 = vpop.f32.mrf.mxu0
        %v1221 = vpop.f32.mrf.mxu0
        %v1222 = vadd.f32 0.0, %v1221
        %v1223 = vpop.f32.mrf.mxu0
        %1224 = vmatprep.mubr.bf16.mxu0 0
        %1225 = vmatmul.mubr.bf16.gmra.mxu0 %v624
        %v1226 = vpop.f32.mrf.mxu0
        %v1227 = vadd.f32 0.0, %v1226
        %v1228 = vpop.f32.mrf.mxu0
        %v1229 = vpop.f32.mrf.mxu0
        %v1230 = vadd.f32 0.0, %v1229
        %v1231 = vpop.f32.mrf.mxu0
        %1232 = vmatprep.mubr.bf16.mxu0 0
        %1233 = vmatmul.mubr.bf16.gmra.mxu0 %v625
        %v1234 = vpop.f32.mrf.mxu0
        %v1235 = vadd.f32 0.0, %v1234
        %v1236 = vpop.f32.mrf.mxu0
        %v1237 = vpop.f32.mrf.mxu0
        %v1238 = vadd.f32 0.0, %v1237
        %v1239 = vpop.f32.mrf.mxu0
        %1240 = vmatprep.mubr.bf16.mxu0 0
        %1241 = vmatmul.mubr.bf16.gmra.mxu0 %v626
        %v1242 = vpop.f32.mrf.mxu0
        %v1243 = vadd.f32 0.0, %v1242
        %v1244 = vpop.f32.mrf.mxu0
        %v1245 = vpop.f32.mrf.mxu0
        %v1246 = vadd.f32 0.0, %v1245
        %v1247 = vpop.f32.mrf.mxu0
        %1248 = vmatprep.mubr.bf16.mxu0 0
        %1249 = vmatmul.mubr.bf16.gmra.mxu0 %v627
        %v1250 = vpop.f32.mrf.mxu0
        %v1251 = vadd.f32 0.0, %v1250
        %v1252 = vpop.f32.mrf.mxu0
        %v1253 = vpop.f32.mrf.mxu0
        %v1254 = vadd.f32 0.0, %v1253
        %v1255 = vpop.f32.mrf.mxu0
        %1256 = vmatprep.mubr.bf16.mxu0 0
        %1257 = vmatmul.mubr.bf16.gmra.mxu0 %v628
        %v1258 = vpop.f32.mrf.mxu0
        %v1259 = vadd.f32 0.0, %v1258
        %v1260 = vpop.f32.mrf.mxu0
        %v1261 = vpop.f32.mrf.mxu0
        %v1262 = vadd.f32 0.0, %v1261
        %v1263 = vpop.f32.mrf.mxu0
        %1264 = vmatprep.mubr.bf16.mxu0 0
        %1265 = vmatmul.mubr.bf16.gmra.mxu0 %v629
        %v1266 = vpop.f32.mrf.mxu0
        %v1267 = vadd.f32 0.0, %v1266
        %v1268 = vpop.f32.mrf.mxu0
        %v1269 = vpop.f32.mrf.mxu0
        %v1270 = vadd.f32 0.0, %v1269
        %v1271 = vpop.f32.mrf.mxu0
        %1272 = vmatprep.mubr.bf16.mxu0 0
        %1273 = vmatmul.mubr.bf16.gmra.mxu0 %v630
        %v1274 = vpop.f32.mrf.mxu0
        %v1275 = vadd.f32 0.0, %v1274
        %v1276 = vpop.f32.mrf.mxu0
        %v1277 = vpop.f32.mrf.mxu0
        %v1278 = vadd.f32 0.0, %v1277
        %v1279 = vpop.f32.mrf.mxu0
        %1280 = vmatprep.mubr.bf16.mxu0 0
        %1281 = vmatmul.mubr.bf16.gmra.mxu0 %v631
        %v1282 = vpop.f32.mrf.mxu0
        %v1283 = vadd.f32 0.0, %v1282
        %v1284 = vpop.f32.mrf.mxu0
        %v1285 = vpop.f32.mrf.mxu0
        %v1286 = vadd.f32 0.0, %v1285
        %v1287 = vpop.f32.mrf.mxu0
        %1288 = vmatprep.mubr.bf16.mxu0 0
        %1289 = vmatmul.mubr.bf16.gmra.mxu0 %v632
        %v1290 = vpop.f32.mrf.mxu0
        %v1291 = vadd.f32 0.0, %v1290
        %v1292 = vpop.f32.mrf.mxu0
        %v1293 = vpop.f32.mrf.mxu0
        %v1294 = vadd.f32 0.0, %v1293
        %v1295 = vpop.f32.mrf.mxu0
        %1296 = vmatprep.mubr.bf16.mxu0 0
        %1297 = vmatmul.mubr.bf16.gmra.mxu0 %v1094
        %v1298 = vpop.f32.mrf.mxu0
        %v1299 = vadd.f32 0.0, %v1298
        %v1300 = vpop.f32.mrf.mxu0
        %v1301 = vpop.f32.mrf.mxu0
        %v1302 = vadd.f32 0.0, %v1301
        %v1303 = vpop.f32.mrf.mxu0
        %1304 = vdwg.mxu0
        %v1305 = vadd.f32 %v947, %v1179
        %v1306 = vadd.f32 %v950, %v1182
        %v1307 = vadd.f32 %v955, %v1187
        %v1308 = vadd.f32 %v958, %v1190
        %v1309 = vadd.f32 %v963, %v1195
        %v1310 = vadd.f32 %v966, %v1198
        %v1311 = vadd.f32 %v971, %v1203
        %v1312 = vadd.f32 %v974, %v1206
        %v1313 = vadd.f32 %v979, %v1211
        %v1314 = vadd.f32 %v982, %v1214
        %v1315 = vadd.f32 %v987, %v1219
        %v1316 = vadd.f32 %v990, %v1222
        %v1317 = vadd.f32 %v995, %v1227
        %v1318 = vadd.f32 %v998, %v1230
        %v1319 = vadd.f32 %v1003, %v1235
        %v1320 = vadd.f32 %v1006, %v1238
        %v1321 = vadd.f32 %v1011, %v1243
        %v1322 = vadd.f32 %v1014, %v1246
        %v1323 = vadd.f32 %v1019, %v1251
        %v1324 = vadd.f32 %v1022, %v1254
        %v1325 = vadd.f32 %v1027, %v1259
        %v1326 = vadd.f32 %v1030, %v1262
        %v1327 = vadd.f32 %v1035, %v1267
        %v1328 = vadd.f32 %v1038, %v1270
        %v1329 = vadd.f32 %v1043, %v1275
        %v1330 = vadd.f32 %v1046, %v1278
        %v1331 = vadd.f32 %v1051, %v1283
        %v1332 = vadd.f32 %v1054, %v1286
        %v1333 = vadd.f32 %v1059, %v1291
        %v1334 = vadd.f32 %v1062, %v1294
        %v1335 = vadd.f32 %v1067, %v1299
        %v1336 = vadd.f32 %v1070, %v1302
        %v1337 = vld [vmem:[%s360] sm:$0xf]
        %v1338 = vld [vmem:[%s360 + $0x4] sm:$0xf]
        %v1339 = vld [vmem:[%s360 + $0x8] sm:$0x1]
        %v1340 = vld [vmem:[%s360 + $0xc] sm:$0xf]
        %v1341 = vld [vmem:[%s360 + $0x10] sm:$0xf]
        %v1342 = vld [vmem:[%s360 + $0x14] sm:$0x1]
        %v1343 = vld [vmem:[%s360 + $0x18] sm:$0xf]
        %v1344 = vld [vmem:[%s360 + $0x1c] sm:$0xf]
        %v1345 = vld [vmem:[%s360 + $0x20] sm:$0x1]
        %v1346 = vld [vmem:[%s360 + $0x24] sm:$0xf]
        %v1347 = vld [vmem:[%s360 + $0x28] sm:$0xf]
        %v1348 = vld [vmem:[%s360 + $0x2c] sm:$0x1]
        %v1349 = vld [vmem:[%s360 + $0x30] sm:$0xf]
        %v1350 = vld [vmem:[%s360 + $0x34] sm:$0xf]
        %v1351 = vld [vmem:[%s360 + $0x38] sm:$0x1]
        %v1352 = vld [vmem:[%s360 + $0x3c] sm:$0xf]
        %v1353 = vld [vmem:[%s360 + $0x40] sm:$0xf]
        %v1354 = vld [vmem:[%s360 + $0x44] sm:$0x1]
        %v1355 = vld [vmem:[%s360 + $0x48] sm:$0xf]
        %v1356 = vld [vmem:[%s360 + $0x4c] sm:$0xf]
        %v1357 = vld [vmem:[%s360 + $0x50] sm:$0x1]
        %v1358 = vld [vmem:[%s360 + $0x54] sm:$0xf]
        %v1359 = vld [vmem:[%s360 + $0x58] sm:$0xf]
        %v1360 = vld [vmem:[%s360 + $0x5c] sm:$0x1]
        %v1361 = vld [vmem:[%s360 + $0x60] sm:$0xf]
        %v1362 = vld [vmem:[%s360 + $0x64] sm:$0xf]
        %v1363 = vld [vmem:[%s360 + $0x68] sm:$0x1]
        %v1364 = vld [vmem:[%s360 + $0x6c] sm:$0xf]
        %v1365 = vld [vmem:[%s360 + $0x70] sm:$0xf]
        %v1366 = vld [vmem:[%s360 + $0x74] sm:$0x1]
        %v1367 = vld [vmem:[%s360 + $0x78] sm:$0xf]
        %v1368 = vld [vmem:[%s360 + $0x7c] sm:$0xf]
        %v1369 = vld [vmem:[%s360 + $0x80] sm:$0x1]
        %v1370 = vld [vmem:[%s360 + $0x84] sm:$0xf]
        %v1371 = vld [vmem:[%s360 + $0x88] sm:$0xf]
        %v1372 = vld [vmem:[%s360 + $0x8c] sm:$0x1]
        %v1373 = vld [vmem:[%s360 + $0x90] sm:$0xf]
        %v1374 = vld [vmem:[%s360 + $0x94] sm:$0xf]
        %v1375 = vld [vmem:[%s360 + $0x98] sm:$0x1]
        %v1376 = vld [vmem:[%s360 + $0x9c] sm:$0xf]
        %v1377 = vld [vmem:[%s360 + $0xa0] sm:$0xf]
        %v1378 = vld [vmem:[%s360 + $0xa4] sm:$0x1]
        %v1379 = vld [vmem:[%s360 + $0xa8] sm:$0xf]
        %v1380 = vld [vmem:[%s360 + $0xac] sm:$0xf]
        %v1381 = vld [vmem:[%s360 + $0xb0] sm:$0x1]
        %v1382 = vld [vmem:[%s360 + $0xb4] sm:$0xf]
        %v1383 = vld [vmem:[%s360 + $0xb8] sm:$0xf]
        %v1384 = vld [vmem:[%s360 + $0xbc] sm:$0x1]
        %v1385 = vld [vmem:[%s360 + $0xc0] sm:$0xf]
        %v1386 = vld [vmem:[%s360 + $0xc4] sm:$0xf]
        %v1387 = vld [vmem:[%s360 + $0xc8] sm:$0x1]
        %v1388 = vld [vmem:[%s360 + $0xcc] sm:$0xf]
        %v1389 = vld [vmem:[%s360 + $0xd0] sm:$0xf]
        %v1390 = vld [vmem:[%s360 + $0xd4] sm:$0x1]
        %vm1391 = vsmask.f32 3328
        %vm1392 = vsmask.f32 7440
        %vm1393 = vmor %vm1391, %vm1392
        %v1395 = vshrl.u32 %v1337, 16
        %v1397 = vrot.slane %v1395, 4
        %v1398 = vshll.u32 %v1337, 16
        %v1400 = vrot.slane %v1398, 5
        %v1401 = vor.u32 %v1397, %v1400
        %v1402 = vrot.slane %v1401, 4
        %v1404 = vshll.u32 %v1338, 16
        %v1406 = vrot.slane %v1404, 5
        %v1407 = vsel %vm1393, %v1402, %v1406
        %v1408 = vshrl.u32 %v1338, 16
        %v1410 = vrot.slane %v1408, 4
        %v1411 = vor.u32 %v1410, %v1406
        %v1412 = vrot.slane %v1411, 4
        %v1414 = vshll.u32 %v1339, 16
        %v1416 = vrot.slane %v1414, 5
        %v1417 = vsel %vm1393, %v1412, %v1416
        %v1419 = vshrl.u32 %v1340, 16
        %v1421 = vrot.slane %v1419, 4
        %v1422 = vshll.u32 %v1340, 16
        %v1424 = vrot.slane %v1422, 5
        %v1425 = vor.u32 %v1421, %v1424
        %v1426 = vrot.slane %v1425, 4
        %v1428 = vshll.u32 %v1341, 16
        %v1430 = vrot.slane %v1428, 5
        %v1431 = vsel %vm1393, %v1426, %v1430
        %v1432 = vshrl.u32 %v1341, 16
        %v1434 = vrot.slane %v1432, 4
        %v1435 = vor.u32 %v1434, %v1430
        %v1436 = vrot.slane %v1435, 4
        %v1438 = vshll.u32 %v1342, 16
        %v1440 = vrot.slane %v1438, 5
        %v1441 = vsel %vm1393, %v1436, %v1440
        %v1443 = vshrl.u32 %v1343, 16
        %v1445 = vrot.slane %v1443, 4
        %v1446 = vshll.u32 %v1343, 16
        %v1448 = vrot.slane %v1446, 5
        %v1449 = vor.u32 %v1445, %v1448
        %v1450 = vrot.slane %v1449, 4
        %v1452 = vshll.u32 %v1344, 16
        %v1454 = vrot.slane %v1452, 5
        %v1455 = vsel %vm1393, %v1450, %v1454
        %v1456 = vshrl.u32 %v1344, 16
        %v1458 = vrot.slane %v1456, 4
        %v1459 = vor.u32 %v1458, %v1454
        %v1460 = vrot.slane %v1459, 4
        %v1462 = vshll.u32 %v1345, 16
        %v1464 = vrot.slane %v1462, 5
        %v1465 = vsel %vm1393, %v1460, %v1464
        %v1467 = vshrl.u32 %v1346, 16
        %v1469 = vrot.slane %v1467, 4
        %v1470 = vshll.u32 %v1346, 16
        %v1472 = vrot.slane %v1470, 5
        %v1473 = vor.u32 %v1469, %v1472
        %v1474 = vrot.slane %v1473, 4
        %v1476 = vshll.u32 %v1347, 16
        %v1478 = vrot.slane %v1476, 5
        %v1479 = vsel %vm1393, %v1474, %v1478
        %v1480 = vshrl.u32 %v1347, 16
        %v1482 = vrot.slane %v1480, 4
        %v1483 = vor.u32 %v1482, %v1478
        %v1484 = vrot.slane %v1483, 4
        %v1486 = vshll.u32 %v1348, 16
        %v1488 = vrot.slane %v1486, 5
        %v1489 = vsel %vm1393, %v1484, %v1488
        %v1491 = vshrl.u32 %v1349, 16
        %v1493 = vrot.slane %v1491, 4
        %v1494 = vshll.u32 %v1349, 16
        %v1496 = vrot.slane %v1494, 5
        %v1497 = vor.u32 %v1493, %v1496
        %v1498 = vrot.slane %v1497, 4
        %v1500 = vshll.u32 %v1350, 16
        %v1502 = vrot.slane %v1500, 5
        %v1503 = vsel %vm1393, %v1498, %v1502
        %v1504 = vshrl.u32 %v1350, 16
        %v1506 = vrot.slane %v1504, 4
        %v1507 = vor.u32 %v1506, %v1502
        %v1508 = vrot.slane %v1507, 4
        %v1510 = vshll.u32 %v1351, 16
        %v1512 = vrot.slane %v1510, 5
        %v1513 = vsel %vm1393, %v1508, %v1512
        %v1515 = vshrl.u32 %v1352, 16
        %v1517 = vrot.slane %v1515, 4
        %v1518 = vshll.u32 %v1352, 16
        %v1520 = vrot.slane %v1518, 5
        %v1521 = vor.u32 %v1517, %v1520
        %v1522 = vrot.slane %v1521, 4
        %v1524 = vshll.u32 %v1353, 16
        %v1526 = vrot.slane %v1524, 5
        %v1527 = vsel %vm1393, %v1522, %v1526
        %v1528 = vshrl.u32 %v1353, 16
        %v1530 = vrot.slane %v1528, 4
        %v1531 = vor.u32 %v1530, %v1526
        %v1532 = vrot.slane %v1531, 4
        %v1534 = vshll.u32 %v1354, 16
        %v1536 = vrot.slane %v1534, 5
        %v1537 = vsel %vm1393, %v1532, %v1536
        %v1539 = vshrl.u32 %v1355, 16
        %v1541 = vrot.slane %v1539, 4
        %v1542 = vshll.u32 %v1355, 16
        %v1544 = vrot.slane %v1542, 5
        %v1545 = vor.u32 %v1541, %v1544
        %v1546 = vrot.slane %v1545, 4
        %v1548 = vshll.u32 %v1356, 16
        %v1550 = vrot.slane %v1548, 5
        %v1551 = vsel %vm1393, %v1546, %v1550
        %v1552 = vshrl.u32 %v1356, 16
        %v1554 = vrot.slane %v1552, 4
        %v1555 = vor.u32 %v1554, %v1550
        %v1556 = vrot.slane %v1555, 4
        %v1558 = vshll.u32 %v1357, 16
        %v1560 = vrot.slane %v1558, 5
        %v1561 = vsel %vm1393, %v1556, %v1560
        %v1563 = vshrl.u32 %v1358, 16
        %v1565 = vrot.slane %v1563, 4
        %v1566 = vshll.u32 %v1358, 16
        %v1568 = vrot.slane %v1566, 5
        %v1569 = vor.u32 %v1565, %v1568
        %v1570 = vrot.slane %v1569, 4
        %v1572 = vshll.u32 %v1359, 16
        %v1574 = vrot.slane %v1572, 5
        %v1575 = vsel %vm1393, %v1570, %v1574
        %v1576 = vshrl.u32 %v1359, 16
        %v1578 = vrot.slane %v1576, 4
        %v1579 = vor.u32 %v1578, %v1574
        %v1580 = vrot.slane %v1579, 4
        %v1582 = vshll.u32 %v1360, 16
        %v1584 = vrot.slane %v1582, 5
        %v1585 = vsel %vm1393, %v1580, %v1584
        %v1587 = vshrl.u32 %v1361, 16
        %v1589 = vrot.slane %v1587, 4
        %v1590 = vshll.u32 %v1361, 16
        %v1592 = vrot.slane %v1590, 5
        %v1593 = vor.u32 %v1589, %v1592
        %v1594 = vrot.slane %v1593, 4
        %v1596 = vshll.u32 %v1362, 16
        %v1598 = vrot.slane %v1596, 5
        %v1599 = vsel %vm1393, %v1594, %v1598
        %v1600 = vshrl.u32 %v1362, 16
        %v1602 = vrot.slane %v1600, 4
        %v1603 = vor.u32 %v1602, %v1598
        %v1604 = vrot.slane %v1603, 4
        %v1606 = vshll.u32 %v1363, 16
        %v1608 = vrot.slane %v1606, 5
        %v1609 = vsel %vm1393, %v1604, %v1608
        %v1611 = vshrl.u32 %v1364, 16
        %v1613 = vrot.slane %v1611, 4
        %v1614 = vshll.u32 %v1364, 16
        %v1616 = vrot.slane %v1614, 5
        %v1617 = vor.u32 %v1613, %v1616
        %v1618 = vrot.slane %v1617, 4
        %v1620 = vshll.u32 %v1365, 16
        %v1622 = vrot.slane %v1620, 5
        %v1623 = vsel %vm1393, %v1618, %v1622
        %v1624 = vshrl.u32 %v1365, 16
        %v1626 = vrot.slane %v1624, 4
        %v1627 = vor.u32 %v1626, %v1622
        %v1628 = vrot.slane %v1627, 4
        %v1630 = vshll.u32 %v1366, 16
        %v1632 = vrot.slane %v1630, 5
        %v1633 = vsel %vm1393, %v1628, %v1632
        %v1635 = vshrl.u32 %v1367, 16
        %v1637 = vrot.slane %v1635, 4
        %v1638 = vshll.u32 %v1367, 16
        %v1640 = vrot.slane %v1638, 5
        %v1641 = vor.u32 %v1637, %v1640
        %v1642 = vrot.slane %v1641, 4
        %v1644 = vshll.u32 %v1368, 16
        %v1646 = vrot.slane %v1644, 5
        %v1647 = vsel %vm1393, %v1642, %v1646
        %v1648 = vshrl.u32 %v1368, 16
        %v1650 = vrot.slane %v1648, 4
        %v1651 = vor.u32 %v1650, %v1646
        %v1652 = vrot.slane %v1651, 4
        %v1654 = vshll.u32 %v1369, 16
        %v1656 = vrot.slane %v1654, 5
        %v1657 = vsel %vm1393, %v1652, %v1656
        %v1659 = vshrl.u32 %v1370, 16
        %v1661 = vrot.slane %v1659, 4
        %v1662 = vshll.u32 %v1370, 16
        %v1664 = vrot.slane %v1662, 5
        %v1665 = vor.u32 %v1661, %v1664
        %v1666 = vrot.slane %v1665, 4
        %v1668 = vshll.u32 %v1371, 16
        %v1670 = vrot.slane %v1668, 5
        %v1671 = vsel %vm1393, %v1666, %v1670
        %v1672 = vshrl.u32 %v1371, 16
        %v1674 = vrot.slane %v1672, 4
        %v1675 = vor.u32 %v1674, %v1670
        %v1676 = vrot.slane %v1675, 4
        %v1678 = vshll.u32 %v1372, 16
        %v1680 = vrot.slane %v1678, 5
        %v1681 = vsel %vm1393, %v1676, %v1680
        %v1683 = vshrl.u32 %v1373, 16
        %v1685 = vrot.slane %v1683, 4
        %v1686 = vshll.u32 %v1373, 16
        %v1688 = vrot.slane %v1686, 5
        %v1689 = vor.u32 %v1685, %v1688
        %v1690 = vrot.slane %v1689, 4
        %v1692 = vshll.u32 %v1374, 16
        %v1694 = vrot.slane %v1692, 5
        %v1695 = vsel %vm1393, %v1690, %v1694
        %v1696 = vshrl.u32 %v1374, 16
        %v1698 = vrot.slane %v1696, 4
        %v1699 = vor.u32 %v1698, %v1694
        %v1700 = vrot.slane %v1699, 4
        %v1702 = vshll.u32 %v1375, 16
        %v1704 = vrot.slane %v1702, 5
        %v1705 = vsel %vm1393, %v1700, %v1704
        %v1707 = vshrl.u32 %v1376, 16
        %v1709 = vrot.slane %v1707, 4
        %v1710 = vshll.u32 %v1376, 16
        %v1712 = vrot.slane %v1710, 5
        %v1713 = vor.u32 %v1709, %v1712
        %v1714 = vrot.slane %v1713, 4
        %v1716 = vshll.u32 %v1377, 16
        %v1718 = vrot.slane %v1716, 5
        %v1719 = vsel %vm1393, %v1714, %v1718
        %v1720 = vshrl.u32 %v1377, 16
        %v1722 = vrot.slane %v1720, 4
        %v1723 = vor.u32 %v1722, %v1718
        %v1724 = vrot.slane %v1723, 4
        %v1726 = vshll.u32 %v1378, 16
        %v1728 = vrot.slane %v1726, 5
        %v1729 = vsel %vm1393, %v1724, %v1728
        %v1731 = vshrl.u32 %v1379, 16
        %v1733 = vrot.slane %v1731, 4
        %v1734 = vshll.u32 %v1379, 16
        %v1736 = vrot.slane %v1734, 5
        %v1737 = vor.u32 %v1733, %v1736
        %v1738 = vrot.slane %v1737, 4
        %v1740 = vshll.u32 %v1380, 16
        %v1742 = vrot.slane %v1740, 5
        %v1743 = vsel %vm1393, %v1738, %v1742
        %v1744 = vshrl.u32 %v1380, 16
        %v1746 = vrot.slane %v1744, 4
        %v1747 = vor.u32 %v1746, %v1742
        %v1748 = vrot.slane %v1747, 4
        %v1750 = vshll.u32 %v1381, 16
        %v1752 = vrot.slane %v1750, 5
        %v1753 = vsel %vm1393, %v1748, %v1752
        %v1755 = vshrl.u32 %v1382, 16
        %v1757 = vrot.slane %v1755, 4
        %v1758 = vshll.u32 %v1382, 16
        %v1760 = vrot.slane %v1758, 5
        %v1761 = vor.u32 %v1757, %v1760
        %v1762 = vrot.slane %v1761, 4
        %v1764 = vshll.u32 %v1383, 16
        %v1766 = vrot.slane %v1764, 5
        %v1767 = vsel %vm1393, %v1762, %v1766
        %v1768 = vshrl.u32 %v1383, 16
        %v1770 = vrot.slane %v1768, 4
        %v1771 = vor.u32 %v1770, %v1766
        %v1772 = vrot.slane %v1771, 4
        %v1774 = vshll.u32 %v1384, 16
        %v1776 = vrot.slane %v1774, 5
        %v1777 = vsel %vm1393, %v1772, %v1776
        %v1779 = vshrl.u32 %v1385, 16
        %v1781 = vrot.slane %v1779, 4
        %v1782 = vshll.u32 %v1385, 16
        %v1784 = vrot.slane %v1782, 5
        %v1785 = vor.u32 %v1781, %v1784
        %v1786 = vrot.slane %v1785, 4
        %v1788 = vshll.u32 %v1386, 16
        %v1790 = vrot.slane %v1788, 5
        %v1791 = vsel %vm1393, %v1786, %v1790
        %v1792 = vshrl.u32 %v1386, 16
        %v1794 = vrot.slane %v1792, 4
        %v1795 = vor.u32 %v1794, %v1790
        %v1796 = vrot.slane %v1795, 4
        %v1798 = vshll.u32 %v1387, 16
        %v1800 = vrot.slane %v1798, 5
        %v1801 = vsel %vm1393, %v1796, %v1800
        %v1803 = vshrl.u32 %v1388, 16
        %v1805 = vrot.slane %v1803, 4
        %v1806 = vshll.u32 %v1388, 16
        %v1808 = vrot.slane %v1806, 5
        %v1809 = vor.u32 %v1805, %v1808
        %v1810 = vrot.slane %v1809, 4
        %v1812 = vshll.u32 %v1389, 16
        %v1814 = vrot.slane %v1812, 5
        %v1815 = vsel %vm1393, %v1810, %v1814
        %v1816 = vshrl.u32 %v1389, 16
        %v1818 = vrot.slane %v1816, 4
        %v1819 = vor.u32 %v1818, %v1814
        %v1820 = vrot.slane %v1819, 4
        %v1822 = vshll.u32 %v1390, 16
        %v1824 = vrot.slane %v1822, 5
        %v1825 = vsel %vm1393, %v1820, %v1824
        %s1826 = scalar_lea.vmem %s1, 64
        %v1827 = vld [vmem:[%s1826] sm:$0xf]
        %v1828 = vld [vmem:[%s1826 + $0x4] sm:$0xf]
        %v1829 = vld [vmem:[%s1826 + $0x8] sm:$0xf]
        %v1830 = vld [vmem:[%s1826 + $0xc] sm:$0xf]
        %v1831 = vld [vmem:[%s1826 + $0x10] sm:$0xf]
        %v1832 = vld [vmem:[%s1826 + $0x14] sm:$0xf]
        %v1833 = vld [vmem:[%s1826 + $0x18] sm:$0xf]
        %v1834 = vld [vmem:[%s1826 + $0x1c] sm:$0xf]
        %v1835 = vld [vmem:[%s1826 + $0x20] sm:$0xf]
        %v1836 = vld [vmem:[%s1826 + $0x24] sm:$0xf]
        %v1837 = vld [vmem:[%s1826 + $0x28] sm:$0xf]
        %v1838 = vld [vmem:[%s1826 + $0x2c] sm:$0xf]
        %v1839 = vld [vmem:[%s1826 + $0x30] sm:$0xf]
        %v1840 = vld [vmem:[%s1826 + $0x34] sm:$0xf]
        %v1841 = vld [vmem:[%s1826 + $0x38] sm:$0xf]
        %v1842 = vld [vmem:[%s1826 + $0x3c] sm:$0xf]
        %v1843 = vunpack.c.l.b16 %v1407
        %v1844 = vunpack.c.l.b16 %v1417
        %v1845 = vunpack.c.l.b16 %v1431
        %v1846 = vunpack.c.l.b16 %v1441
        %v1847 = vunpack.c.l.b16 %v1455
        %v1848 = vunpack.c.l.b16 %v1465
        %v1849 = vunpack.c.l.b16 %v1479
        %v1850 = vunpack.c.l.b16 %v1489
        %v1851 = vunpack.c.l.b16 %v1503
        %v1852 = vunpack.c.l.b16 %v1513
        %v1853 = vunpack.c.l.b16 %v1527
        %v1854 = vunpack.c.l.b16 %v1537
        %v1855 = vunpack.c.l.b16 %v1551
        %v1856 = vunpack.c.l.b16 %v1561
        %v1857 = vunpack.c.l.b16 %v1575
        %v1858 = vunpack.c.l.b16 %v1585
        %v1859 = vunpack.c.l.b16 %v1599
        %v1860 = vunpack.c.l.b16 %v1609
        %v1861 = vunpack.c.l.b16 %v1623
        %v1862 = vunpack.c.l.b16 %v1633
        %v1863 = vunpack.c.l.b16 %v1647
        %v1864 = vunpack.c.l.b16 %v1657
        %v1865 = vunpack.c.l.b16 %v1671
        %v1866 = vunpack.c.l.b16 %v1681
        %v1867 = vunpack.c.l.b16 %v1695
        %v1868 = vunpack.c.l.b16 %v1705
        %v1869 = vunpack.c.l.b16 %v1719
        %v1870 = vunpack.c.l.b16 %v1729
        %v1871 = vunpack.c.l.b16 %v1743
        %v1872 = vunpack.c.l.b16 %v1753
        %v1873 = vunpack.c.l.b16 %v1767
        %v1874 = vunpack.c.l.b16 %v1777
        %v1875 = vpack.c.b16 %v1844, %v1843
        %v1876 = vpack.c.b16 %v1846, %v1845
        %v1877 = vpack.c.b16 %v1848, %v1847
        %v1878 = vpack.c.b16 %v1850, %v1849
        %v1879 = vpack.c.b16 %v1852, %v1851
        %v1880 = vpack.c.b16 %v1854, %v1853
        %v1881 = vpack.c.b16 %v1856, %v1855
        %v1882 = vpack.c.b16 %v1858, %v1857
        %v1883 = vpack.c.b16 %v1860, %v1859
        %v1884 = vpack.c.b16 %v1862, %v1861
        %v1885 = vpack.c.b16 %v1864, %v1863
        %v1886 = vpack.c.b16 %v1866, %v1865
        %v1887 = vpack.c.b16 %v1868, %v1867
        %v1888 = vpack.c.b16 %v1870, %v1869
        %v1889 = vpack.c.b16 %v1872, %v1871
        %v1890 = vpack.c.b16 %v1874, %v1873
        %v1923 = vunpack.c.l.b16 %v1827
        %v1924 = vunpack.c.l.b16 %v1828
        %v1925 = vunpack.c.l.b16 %v1829
        %v1926 = vunpack.c.l.b16 %v1830
        %v1927 = vunpack.c.l.b16 %v1831
        %v1928 = vunpack.c.l.b16 %v1832
        %v1929 = vunpack.c.l.b16 %v1833
        %v1930 = vunpack.c.l.b16 %v1834
        %v1931 = vunpack.c.l.b16 %v1835
        %v1932 = vunpack.c.l.b16 %v1836
        %v1933 = vunpack.c.l.b16 %v1837
        %v1934 = vunpack.c.l.b16 %v1838
        %v1935 = vunpack.c.l.b16 %v1839
        %v1936 = vunpack.c.l.b16 %v1840
        %v1937 = vunpack.c.l.b16 %v1841
        %v1938 = vunpack.c.l.b16 %v1842
        %v1939 = vpack.c.b16 %v1924, %v1923
        %v1940 = vpack.c.b16 %v1926, %v1925
        %v1941 = vpack.c.b16 %v1928, %v1927
        %v1942 = vpack.c.b16 %v1930, %v1929
        %v1943 = vpack.c.b16 %v1932, %v1931
        %v1944 = vpack.c.b16 %v1934, %v1933
        %v1945 = vpack.c.b16 %v1936, %v1935
        %v1946 = vpack.c.b16 %v1938, %v1937
        %1955 = vmatprep.subr.bf16.mxu0 0
        %1956 = vmatpush1.bf16.msra.mxu0 %v1946
        %1957 = vmatprep.subr.bf16.mxu0 0
        %1958 = vmatpush1.bf16.msra.mxu0 %v1945
        %1959 = vmatprep.subr.bf16.mxu0 0
        %1960 = vmatpush1.bf16.msra.mxu0 %v1944
        %1961 = vmatprep.subr.bf16.mxu0 0
        %1962 = vmatpush1.bf16.msra.mxu0 %v1943
        %1963 = vmatprep.subr.bf16.mxu0 0
        %1964 = vmatpush1.bf16.msra.mxu0 %v1942
        %1965 = vmatprep.subr.bf16.mxu0 0
        %1966 = vmatpush1.bf16.msra.mxu0 %v1941
        %1967 = vmatprep.subr.bf16.mxu0 0
        %1968 = vmatpush1.bf16.msra.mxu0 %v1940
        %1969 = vmatprep.subr.bf16.mxu0 0
        %1970 = vmatpush1.bf16.msra.mxu0 %v1939
        %1971 = vmatprep.subr.bf16.mxu0 0
        %1972 = vmatpush2.bf16.msra.mxu0 0
        %1973 = vmatprep.subr.bf16.mxu0 0
        %1974 = vmatpush2.bf16.msra.mxu0 0
        %1975 = vmatprep.subr.bf16.mxu0 0
        %1976 = vmatpush2.bf16.msra.mxu0 0
        %1977 = vmatprep.subr.bf16.mxu0 0
        %1978 = vmatpush2.bf16.msra.mxu0 0
        %1979 = vmatprep.subr.bf16.mxu0 0
        %1980 = vmatpush2.bf16.msra.mxu0 0
        %1981 = vmatprep.subr.bf16.mxu0 0
        %1982 = vmatpush2.bf16.msra.mxu0 0
        %1983 = vmatprep.subr.bf16.mxu0 0
        %1984 = vmatpush2.bf16.msra.mxu0 0
        %1985 = vmatprep.subr.bf16.mxu0 0
        %1986 = vmatpush2.bf16.msra.mxu0 0
        %1987 = vmatprep.mubr.bf16.mxu0 0
        %1988 = vmatmul.mubr.bf16.gmra.mxu0 %v1875
        %v1989 = vpop.f32.mrf.mxu0
        %v1990 = vadd.f32 0.0, %v1989
        %v1991 = vpop.f32.mrf.mxu0
        %v1992 = vpop.f32.mrf.mxu0
        %v1993 = vadd.f32 0.0, %v1992
        %v1994 = vpop.f32.mrf.mxu0
        %1995 = vmatprep.mubr.bf16.mxu0 0
        %1996 = vmatmul.mubr.bf16.gmra.mxu0 %v1876
        %v1997 = vpop.f32.mrf.mxu0
        %v1998 = vadd.f32 0.0, %v1997
        %v1999 = vpop.f32.mrf.mxu0
        %v2000 = vpop.f32.mrf.mxu0
        %v2001 = vadd.f32 0.0, %v2000
        %v2002 = vpop.f32.mrf.mxu0
        %2003 = vmatprep.mubr.bf16.mxu0 0
        %2004 = vmatmul.mubr.bf16.gmra.mxu0 %v1877
        %v2005 = vpop.f32.mrf.mxu0
        %v2006 = vadd.f32 0.0, %v2005
        %v2007 = vpop.f32.mrf.mxu0
        %v2008 = vpop.f32.mrf.mxu0
        %v2009 = vadd.f32 0.0, %v2008
        %v2010 = vpop.f32.mrf.mxu0
        %2011 = vmatprep.mubr.bf16.mxu0 0
        %2012 = vmatmul.mubr.bf16.gmra.mxu0 %v1878
        %v2013 = vpop.f32.mrf.mxu0
        %v2014 = vadd.f32 0.0, %v2013
        %v2015 = vpop.f32.mrf.mxu0
        %v2016 = vpop.f32.mrf.mxu0
        %v2017 = vadd.f32 0.0, %v2016
        %v2018 = vpop.f32.mrf.mxu0
        %2019 = vmatprep.mubr.bf16.mxu0 0
        %2020 = vmatmul.mubr.bf16.gmra.mxu0 %v1879
        %v2021 = vpop.f32.mrf.mxu0
        %v2022 = vadd.f32 0.0, %v2021
        %v2023 = vpop.f32.mrf.mxu0
        %v2024 = vpop.f32.mrf.mxu0
        %v2025 = vadd.f32 0.0, %v2024
        %v2026 = vpop.f32.mrf.mxu0
        %2027 = vmatprep.mubr.bf16.mxu0 0
        %2028 = vmatmul.mubr.bf16.gmra.mxu0 %v1880
        %v2029 = vpop.f32.mrf.mxu0
        %v2030 = vadd.f32 0.0, %v2029
        %v2031 = vpop.f32.mrf.mxu0
        %v2032 = vpop.f32.mrf.mxu0
        %v2033 = vadd.f32 0.0, %v2032
        %v2034 = vpop.f32.mrf.mxu0
        %2035 = vmatprep.mubr.bf16.mxu0 0
        %2036 = vmatmul.mubr.bf16.gmra.mxu0 %v1881
        %v2037 = vpop.f32.mrf.mxu0
        %v2038 = vadd.f32 0.0, %v2037
        %v2039 = vpop.f32.mrf.mxu0
        %v2040 = vpop.f32.mrf.mxu0
        %v2041 = vadd.f32 0.0, %v2040
        %v2042 = vpop.f32.mrf.mxu0
        %2043 = vmatprep.mubr.bf16.mxu0 0
        %2044 = vmatmul.mubr.bf16.gmra.mxu0 %v1882
        %v2045 = vpop.f32.mrf.mxu0
        %v2046 = vadd.f32 0.0, %v2045
        %v2047 = vpop.f32.mrf.mxu0
        %v2048 = vpop.f32.mrf.mxu0
        %v2049 = vadd.f32 0.0, %v2048
        %v2050 = vpop.f32.mrf.mxu0
        %2051 = vmatprep.mubr.bf16.mxu0 0
        %2052 = vmatmul.mubr.bf16.gmra.mxu0 %v1883
        %v2053 = vpop.f32.mrf.mxu0
        %v2054 = vadd.f32 0.0, %v2053
        %v2055 = vpop.f32.mrf.mxu0
        %v2056 = vpop.f32.mrf.mxu0
        %v2057 = vadd.f32 0.0, %v2056
        %v2058 = vpop.f32.mrf.mxu0
        %2059 = vmatprep.mubr.bf16.mxu0 0
        %2060 = vmatmul.mubr.bf16.gmra.mxu0 %v1884
        %v2061 = vpop.f32.mrf.mxu0
        %v2062 = vadd.f32 0.0, %v2061
        %v2063 = vpop.f32.mrf.mxu0
        %v2064 = vpop.f32.mrf.mxu0
        %v2065 = vadd.f32 0.0, %v2064
        %v2066 = vpop.f32.mrf.mxu0
        %2067 = vmatprep.mubr.bf16.mxu0 0
        %2068 = vmatmul.mubr.bf16.gmra.mxu0 %v1885
        %v2069 = vpop.f32.mrf.mxu0
        %v2070 = vadd.f32 0.0, %v2069
        %v2071 = vpop.f32.mrf.mxu0
        %v2072 = vpop.f32.mrf.mxu0
        %v2073 = vadd.f32 0.0, %v2072
        %v2074 = vpop.f32.mrf.mxu0
        %2075 = vmatprep.mubr.bf16.mxu0 0
        %2076 = vmatmul.mubr.bf16.gmra.mxu0 %v1886
        %v2077 = vpop.f32.mrf.mxu0
        %v2078 = vadd.f32 0.0, %v2077
        %v2079 = vpop.f32.mrf.mxu0
        %v2080 = vpop.f32.mrf.mxu0
        %v2081 = vadd.f32 0.0, %v2080
        %v2082 = vpop.f32.mrf.mxu0
        %2083 = vmatprep.mubr.bf16.mxu0 0
        %2084 = vmatmul.mubr.bf16.gmra.mxu0 %v1887
        %v2085 = vpop.f32.mrf.mxu0
        %v2086 = vadd.f32 0.0, %v2085
        %v2087 = vpop.f32.mrf.mxu0
        %v2088 = vpop.f32.mrf.mxu0
        %v2089 = vadd.f32 0.0, %v2088
        %v2090 = vpop.f32.mrf.mxu0
        %2091 = vmatprep.mubr.bf16.mxu0 0
        %2092 = vmatmul.mubr.bf16.gmra.mxu0 %v1888
        %v2093 = vpop.f32.mrf.mxu0
        %v2094 = vadd.f32 0.0, %v2093
        %v2095 = vpop.f32.mrf.mxu0
        %v2096 = vpop.f32.mrf.mxu0
        %v2097 = vadd.f32 0.0, %v2096
        %v2098 = vpop.f32.mrf.mxu0
        %2099 = vmatprep.mubr.bf16.mxu0 0
        %2100 = vmatmul.mubr.bf16.gmra.mxu0 %v1889
        %v2101 = vpop.f32.mrf.mxu0
        %v2102 = vadd.f32 0.0, %v2101
        %v2103 = vpop.f32.mrf.mxu0
        %v2104 = vpop.f32.mrf.mxu0
        %v2105 = vadd.f32 0.0, %v2104
        %v2106 = vpop.f32.mrf.mxu0
        %2107 = vmatprep.mubr.bf16.mxu0 0
        %2108 = vmatmul.mubr.bf16.gmra.mxu0 %v1890
        %v2109 = vpop.f32.mrf.mxu0
        %v2110 = vadd.f32 0.0, %v2109
        %v2111 = vpop.f32.mrf.mxu0
        %v2112 = vpop.f32.mrf.mxu0
        %v2113 = vadd.f32 0.0, %v2112
        %v2114 = vpop.f32.mrf.mxu0
        %2115 = vdwg.mxu0
        %v2116 = vadd.f32 %v1305, %v1990
        %v2117 = vadd.f32 %v1306, %v1993
        %v2118 = vadd.f32 %v1307, %v1998
        %v2119 = vadd.f32 %v1308, %v2001
        %v2120 = vadd.f32 %v1309, %v2006
        %v2121 = vadd.f32 %v1310, %v2009
        %v2122 = vadd.f32 %v1311, %v2014
        %v2123 = vadd.f32 %v1312, %v2017
        %v2124 = vadd.f32 %v1313, %v2022
        %v2125 = vadd.f32 %v1314, %v2025
        %v2126 = vadd.f32 %v1315, %v2030
        %v2127 = vadd.f32 %v1316, %v2033
        %v2128 = vadd.f32 %v1317, %v2038
        %v2129 = vadd.f32 %v1318, %v2041
        %v2130 = vadd.f32 %v1319, %v2046
        %v2131 = vadd.f32 %v1320, %v2049
        %v2132 = vadd.f32 %v1321, %v2054
        %v2133 = vadd.f32 %v1322, %v2057
        %v2134 = vadd.f32 %v1323, %v2062
        %v2135 = vadd.f32 %v1324, %v2065
        %v2136 = vadd.f32 %v1325, %v2070
        %v2137 = vadd.f32 %v1326, %v2073
        %v2138 = vadd.f32 %v1327, %v2078
        %v2139 = vadd.f32 %v1328, %v2081
        %v2140 = vadd.f32 %v1329, %v2086
        %v2141 = vadd.f32 %v1330, %v2089
        %v2142 = vadd.f32 %v1331, %v2094
        %v2143 = vadd.f32 %v1332, %v2097
        %v2144 = vadd.f32 %v1333, %v2102
        %v2145 = vadd.f32 %v1334, %v2105
        %v2146 = vadd.f32 %v1335, %v2110
        %v2147 = vadd.f32 %v1336, %v2113
        %s2148 = scalar_lea.vmem %s1, 256
        %v2149 = vld [vmem:[%s2148] sm:$0xf]
        %v2150 = vld [vmem:[%s2148 + $0x4] sm:$0xf]
        %v2151 = vld [vmem:[%s2148 + $0x8] sm:$0xf]
        %v2152 = vld [vmem:[%s2148 + $0xc] sm:$0xf]
        %v2153 = vld [vmem:[%s2148 + $0x10] sm:$0xf]
        %v2154 = vld [vmem:[%s2148 + $0x14] sm:$0xf]
        %v2155 = vld [vmem:[%s2148 + $0x18] sm:$0xf]
        %v2156 = vld [vmem:[%s2148 + $0x1c] sm:$0xf]
        %v2157 = vld [vmem:[%s2148 + $0x20] sm:$0xf]
        %v2158 = vld [vmem:[%s2148 + $0x24] sm:$0xf]
        %v2159 = vld [vmem:[%s2148 + $0x28] sm:$0xf]
        %v2160 = vld [vmem:[%s2148 + $0x2c] sm:$0xf]
        %v2161 = vld [vmem:[%s2148 + $0x30] sm:$0xf]
        %v2162 = vld [vmem:[%s2148 + $0x34] sm:$0xf]
        %v2163 = vld [vmem:[%s2148 + $0x38] sm:$0xf]
        %v2164 = vld [vmem:[%s2148 + $0x3c] sm:$0xf]
        %v2165 = vunpack.c.l.b16 %v1791
        %v2166 = vunpack.c.l.b16 %v1801
        %v2167 = vpack.c.b16 %v2166, %v2165
        %v2185 = vunpack.c.l.b16 %v2149
        %v2186 = vunpack.c.l.b16 %v2150
        %v2187 = vunpack.c.l.b16 %v2151
        %v2188 = vunpack.c.l.b16 %v2152
        %v2189 = vunpack.c.l.b16 %v2153
        %v2190 = vunpack.c.l.b16 %v2154
        %v2191 = vunpack.c.l.b16 %v2155
        %v2192 = vunpack.c.l.b16 %v2156
        %v2193 = vunpack.c.l.b16 %v2157
        %v2194 = vunpack.c.l.b16 %v2158
        %v2195 = vunpack.c.l.b16 %v2159
        %v2196 = vunpack.c.l.b16 %v2160
        %v2197 = vunpack.c.l.b16 %v2161
        %v2198 = vunpack.c.l.b16 %v2162
        %v2199 = vunpack.c.l.b16 %v2163
        %v2200 = vunpack.c.l.b16 %v2164
        %v2201 = vpack.c.b16 %v2186, %v2185
        %v2202 = vpack.c.b16 %v2188, %v2187
        %v2203 = vpack.c.b16 %v2190, %v2189
        %v2204 = vpack.c.b16 %v2192, %v2191
        %v2205 = vpack.c.b16 %v2194, %v2193
        %v2206 = vpack.c.b16 %v2196, %v2195
        %v2207 = vpack.c.b16 %v2198, %v2197
        %v2208 = vpack.c.b16 %v2200, %v2199
        %2217 = vmatprep.subr.bf16.mxu0 0
        %2218 = vmatpush1.bf16.msra.mxu0 %v2208
        %2219 = vmatprep.subr.bf16.mxu0 0
        %2220 = vmatpush1.bf16.msra.mxu0 %v2207
        %2221 = vmatprep.subr.bf16.mxu0 0
        %2222 = vmatpush1.bf16.msra.mxu0 %v2206
        %2223 = vmatprep.subr.bf16.mxu0 0
        %2224 = vmatpush1.bf16.msra.mxu0 %v2205
        %2225 = vmatprep.subr.bf16.mxu0 0
        %2226 = vmatpush1.bf16.msra.mxu0 %v2204
        %2227 = vmatprep.subr.bf16.mxu0 0
        %2228 = vmatpush1.bf16.msra.mxu0 %v2203
        %2229 = vmatprep.subr.bf16.mxu0 0
        %2230 = vmatpush1.bf16.msra.mxu0 %v2202
        %2231 = vmatprep.subr.bf16.mxu0 0
        %2232 = vmatpush1.bf16.msra.mxu0 %v2201
        %2233 = vmatprep.subr.bf16.mxu0 0
        %2234 = vmatpush2.bf16.msra.mxu0 0
        %2235 = vmatprep.subr.bf16.mxu0 0
        %2236 = vmatpush2.bf16.msra.mxu0 0
        %2237 = vmatprep.subr.bf16.mxu0 0
        %2238 = vmatpush2.bf16.msra.mxu0 0
        %2239 = vmatprep.subr.bf16.mxu0 0
        %2240 = vmatpush2.bf16.msra.mxu0 0
        %2241 = vmatprep.subr.bf16.mxu0 0
        %2242 = vmatpush2.bf16.msra.mxu0 0
        %2243 = vmatprep.subr.bf16.mxu0 0
        %2244 = vmatpush2.bf16.msra.mxu0 0
        %2245 = vmatprep.subr.bf16.mxu0 0
        %2246 = vmatpush2.bf16.msra.mxu0 0
        %2247 = vmatprep.subr.bf16.mxu0 0
        %2248 = vmatpush2.bf16.msra.mxu0 0
        %2249 = vmatprep.mubr.bf16.mxu0 0
        %2250 = vmatmul.mubr.bf16.gmra.mxu0 %v1876
        %v2251 = vpop.f32.mrf.mxu0
        %v2252 = vadd.f32 0.0, %v2251
        %v2253 = vpop.f32.mrf.mxu0
        %v2254 = vpop.f32.mrf.mxu0
        %v2255 = vadd.f32 0.0, %v2254
        %v2256 = vpop.f32.mrf.mxu0
        %2257 = vmatprep.mubr.bf16.mxu0 0
        %2258 = vmatmul.mubr.bf16.gmra.mxu0 %v1877
        %v2259 = vpop.f32.mrf.mxu0
        %v2260 = vadd.f32 0.0, %v2259
        %v2261 = vpop.f32.mrf.mxu0
        %v2262 = vpop.f32.mrf.mxu0
        %v2263 = vadd.f32 0.0, %v2262
        %v2264 = vpop.f32.mrf.mxu0
        %2265 = vmatprep.mubr.bf16.mxu0 0
        %2266 = vmatmul.mubr.bf16.gmra.mxu0 %v1878
        %v2267 = vpop.f32.mrf.mxu0
        %v2268 = vadd.f32 0.0, %v2267
        %v2269 = vpop.f32.mrf.mxu0
        %v2270 = vpop.f32.mrf.mxu0
        %v2271 = vadd.f32 0.0, %v2270
        %v2272 = vpop.f32.mrf.mxu0
        %2273 = vmatprep.mubr.bf16.mxu0 0
        %2274 = vmatmul.mubr.bf16.gmra.mxu0 %v1879
        %v2275 = vpop.f32.mrf.mxu0
        %v2276 = vadd.f32 0.0, %v2275
        %v2277 = vpop.f32.mrf.mxu0
        %v2278 = vpop.f32.mrf.mxu0
        %v2279 = vadd.f32 0.0, %v2278
        %v2280 = vpop.f32.mrf.mxu0
        %2281 = vmatprep.mubr.bf16.mxu0 0
        %2282 = vmatmul.mubr.bf16.gmra.mxu0 %v1880
        %v2283 = vpop.f32.mrf.mxu0
        %v2284 = vadd.f32 0.0, %v2283
        %v2285 = vpop.f32.mrf.mxu0
        %v2286 = vpop.f32.mrf.mxu0
        %v2287 = vadd.f32 0.0, %v2286
        %v2288 = vpop.f32.mrf.mxu0
        %2289 = vmatprep.mubr.bf16.mxu0 0
        %2290 = vmatmul.mubr.bf16.gmra.mxu0 %v1881
        %v2291 = vpop.f32.mrf.mxu0
        %v2292 = vadd.f32 0.0, %v2291
        %v2293 = vpop.f32.mrf.mxu0
        %v2294 = vpop.f32.mrf.mxu0
        %v2295 = vadd.f32 0.0, %v2294
        %v2296 = vpop.f32.mrf.mxu0
        %2297 = vmatprep.mubr.bf16.mxu0 0
        %2298 = vmatmul.mubr.bf16.gmra.mxu0 %v1882
        %v2299 = vpop.f32.mrf.mxu0
        %v2300 = vadd.f32 0.0, %v2299
        %v2301 = vpop.f32.mrf.mxu0
        %v2302 = vpop.f32.mrf.mxu0
        %v2303 = vadd.f32 0.0, %v2302
        %v2304 = vpop.f32.mrf.mxu0
        %2305 = vmatprep.mubr.bf16.mxu0 0
        %2306 = vmatmul.mubr.bf16.gmra.mxu0 %v1883
        %v2307 = vpop.f32.mrf.mxu0
        %v2308 = vadd.f32 0.0, %v2307
        %v2309 = vpop.f32.mrf.mxu0
        %v2310 = vpop.f32.mrf.mxu0
        %v2311 = vadd.f32 0.0, %v2310
        %v2312 = vpop.f32.mrf.mxu0
        %2313 = vmatprep.mubr.bf16.mxu0 0
        %2314 = vmatmul.mubr.bf16.gmra.mxu0 %v1884
        %v2315 = vpop.f32.mrf.mxu0
        %v2316 = vadd.f32 0.0, %v2315
        %v2317 = vpop.f32.mrf.mxu0
        %v2318 = vpop.f32.mrf.mxu0
        %v2319 = vadd.f32 0.0, %v2318
        %v2320 = vpop.f32.mrf.mxu0
        %2321 = vmatprep.mubr.bf16.mxu0 0
        %2322 = vmatmul.mubr.bf16.gmra.mxu0 %v1885
        %v2323 = vpop.f32.mrf.mxu0
        %v2324 = vadd.f32 0.0, %v2323
        %v2325 = vpop.f32.mrf.mxu0
        %v2326 = vpop.f32.mrf.mxu0
        %v2327 = vadd.f32 0.0, %v2326
        %v2328 = vpop.f32.mrf.mxu0
        %2329 = vmatprep.mubr.bf16.mxu0 0
        %2330 = vmatmul.mubr.bf16.gmra.mxu0 %v1886
        %v2331 = vpop.f32.mrf.mxu0
        %v2332 = vadd.f32 0.0, %v2331
        %v2333 = vpop.f32.mrf.mxu0
        %v2334 = vpop.f32.mrf.mxu0
        %v2335 = vadd.f32 0.0, %v2334
        %v2336 = vpop.f32.mrf.mxu0
        %2337 = vmatprep.mubr.bf16.mxu0 0
        %2338 = vmatmul.mubr.bf16.gmra.mxu0 %v1887
        %v2339 = vpop.f32.mrf.mxu0
        %v2340 = vadd.f32 0.0, %v2339
        %v2341 = vpop.f32.mrf.mxu0
        %v2342 = vpop.f32.mrf.mxu0
        %v2343 = vadd.f32 0.0, %v2342
        %v2344 = vpop.f32.mrf.mxu0
        %2345 = vmatprep.mubr.bf16.mxu0 0
        %2346 = vmatmul.mubr.bf16.gmra.mxu0 %v1888
        %v2347 = vpop.f32.mrf.mxu0
        %v2348 = vadd.f32 0.0, %v2347
        %v2349 = vpop.f32.mrf.mxu0
        %v2350 = vpop.f32.mrf.mxu0
        %v2351 = vadd.f32 0.0, %v2350
        %v2352 = vpop.f32.mrf.mxu0
        %2353 = vmatprep.mubr.bf16.mxu0 0
        %2354 = vmatmul.mubr.bf16.gmra.mxu0 %v1889
        %v2355 = vpop.f32.mrf.mxu0
        %v2356 = vadd.f32 0.0, %v2355
        %v2357 = vpop.f32.mrf.mxu0
        %v2358 = vpop.f32.mrf.mxu0
        %v2359 = vadd.f32 0.0, %v2358
        %v2360 = vpop.f32.mrf.mxu0
        %2361 = vmatprep.mubr.bf16.mxu0 0
        %2362 = vmatmul.mubr.bf16.gmra.mxu0 %v1890
        %v2363 = vpop.f32.mrf.mxu0
        %v2364 = vadd.f32 0.0, %v2363
        %v2365 = vpop.f32.mrf.mxu0
        %v2366 = vpop.f32.mrf.mxu0
        %v2367 = vadd.f32 0.0, %v2366
        %v2368 = vpop.f32.mrf.mxu0
        %2369 = vmatprep.mubr.bf16.mxu0 0
        %2370 = vmatmul.mubr.bf16.gmra.mxu0 %v2167
        %v2371 = vpop.f32.mrf.mxu0
        %v2372 = vadd.f32 0.0, %v2371
        %v2373 = vpop.f32.mrf.mxu0
        %v2374 = vpop.f32.mrf.mxu0
        %v2375 = vadd.f32 0.0, %v2374
        %v2376 = vpop.f32.mrf.mxu0
        %2377 = vdwg.mxu0
        %v2378 = vadd.f32 %v2116, %v2252
        %v2379 = vadd.f32 %v2117, %v2255
        %v2380 = vadd.f32 %v2118, %v2260
        %v2381 = vadd.f32 %v2119, %v2263
        %v2382 = vadd.f32 %v2120, %v2268
        %v2383 = vadd.f32 %v2121, %v2271
        %v2384 = vadd.f32 %v2122, %v2276
        %v2385 = vadd.f32 %v2123, %v2279
        %v2386 = vadd.f32 %v2124, %v2284
        %v2387 = vadd.f32 %v2125, %v2287
        %v2388 = vadd.f32 %v2126, %v2292
        %v2389 = vadd.f32 %v2127, %v2295
        %v2390 = vadd.f32 %v2128, %v2300
        %v2391 = vadd.f32 %v2129, %v2303
        %v2392 = vadd.f32 %v2130, %v2308
        %v2393 = vadd.f32 %v2131, %v2311
        %v2394 = vadd.f32 %v2132, %v2316
        %v2395 = vadd.f32 %v2133, %v2319
        %v2396 = vadd.f32 %v2134, %v2324
        %v2397 = vadd.f32 %v2135, %v2327
        %v2398 = vadd.f32 %v2136, %v2332
        %v2399 = vadd.f32 %v2137, %v2335
        %v2400 = vadd.f32 %v2138, %v2340
        %v2401 = vadd.f32 %v2139, %v2343
        %v2402 = vadd.f32 %v2140, %v2348
        %v2403 = vadd.f32 %v2141, %v2351
        %v2404 = vadd.f32 %v2142, %v2356
        %v2405 = vadd.f32 %v2143, %v2359
        %v2406 = vadd.f32 %v2144, %v2364
        %v2407 = vadd.f32 %v2145, %v2367
        %v2408 = vadd.f32 %v2146, %v2372
        %v2409 = vadd.f32 %v2147, %v2375
        %s2410 = scalar_lea.vmem %s1, 448
        %v2411 = vld [vmem:[%s2410] sm:$0xf]
        %v2412 = vld [vmem:[%s2410 + $0x4] sm:$0xf]
        %v2413 = vld [vmem:[%s2410 + $0x8] sm:$0xf]
        %v2414 = vld [vmem:[%s2410 + $0xc] sm:$0xf]
        %v2415 = vld [vmem:[%s2410 + $0x10] sm:$0xf]
        %v2416 = vld [vmem:[%s2410 + $0x14] sm:$0xf]
        %v2417 = vld [vmem:[%s2410 + $0x18] sm:$0xf]
        %v2418 = vld [vmem:[%s2410 + $0x1c] sm:$0xf]
        %v2419 = vld [vmem:[%s2410 + $0x20] sm:$0xf]
        %v2420 = vld [vmem:[%s2410 + $0x24] sm:$0xf]
        %v2421 = vld [vmem:[%s2410 + $0x28] sm:$0xf]
        %v2422 = vld [vmem:[%s2410 + $0x2c] sm:$0xf]
        %v2423 = vld [vmem:[%s2410 + $0x30] sm:$0xf]
        %v2424 = vld [vmem:[%s2410 + $0x34] sm:$0xf]
        %v2425 = vld [vmem:[%s2410 + $0x38] sm:$0xf]
        %v2426 = vld [vmem:[%s2410 + $0x3c] sm:$0xf]
        %v2427 = vunpack.c.l.b16 %v1815
        %v2428 = vunpack.c.l.b16 %v1825
        %v2429 = vpack.c.b16 %v2428, %v2427
        %v2447 = vunpack.c.l.b16 %v2411
        %v2448 = vunpack.c.l.b16 %v2412
        %v2449 = vunpack.c.l.b16 %v2413
        %v2450 = vunpack.c.l.b16 %v2414
        %v2451 = vunpack.c.l.b16 %v2415
        %v2452 = vunpack.c.l.b16 %v2416
        %v2453 = vunpack.c.l.b16 %v2417
        %v2454 = vunpack.c.l.b16 %v2418
        %v2455 = vunpack.c.l.b16 %v2419
        %v2456 = vunpack.c.l.b16 %v2420
        %v2457 = vunpack.c.l.b16 %v2421
        %v2458 = vunpack.c.l.b16 %v2422
        %v2459 = vunpack.c.l.b16 %v2423
        %v2460 = vunpack.c.l.b16 %v2424
        %v2461 = vunpack.c.l.b16 %v2425
        %v2462 = vunpack.c.l.b16 %v2426
        %v2463 = vpack.c.b16 %v2448, %v2447
        %v2464 = vpack.c.b16 %v2450, %v2449
        %v2465 = vpack.c.b16 %v2452, %v2451
        %v2466 = vpack.c.b16 %v2454, %v2453
        %v2467 = vpack.c.b16 %v2456, %v2455
        %v2468 = vpack.c.b16 %v2458, %v2457
        %v2469 = vpack.c.b16 %v2460, %v2459
        %v2470 = vpack.c.b16 %v2462, %v2461
        %2479 = vmatprep.subr.bf16.mxu0 0
        %2480 = vmatpush1.bf16.msra.mxu0 %v2470
        %2481 = vmatprep.subr.bf16.mxu0 0
        %2482 = vmatpush1.bf16.msra.mxu0 %v2469
        %2483 = vmatprep.subr.bf16.mxu0 0
        %2484 = vmatpush1.bf16.msra.mxu0 %v2468
        %2485 = vmatprep.subr.bf16.mxu0 0
        %2486 = vmatpush1.bf16.msra.mxu0 %v2467
        %2487 = vmatprep.subr.bf16.mxu0 0
        %2488 = vmatpush1.bf16.msra.mxu0 %v2466
        %2489 = vmatprep.subr.bf16.mxu0 0
        %2490 = vmatpush1.bf16.msra.mxu0 %v2465
        %2491 = vmatprep.subr.bf16.mxu0 0
        %2492 = vmatpush1.bf16.msra.mxu0 %v2464
        %2493 = vmatprep.subr.bf16.mxu0 0
        %2494 = vmatpush1.bf16.msra.mxu0 %v2463
        %2495 = vmatprep.subr.bf16.mxu0 0
        %2496 = vmatpush2.bf16.msra.mxu0 0
        %2497 = vmatprep.subr.bf16.mxu0 0
        %2498 = vmatpush2.bf16.msra.mxu0 0
        %2499 = vmatprep.subr.bf16.mxu0 0
        %2500 = vmatpush2.bf16.msra.mxu0 0
        %2501 = vmatprep.subr.bf16.mxu0 0
        %2502 = vmatpush2.bf16.msra.mxu0 0
        %2503 = vmatprep.subr.bf16.mxu0 0
        %2504 = vmatpush2.bf16.msra.mxu0 0
        %2505 = vmatprep.subr.bf16.mxu0 0
        %2506 = vmatpush2.bf16.msra.mxu0 0
        %2507 = vmatprep.subr.bf16.mxu0 0
        %2508 = vmatpush2.bf16.msra.mxu0 0
        %2509 = vmatprep.subr.bf16.mxu0 0
        %2510 = vmatpush2.bf16.msra.mxu0 0
        %2511 = vmatprep.mubr.bf16.mxu0 0
        %2512 = vmatmul.mubr.bf16.gmra.mxu0 %v1877
        %v2513 = vpop.f32.mrf.mxu0
        %v2514 = vadd.f32 0.0, %v2513
        %v2515 = vpop.f32.mrf.mxu0
        %v2516 = vpop.f32.mrf.mxu0
        %v2517 = vadd.f32 0.0, %v2516
        %v2518 = vpop.f32.mrf.mxu0
        %2519 = vmatprep.mubr.bf16.mxu0 0
        %2520 = vmatmul.mubr.bf16.gmra.mxu0 %v1878
        %v2521 = vpop.f32.mrf.mxu0
        %v2522 = vadd.f32 0.0, %v2521
        %v2523 = vpop.f32.mrf.mxu0
        %v2524 = vpop.f32.mrf.mxu0
        %v2525 = vadd.f32 0.0, %v2524
        %v2526 = vpop.f32.mrf.mxu0
        %2527 = vmatprep.mubr.bf16.mxu0 0
        %2528 = vmatmul.mubr.bf16.gmra.mxu0 %v1879
        %v2529 = vpop.f32.mrf.mxu0
        %v2530 = vadd.f32 0.0, %v2529
        %v2531 = vpop.f32.mrf.mxu0
        %v2532 = vpop.f32.mrf.mxu0
        %v2533 = vadd.f32 0.0, %v2532
        %v2534 = vpop.f32.mrf.mxu0
        %2535 = vmatprep.mubr.bf16.mxu0 0
        %2536 = vmatmul.mubr.bf16.gmra.mxu0 %v1880
        %v2537 = vpop.f32.mrf.mxu0
        %v2538 = vadd.f32 0.0, %v2537
        %v2539 = vpop.f32.mrf.mxu0
        %v2540 = vpop.f32.mrf.mxu0
        %v2541 = vadd.f32 0.0, %v2540
        %v2542 = vpop.f32.mrf.mxu0
        %2543 = vmatprep.mubr.bf16.mxu0 0
        %2544 = vmatmul.mubr.bf16.gmra.mxu0 %v1881
        %v2545 = vpop.f32.mrf.mxu0
        %v2546 = vadd.f32 0.0, %v2545
        %v2547 = vpop.f32.mrf.mxu0
        %v2548 = vpop.f32.mrf.mxu0
        %v2549 = vadd.f32 0.0, %v2548
        %v2550 = vpop.f32.mrf.mxu0
        %2551 = vmatprep.mubr.bf16.mxu0 0
        %2552 = vmatmul.mubr.bf16.gmra.mxu0 %v1882
        %v2553 = vpop.f32.mrf.mxu0
        %v2554 = vadd.f32 0.0, %v2553
        %v2555 = vpop.f32.mrf.mxu0
        %v2556 = vpop.f32.mrf.mxu0
        %v2557 = vadd.f32 0.0, %v2556
        %v2558 = vpop.f32.mrf.mxu0
        %2559 = vmatprep.mubr.bf16.mxu0 0
        %2560 = vmatmul.mubr.bf16.gmra.mxu0 %v1883
        %v2561 = vpop.f32.mrf.mxu0
        %v2562 = vadd.f32 0.0, %v2561
        %v2563 = vpop.f32.mrf.mxu0
        %v2564 = vpop.f32.mrf.mxu0
        %v2565 = vadd.f32 0.0, %v2564
        %v2566 = vpop.f32.mrf.mxu0
        %2567 = vmatprep.mubr.bf16.mxu0 0
        %2568 = vmatmul.mubr.bf16.gmra.mxu0 %v1884
        %v2569 = vpop.f32.mrf.mxu0
        %v2570 = vadd.f32 0.0, %v2569
        %v2571 = vpop.f32.mrf.mxu0
        %v2572 = vpop.f32.mrf.mxu0
        %v2573 = vadd.f32 0.0, %v2572
        %v2574 = vpop.f32.mrf.mxu0
        %2575 = vmatprep.mubr.bf16.mxu0 0
        %2576 = vmatmul.mubr.bf16.gmra.mxu0 %v1885
        %v2577 = vpop.f32.mrf.mxu0
        %v2578 = vadd.f32 0.0, %v2577
        %v2579 = vpop.f32.mrf.mxu0
        %v2580 = vpop.f32.mrf.mxu0
        %v2581 = vadd.f32 0.0, %v2580
        %v2582 = vpop.f32.mrf.mxu0
        %2583 = vmatprep.mubr.bf16.mxu0 0
        %2584 = vmatmul.mubr.bf16.gmra.mxu0 %v1886
        %v2585 = vpop.f32.mrf.mxu0
        %v2586 = vadd.f32 0.0, %v2585
        %v2587 = vpop.f32.mrf.mxu0
        %v2588 = vpop.f32.mrf.mxu0
        %v2589 = vadd.f32 0.0, %v2588
        %v2590 = vpop.f32.mrf.mxu0
        %2591 = vmatprep.mubr.bf16.mxu0 0
        %2592 = vmatmul.mubr.bf16.gmra.mxu0 %v1887
        %v2593 = vpop.f32.mrf.mxu0
        %v2594 = vadd.f32 0.0, %v2593
        %v2595 = vpop.f32.mrf.mxu0
        %v2596 = vpop.f32.mrf.mxu0
        %v2597 = vadd.f32 0.0, %v2596
        %v2598 = vpop.f32.mrf.mxu0
        %2599 = vmatprep.mubr.bf16.mxu0 0
        %2600 = vmatmul.mubr.bf16.gmra.mxu0 %v1888
        %v2601 = vpop.f32.mrf.mxu0
        %v2602 = vadd.f32 0.0, %v2601
        %v2603 = vpop.f32.mrf.mxu0
        %v2604 = vpop.f32.mrf.mxu0
        %v2605 = vadd.f32 0.0, %v2604
        %v2606 = vpop.f32.mrf.mxu0
        %2607 = vmatprep.mubr.bf16.mxu0 0
        %2608 = vmatmul.mubr.bf16.gmra.mxu0 %v1889
        %v2609 = vpop.f32.mrf.mxu0
        %v2610 = vadd.f32 0.0, %v2609
        %v2611 = vpop.f32.mrf.mxu0
        %v2612 = vpop.f32.mrf.mxu0
        %v2613 = vadd.f32 0.0, %v2612
        %v2614 = vpop.f32.mrf.mxu0
        %2615 = vmatprep.mubr.bf16.mxu0 0
        %2616 = vmatmul.mubr.bf16.gmra.mxu0 %v1890
        %v2617 = vpop.f32.mrf.mxu0
        %v2618 = vadd.f32 0.0, %v2617
        %v2619 = vpop.f32.mrf.mxu0
        %v2620 = vpop.f32.mrf.mxu0
        %v2621 = vadd.f32 0.0, %v2620
        %v2622 = vpop.f32.mrf.mxu0
        %2623 = vmatprep.mubr.bf16.mxu0 0
        %2624 = vmatmul.mubr.bf16.gmra.mxu0 %v2167
        %v2625 = vpop.f32.mrf.mxu0
        %v2626 = vadd.f32 0.0, %v2625
        %v2627 = vpop.f32.mrf.mxu0
        %v2628 = vpop.f32.mrf.mxu0
        %v2629 = vadd.f32 0.0, %v2628
        %v2630 = vpop.f32.mrf.mxu0
        %2631 = vmatprep.mubr.bf16.mxu0 0
        %2632 = vmatmul.mubr.bf16.gmra.mxu0 %v2429
        %v2633 = vpop.f32.mrf.mxu0
        %v2634 = vadd.f32 0.0, %v2633
        %v2635 = vpop.f32.mrf.mxu0
        %v2636 = vpop.f32.mrf.mxu0
        %v2637 = vadd.f32 0.0, %v2636
        %v2638 = vpop.f32.mrf.mxu0
        %2639 = vdwg.mxu0
        %v2640 = vadd.f32 %v2378, %v2514
        %v2641 = vadd.f32 %v2379, %v2517
        %v2642 = vadd.f32 %v2380, %v2522
        %v2643 = vadd.f32 %v2381, %v2525
        %v2644 = vadd.f32 %v2382, %v2530
        %v2645 = vadd.f32 %v2383, %v2533
        %v2646 = vadd.f32 %v2384, %v2538
        %v2647 = vadd.f32 %v2385, %v2541
        %v2648 = vadd.f32 %v2386, %v2546
        %v2649 = vadd.f32 %v2387, %v2549
        %v2650 = vadd.f32 %v2388, %v2554
        %v2651 = vadd.f32 %v2389, %v2557
        %v2652 = vadd.f32 %v2390, %v2562
        %v2653 = vadd.f32 %v2391, %v2565
        %v2654 = vadd.f32 %v2392, %v2570
        %v2655 = vadd.f32 %v2393, %v2573
        %v2656 = vadd.f32 %v2394, %v2578
        %v2657 = vadd.f32 %v2395, %v2581
        %v2658 = vadd.f32 %v2396, %v2586
        %v2659 = vadd.f32 %v2397, %v2589
        %v2660 = vadd.f32 %v2398, %v2594
        %v2661 = vadd.f32 %v2399, %v2597
        %v2662 = vadd.f32 %v2400, %v2602
        %v2663 = vadd.f32 %v2401, %v2605
        %v2664 = vadd.f32 %v2402, %v2610
        %v2665 = vadd.f32 %v2403, %v2613
        %v2666 = vadd.f32 %v2404, %v2618
        %v2667 = vadd.f32 %v2405, %v2621
        %v2668 = vadd.f32 %v2406, %v2626
        %v2669 = vadd.f32 %v2407, %v2629
        %v2670 = vadd.f32 %v2408, %v2634
        %v2671 = vadd.f32 %v2409, %v2637
        %v2672 = vld [vmem:[%s360] sm:$0xe]
        %v2673 = vld [vmem:[%s360 + $0xc] sm:$0xe]
        %v2674 = vld [vmem:[%s360 + $0x18] sm:$0xe]
        %v2675 = vld [vmem:[%s360 + $0x24] sm:$0xe]
        %v2676 = vld [vmem:[%s360 + $0x30] sm:$0xe]
        %v2677 = vld [vmem:[%s360 + $0x3c] sm:$0xe]
        %v2678 = vld [vmem:[%s360 + $0x48] sm:$0xe]
        %v2679 = vld [vmem:[%s360 + $0x54] sm:$0xe]
        %v2680 = vld [vmem:[%s360 + $0x60] sm:$0xe]
        %v2681 = vld [vmem:[%s360 + $0x6c] sm:$0xe]
        %v2682 = vld [vmem:[%s360 + $0x78] sm:$0xe]
        %v2683 = vld [vmem:[%s360 + $0x84] sm:$0xe]
        %v2684 = vld [vmem:[%s360 + $0x90] sm:$0xe]
        %v2685 = vld [vmem:[%s360 + $0x9c] sm:$0xe]
        %v2686 = vld [vmem:[%s360 + $0xa8] sm:$0xe]
        %v2687 = vld [vmem:[%s360 + $0xb4] sm:$0xe]
        %v2688 = vld [vmem:[%s360 + $0xc0] sm:$0xe]
        %v2689 = vld [vmem:[%s360 + $0xcc] sm:$0xe]
        %vm2744 = vcmask 1042432
        %vm2745 = vcmask 1046532
        %vm2746 = vmor %vm2744, %vm2745
        %v2747 = vrot.slane %v2672, 5
        %v2748 = vrot.slane %v2747, 4
        %v2749 = vrot.slane %v1338, 5
        %v2750 = vsel %vm2746, %v2748, %v2749
        %v2751 = vrot.slane %v2749, 4
        %v2752 = vrot.slane %v1339, 5
        %v2753 = vsel %vm2746, %v2751, %v2752
        %v2754 = vrot.slane %v2673, 5
        %v2755 = vrot.slane %v2754, 4
        %v2756 = vrot.slane %v1341, 5
        %v2757 = vsel %vm2746, %v2755, %v2756
        %v2758 = vrot.slane %v2756, 4
        %v2759 = vrot.slane %v1342, 5
        %v2760 = vsel %vm2746, %v2758, %v2759
        %v2761 = vrot.slane %v2674, 5
        %v2762 = vrot.slane %v2761, 4
        %v2763 = vrot.slane %v1344, 5
        %v2764 = vsel %vm2746, %v2762, %v2763
        %v2765 = vrot.slane %v2763, 4
        %v2766 = vrot.slane %v1345, 5
        %v2767 = vsel %vm2746, %v2765, %v2766
        %v2768 = vrot.slane %v2675, 5
        %v2769 = vrot.slane %v2768, 4
        %v2770 = vrot.slane %v1347, 5
        %v2771 = vsel %vm2746, %v2769, %v2770
        %v2772 = vrot.slane %v2770, 4
        %v2773 = vrot.slane %v1348, 5
        %v2774 = vsel %vm2746, %v2772, %v2773
        %v2775 = vrot.slane %v2676, 5
        %v2776 = vrot.slane %v2775, 4
        %v2777 = vrot.slane %v1350, 5
        %v2778 = vsel %vm2746, %v2776, %v2777
        %v2779 = vrot.slane %v2777, 4
        %v2780 = vrot.slane %v1351, 5
        %v2781 = vsel %vm2746, %v2779, %v2780
        %v2782 = vrot.slane %v2677, 5
        %v2783 = vrot.slane %v2782, 4
        %v2784 = vrot.slane %v1353, 5
        %v2785 = vsel %vm2746, %v2783, %v2784
        %v2786 = vrot.slane %v2784, 4
        %v2787 = vrot.slane %v1354, 5
        %v2788 = vsel %vm2746, %v2786, %v2787
        %v2789 = vrot.slane %v2678, 5
        %v2790 = vrot.slane %v2789, 4
        %v2791 = vrot.slane %v1356, 5
        %v2792 = vsel %vm2746, %v2790, %v2791
        %v2793 = vrot.slane %v2791, 4
        %v2794 = vrot.slane %v1357, 5
        %v2795 = vsel %vm2746, %v2793, %v2794
        %v2796 = vrot.slane %v2679, 5
        %v2797 = vrot.slane %v2796, 4
        %v2798 = vrot.slane %v1359, 5
        %v2799 = vsel %vm2746, %v2797, %v2798
        %v2800 = vrot.slane %v2798, 4
        %v2801 = vrot.slane %v1360, 5
        %v2802 = vsel %vm2746, %v2800, %v2801
        %v2803 = vrot.slane %v2680, 5
        %v2804 = vrot.slane %v2803, 4
        %v2805 = vrot.slane %v1362, 5
        %v2806 = vsel %vm2746, %v2804, %v2805
        %v2807 = vrot.slane %v2805, 4
        %v2808 = vrot.slane %v1363, 5
        %v2809 = vsel %vm2746, %v2807, %v2808
        %v2810 = vrot.slane %v2681, 5
        %v2811 = vrot.slane %v2810, 4
        %v2812 = vrot.slane %v1365, 5
        %v2813 = vsel %vm2746, %v2811, %v2812
        %v2814 = vrot.slane %v2812, 4
        %v2815 = vrot.slane %v1366, 5
        %v2816 = vsel %vm2746, %v2814, %v2815
        %v2817 = vrot.slane %v2682, 5
        %v2818 = vrot.slane %v2817, 4
        %v2819 = vrot.slane %v1368, 5
        %v2820 = vsel %vm2746, %v2818, %v2819
        %v2821 = vrot.slane %v2819, 4
        %v2822 = vrot.slane %v1369, 5
        %v2823 = vsel %vm2746, %v2821, %v2822
        %v2824 = vrot.slane %v2683, 5
        %v2825 = vrot.slane %v2824, 4
        %v2826 = vrot.slane %v1371, 5
        %v2827 = vsel %vm2746, %v2825, %v2826
        %v2828 = vrot.slane %v2826, 4
        %v2829 = vrot.slane %v1372, 5
        %v2830 = vsel %vm2746, %v2828, %v2829
        %v2831 = vrot.slane %v2684, 5
        %v2832 = vrot.slane %v2831, 4
        %v2833 = vrot.slane %v1374, 5
        %v2834 = vsel %vm2746, %v2832, %v2833
        %v2835 = vrot.slane %v2833, 4
        %v2836 = vrot.slane %v1375, 5
        %v2837 = vsel %vm2746, %v2835, %v2836
        %v2838 = vrot.slane %v2685, 5
        %v2839 = vrot.slane %v2838, 4
        %v2840 = vrot.slane %v1377, 5
        %v2841 = vsel %vm2746, %v2839, %v2840
        %v2842 = vrot.slane %v2840, 4
        %v2843 = vrot.slane %v1378, 5
        %v2844 = vsel %vm2746, %v2842, %v2843
        %v2845 = vrot.slane %v2686, 5
        %v2846 = vrot.slane %v2845, 4
        %v2847 = vrot.slane %v1380, 5
        %v2848 = vsel %vm2746, %v2846, %v2847
        %v2849 = vrot.slane %v2847, 4
        %v2850 = vrot.slane %v1381, 5
        %v2851 = vsel %vm2746, %v2849, %v2850
        %v2852 = vrot.slane %v2687, 5
        %v2853 = vrot.slane %v2852, 4
        %v2854 = vrot.slane %v1383, 5
        %v2855 = vsel %vm2746, %v2853, %v2854
        %v2856 = vrot.slane %v2854, 4
        %v2857 = vrot.slane %v1384, 5
        %v2858 = vsel %vm2746, %v2856, %v2857
        %v2859 = vrot.slane %v2688, 5
        %v2860 = vrot.slane %v2859, 4
        %v2861 = vrot.slane %v1386, 5
        %v2862 = vsel %vm2746, %v2860, %v2861
        %v2863 = vrot.slane %v2861, 4
        %v2864 = vrot.slane %v1387, 5
        %v2865 = vsel %vm2746, %v2863, %v2864
        %v2866 = vrot.slane %v2689, 5
        %v2867 = vrot.slane %v2866, 4
        %v2868 = vrot.slane %v1389, 5
        %v2869 = vsel %vm2746, %v2867, %v2868
        %v2870 = vrot.slane %v2868, 4
        %v2871 = vrot.slane %v1390, 5
        %v2872 = vsel %vm2746, %v2870, %v2871
        %s2873 = scalar_lea.vmem %s1, 128
        %v2874 = vld [vmem:[%s2873] sm:$0xf]
        %v2875 = vld [vmem:[%s2873 + $0x4] sm:$0xf]
        %v2876 = vld [vmem:[%s2873 + $0x8] sm:$0xf]
        %v2877 = vld [vmem:[%s2873 + $0xc] sm:$0xf]
        %v2878 = vld [vmem:[%s2873 + $0x10] sm:$0xf]
        %v2879 = vld [vmem:[%s2873 + $0x14] sm:$0xf]
        %v2880 = vld [vmem:[%s2873 + $0x18] sm:$0xf]
        %v2881 = vld [vmem:[%s2873 + $0x1c] sm:$0xf]
        %v2882 = vld [vmem:[%s2873 + $0x20] sm:$0xf]
        %v2883 = vld [vmem:[%s2873 + $0x24] sm:$0xf]
        %v2884 = vld [vmem:[%s2873 + $0x28] sm:$0xf]
        %v2885 = vld [vmem:[%s2873 + $0x2c] sm:$0xf]
        %v2886 = vld [vmem:[%s2873 + $0x30] sm:$0xf]
        %v2887 = vld [vmem:[%s2873 + $0x34] sm:$0xf]
        %v2888 = vld [vmem:[%s2873 + $0x38] sm:$0xf]
        %v2889 = vld [vmem:[%s2873 + $0x3c] sm:$0xf]
        %v2890 = vunpack.c.l.b16 %v2750
        %v2891 = vunpack.c.l.b16 %v2753
        %v2892 = vunpack.c.l.b16 %v2757
        %v2893 = vunpack.c.l.b16 %v2760
        %v2894 = vunpack.c.l.b16 %v2764
        %v2895 = vunpack.c.l.b16 %v2767
        %v2896 = vunpack.c.l.b16 %v2771
        %v2897 = vunpack.c.l.b16 %v2774
        %v2898 = vunpack.c.l.b16 %v2778
        %v2899 = vunpack.c.l.b16 %v2781
        %v2900 = vunpack.c.l.b16 %v2785
        %v2901 = vunpack.c.l.b16 %v2788
        %v2902 = vunpack.c.l.b16 %v2792
        %v2903 = vunpack.c.l.b16 %v2795
        %v2904 = vunpack.c.l.b16 %v2799
        %v2905 = vunpack.c.l.b16 %v2802
        %v2906 = vunpack.c.l.b16 %v2806
        %v2907 = vunpack.c.l.b16 %v2809
        %v2908 = vunpack.c.l.b16 %v2813
        %v2909 = vunpack.c.l.b16 %v2816
        %v2910 = vunpack.c.l.b16 %v2820
        %v2911 = vunpack.c.l.b16 %v2823
        %v2912 = vunpack.c.l.b16 %v2827
        %v2913 = vunpack.c.l.b16 %v2830
        %v2914 = vunpack.c.l.b16 %v2834
        %v2915 = vunpack.c.l.b16 %v2837
        %v2916 = vunpack.c.l.b16 %v2841
        %v2917 = vunpack.c.l.b16 %v2844
        %v2918 = vunpack.c.l.b16 %v2848
        %v2919 = vunpack.c.l.b16 %v2851
        %v2920 = vunpack.c.l.b16 %v2855
        %v2921 = vunpack.c.l.b16 %v2858
        %v2922 = vpack.c.b16 %v2891, %v2890
        %v2923 = vpack.c.b16 %v2893, %v2892
        %v2924 = vpack.c.b16 %v2895, %v2894
        %v2925 = vpack.c.b16 %v2897, %v2896
        %v2926 = vpack.c.b16 %v2899, %v2898
        %v2927 = vpack.c.b16 %v2901, %v2900
        %v2928 = vpack.c.b16 %v2903, %v2902
        %v2929 = vpack.c.b16 %v2905, %v2904
        %v2930 = vpack.c.b16 %v2907, %v2906
        %v2931 = vpack.c.b16 %v2909, %v2908
        %v2932 = vpack.c.b16 %v2911, %v2910
        %v2933 = vpack.c.b16 %v2913, %v2912
        %v2934 = vpack.c.b16 %v2915, %v2914
        %v2935 = vpack.c.b16 %v2917, %v2916
        %v2936 = vpack.c.b16 %v2919, %v2918
        %v2937 = vpack.c.b16 %v2921, %v2920
        %v2970 = vunpack.c.l.b16 %v2874
        %v2971 = vunpack.c.l.b16 %v2875
        %v2972 = vunpack.c.l.b16 %v2876
        %v2973 = vunpack.c.l.b16 %v2877
        %v2974 = vunpack.c.l.b16 %v2878
        %v2975 = vunpack.c.l.b16 %v2879
        %v2976 = vunpack.c.l.b16 %v2880
        %v2977 = vunpack.c.l.b16 %v2881
        %v2978 = vunpack.c.l.b16 %v2882
        %v2979 = vunpack.c.l.b16 %v2883
        %v2980 = vunpack.c.l.b16 %v2884
        %v2981 = vunpack.c.l.b16 %v2885
        %v2982 = vunpack.c.l.b16 %v2886
        %v2983 = vunpack.c.l.b16 %v2887
        %v2984 = vunpack.c.l.b16 %v2888
        %v2985 = vunpack.c.l.b16 %v2889
        %v2986 = vpack.c.b16 %v2971, %v2970
        %v2987 = vpack.c.b16 %v2973, %v2972
        %v2988 = vpack.c.b16 %v2975, %v2974
        %v2989 = vpack.c.b16 %v2977, %v2976
        %v2990 = vpack.c.b16 %v2979, %v2978
        %v2991 = vpack.c.b16 %v2981, %v2980
        %v2992 = vpack.c.b16 %v2983, %v2982
        %v2993 = vpack.c.b16 %v2985, %v2984
        %3002 = vmatprep.subr.bf16.mxu0 0
        %3003 = vmatpush1.bf16.msra.mxu0 %v2993
        %3004 = vmatprep.subr.bf16.mxu0 0
        %3005 = vmatpush1.bf16.msra.mxu0 %v2992
        %3006 = vmatprep.subr.bf16.mxu0 0
        %3007 = vmatpush1.bf16.msra.mxu0 %v2991
        %3008 = vmatprep.subr.bf16.mxu0 0
        %3009 = vmatpush1.bf16.msra.mxu0 %v2990
        %3010 = vmatprep.subr.bf16.mxu0 0
        %3011 = vmatpush1.bf16.msra.mxu0 %v2989
        %3012 = vmatprep.subr.bf16.mxu0 0
        %3013 = vmatpush1.bf16.msra.mxu0 %v2988
        %3014 = vmatprep.subr.bf16.mxu0 0
        %3015 = vmatpush1.bf16.msra.mxu0 %v2987
        %3016 = vmatprep.subr.bf16.mxu0 0
        %3017 = vmatpush1.bf16.msra.mxu0 %v2986
        %3018 = vmatprep.subr.bf16.mxu0 0
        %3019 = vmatpush2.bf16.msra.mxu0 0
        %3020 = vmatprep.subr.bf16.mxu0 0
        %3021 = vmatpush2.bf16.msra.mxu0 0
        %3022 = vmatprep.subr.bf16.mxu0 0
        %3023 = vmatpush2.bf16.msra.mxu0 0
        %3024 = vmatprep.subr.bf16.mxu0 0
        %3025 = vmatpush2.bf16.msra.mxu0 0
        %3026 = vmatprep.subr.bf16.mxu0 0
        %3027 = vmatpush2.bf16.msra.mxu0 0
        %3028 = vmatprep.subr.bf16.mxu0 0
        %3029 = vmatpush2.bf16.msra.mxu0 0
        %3030 = vmatprep.subr.bf16.mxu0 0
        %3031 = vmatpush2.bf16.msra.mxu0 0
        %3032 = vmatprep.subr.bf16.mxu0 0
        %3033 = vmatpush2.bf16.msra.mxu0 0
        %3034 = vmatprep.mubr.bf16.mxu0 0
        %3035 = vmatmul.mubr.bf16.gmra.mxu0 %v2922
        %v3036 = vpop.f32.mrf.mxu0
        %v3037 = vadd.f32 0.0, %v3036
        %v3038 = vpop.f32.mrf.mxu0
        %v3039 = vpop.f32.mrf.mxu0
        %v3040 = vadd.f32 0.0, %v3039
        %v3041 = vpop.f32.mrf.mxu0
        %3042 = vmatprep.mubr.bf16.mxu0 0
        %3043 = vmatmul.mubr.bf16.gmra.mxu0 %v2923
        %v3044 = vpop.f32.mrf.mxu0
        %v3045 = vadd.f32 0.0, %v3044
        %v3046 = vpop.f32.mrf.mxu0
        %v3047 = vpop.f32.mrf.mxu0
        %v3048 = vadd.f32 0.0, %v3047
        %v3049 = vpop.f32.mrf.mxu0
        %3050 = vmatprep.mubr.bf16.mxu0 0
        %3051 = vmatmul.mubr.bf16.gmra.mxu0 %v2924
        %v3052 = vpop.f32.mrf.mxu0
        %v3053 = vadd.f32 0.0, %v3052
        %v3054 = vpop.f32.mrf.mxu0
        %v3055 = vpop.f32.mrf.mxu0
        %v3056 = vadd.f32 0.0, %v3055
        %v3057 = vpop.f32.mrf.mxu0
        %3058 = vmatprep.mubr.bf16.mxu0 0
        %3059 = vmatmul.mubr.bf16.gmra.mxu0 %v2925
        %v3060 = vpop.f32.mrf.mxu0
        %v3061 = vadd.f32 0.0, %v3060
        %v3062 = vpop.f32.mrf.mxu0
        %v3063 = vpop.f32.mrf.mxu0
        %v3064 = vadd.f32 0.0, %v3063
        %v3065 = vpop.f32.mrf.mxu0
        %3066 = vmatprep.mubr.bf16.mxu0 0
        %3067 = vmatmul.mubr.bf16.gmra.mxu0 %v2926
        %v3068 = vpop.f32.mrf.mxu0
        %v3069 = vadd.f32 0.0, %v3068
        %v3070 = vpop.f32.mrf.mxu0
        %v3071 = vpop.f32.mrf.mxu0
        %v3072 = vadd.f32 0.0, %v3071
        %v3073 = vpop.f32.mrf.mxu0
        %3074 = vmatprep.mubr.bf16.mxu0 0
        %3075 = vmatmul.mubr.bf16.gmra.mxu0 %v2927
        %v3076 = vpop.f32.mrf.mxu0
        %v3077 = vadd.f32 0.0, %v3076
        %v3078 = vpop.f32.mrf.mxu0
        %v3079 = vpop.f32.mrf.mxu0
        %v3080 = vadd.f32 0.0, %v3079
        %v3081 = vpop.f32.mrf.mxu0
        %3082 = vmatprep.mubr.bf16.mxu0 0
        %3083 = vmatmul.mubr.bf16.gmra.mxu0 %v2928
        %v3084 = vpop.f32.mrf.mxu0
        %v3085 = vadd.f32 0.0, %v3084
        %v3086 = vpop.f32.mrf.mxu0
        %v3087 = vpop.f32.mrf.mxu0
        %v3088 = vadd.f32 0.0, %v3087
        %v3089 = vpop.f32.mrf.mxu0
        %3090 = vmatprep.mubr.bf16.mxu0 0
        %3091 = vmatmul.mubr.bf16.gmra.mxu0 %v2929
        %v3092 = vpop.f32.mrf.mxu0
        %v3093 = vadd.f32 0.0, %v3092
        %v3094 = vpop.f32.mrf.mxu0
        %v3095 = vpop.f32.mrf.mxu0
        %v3096 = vadd.f32 0.0, %v3095
        %v3097 = vpop.f32.mrf.mxu0
        %3098 = vmatprep.mubr.bf16.mxu0 0
        %3099 = vmatmul.mubr.bf16.gmra.mxu0 %v2930
        %v3100 = vpop.f32.mrf.mxu0
        %v3101 = vadd.f32 0.0, %v3100
        %v3102 = vpop.f32.mrf.mxu0
        %v3103 = vpop.f32.mrf.mxu0
        %v3104 = vadd.f32 0.0, %v3103
        %v3105 = vpop.f32.mrf.mxu0
        %3106 = vmatprep.mubr.bf16.mxu0 0
        %3107 = vmatmul.mubr.bf16.gmra.mxu0 %v2931
        %v3108 = vpop.f32.mrf.mxu0
        %v3109 = vadd.f32 0.0, %v3108
        %v3110 = vpop.f32.mrf.mxu0
        %v3111 = vpop.f32.mrf.mxu0
        %v3112 = vadd.f32 0.0, %v3111
        %v3113 = vpop.f32.mrf.mxu0
        %3114 = vmatprep.mubr.bf16.mxu0 0
        %3115 = vmatmul.mubr.bf16.gmra.mxu0 %v2932
        %v3116 = vpop.f32.mrf.mxu0
        %v3117 = vadd.f32 0.0, %v3116
        %v3118 = vpop.f32.mrf.mxu0
        %v3119 = vpop.f32.mrf.mxu0
        %v3120 = vadd.f32 0.0, %v3119
        %v3121 = vpop.f32.mrf.mxu0
        %3122 = vmatprep.mubr.bf16.mxu0 0
        %3123 = vmatmul.mubr.bf16.gmra.mxu0 %v2933
        %v3124 = vpop.f32.mrf.mxu0
        %v3125 = vadd.f32 0.0, %v3124
        %v3126 = vpop.f32.mrf.mxu0
        %v3127 = vpop.f32.mrf.mxu0
        %v3128 = vadd.f32 0.0, %v3127
        %v3129 = vpop.f32.mrf.mxu0
        %3130 = vmatprep.mubr.bf16.mxu0 0
        %3131 = vmatmul.mubr.bf16.gmra.mxu0 %v2934
        %v3132 = vpop.f32.mrf.mxu0
        %v3133 = vadd.f32 0.0, %v3132
        %v3134 = vpop.f32.mrf.mxu0
        %v3135 = vpop.f32.mrf.mxu0
        %v3136 = vadd.f32 0.0, %v3135
        %v3137 = vpop.f32.mrf.mxu0
        %3138 = vmatprep.mubr.bf16.mxu0 0
        %3139 = vmatmul.mubr.bf16.gmra.mxu0 %v2935
        %v3140 = vpop.f32.mrf.mxu0
        %v3141 = vadd.f32 0.0, %v3140
        %v3142 = vpop.f32.mrf.mxu0
        %v3143 = vpop.f32.mrf.mxu0
        %v3144 = vadd.f32 0.0, %v3143
        %v3145 = vpop.f32.mrf.mxu0
        %3146 = vmatprep.mubr.bf16.mxu0 0
        %3147 = vmatmul.mubr.bf16.gmra.mxu0 %v2936
        %v3148 = vpop.f32.mrf.mxu0
        %v3149 = vadd.f32 0.0, %v3148
        %v3150 = vpop.f32.mrf.mxu0
        %v3151 = vpop.f32.mrf.mxu0
        %v3152 = vadd.f32 0.0, %v3151
        %v3153 = vpop.f32.mrf.mxu0
        %3154 = vmatprep.mubr.bf16.mxu0 0
        %3155 = vmatmul.mubr.bf16.gmra.mxu0 %v2937
        %v3156 = vpop.f32.mrf.mxu0
        %v3157 = vadd.f32 0.0, %v3156
        %v3158 = vpop.f32.mrf.mxu0
        %v3159 = vpop.f32.mrf.mxu0
        %v3160 = vadd.f32 0.0, %v3159
        %v3161 = vpop.f32.mrf.mxu0
        %3162 = vdwg.mxu0
        %v3163 = vadd.f32 %v2640, %v3037
        %v3164 = vadd.f32 %v2641, %v3040
        %v3165 = vadd.f32 %v2642, %v3045
        %v3166 = vadd.f32 %v2643, %v3048
        %v3167 = vadd.f32 %v2644, %v3053
        %v3168 = vadd.f32 %v2645, %v3056
        %v3169 = vadd.f32 %v2646, %v3061
        %v3170 = vadd.f32 %v2647, %v3064
        %v3171 = vadd.f32 %v2648, %v3069
        %v3172 = vadd.f32 %v2649, %v3072
        %v3173 = vadd.f32 %v2650, %v3077
        %v3174 = vadd.f32 %v2651, %v3080
        %v3175 = vadd.f32 %v2652, %v3085
        %v3176 = vadd.f32 %v2653, %v3088
        %v3177 = vadd.f32 %v2654, %v3093
        %v3178 = vadd.f32 %v2655, %v3096
        %v3179 = vadd.f32 %v2656, %v3101
        %v3180 = vadd.f32 %v2657, %v3104
        %v3181 = vadd.f32 %v2658, %v3109
        %v3182 = vadd.f32 %v2659, %v3112
        %v3183 = vadd.f32 %v2660, %v3117
        %v3184 = vadd.f32 %v2661, %v3120
        %v3185 = vadd.f32 %v2662, %v3125
        %v3186 = vadd.f32 %v2663, %v3128
        %v3187 = vadd.f32 %v2664, %v3133
        %v3188 = vadd.f32 %v2665, %v3136
        %v3189 = vadd.f32 %v2666, %v3141
        %v3190 = vadd.f32 %v2667, %v3144
        %v3191 = vadd.f32 %v2668, %v3149
        %v3192 = vadd.f32 %v2669, %v3152
        %v3193 = vadd.f32 %v2670, %v3157
        %v3194 = vadd.f32 %v2671, %v3160
        %s3195 = scalar_lea.vmem %s1, 320
        %v3196 = vld [vmem:[%s3195] sm:$0xf]
        %v3197 = vld [vmem:[%s3195 + $0x4] sm:$0xf]
        %v3198 = vld [vmem:[%s3195 + $0x8] sm:$0xf]
        %v3199 = vld [vmem:[%s3195 + $0xc] sm:$0xf]
        %v3200 = vld [vmem:[%s3195 + $0x10] sm:$0xf]
        %v3201 = vld [vmem:[%s3195 + $0x14] sm:$0xf]
        %v3202 = vld [vmem:[%s3195 + $0x18] sm:$0xf]
        %v3203 = vld [vmem:[%s3195 + $0x1c] sm:$0xf]
        %v3204 = vld [vmem:[%s3195 + $0x20] sm:$0xf]
        %v3205 = vld [vmem:[%s3195 + $0x24] sm:$0xf]
        %v3206 = vld [vmem:[%s3195 + $0x28] sm:$0xf]
        %v3207 = vld [vmem:[%s3195 + $0x2c] sm:$0xf]
        %v3208 = vld [vmem:[%s3195 + $0x30] sm:$0xf]
        %v3209 = vld [vmem:[%s3195 + $0x34] sm:$0xf]
        %v3210 = vld [vmem:[%s3195 + $0x38] sm:$0xf]
        %v3211 = vld [vmem:[%s3195 + $0x3c] sm:$0xf]
        %v3212 = vunpack.c.l.b16 %v2862
        %v3213 = vunpack.c.l.b16 %v2865
        %v3214 = vpack.c.b16 %v3213, %v3212
        %v3232 = vunpack.c.l.b16 %v3196
        %v3233 = vunpack.c.l.b16 %v3197
        %v3234 = vunpack.c.l.b16 %v3198
        %v3235 = vunpack.c.l.b16 %v3199
        %v3236 = vunpack.c.l.b16 %v3200
        %v3237 = vunpack.c.l.b16 %v3201
        %v3238 = vunpack.c.l.b16 %v3202
        %v3239 = vunpack.c.l.b16 %v3203
        %v3240 = vunpack.c.l.b16 %v3204
        %v3241 = vunpack.c.l.b16 %v3205
        %v3242 = vunpack.c.l.b16 %v3206
        %v3243 = vunpack.c.l.b16 %v3207
        %v3244 = vunpack.c.l.b16 %v3208
        %v3245 = vunpack.c.l.b16 %v3209
        %v3246 = vunpack.c.l.b16 %v3210
        %v3247 = vunpack.c.l.b16 %v3211
        %v3248 = vpack.c.b16 %v3233, %v3232
        %v3249 = vpack.c.b16 %v3235, %v3234
        %v3250 = vpack.c.b16 %v3237, %v3236
        %v3251 = vpack.c.b16 %v3239, %v3238
        %v3252 = vpack.c.b16 %v3241, %v3240
        %v3253 = vpack.c.b16 %v3243, %v3242
        %v3254 = vpack.c.b16 %v3245, %v3244
        %v3255 = vpack.c.b16 %v3247, %v3246
        %3264 = vmatprep.subr.bf16.mxu0 0
        %3265 = vmatpush1.bf16.msra.mxu0 %v3255
        %3266 = vmatprep.subr.bf16.mxu0 0
        %3267 = vmatpush1.bf16.msra.mxu0 %v3254
        %3268 = vmatprep.subr.bf16.mxu0 0
        %3269 = vmatpush1.bf16.msra.mxu0 %v3253
        %3270 = vmatprep.subr.bf16.mxu0 0
        %3271 = vmatpush1.bf16.msra.mxu0 %v3252
        %3272 = vmatprep.subr.bf16.mxu0 0
        %3273 = vmatpush1.bf16.msra.mxu0 %v3251
        %3274 = vmatprep.subr.bf16.mxu0 0
        %3275 = vmatpush1.bf16.msra.mxu0 %v3250
        %3276 = vmatprep.subr.bf16.mxu0 0
        %3277 = vmatpush1.bf16.msra.mxu0 %v3249
        %3278 = vmatprep.subr.bf16.mxu0 0
        %3279 = vmatpush1.bf16.msra.mxu0 %v3248
        %3280 = vmatprep.subr.bf16.mxu0 0
        %3281 = vmatpush2.bf16.msra.mxu0 0
        %3282 = vmatprep.subr.bf16.mxu0 0
        %3283 = vmatpush2.bf16.msra.mxu0 0
        %3284 = vmatprep.subr.bf16.mxu0 0
        %3285 = vmatpush2.bf16.msra.mxu0 0
        %3286 = vmatprep.subr.bf16.mxu0 0
        %3287 = vmatpush2.bf16.msra.mxu0 0
        %3288 = vmatprep.subr.bf16.mxu0 0
        %3289 = vmatpush2.bf16.msra.mxu0 0
        %3290 = vmatprep.subr.bf16.mxu0 0
        %3291 = vmatpush2.bf16.msra.mxu0 0
        %3292 = vmatprep.subr.bf16.mxu0 0
        %3293 = vmatpush2.bf16.msra.mxu0 0
        %3294 = vmatprep.subr.bf16.mxu0 0
        %3295 = vmatpush2.bf16.msra.mxu0 0
        %3296 = vmatprep.mubr.bf16.mxu0 0
        %3297 = vmatmul.mubr.bf16.gmra.mxu0 %v2923
        %v3298 = vpop.f32.mrf.mxu0
        %v3299 = vadd.f32 0.0, %v3298
        %v3300 = vpop.f32.mrf.mxu0
        %v3301 = vpop.f32.mrf.mxu0
        %v3302 = vadd.f32 0.0, %v3301
        %v3303 = vpop.f32.mrf.mxu0
        %3304 = vmatprep.mubr.bf16.mxu0 0
        %3305 = vmatmul.mubr.bf16.gmra.mxu0 %v2924
        %v3306 = vpop.f32.mrf.mxu0
        %v3307 = vadd.f32 0.0, %v3306
        %v3308 = vpop.f32.mrf.mxu0
        %v3309 = vpop.f32.mrf.mxu0
        %v3310 = vadd.f32 0.0, %v3309
        %v3311 = vpop.f32.mrf.mxu0
        %3312 = vmatprep.mubr.bf16.mxu0 0
        %3313 = vmatmul.mubr.bf16.gmra.mxu0 %v2925
        %v3314 = vpop.f32.mrf.mxu0
        %v3315 = vadd.f32 0.0, %v3314
        %v3316 = vpop.f32.mrf.mxu0
        %v3317 = vpop.f32.mrf.mxu0
        %v3318 = vadd.f32 0.0, %v3317
        %v3319 = vpop.f32.mrf.mxu0
        %3320 = vmatprep.mubr.bf16.mxu0 0
        %3321 = vmatmul.mubr.bf16.gmra.mxu0 %v2926
        %v3322 = vpop.f32.mrf.mxu0
        %v3323 = vadd.f32 0.0, %v3322
        %v3324 = vpop.f32.mrf.mxu0
        %v3325 = vpop.f32.mrf.mxu0
        %v3326 = vadd.f32 0.0, %v3325
        %v3327 = vpop.f32.mrf.mxu0
        %3328 = vmatprep.mubr.bf16.mxu0 0
        %3329 = vmatmul.mubr.bf16.gmra.mxu0 %v2927
        %v3330 = vpop.f32.mrf.mxu0
        %v3331 = vadd.f32 0.0, %v3330
        %v3332 = vpop.f32.mrf.mxu0
        %v3333 = vpop.f32.mrf.mxu0
        %v3334 = vadd.f32 0.0, %v3333
        %v3335 = vpop.f32.mrf.mxu0
        %3336 = vmatprep.mubr.bf16.mxu0 0
        %3337 = vmatmul.mubr.bf16.gmra.mxu0 %v2928
        %v3338 = vpop.f32.mrf.mxu0
        %v3339 = vadd.f32 0.0, %v3338
        %v3340 = vpop.f32.mrf.mxu0
        %v3341 = vpop.f32.mrf.mxu0
        %v3342 = vadd.f32 0.0, %v3341
        %v3343 = vpop.f32.mrf.mxu0
        %3344 = vmatprep.mubr.bf16.mxu0 0
        %3345 = vmatmul.mubr.bf16.gmra.mxu0 %v2929
        %v3346 = vpop.f32.mrf.mxu0
        %v3347 = vadd.f32 0.0, %v3346
        %v3348 = vpop.f32.mrf.mxu0
        %v3349 = vpop.f32.mrf.mxu0
        %v3350 = vadd.f32 0.0, %v3349
        %v3351 = vpop.f32.mrf.mxu0
        %3352 = vmatprep.mubr.bf16.mxu0 0
        %3353 = vmatmul.mubr.bf16.gmra.mxu0 %v2930
        %v3354 = vpop.f32.mrf.mxu0
        %v3355 = vadd.f32 0.0, %v3354
        %v3356 = vpop.f32.mrf.mxu0
        %v3357 = vpop.f32.mrf.mxu0
        %v3358 = vadd.f32 0.0, %v3357
        %v3359 = vpop.f32.mrf.mxu0
        %3360 = vmatprep.mubr.bf16.mxu0 0
        %3361 = vmatmul.mubr.bf16.gmra.mxu0 %v2931
        %v3362 = vpop.f32.mrf.mxu0
        %v3363 = vadd.f32 0.0, %v3362
        %v3364 = vpop.f32.mrf.mxu0
        %v3365 = vpop.f32.mrf.mxu0
        %v3366 = vadd.f32 0.0, %v3365
        %v3367 = vpop.f32.mrf.mxu0
        %3368 = vmatprep.mubr.bf16.mxu0 0
        %3369 = vmatmul.mubr.bf16.gmra.mxu0 %v2932
        %v3370 = vpop.f32.mrf.mxu0
        %v3371 = vadd.f32 0.0, %v3370
        %v3372 = vpop.f32.mrf.mxu0
        %v3373 = vpop.f32.mrf.mxu0
        %v3374 = vadd.f32 0.0, %v3373
        %v3375 = vpop.f32.mrf.mxu0
        %3376 = vmatprep.mubr.bf16.mxu0 0
        %3377 = vmatmul.mubr.bf16.gmra.mxu0 %v2933
        %v3378 = vpop.f32.mrf.mxu0
        %v3379 = vadd.f32 0.0, %v3378
        %v3380 = vpop.f32.mrf.mxu0
        %v3381 = vpop.f32.mrf.mxu0
        %v3382 = vadd.f32 0.0, %v3381
        %v3383 = vpop.f32.mrf.mxu0
        %3384 = vmatprep.mubr.bf16.mxu0 0
        %3385 = vmatmul.mubr.bf16.gmra.mxu0 %v2934
        %v3386 = vpop.f32.mrf.mxu0
        %v3387 = vadd.f32 0.0, %v3386
        %v3388 = vpop.f32.mrf.mxu0
        %v3389 = vpop.f32.mrf.mxu0
        %v3390 = vadd.f32 0.0, %v3389
        %v3391 = vpop.f32.mrf.mxu0
        %3392 = vmatprep.mubr.bf16.mxu0 0
        %3393 = vmatmul.mubr.bf16.gmra.mxu0 %v2935
        %v3394 = vpop.f32.mrf.mxu0
        %v3395 = vadd.f32 0.0, %v3394
        %v3396 = vpop.f32.mrf.mxu0
        %v3397 = vpop.f32.mrf.mxu0
        %v3398 = vadd.f32 0.0, %v3397
        %v3399 = vpop.f32.mrf.mxu0
        %3400 = vmatprep.mubr.bf16.mxu0 0
        %3401 = vmatmul.mubr.bf16.gmra.mxu0 %v2936
        %v3402 = vpop.f32.mrf.mxu0
        %v3403 = vadd.f32 0.0, %v3402
        %v3404 = vpop.f32.mrf.mxu0
        %v3405 = vpop.f32.mrf.mxu0
        %v3406 = vadd.f32 0.0, %v3405
        %v3407 = vpop.f32.mrf.mxu0
        %3408 = vmatprep.mubr.bf16.mxu0 0
        %3409 = vmatmul.mubr.bf16.gmra.mxu0 %v2937
        %v3410 = vpop.f32.mrf.mxu0
        %v3411 = vadd.f32 0.0, %v3410
        %v3412 = vpop.f32.mrf.mxu0
        %v3413 = vpop.f32.mrf.mxu0
        %v3414 = vadd.f32 0.0, %v3413
        %v3415 = vpop.f32.mrf.mxu0
        %3416 = vmatprep.mubr.bf16.mxu0 0
        %3417 = vmatmul.mubr.bf16.gmra.mxu0 %v3214
        %v3418 = vpop.f32.mrf.mxu0
        %v3419 = vadd.f32 0.0, %v3418
        %v3420 = vpop.f32.mrf.mxu0
        %v3421 = vpop.f32.mrf.mxu0
        %v3422 = vadd.f32 0.0, %v3421
        %v3423 = vpop.f32.mrf.mxu0
        %3424 = vdwg.mxu0
        %v3425 = vadd.f32 %v3163, %v3299
        %v3426 = vadd.f32 %v3164, %v3302
        %v3427 = vadd.f32 %v3165, %v3307
        %v3428 = vadd.f32 %v3166, %v3310
        %v3429 = vadd.f32 %v3167, %v3315
        %v3430 = vadd.f32 %v3168, %v3318
        %v3431 = vadd.f32 %v3169, %v3323
        %v3432 = vadd.f32 %v3170, %v3326
        %v3433 = vadd.f32 %v3171, %v3331
        %v3434 = vadd.f32 %v3172, %v3334
        %v3435 = vadd.f32 %v3173, %v3339
        %v3436 = vadd.f32 %v3174, %v3342
        %v3437 = vadd.f32 %v3175, %v3347
        %v3438 = vadd.f32 %v3176, %v3350
        %v3439 = vadd.f32 %v3177, %v3355
        %v3440 = vadd.f32 %v3178, %v3358
        %v3441 = vadd.f32 %v3179, %v3363
        %v3442 = vadd.f32 %v3180, %v3366
        %v3443 = vadd.f32 %v3181, %v3371
        %v3444 = vadd.f32 %v3182, %v3374
        %v3445 = vadd.f32 %v3183, %v3379
        %v3446 = vadd.f32 %v3184, %v3382
        %v3447 = vadd.f32 %v3185, %v3387
        %v3448 = vadd.f32 %v3186, %v3390
        %v3449 = vadd.f32 %v3187, %v3395
        %v3450 = vadd.f32 %v3188, %v3398
        %v3451 = vadd.f32 %v3189, %v3403
        %v3452 = vadd.f32 %v3190, %v3406
        %v3453 = vadd.f32 %v3191, %v3411
        %v3454 = vadd.f32 %v3192, %v3414
        %v3455 = vadd.f32 %v3193, %v3419
        %v3456 = vadd.f32 %v3194, %v3422
        %s3457 = scalar_lea.vmem %s1, 512
        %v3458 = vld [vmem:[%s3457] sm:$0xf]
        %v3459 = vld [vmem:[%s3457 + $0x4] sm:$0xf]
        %v3460 = vld [vmem:[%s3457 + $0x8] sm:$0xf]
        %v3461 = vld [vmem:[%s3457 + $0xc] sm:$0xf]
        %v3462 = vld [vmem:[%s3457 + $0x10] sm:$0xf]
        %v3463 = vld [vmem:[%s3457 + $0x14] sm:$0xf]
        %v3464 = vld [vmem:[%s3457 + $0x18] sm:$0xf]
        %v3465 = vld [vmem:[%s3457 + $0x1c] sm:$0xf]
        %v3466 = vld [vmem:[%s3457 + $0x20] sm:$0xf]
        %v3467 = vld [vmem:[%s3457 + $0x24] sm:$0xf]
        %v3468 = vld [vmem:[%s3457 + $0x28] sm:$0xf]
        %v3469 = vld [vmem:[%s3457 + $0x2c] sm:$0xf]
        %v3470 = vld [vmem:[%s3457 + $0x30] sm:$0xf]
        %v3471 = vld [vmem:[%s3457 + $0x34] sm:$0xf]
        %v3472 = vld [vmem:[%s3457 + $0x38] sm:$0xf]
        %v3473 = vld [vmem:[%s3457 + $0x3c] sm:$0xf]
        %v3474 = vunpack.c.l.b16 %v2869
        %v3475 = vunpack.c.l.b16 %v2872
        %v3476 = vpack.c.b16 %v3475, %v3474
        %v3494 = vunpack.c.l.b16 %v3458
        %v3495 = vunpack.c.l.b16 %v3459
        %v3496 = vunpack.c.l.b16 %v3460
        %v3497 = vunpack.c.l.b16 %v3461
        %v3498 = vunpack.c.l.b16 %v3462
        %v3499 = vunpack.c.l.b16 %v3463
        %v3500 = vunpack.c.l.b16 %v3464
        %v3501 = vunpack.c.l.b16 %v3465
        %v3502 = vunpack.c.l.b16 %v3466
        %v3503 = vunpack.c.l.b16 %v3467
        %v3504 = vunpack.c.l.b16 %v3468
        %v3505 = vunpack.c.l.b16 %v3469
        %v3506 = vunpack.c.l.b16 %v3470
        %v3507 = vunpack.c.l.b16 %v3471
        %v3508 = vunpack.c.l.b16 %v3472
        %v3509 = vunpack.c.l.b16 %v3473
        %v3510 = vpack.c.b16 %v3495, %v3494
        %v3511 = vpack.c.b16 %v3497, %v3496
        %v3512 = vpack.c.b16 %v3499, %v3498
        %v3513 = vpack.c.b16 %v3501, %v3500
        %v3514 = vpack.c.b16 %v3503, %v3502
        %v3515 = vpack.c.b16 %v3505, %v3504
        %v3516 = vpack.c.b16 %v3507, %v3506
        %v3517 = vpack.c.b16 %v3509, %v3508
        %3526 = vmatprep.subr.bf16.mxu0 0
        %3527 = vmatpush1.bf16.msra.mxu0 %v3517
        %3528 = vmatprep.subr.bf16.mxu0 0
        %3529 = vmatpush1.bf16.msra.mxu0 %v3516
        %3530 = vmatprep.subr.bf16.mxu0 0
        %3531 = vmatpush1.bf16.msra.mxu0 %v3515
        %3532 = vmatprep.subr.bf16.mxu0 0
        %3533 = vmatpush1.bf16.msra.mxu0 %v3514
        %3534 = vmatprep.subr.bf16.mxu0 0
        %3535 = vmatpush1.bf16.msra.mxu0 %v3513
        %3536 = vmatprep.subr.bf16.mxu0 0
        %3537 = vmatpush1.bf16.msra.mxu0 %v3512
        %3538 = vmatprep.subr.bf16.mxu0 0
        %3539 = vmatpush1.bf16.msra.mxu0 %v3511
        %3540 = vmatprep.subr.bf16.mxu0 0
        %3541 = vmatpush1.bf16.msra.mxu0 %v3510
        %3542 = vmatprep.subr.bf16.mxu0 0
        %3543 = vmatpush2.bf16.msra.mxu0 0
        %3544 = vmatprep.subr.bf16.mxu0 0
        %3545 = vmatpush2.bf16.msra.mxu0 0
        %3546 = vmatprep.subr.bf16.mxu0 0
        %3547 = vmatpush2.bf16.msra.mxu0 0
        %3548 = vmatprep.subr.bf16.mxu0 0
        %3549 = vmatpush2.bf16.msra.mxu0 0
        %3550 = vmatprep.subr.bf16.mxu0 0
        %3551 = vmatpush2.bf16.msra.mxu0 0
        %3552 = vmatprep.subr.bf16.mxu0 0
        %3553 = vmatpush2.bf16.msra.mxu0 0
        %3554 = vmatprep.subr.bf16.mxu0 0
        %3555 = vmatpush2.bf16.msra.mxu0 0
        %3556 = vmatprep.subr.bf16.mxu0 0
        %3557 = vmatpush2.bf16.msra.mxu0 0
        %3558 = vmatprep.mubr.bf16.mxu0 0
        %3559 = vmatmul.mubr.bf16.gmra.mxu0 %v2924
        %v3560 = vpop.f32.mrf.mxu0
        %v3561 = vadd.f32 0.0, %v3560
        %v3562 = vpop.f32.mrf.mxu0
        %v3563 = vpop.f32.mrf.mxu0
        %v3564 = vadd.f32 0.0, %v3563
        %v3565 = vpop.f32.mrf.mxu0
        %3566 = vmatprep.mubr.bf16.mxu0 0
        %3567 = vmatmul.mubr.bf16.gmra.mxu0 %v2925
        %v3568 = vpop.f32.mrf.mxu0
        %v3569 = vadd.f32 0.0, %v3568
        %v3570 = vpop.f32.mrf.mxu0
        %v3571 = vpop.f32.mrf.mxu0
        %v3572 = vadd.f32 0.0, %v3571
        %v3573 = vpop.f32.mrf.mxu0
        %3574 = vmatprep.mubr.bf16.mxu0 0
        %3575 = vmatmul.mubr.bf16.gmra.mxu0 %v2926
        %v3576 = vpop.f32.mrf.mxu0
        %v3577 = vadd.f32 0.0, %v3576
        %v3578 = vpop.f32.mrf.mxu0
        %v3579 = vpop.f32.mrf.mxu0
        %v3580 = vadd.f32 0.0, %v3579
        %v3581 = vpop.f32.mrf.mxu0
        %3582 = vmatprep.mubr.bf16.mxu0 0
        %3583 = vmatmul.mubr.bf16.gmra.mxu0 %v2927
        %v3584 = vpop.f32.mrf.mxu0
        %v3585 = vadd.f32 0.0, %v3584
        %v3586 = vpop.f32.mrf.mxu0
        %v3587 = vpop.f32.mrf.mxu0
        %v3588 = vadd.f32 0.0, %v3587
        %v3589 = vpop.f32.mrf.mxu0
        %3590 = vmatprep.mubr.bf16.mxu0 0
        %3591 = vmatmul.mubr.bf16.gmra.mxu0 %v2928
        %v3592 = vpop.f32.mrf.mxu0
        %v3593 = vadd.f32 0.0, %v3592
        %v3594 = vpop.f32.mrf.mxu0
        %v3595 = vpop.f32.mrf.mxu0
        %v3596 = vadd.f32 0.0, %v3595
        %v3597 = vpop.f32.mrf.mxu0
        %3598 = vmatprep.mubr.bf16.mxu0 0
        %3599 = vmatmul.mubr.bf16.gmra.mxu0 %v2929
        %v3600 = vpop.f32.mrf.mxu0
        %v3601 = vadd.f32 0.0, %v3600
        %v3602 = vpop.f32.mrf.mxu0
        %v3603 = vpop.f32.mrf.mxu0
        %v3604 = vadd.f32 0.0, %v3603
        %v3605 = vpop.f32.mrf.mxu0
        %3606 = vmatprep.mubr.bf16.mxu0 0
        %3607 = vmatmul.mubr.bf16.gmra.mxu0 %v2930
        %v3608 = vpop.f32.mrf.mxu0
        %v3609 = vadd.f32 0.0, %v3608
        %v3610 = vpop.f32.mrf.mxu0
        %v3611 = vpop.f32.mrf.mxu0
        %v3612 = vadd.f32 0.0, %v3611
        %v3613 = vpop.f32.mrf.mxu0
        %3614 = vmatprep.mubr.bf16.mxu0 0
        %3615 = vmatmul.mubr.bf16.gmra.mxu0 %v2931
        %v3616 = vpop.f32.mrf.mxu0
        %v3617 = vadd.f32 0.0, %v3616
        %v3618 = vpop.f32.mrf.mxu0
        %v3619 = vpop.f32.mrf.mxu0
        %v3620 = vadd.f32 0.0, %v3619
        %v3621 = vpop.f32.mrf.mxu0
        %3622 = vmatprep.mubr.bf16.mxu0 0
        %3623 = vmatmul.mubr.bf16.gmra.mxu0 %v2932
        %v3624 = vpop.f32.mrf.mxu0
        %v3625 = vadd.f32 0.0, %v3624
        %v3626 = vpop.f32.mrf.mxu0
        %v3627 = vpop.f32.mrf.mxu0
        %v3628 = vadd.f32 0.0, %v3627
        %v3629 = vpop.f32.mrf.mxu0
        %3630 = vmatprep.mubr.bf16.mxu0 0
        %3631 = vmatmul.mubr.bf16.gmra.mxu0 %v2933
        %v3632 = vpop.f32.mrf.mxu0
        %v3633 = vadd.f32 0.0, %v3632
        %v3634 = vpop.f32.mrf.mxu0
        %v3635 = vpop.f32.mrf.mxu0
        %v3636 = vadd.f32 0.0, %v3635
        %v3637 = vpop.f32.mrf.mxu0
        %3638 = vmatprep.mubr.bf16.mxu0 0
        %3639 = vmatmul.mubr.bf16.gmra.mxu0 %v2934
        %v3640 = vpop.f32.mrf.mxu0
        %v3641 = vadd.f32 0.0, %v3640
        %v3642 = vpop.f32.mrf.mxu0
        %v3643 = vpop.f32.mrf.mxu0
        %v3644 = vadd.f32 0.0, %v3643
        %v3645 = vpop.f32.mrf.mxu0
        %3646 = vmatprep.mubr.bf16.mxu0 0
        %3647 = vmatmul.mubr.bf16.gmra.mxu0 %v2935
        %v3648 = vpop.f32.mrf.mxu0
        %v3649 = vadd.f32 0.0, %v3648
        %v3650 = vpop.f32.mrf.mxu0
        %v3651 = vpop.f32.mrf.mxu0
        %v3652 = vadd.f32 0.0, %v3651
        %v3653 = vpop.f32.mrf.mxu0
        %3654 = vmatprep.mubr.bf16.mxu0 0
        %3655 = vmatmul.mubr.bf16.gmra.mxu0 %v2936
        %v3656 = vpop.f32.mrf.mxu0
        %v3657 = vadd.f32 0.0, %v3656
        %v3658 = vpop.f32.mrf.mxu0
        %v3659 = vpop.f32.mrf.mxu0
        %v3660 = vadd.f32 0.0, %v3659
        %v3661 = vpop.f32.mrf.mxu0
        %3662 = vmatprep.mubr.bf16.mxu0 0
        %3663 = vmatmul.mubr.bf16.gmra.mxu0 %v2937
        %v3664 = vpop.f32.mrf.mxu0
        %v3665 = vadd.f32 0.0, %v3664
        %v3666 = vpop.f32.mrf.mxu0
        %v3667 = vpop.f32.mrf.mxu0
        %v3668 = vadd.f32 0.0, %v3667
        %v3669 = vpop.f32.mrf.mxu0
        %3670 = vmatprep.mubr.bf16.mxu0 0
        %3671 = vmatmul.mubr.bf16.gmra.mxu0 %v3214
        %v3672 = vpop.f32.mrf.mxu0
        %v3673 = vadd.f32 0.0, %v3672
        %v3674 = vpop.f32.mrf.mxu0
        %v3675 = vpop.f32.mrf.mxu0
        %v3676 = vadd.f32 0.0, %v3675
        %v3677 = vpop.f32.mrf.mxu0
        %3678 = vmatprep.mubr.bf16.mxu0 0
        %3679 = vmatmul.mubr.bf16.gmra.mxu0 %v3476
        %v3680 = vpop.f32.mrf.mxu0
        %v3681 = vadd.f32 0.0, %v3680
        %v3682 = vpop.f32.mrf.mxu0
        %v3683 = vpop.f32.mrf.mxu0
        %v3684 = vadd.f32 0.0, %v3683
        %v3685 = vpop.f32.mrf.mxu0
        %3686 = vdwg.mxu0
        %v3687 = vadd.f32 %v3425, %v3561
        %v3688 = vadd.f32 %v3426, %v3564
        %v3689 = vadd.f32 %v3427, %v3569
        %v3690 = vadd.f32 %v3428, %v3572
        %v3691 = vadd.f32 %v3429, %v3577
        %v3692 = vadd.f32 %v3430, %v3580
        %v3693 = vadd.f32 %v3431, %v3585
        %v3694 = vadd.f32 %v3432, %v3588
        %v3695 = vadd.f32 %v3433, %v3593
        %v3696 = vadd.f32 %v3434, %v3596
        %v3697 = vadd.f32 %v3435, %v3601
        %v3698 = vadd.f32 %v3436, %v3604
        %v3699 = vadd.f32 %v3437, %v3609
        %v3700 = vadd.f32 %v3438, %v3612
        %v3701 = vadd.f32 %v3439, %v3617
        %v3702 = vadd.f32 %v3440, %v3620
        %v3703 = vadd.f32 %v3441, %v3625
        %v3704 = vadd.f32 %v3442, %v3628
        %v3705 = vadd.f32 %v3443, %v3633
        %v3706 = vadd.f32 %v3444, %v3636
        %v3707 = vadd.f32 %v3445, %v3641
        %v3708 = vadd.f32 %v3446, %v3644
        %v3709 = vadd.f32 %v3447, %v3649
        %v3710 = vadd.f32 %v3448, %v3652
        %v3711 = vadd.f32 %v3449, %v3657
        %v3712 = vadd.f32 %v3450, %v3660
        %v3713 = vadd.f32 %v3451, %v3665
        %v3714 = vadd.f32 %v3452, %v3668
        %v3715 = vadd.f32 %v3453, %v3673
        %v3716 = vadd.f32 %v3454, %v3676
        %v3717 = vadd.f32 %v3455, %v3681
        %v3718 = vadd.f32 %v3456, %v3684
        %v3720 = vlaneseq
        %v3721 = vshrl.u32 %v3720, 7
        %v3722 = vsub.s32 0, %v3721
        %v3723 = vrot.slane %v482, %v3722
        %v3725 = vadd.f32 %v3687, %v3723
        %v3726 = vadd.f32 %v3688, %v3723
        %v3727 = vadd.f32 %v3689, %v3723
        %v3728 = vadd.f32 %v3690, %v3723
        %v3729 = vadd.f32 %v3691, %v3723
        %v3730 = vadd.f32 %v3692, %v3723
        %v3731 = vadd.f32 %v3693, %v3723
        %v3732 = vadd.f32 %v3694, %v3723
        %v3733 = vadd.f32 %v3695, %v3723
        %v3734 = vadd.f32 %v3696, %v3723
        %v3735 = vadd.f32 %v3697, %v3723
        %v3736 = vadd.f32 %v3698, %v3723
        %v3737 = vadd.f32 %v3699, %v3723
        %v3738 = vadd.f32 %v3700, %v3723
        %v3739 = vadd.f32 %v3701, %v3723
        %v3740 = vadd.f32 %v3702, %v3723
        %v3741 = vadd.f32 %v3703, %v3723
        %v3742 = vadd.f32 %v3704, %v3723
        %v3743 = vadd.f32 %v3705, %v3723
        %v3744 = vadd.f32 %v3706, %v3723
        %v3745 = vadd.f32 %v3707, %v3723
        %v3746 = vadd.f32 %v3708, %v3723
        %v3747 = vadd.f32 %v3709, %v3723
        %v3748 = vadd.f32 %v3710, %v3723
        %v3749 = vadd.f32 %v3711, %v3723
        %v3750 = vadd.f32 %v3712, %v3723
        %v3751 = vadd.f32 %v3713, %v3723
        %v3752 = vadd.f32 %v3714, %v3723
        %v3753 = vadd.f32 %v3715, %v3723
        %v3754 = vadd.f32 %v3716, %v3723
        %v3755 = vadd.f32 %v3717, %v3723
        %v3756 = vadd.f32 %v3718, %v3723
        %v3757 = vmax.f32 %v3725, 0.0
        %v3758 = vmax.f32 %v3726, 0.0
        %v3759 = vmax.f32 %v3727, 0.0
        %v3760 = vmax.f32 %v3728, 0.0
        %v3761 = vmax.f32 %v3729, 0.0
        %v3762 = vmax.f32 %v3730, 0.0
        %v3763 = vmax.f32 %v3731, 0.0
        %v3764 = vmax.f32 %v3732, 0.0
        %v3765 = vmax.f32 %v3733, 0.0
        %v3766 = vmax.f32 %v3734, 0.0
        %v3767 = vmax.f32 %v3735, 0.0
        %v3768 = vmax.f32 %v3736, 0.0
        %v3769 = vmax.f32 %v3737, 0.0
        %v3770 = vmax.f32 %v3738, 0.0
        %v3771 = vmax.f32 %v3739, 0.0
        %v3772 = vmax.f32 %v3740, 0.0
        %v3773 = vmax.f32 %v3741, 0.0
        %v3774 = vmax.f32 %v3742, 0.0
        %v3775 = vmax.f32 %v3743, 0.0
        %v3776 = vmax.f32 %v3744, 0.0
        %v3777 = vmax.f32 %v3745, 0.0
        %v3778 = vmax.f32 %v3746, 0.0
        %v3779 = vmax.f32 %v3747, 0.0
        %v3780 = vmax.f32 %v3748, 0.0
        %v3781 = vmax.f32 %v3749, 0.0
        %v3782 = vmax.f32 %v3750, 0.0
        %v3783 = vmax.f32 %v3751, 0.0
        %v3784 = vmax.f32 %v3752, 0.0
        %v3785 = vmax.f32 %v3753, 0.0
        %v3786 = vmax.f32 %v3754, 0.0
        %v3787 = vmax.f32 %v3755, 0.0
        %v3788 = vmax.f32 %v3756, 0.0
        %v3789 = vadd.f32 %v3757, %v3758
        %v3790 = vadd.f32 %v3789, %v3759
        %v3791 = vadd.f32 %v3790, %v3760
        %v3792 = vadd.f32 %v3791, %v3761
        %v3793 = vadd.f32 %v3792, %v3762
        %v3794 = vadd.f32 %v3793, %v3763
        %v3795 = vadd.f32 %v3794, %v3764
        %v3796 = vadd.f32 %v3795, %v3765
        %v3797 = vadd.f32 %v3796, %v3766
        %v3798 = vadd.f32 %v3797, %v3767
        %v3799 = vadd.f32 %v3798, %v3768
        %v3800 = vadd.f32 %v3799, %v3769
        %v3801 = vadd.f32 %v3800, %v3770
        %v3802 = vadd.f32 %v3801, %v3771
        %v3803 = vadd.f32 %v3802, %v3772
        %v3804 = vadd.f32 %v3803, %v3773
        %v3805 = vadd.f32 %v3804, %v3774
        %v3806 = vadd.f32 %v3805, %v3775
        %v3807 = vadd.f32 %v3806, %v3776
        %v3808 = vadd.f32 %v3807, %v3777
        %v3809 = vadd.f32 %v3808, %v3778
        %v3810 = vadd.f32 %v3809, %v3779
        %v3811 = vadd.f32 %v3810, %v3780
        %v3812 = vadd.f32 %v3811, %v3781
        %v3813 = vadd.f32 %v3812, %v3782
        %v3814 = vadd.f32 %v3813, %v3783
        %v3815 = vadd.f32 %v3814, %v3784
        %v3816 = vadd.f32 %v3815, %v3785
        %v3817 = vadd.f32 %v3816, %v3786
        %v3818 = vadd.f32 %v3817, %v3787
        %v3819 = vadd.f32 %v3818, %v3788
        %v3820 = vrot.slane %v3819, 4
        %v3821 = vadd.f32 %v3819, %v3820
        %v3822 = vrot.slane %v3821, 2
        %v3823 = vadd.f32 %v3821, %v3822
        %v3824 = vrot.slane %v3823, 1
        %v3825 = vadd.f32 %v3823, %v3824
        %v3826 = vadd.f32 %v3825, 0.0
        %v3827 = vpack.c.bf16 %v3758, %v3757
        %v3828 = vpack.c.bf16 %v3760, %v3759
        %v3829 = vpack.c.bf16 %v3762, %v3761
        %v3830 = vpack.c.bf16 %v3764, %v3763
        %v3831 = vpack.c.bf16 %v3766, %v3765
        %v3832 = vpack.c.bf16 %v3768, %v3767
        %v3833 = vpack.c.bf16 %v3770, %v3769
        %v3834 = vpack.c.bf16 %v3772, %v3771
        %v3835 = vpack.c.bf16 %v3774, %v3773
        %v3836 = vpack.c.bf16 %v3776, %v3775
        %v3837 = vpack.c.bf16 %v3778, %v3777
        %v3838 = vpack.c.bf16 %v3780, %v3779
        %v3839 = vpack.c.bf16 %v3782, %v3781
        %v3840 = vpack.c.bf16 %v3784, %v3783
        %v3841 = vpack.c.bf16 %v3786, %v3785
        %v3842 = vpack.c.bf16 %v3788, %v3787
        %v3859 = vunpack.c.l.b16 %v3827
        %v3860 = vunpack.c.h.b16 %v3827
        %v3861 = vunpack.c.l.b16 %v3828
        %v3862 = vunpack.c.h.b16 %v3828
        %v3863 = vunpack.c.l.b16 %v3829
        %v3864 = vunpack.c.h.b16 %v3829
        %v3865 = vunpack.c.l.b16 %v3830
        %v3866 = vunpack.c.h.b16 %v3830
        %v3867 = vunpack.c.l.b16 %v3831
        %v3868 = vunpack.c.h.b16 %v3831
        %v3869 = vunpack.c.l.b16 %v3832
        %v3870 = vunpack.c.h.b16 %v3832
        %v3871 = vunpack.c.l.b16 %v3833
        %v3872 = vunpack.c.h.b16 %v3833
        %v3873 = vunpack.c.l.b16 %v3834
        %v3874 = vunpack.c.h.b16 %v3834
        %v3875 = vunpack.c.l.b16 %v3835
        %v3876 = vunpack.c.h.b16 %v3835
        %v3877 = vunpack.c.l.b16 %v3836
        %v3878 = vunpack.c.h.b16 %v3836
        %v3879 = vunpack.c.l.b16 %v3837
        %v3880 = vunpack.c.h.b16 %v3837
        %v3881 = vunpack.c.l.b16 %v3838
        %v3882 = vunpack.c.h.b16 %v3838
        %v3883 = vunpack.c.l.b16 %v3839
        %v3884 = vunpack.c.h.b16 %v3839
        %v3885 = vunpack.c.l.b16 %v3840
        %v3886 = vunpack.c.h.b16 %v3840
        %v3887 = vunpack.c.l.b16 %v3841
        %v3888 = vunpack.c.h.b16 %v3841
        %v3889 = vunpack.c.l.b16 %v3842
        %v3890 = vunpack.c.h.b16 %v3842
        %v3891 = vpack.c.b16 %v3859, %v3859
        %v3892 = vpack.c.b16 %v3860, %v3860
        %v3893 = vpack.c.b16 %v3861, %v3861
        %v3894 = vpack.c.b16 %v3862, %v3862
        %v3895 = vpack.c.b16 %v3863, %v3863
        %v3896 = vpack.c.b16 %v3864, %v3864
        %v3897 = vpack.c.b16 %v3865, %v3865
        %v3898 = vpack.c.b16 %v3866, %v3866
        %v3899 = vpack.c.b16 %v3867, %v3867
        %v3900 = vpack.c.b16 %v3868, %v3868
        %v3901 = vpack.c.b16 %v3869, %v3869
        %v3902 = vpack.c.b16 %v3870, %v3870
        %v3903 = vpack.c.b16 %v3871, %v3871
        %v3904 = vpack.c.b16 %v3872, %v3872
        %v3905 = vpack.c.b16 %v3873, %v3873
        %v3906 = vpack.c.b16 %v3874, %v3874
        %v3907 = vpack.c.b16 %v3875, %v3875
        %v3908 = vpack.c.b16 %v3876, %v3876
        %v3909 = vpack.c.b16 %v3877, %v3877
        %v3910 = vpack.c.b16 %v3878, %v3878
        %v3911 = vpack.c.b16 %v3879, %v3879
        %v3912 = vpack.c.b16 %v3880, %v3880
        %v3913 = vpack.c.b16 %v3881, %v3881
        %v3914 = vpack.c.b16 %v3882, %v3882
        %v3915 = vpack.c.b16 %v3883, %v3883
        %v3916 = vpack.c.b16 %v3884, %v3884
        %v3917 = vpack.c.b16 %v3885, %v3885
        %v3918 = vpack.c.b16 %v3886, %v3886
        %v3919 = vpack.c.b16 %v3887, %v3887
        %v3920 = vpack.c.b16 %v3888, %v3888
        %v3921 = vpack.c.b16 %v3889, %v3889
        %v3922 = vpack.c.b16 %v3890, %v3890
        %vm3923 = vsmask.f32 4368
        %vm3924 = vmor %vm370, %vm3923
        %v3926 = vshrl.u32 %v3891, 16
        %v3928 = vrot.slane %v3926, 7
        %v3929 = vshll.u32 %v3891, 16
        %v3931 = vor.u32 %v3928, %v3929
        %v3932 = vrot.slane %v3928, 4
        %v3934 = vshrl.u32 %v3892, 16
        %v3936 = vrot.slane %v3934, 7
        %v3937 = vshll.u32 %v3892, 16
        %v3939 = vor.u32 %v3936, %v3937
        %v3940 = vsel %vm3924, %v3932, %v3939
        %v3941 = vrot.slane %v3936, 4
        %v3943 = vshrl.u32 %v3893, 16
        %v3945 = vrot.slane %v3943, 7
        %v3946 = vshll.u32 %v3893, 16
        %v3948 = vor.u32 %v3945, %v3946
        %v3949 = vrot.slane %v3945, 4
        %v3951 = vshrl.u32 %v3894, 16
        %v3953 = vrot.slane %v3951, 7
        %v3954 = vshll.u32 %v3894, 16
        %v3956 = vor.u32 %v3953, %v3954
        %v3957 = vsel %vm3924, %v3949, %v3956
        %v3958 = vrot.slane %v3953, 4
        %v3960 = vshrl.u32 %v3895, 16
        %v3962 = vrot.slane %v3960, 7
        %v3963 = vshll.u32 %v3895, 16
        %v3965 = vor.u32 %v3962, %v3963
        %v3966 = vrot.slane %v3962, 4
        %v3968 = vshrl.u32 %v3896, 16
        %v3970 = vrot.slane %v3968, 7
        %v3971 = vshll.u32 %v3896, 16
        %v3973 = vor.u32 %v3970, %v3971
        %v3974 = vsel %vm3924, %v3966, %v3973
        %v3975 = vrot.slane %v3970, 4
        %v3977 = vshrl.u32 %v3897, 16
        %v3979 = vrot.slane %v3977, 7
        %v3980 = vshll.u32 %v3897, 16
        %v3982 = vor.u32 %v3979, %v3980
        %v3983 = vrot.slane %v3979, 4
        %v3985 = vshrl.u32 %v3898, 16
        %v3987 = vrot.slane %v3985, 7
        %v3988 = vshll.u32 %v3898, 16
        %v3990 = vor.u32 %v3987, %v3988
        %v3991 = vsel %vm3924, %v3983, %v3990
        %v3992 = vrot.slane %v3987, 4
        %v3994 = vshrl.u32 %v3899, 16
        %v3996 = vrot.slane %v3994, 7
        %v3997 = vshll.u32 %v3899, 16
        %v3999 = vor.u32 %v3996, %v3997
        %v4000 = vrot.slane %v3996, 4
        %v4002 = vshrl.u32 %v3900, 16
        %v4004 = vrot.slane %v4002, 7
        %v4005 = vshll.u32 %v3900, 16
        %v4007 = vor.u32 %v4004, %v4005
        %v4008 = vsel %vm3924, %v4000, %v4007
        %v4009 = vrot.slane %v4004, 4
        %v4011 = vshrl.u32 %v3901, 16
        %v4013 = vrot.slane %v4011, 7
        %v4014 = vshll.u32 %v3901, 16
        %v4016 = vor.u32 %v4013, %v4014
        %v4017 = vrot.slane %v4013, 4
        %v4019 = vshrl.u32 %v3902, 16
        %v4021 = vrot.slane %v4019, 7
        %v4022 = vshll.u32 %v3902, 16
        %v4024 = vor.u32 %v4021, %v4022
        %v4025 = vsel %vm3924, %v4017, %v4024
        %v4026 = vrot.slane %v4021, 4
        %v4028 = vshrl.u32 %v3903, 16
        %v4030 = vrot.slane %v4028, 7
        %v4031 = vshll.u32 %v3903, 16
        %v4033 = vor.u32 %v4030, %v4031
        %v4034 = vrot.slane %v4030, 4
        %v4036 = vshrl.u32 %v3904, 16
        %v4038 = vrot.slane %v4036, 7
        %v4039 = vshll.u32 %v3904, 16
        %v4041 = vor.u32 %v4038, %v4039
        %v4042 = vsel %vm3924, %v4034, %v4041
        %v4043 = vrot.slane %v4038, 4
        %v4045 = vshrl.u32 %v3905, 16
        %v4047 = vrot.slane %v4045, 7
        %v4048 = vshll.u32 %v3905, 16
        %v4050 = vor.u32 %v4047, %v4048
        %v4051 = vrot.slane %v4047, 4
        %v4053 = vshrl.u32 %v3906, 16
        %v4055 = vrot.slane %v4053, 7
        %v4056 = vshll.u32 %v3906, 16
        %v4058 = vor.u32 %v4055, %v4056
        %v4059 = vsel %vm3924, %v4051, %v4058
        %v4060 = vrot.slane %v4055, 4
        %v4062 = vshrl.u32 %v3907, 16
        %v4064 = vrot.slane %v4062, 7
        %v4065 = vshll.u32 %v3907, 16
        %v4067 = vor.u32 %v4064, %v4065
        %v4068 = vrot.slane %v4064, 4
        %v4070 = vshrl.u32 %v3908, 16
        %v4072 = vrot.slane %v4070, 7
        %v4073 = vshll.u32 %v3908, 16
        %v4075 = vor.u32 %v4072, %v4073
        %v4076 = vsel %vm3924, %v4068, %v4075
        %v4077 = vrot.slane %v4072, 4
        %v4079 = vshrl.u32 %v3909, 16
        %v4081 = vrot.slane %v4079, 7
        %v4082 = vshll.u32 %v3909, 16
        %v4084 = vor.u32 %v4081, %v4082
        %v4085 = vrot.slane %v4081, 4
        %v4087 = vshrl.u32 %v3910, 16
        %v4089 = vrot.slane %v4087, 7
        %v4090 = vshll.u32 %v3910, 16
        %v4092 = vor.u32 %v4089, %v4090
        %v4093 = vsel %vm3924, %v4085, %v4092
        %v4094 = vrot.slane %v4089, 4
        %v4096 = vshrl.u32 %v3911, 16
        %v4098 = vrot.slane %v4096, 7
        %v4099 = vshll.u32 %v3911, 16
        %v4101 = vor.u32 %v4098, %v4099
        %v4102 = vrot.slane %v4098, 4
        %v4104 = vshrl.u32 %v3912, 16
        %v4106 = vrot.slane %v4104, 7
        %v4107 = vshll.u32 %v3912, 16
        %v4109 = vor.u32 %v4106, %v4107
        %v4110 = vsel %vm3924, %v4102, %v4109
        %v4111 = vrot.slane %v4106, 4
        %v4113 = vshrl.u32 %v3913, 16
        %v4115 = vrot.slane %v4113, 7
        %v4116 = vshll.u32 %v3913, 16
        %v4118 = vor.u32 %v4115, %v4116
        %v4119 = vrot.slane %v4115, 4
        %v4121 = vshrl.u32 %v3914, 16
        %v4123 = vrot.slane %v4121, 7
        %v4124 = vshll.u32 %v3914, 16
        %v4126 = vor.u32 %v4123, %v4124
        %v4127 = vsel %vm3924, %v4119, %v4126
        %v4128 = vrot.slane %v4123, 4
        %v4130 = vshrl.u32 %v3915, 16
        %v4132 = vrot.slane %v4130, 7
        %v4133 = vshll.u32 %v3915, 16
        %v4135 = vor.u32 %v4132, %v4133
        %v4136 = vrot.slane %v4132, 4
        %v4138 = vshrl.u32 %v3916, 16
        %v4140 = vrot.slane %v4138, 7
        %v4141 = vshll.u32 %v3916, 16
        %v4143 = vor.u32 %v4140, %v4141
        %v4144 = vsel %vm3924, %v4136, %v4143
        %v4145 = vrot.slane %v4140, 4
        %v4147 = vshrl.u32 %v3917, 16
        %v4149 = vrot.slane %v4147, 7
        %v4150 = vshll.u32 %v3917, 16
        %v4152 = vor.u32 %v4149, %v4150
        %v4153 = vrot.slane %v4149, 4
        %v4155 = vshrl.u32 %v3918, 16
        %v4157 = vrot.slane %v4155, 7
        %v4158 = vshll.u32 %v3918, 16
        %v4160 = vor.u32 %v4157, %v4158
        %v4161 = vsel %vm3924, %v4153, %v4160
        %v4162 = vrot.slane %v4157, 4
        %v4164 = vshrl.u32 %v3919, 16
        %v4166 = vrot.slane %v4164, 7
        %v4167 = vshll.u32 %v3919, 16
        %v4169 = vor.u32 %v4166, %v4167
        %v4170 = vrot.slane %v4166, 4
        %v4172 = vshrl.u32 %v3920, 16
        %v4174 = vrot.slane %v4172, 7
        %v4175 = vshll.u32 %v3920, 16
        %v4177 = vor.u32 %v4174, %v4175
        %v4178 = vsel %vm3924, %v4170, %v4177
        %v4179 = vrot.slane %v4174, 4
        %v4181 = vshrl.u32 %v3921, 16
        %v4183 = vrot.slane %v4181, 7
        %v4184 = vshll.u32 %v3921, 16
        %v4186 = vor.u32 %v4183, %v4184
        %v4187 = vrot.slane %v4183, 4
        %v4189 = vshrl.u32 %v3922, 16
        %v4191 = vrot.slane %v4189, 7
        %v4192 = vshll.u32 %v3922, 16
        %v4194 = vor.u32 %v4191, %v4192
        %v4195 = vsel %vm3924, %v4187, %v4194
        %v4196 = vrot.slane %v4191, 4
        %s4245 = scalar_lea.vmem [#allocation2], 12
        %vm4246 = vcmask 1043456
        %vm4247 = vmand %vm4246, %vm426
        %v4248 = vld [vmem:[%s4245] sm:$0xf]
        %v4249 = vsel %vm4247, %v3931, %v4248
        %4250 = vst [vmem:[%s4245] sm:$0xf] %v4249
        %4251 = vst [vmem:[%s4245 + $0x4] sm:$0xf] %v3940
        %v4252 = vld [vmem:[%s4245 + $0x8] sm:$0x1]
        %v4253 = vsel %vm371, %v3941, %v4252
        %4254 = vst [vmem:[%s4245 + $0x8] sm:$0x1] %v4253
        %v4255 = vld [vmem:[%s4245 + $0xc] sm:$0xf]
        %v4256 = vsel %vm4247, %v3948, %v4255
        %4257 = vst [vmem:[%s4245 + $0xc] sm:$0xf] %v4256
        %4258 = vst [vmem:[%s4245 + $0x10] sm:$0xf] %v3957
        %v4259 = vld [vmem:[%s4245 + $0x14] sm:$0x1]
        %v4260 = vsel %vm371, %v3958, %v4259
        %4261 = vst [vmem:[%s4245 + $0x14] sm:$0x1] %v4260
        %v4262 = vld [vmem:[%s4245 + $0x18] sm:$0xf]
        %v4263 = vsel %vm4247, %v3965, %v4262
        %4264 = vst [vmem:[%s4245 + $0x18] sm:$0xf] %v4263
        %4265 = vst [vmem:[%s4245 + $0x1c] sm:$0xf] %v3974
        %v4266 = vld [vmem:[%s4245 + $0x20] sm:$0x1]
        %v4267 = vsel %vm371, %v3975, %v4266
        %4268 = vst [vmem:[%s4245 + $0x20] sm:$0x1] %v4267
        %v4269 = vld [vmem:[%s4245 + $0x24] sm:$0xf]
        %v4270 = vsel %vm4247, %v3982, %v4269
        %4271 = vst [vmem:[%s4245 + $0x24] sm:$0xf] %v4270
        %4272 = vst [vmem:[%s4245 + $0x28] sm:$0xf] %v3991
        %v4273 = vld [vmem:[%s4245 + $0x2c] sm:$0x1]
        %v4274 = vsel %vm371, %v3992, %v4273
        %4275 = vst [vmem:[%s4245 + $0x2c] sm:$0x1] %v4274
        %v4276 = vld [vmem:[%s4245 + $0x30] sm:$0xf]
        %v4277 = vsel %vm4247, %v3999, %v4276
        %4278 = vst [vmem:[%s4245 + $0x30] sm:$0xf] %v4277
        %4279 = vst [vmem:[%s4245 + $0x34] sm:$0xf] %v4008
        %v4280 = vld [vmem:[%s4245 + $0x38] sm:$0x1]
        %v4281 = vsel %vm371, %v4009, %v4280
        %4282 = vst [vmem:[%s4245 + $0x38] sm:$0x1] %v4281
        %v4283 = vld [vmem:[%s4245 + $0x3c] sm:$0xf]
        %v4284 = vsel %vm4247, %v4016, %v4283
        %4285 = vst [vmem:[%s4245 + $0x3c] sm:$0xf] %v4284
        %4286 = vst [vmem:[%s4245 + $0x40] sm:$0xf] %v4025
        %v4287 = vld [vmem:[%s4245 + $0x44] sm:$0x1]
        %v4288 = vsel %vm371, %v4026, %v4287
        %4289 = vst [vmem:[%s4245 + $0x44] sm:$0x1] %v4288
        %v4290 = vld [vmem:[%s4245 + $0x48] sm:$0xf]
        %v4291 = vsel %vm4247, %v4033, %v4290
        %4292 = vst [vmem:[%s4245 + $0x48] sm:$0xf] %v4291
        %4293 = vst [vmem:[%s4245 + $0x4c] sm:$0xf] %v4042
        %v4294 = vld [vmem:[%s4245 + $0x50] sm:$0x1]
        %v4295 = vsel %vm371, %v4043, %v4294
        %4296 = vst [vmem:[%s4245 + $0x50] sm:$0x1] %v4295
        %v4297 = vld [vmem:[%s4245 + $0x54] sm:$0xf]
        %v4298 = vsel %vm4247, %v4050, %v4297
        %4299 = vst [vmem:[%s4245 + $0x54] sm:$0xf] %v4298
        %4300 = vst [vmem:[%s4245 + $0x58] sm:$0xf] %v4059
        %v4301 = vld [vmem:[%s4245 + $0x5c] sm:$0x1]
        %v4302 = vsel %vm371, %v4060, %v4301
        %4303 = vst [vmem:[%s4245 + $0x5c] sm:$0x1] %v4302
        %v4304 = vld [vmem:[%s4245 + $0x60] sm:$0xf]
        %v4305 = vsel %vm4247, %v4067, %v4304
        %4306 = vst [vmem:[%s4245 + $0x60] sm:$0xf] %v4305
        %4307 = vst [vmem:[%s4245 + $0x64] sm:$0xf] %v4076
        %v4308 = vld [vmem:[%s4245 + $0x68] sm:$0x1]
        %v4309 = vsel %vm371, %v4077, %v4308
        %4310 = vst [vmem:[%s4245 + $0x68] sm:$0x1] %v4309
        %v4311 = vld [vmem:[%s4245 + $0x6c] sm:$0xf]
        %v4312 = vsel %vm4247, %v4084, %v4311
        %4313 = vst [vmem:[%s4245 + $0x6c] sm:$0xf] %v4312
        %4314 = vst [vmem:[%s4245 + $0x70] sm:$0xf] %v4093
        %v4315 = vld [vmem:[%s4245 + $0x74] sm:$0x1]
        %v4316 = vsel %vm371, %v4094, %v4315
        %4317 = vst [vmem:[%s4245 + $0x74] sm:$0x1] %v4316
        %v4318 = vld [vmem:[%s4245 + $0x78] sm:$0xf]
        %v4319 = vsel %vm4247, %v4101, %v4318
        %4320 = vst [vmem:[%s4245 + $0x78] sm:$0xf] %v4319
        %4321 = vst [vmem:[%s4245 + $0x7c] sm:$0xf] %v4110
        %v4322 = vld [vmem:[%s4245 + $0x80] sm:$0x1]
        %v4323 = vsel %vm371, %v4111, %v4322
        %4324 = vst [vmem:[%s4245 + $0x80] sm:$0x1] %v4323
        %v4325 = vld [vmem:[%s4245 + $0x84] sm:$0xf]
        %v4326 = vsel %vm4247, %v4118, %v4325
        %4327 = vst [vmem:[%s4245 + $0x84] sm:$0xf] %v4326
        %4328 = vst [vmem:[%s4245 + $0x88] sm:$0xf] %v4127
        %v4329 = vld [vmem:[%s4245 + $0x8c] sm:$0x1]
        %v4330 = vsel %vm371, %v4128, %v4329
        %4331 = vst [vmem:[%s4245 + $0x8c] sm:$0x1] %v4330
        %v4332 = vld [vmem:[%s4245 + $0x90] sm:$0xf]
        %v4333 = vsel %vm4247, %v4135, %v4332
        %4334 = vst [vmem:[%s4245 + $0x90] sm:$0xf] %v4333
        %4335 = vst [vmem:[%s4245 + $0x94] sm:$0xf] %v4144
        %v4336 = vld [vmem:[%s4245 + $0x98] sm:$0x1]
        %v4337 = vsel %vm371, %v4145, %v4336
        %4338 = vst [vmem:[%s4245 + $0x98] sm:$0x1] %v4337
        %v4339 = vld [vmem:[%s4245 + $0x9c] sm:$0xf]
        %v4340 = vsel %vm4247, %v4152, %v4339
        %4341 = vst [vmem:[%s4245 + $0x9c] sm:$0xf] %v4340
        %4342 = vst [vmem:[%s4245 + $0xa0] sm:$0xf] %v4161
        %v4343 = vld [vmem:[%s4245 + $0xa4] sm:$0x1]
        %v4344 = vsel %vm371, %v4162, %v4343
        %4345 = vst [vmem:[%s4245 + $0xa4] sm:$0x1] %v4344
        %v4346 = vld [vmem:[%s4245 + $0xa8] sm:$0xf]
        %v4347 = vsel %vm4247, %v4169, %v4346
        %4348 = vst [vmem:[%s4245 + $0xa8] sm:$0xf] %v4347
        %4349 = vst [vmem:[%s4245 + $0xac] sm:$0xf] %v4178
        %v4350 = vld [vmem:[%s4245 + $0xb0] sm:$0x1]
        %v4351 = vsel %vm371, %v4179, %v4350
        %4352 = vst [vmem:[%s4245 + $0xb0] sm:$0x1] %v4351
        %v4353 = vld [vmem:[%s4245 + $0xb4] sm:$0xf]
        %v4354 = vsel %vm4247, %v4186, %v4353
        %4355 = vst [vmem:[%s4245 + $0xb4] sm:$0xf] %v4354
        %4356 = vst [vmem:[%s4245 + $0xb8] sm:$0xf] %v4195
        %v4357 = vld [vmem:[%s4245 + $0xbc] sm:$0x1]
        %v4358 = vsel %vm371, %v4196, %v4357
        %4359 = vst [vmem:[%s4245 + $0xbc] sm:$0x1] %v4358
        %v4360 = vmul.f32 %v3826, 0.00390625
        %4361 = vst [vmem:[%s343] sm:$0x1] %v4360
        %v4362 = vld [vmem:[#allocation2] sm:$0xf]
        %v4363 = vld [vmem:[#allocation2 + $0x4] sm:$0xf]
        %v4364 = vld [vmem:[#allocation2 + $0xc] sm:$0xf]
        %v4365 = vld [vmem:[#allocation2 + $0x10] sm:$0xf]
        %v4366 = vld [vmem:[#allocation2 + $0x18] sm:$0xf]
        %v4367 = vld [vmem:[#allocation2 + $0x1c] sm:$0xf]
        %v4368 = vld [vmem:[#allocation2 + $0x24] sm:$0xf]
        %v4369 = vld [vmem:[#allocation2 + $0x28] sm:$0xf]
        %v4370 = vld [vmem:[#allocation2 + $0x30] sm:$0xf]
        %v4371 = vld [vmem:[#allocation2 + $0x34] sm:$0xf]
        %v4372 = vld [vmem:[#allocation2 + $0x3c] sm:$0xf]
        %v4373 = vld [vmem:[#allocation2 + $0x40] sm:$0xf]
        %v4374 = vld [vmem:[#allocation2 + $0x48] sm:$0xf]
        %v4375 = vld [vmem:[#allocation2 + $0x4c] sm:$0xf]
        %v4376 = vld [vmem:[#allocation2 + $0x54] sm:$0xf]
        %v4377 = vld [vmem:[#allocation2 + $0x58] sm:$0xf]
        %v4378 = vld [vmem:[#allocation2 + $0x60] sm:$0xf]
        %v4379 = vld [vmem:[#allocation2 + $0x64] sm:$0xf]
        %v4380 = vld [vmem:[#allocation2 + $0x6c] sm:$0xf]
        %v4381 = vld [vmem:[#allocation2 + $0x70] sm:$0xf]
        %v4382 = vld [vmem:[#allocation2 + $0x78] sm:$0xf]
        %v4383 = vld [vmem:[#allocation2 + $0x7c] sm:$0xf]
        %v4384 = vld [vmem:[#allocation2 + $0x84] sm:$0xf]
        %v4385 = vld [vmem:[#allocation2 + $0x88] sm:$0xf]
        %v4386 = vld [vmem:[#allocation2 + $0x90] sm:$0xf]
        %v4387 = vld [vmem:[#allocation2 + $0x94] sm:$0xf]
        %v4388 = vld [vmem:[#allocation2 + $0x9c] sm:$0xf]
        %v4389 = vld [vmem:[#allocation2 + $0xa0] sm:$0xf]
        %v4390 = vld [vmem:[#allocation2 + $0xa8] sm:$0xf]
        %v4391 = vld [vmem:[#allocation2 + $0xac] sm:$0xf]
        %v4392 = vld [vmem:[#allocation2 + $0xb4] sm:$0xf]
        %v4393 = vld [vmem:[#allocation2 + $0xb8] sm:$0xf]
        %v4394 = vld [vmem:[#allocation2 + $0xc0] sm:$0xf]
        %v4395 = vld [vmem:[#allocation2 + $0xc4] sm:$0xf]
        %v4396 = vld [vmem:[#allocation2 + $0xcc] sm:$0xf]
        %v4397 = vld [vmem:[#allocation2 + $0xd0] sm:$0xf]
        %v4398 = vld [vmem:[#allocation3] sm:$0xf]
        %v4399 = vld [vmem:[#allocation3 + $0x4] sm:$0xf]
        %v4400 = vld [vmem:[#allocation3 + $0x8] sm:$0xf]
        %v4401 = vld [vmem:[#allocation3 + $0xc] sm:$0xf]
        %v4402 = vld [vmem:[#allocation3 + $0x10] sm:$0xf]
        %v4403 = vld [vmem:[#allocation3 + $0x14] sm:$0xf]
        %v4404 = vld [vmem:[#allocation3 + $0x18] sm:$0xf]
        %v4405 = vld [vmem:[#allocation3 + $0x1c] sm:$0xf]
        %v4406 = vld [vmem:[#allocation3 + $0x20] sm:$0xf]
        %v4407 = vld [vmem:[#allocation3 + $0x24] sm:$0xf]
        %v4408 = vld [vmem:[#allocation3 + $0x28] sm:$0xf]
        %v4409 = vld [vmem:[#allocation3 + $0x2c] sm:$0xf]
        %v4410 = vld [vmem:[#allocation3 + $0x30] sm:$0xf]
        %v4411 = vld [vmem:[#allocation3 + $0x34] sm:$0xf]
        %v4412 = vld [vmem:[#allocation3 + $0x38] sm:$0xf]
        %v4413 = vld [vmem:[#allocation3 + $0x3c] sm:$0xf]
        %s4414 = scalar_lea.vmem [#allocation3], 192
        %v4415 = vld [vmem:[%s4414] sm:$0xf]
        %v4416 = vld [vmem:[%s4414 + $0x4] sm:$0xf]
        %v4417 = vld [vmem:[%s4414 + $0x8] sm:$0xf]
        %v4418 = vld [vmem:[%s4414 + $0xc] sm:$0xf]
        %v4419 = vld [vmem:[%s4414 + $0x10] sm:$0xf]
        %v4420 = vld [vmem:[%s4414 + $0x14] sm:$0xf]
        %v4421 = vld [vmem:[%s4414 + $0x18] sm:$0xf]
        %v4422 = vld [vmem:[%s4414 + $0x1c] sm:$0xf]
        %v4423 = vld [vmem:[%s4414 + $0x20] sm:$0xf]
        %v4424 = vld [vmem:[%s4414 + $0x24] sm:$0xf]
        %v4425 = vld [vmem:[%s4414 + $0x28] sm:$0xf]
        %v4426 = vld [vmem:[%s4414 + $0x2c] sm:$0xf]
        %v4427 = vld [vmem:[%s4414 + $0x30] sm:$0xf]
        %v4428 = vld [vmem:[%s4414 + $0x34] sm:$0xf]
        %v4429 = vld [vmem:[%s4414 + $0x38] sm:$0xf]
        %v4430 = vld [vmem:[%s4414 + $0x3c] sm:$0xf]
        %v4463 = vunpack.c.l.b16 %v4364
        %v4464 = vunpack.c.l.b16 %v4365
        %v4465 = vunpack.c.l.b16 %v4366
        %v4466 = vunpack.c.l.b16 %v4367
        %v4467 = vunpack.c.l.b16 %v4368
        %v4468 = vunpack.c.l.b16 %v4369
        %v4469 = vunpack.c.l.b16 %v4370
        %v4470 = vunpack.c.l.b16 %v4371
        %v4471 = vunpack.c.l.b16 %v4372
        %v4472 = vunpack.c.l.b16 %v4373
        %v4473 = vunpack.c.l.b16 %v4374
        %v4474 = vunpack.c.l.b16 %v4375
        %v4475 = vunpack.c.l.b16 %v4376
        %v4476 = vunpack.c.l.b16 %v4377
        %v4477 = vunpack.c.l.b16 %v4378
        %v4478 = vunpack.c.l.b16 %v4379
        %v4479 = vunpack.c.l.b16 %v4380
        %v4480 = vunpack.c.l.b16 %v4381
        %v4481 = vunpack.c.l.b16 %v4382
        %v4482 = vunpack.c.l.b16 %v4383
        %v4483 = vunpack.c.l.b16 %v4384
        %v4484 = vunpack.c.l.b16 %v4385
        %v4485 = vunpack.c.l.b16 %v4386
        %v4486 = vunpack.c.l.b16 %v4387
        %v4487 = vunpack.c.l.b16 %v4388
        %v4488 = vunpack.c.l.b16 %v4389
        %v4489 = vunpack.c.l.b16 %v4390
        %v4490 = vunpack.c.l.b16 %v4391
        %v4491 = vunpack.c.l.b16 %v4392
        %v4492 = vunpack.c.l.b16 %v4393
        %v4493 = vunpack.c.l.b16 %v4394
        %v4494 = vunpack.c.l.b16 %v4395
        %v4495 = vpack.c.b16 %v4464, %v4463
        %v4496 = vpack.c.b16 %v4466, %v4465
        %v4497 = vpack.c.b16 %v4468, %v4467
        %v4498 = vpack.c.b16 %v4470, %v4469
        %v4499 = vpack.c.b16 %v4472, %v4471
        %v4500 = vpack.c.b16 %v4474, %v4473
        %v4501 = vpack.c.b16 %v4476, %v4475
        %v4502 = vpack.c.b16 %v4478, %v4477
        %v4503 = vpack.c.b16 %v4480, %v4479
        %v4504 = vpack.c.b16 %v4482, %v4481
        %v4505 = vpack.c.b16 %v4484, %v4483
        %v4506 = vpack.c.b16 %v4486, %v4485
        %v4507 = vpack.c.b16 %v4488, %v4487
        %v4508 = vpack.c.b16 %v4490, %v4489
        %v4509 = vpack.c.b16 %v4492, %v4491
        %v4510 = vpack.c.b16 %v4494, %v4493
        %v4543 = vunpack.c.l.b16 %v4415
        %v4544 = vunpack.c.l.b16 %v4416
        %v4545 = vunpack.c.l.b16 %v4417
        %v4546 = vunpack.c.l.b16 %v4418
        %v4547 = vunpack.c.l.b16 %v4419
        %v4548 = vunpack.c.l.b16 %v4420
        %v4549 = vunpack.c.l.b16 %v4421
        %v4550 = vunpack.c.l.b16 %v4422
        %v4551 = vunpack.c.l.b16 %v4423
        %v4552 = vunpack.c.l.b16 %v4424
        %v4553 = vunpack.c.l.b16 %v4425
        %v4554 = vunpack.c.l.b16 %v4426
        %v4555 = vunpack.c.l.b16 %v4427
        %v4556 = vunpack.c.l.b16 %v4428
        %v4557 = vunpack.c.l.b16 %v4429
        %v4558 = vunpack.c.l.b16 %v4430
        %v4559 = vpack.c.b16 %v4544, %v4543
        %v4560 = vpack.c.b16 %v4546, %v4545
        %v4561 = vpack.c.b16 %v4548, %v4547
        %v4562 = vpack.c.b16 %v4550, %v4549
        %v4563 = vpack.c.b16 %v4552, %v4551
        %v4564 = vpack.c.b16 %v4554, %v4553
        %v4565 = vpack.c.b16 %v4556, %v4555
        %v4566 = vpack.c.b16 %v4558, %v4557
        %4575 = vmatprep.subr.bf16.mxu0 0
        %4576 = vmatpush1.bf16.msra.mxu0 %v4566
        %4577 = vmatprep.subr.bf16.mxu0 0
        %4578 = vmatpush1.bf16.msra.mxu0 %v4565
        %4579 = vmatprep.subr.bf16.mxu0 0
        %4580 = vmatpush1.bf16.msra.mxu0 %v4564
        %4581 = vmatprep.subr.bf16.mxu0 0
        %4582 = vmatpush1.bf16.msra.mxu0 %v4563
        %4583 = vmatprep.subr.bf16.mxu0 0
        %4584 = vmatpush1.bf16.msra.mxu0 %v4562
        %4585 = vmatprep.subr.bf16.mxu0 0
        %4586 = vmatpush1.bf16.msra.mxu0 %v4561
        %4587 = vmatprep.subr.bf16.mxu0 0
        %4588 = vmatpush1.bf16.msra.mxu0 %v4560
        %4589 = vmatprep.subr.bf16.mxu0 0
        %4590 = vmatpush1.bf16.msra.mxu0 %v4559
        %4591 = vmatprep.subr.bf16.mxu0 0
        %4592 = vmatpush2.bf16.msra.mxu0 0
        %4593 = vmatprep.subr.bf16.mxu0 0
        %4594 = vmatpush2.bf16.msra.mxu0 0
        %4595 = vmatprep.subr.bf16.mxu0 0
        %4596 = vmatpush2.bf16.msra.mxu0 0
        %4597 = vmatprep.subr.bf16.mxu0 0
        %4598 = vmatpush2.bf16.msra.mxu0 0
        %4599 = vmatprep.subr.bf16.mxu0 0
        %4600 = vmatpush2.bf16.msra.mxu0 0
        %4601 = vmatprep.subr.bf16.mxu0 0
        %4602 = vmatpush2.bf16.msra.mxu0 0
        %4603 = vmatprep.subr.bf16.mxu0 0
        %4604 = vmatpush2.bf16.msra.mxu0 0
        %4605 = vmatprep.subr.bf16.mxu0 0
        %4606 = vmatpush2.bf16.msra.mxu0 0
        %4607 = vmatprep.mubr.bf16.mxu0 0
        %4608 = vmatmul.mubr.bf16.gmra.mxu0 %v4495
        %v4609 = vpop.f32.mrf.mxu0
        %v4610 = vadd.f32 0.0, %v4609
        %v4611 = vpop.f32.mrf.mxu0
        %v4612 = vpop.f32.mrf.mxu0
        %v4613 = vadd.f32 0.0, %v4612
        %v4614 = vpop.f32.mrf.mxu0
        %4615 = vmatprep.mubr.bf16.mxu0 0
        %4616 = vmatmul.mubr.bf16.gmra.mxu0 %v4496
        %v4617 = vpop.f32.mrf.mxu0
        %v4618 = vadd.f32 0.0, %v4617
        %v4619 = vpop.f32.mrf.mxu0
        %v4620 = vpop.f32.mrf.mxu0
        %v4621 = vadd.f32 0.0, %v4620
        %v4622 = vpop.f32.mrf.mxu0
        %4623 = vmatprep.mubr.bf16.mxu0 0
        %4624 = vmatmul.mubr.bf16.gmra.mxu0 %v4497
        %v4625 = vpop.f32.mrf.mxu0
        %v4626 = vadd.f32 0.0, %v4625
        %v4627 = vpop.f32.mrf.mxu0
        %v4628 = vpop.f32.mrf.mxu0
        %v4629 = vadd.f32 0.0, %v4628
        %v4630 = vpop.f32.mrf.mxu0
        %4631 = vmatprep.mubr.bf16.mxu0 0
        %4632 = vmatmul.mubr.bf16.gmra.mxu0 %v4498
        %v4633 = vpop.f32.mrf.mxu0
        %v4634 = vadd.f32 0.0, %v4633
        %v4635 = vpop.f32.mrf.mxu0
        %v4636 = vpop.f32.mrf.mxu0
        %v4637 = vadd.f32 0.0, %v4636
        %v4638 = vpop.f32.mrf.mxu0
        %4639 = vmatprep.mubr.bf16.mxu0 0
        %4640 = vmatmul.mubr.bf16.gmra.mxu0 %v4499
        %v4641 = vpop.f32.mrf.mxu0
        %v4642 = vadd.f32 0.0, %v4641
        %v4643 = vpop.f32.mrf.mxu0
        %v4644 = vpop.f32.mrf.mxu0
        %v4645 = vadd.f32 0.0, %v4644
        %v4646 = vpop.f32.mrf.mxu0
        %4647 = vmatprep.mubr.bf16.mxu0 0
        %4648 = vmatmul.mubr.bf16.gmra.mxu0 %v4500
        %v4649 = vpop.f32.mrf.mxu0
        %v4650 = vadd.f32 0.0, %v4649
        %v4651 = vpop.f32.mrf.mxu0
        %v4652 = vpop.f32.mrf.mxu0
        %v4653 = vadd.f32 0.0, %v4652
        %v4654 = vpop.f32.mrf.mxu0
        %4655 = vmatprep.mubr.bf16.mxu0 0
        %4656 = vmatmul.mubr.bf16.gmra.mxu0 %v4501
        %v4657 = vpop.f32.mrf.mxu0
        %v4658 = vadd.f32 0.0, %v4657
        %v4659 = vpop.f32.mrf.mxu0
        %v4660 = vpop.f32.mrf.mxu0
        %v4661 = vadd.f32 0.0, %v4660
        %v4662 = vpop.f32.mrf.mxu0
        %4663 = vmatprep.mubr.bf16.mxu0 0
        %4664 = vmatmul.mubr.bf16.gmra.mxu0 %v4502
        %v4665 = vpop.f32.mrf.mxu0
        %v4666 = vadd.f32 0.0, %v4665
        %v4667 = vpop.f32.mrf.mxu0
        %v4668 = vpop.f32.mrf.mxu0
        %v4669 = vadd.f32 0.0, %v4668
        %v4670 = vpop.f32.mrf.mxu0
        %4671 = vmatprep.mubr.bf16.mxu0 0
        %4672 = vmatmul.mubr.bf16.gmra.mxu0 %v4503
        %v4673 = vpop.f32.mrf.mxu0
        %v4674 = vadd.f32 0.0, %v4673
        %v4675 = vpop.f32.mrf.mxu0
        %v4676 = vpop.f32.mrf.mxu0
        %v4677 = vadd.f32 0.0, %v4676
        %v4678 = vpop.f32.mrf.mxu0
        %4679 = vmatprep.mubr.bf16.mxu0 0
        %4680 = vmatmul.mubr.bf16.gmra.mxu0 %v4504
        %v4681 = vpop.f32.mrf.mxu0
        %v4682 = vadd.f32 0.0, %v4681
        %v4683 = vpop.f32.mrf.mxu0
        %v4684 = vpop.f32.mrf.mxu0
        %v4685 = vadd.f32 0.0, %v4684
        %v4686 = vpop.f32.mrf.mxu0
        %4687 = vmatprep.mubr.bf16.mxu0 0
        %4688 = vmatmul.mubr.bf16.gmra.mxu0 %v4505
        %v4689 = vpop.f32.mrf.mxu0
        %v4690 = vadd.f32 0.0, %v4689
        %v4691 = vpop.f32.mrf.mxu0
        %v4692 = vpop.f32.mrf.mxu0
        %v4693 = vadd.f32 0.0, %v4692
        %v4694 = vpop.f32.mrf.mxu0
        %4695 = vmatprep.mubr.bf16.mxu0 0
        %4696 = vmatmul.mubr.bf16.gmra.mxu0 %v4506
        %v4697 = vpop.f32.mrf.mxu0
        %v4698 = vadd.f32 0.0, %v4697
        %v4699 = vpop.f32.mrf.mxu0
        %v4700 = vpop.f32.mrf.mxu0
        %v4701 = vadd.f32 0.0, %v4700
        %v4702 = vpop.f32.mrf.mxu0
        %4703 = vmatprep.mubr.bf16.mxu0 0
        %4704 = vmatmul.mubr.bf16.gmra.mxu0 %v4507
        %v4705 = vpop.f32.mrf.mxu0
        %v4706 = vadd.f32 0.0, %v4705
        %v4707 = vpop.f32.mrf.mxu0
        %v4708 = vpop.f32.mrf.mxu0
        %v4709 = vadd.f32 0.0, %v4708
        %v4710 = vpop.f32.mrf.mxu0
        %4711 = vmatprep.mubr.bf16.mxu0 0
        %4712 = vmatmul.mubr.bf16.gmra.mxu0 %v4508
        %v4713 = vpop.f32.mrf.mxu0
        %v4714 = vadd.f32 0.0, %v4713
        %v4715 = vpop.f32.mrf.mxu0
        %v4716 = vpop.f32.mrf.mxu0
        %v4717 = vadd.f32 0.0, %v4716
        %v4718 = vpop.f32.mrf.mxu0
        %4719 = vmatprep.mubr.bf16.mxu0 0
        %4720 = vmatmul.mubr.bf16.gmra.mxu0 %v4509
        %v4721 = vpop.f32.mrf.mxu0
        %v4722 = vadd.f32 0.0, %v4721
        %v4723 = vpop.f32.mrf.mxu0
        %v4724 = vpop.f32.mrf.mxu0
        %v4725 = vadd.f32 0.0, %v4724
        %v4726 = vpop.f32.mrf.mxu0
        %4727 = vmatprep.mubr.bf16.mxu0 0
        %4728 = vmatmul.mubr.bf16.gmra.mxu0 %v4510
        %v4729 = vpop.f32.mrf.mxu0
        %v4730 = vadd.f32 0.0, %v4729
        %v4731 = vpop.f32.mrf.mxu0
        %v4732 = vpop.f32.mrf.mxu0
        %v4733 = vadd.f32 0.0, %v4732
        %v4734 = vpop.f32.mrf.mxu0
        %4735 = vdwg.mxu0
        %v4738 = vunpack.c.l.b16 %v4362
        %v4739 = vunpack.c.l.b16 %v4363
        %v4740 = vpack.c.b16 %v4739, %v4738
        %v4758 = vunpack.c.l.b16 %v4398
        %v4759 = vunpack.c.l.b16 %v4399
        %v4760 = vunpack.c.l.b16 %v4400
        %v4761 = vunpack.c.l.b16 %v4401
        %v4762 = vunpack.c.l.b16 %v4402
        %v4763 = vunpack.c.l.b16 %v4403
        %v4764 = vunpack.c.l.b16 %v4404
        %v4765 = vunpack.c.l.b16 %v4405
        %v4766 = vunpack.c.l.b16 %v4406
        %v4767 = vunpack.c.l.b16 %v4407
        %v4768 = vunpack.c.l.b16 %v4408
        %v4769 = vunpack.c.l.b16 %v4409
        %v4770 = vunpack.c.l.b16 %v4410
        %v4771 = vunpack.c.l.b16 %v4411
        %v4772 = vunpack.c.l.b16 %v4412
        %v4773 = vunpack.c.l.b16 %v4413
        %v4774 = vpack.c.b16 %v4759, %v4758
        %v4775 = vpack.c.b16 %v4761, %v4760
        %v4776 = vpack.c.b16 %v4763, %v4762
        %v4777 = vpack.c.b16 %v4765, %v4764
        %v4778 = vpack.c.b16 %v4767, %v4766
        %v4779 = vpack.c.b16 %v4769, %v4768
        %v4780 = vpack.c.b16 %v4771, %v4770
        %v4781 = vpack.c.b16 %v4773, %v4772
        %4790 = vmatprep.subr.bf16.mxu0 0
        %4791 = vmatpush1.bf16.msra.mxu0 %v4781
        %4792 = vmatprep.subr.bf16.mxu0 0
        %4793 = vmatpush1.bf16.msra.mxu0 %v4780
        %4794 = vmatprep.subr.bf16.mxu0 0
        %4795 = vmatpush1.bf16.msra.mxu0 %v4779
        %4796 = vmatprep.subr.bf16.mxu0 0
        %4797 = vmatpush1.bf16.msra.mxu0 %v4778
        %4798 = vmatprep.subr.bf16.mxu0 0
        %4799 = vmatpush1.bf16.msra.mxu0 %v4777
        %4800 = vmatprep.subr.bf16.mxu0 0
        %4801 = vmatpush1.bf16.msra.mxu0 %v4776
        %4802 = vmatprep.subr.bf16.mxu0 0
        %4803 = vmatpush1.bf16.msra.mxu0 %v4775
        %4804 = vmatprep.subr.bf16.mxu0 0
        %4805 = vmatpush1.bf16.msra.mxu0 %v4774
        %4806 = vmatprep.subr.bf16.mxu0 0
        %4807 = vmatpush2.bf16.msra.mxu0 0
        %4808 = vmatprep.subr.bf16.mxu0 0
        %4809 = vmatpush2.bf16.msra.mxu0 0
        %4810 = vmatprep.subr.bf16.mxu0 0
        %4811 = vmatpush2.bf16.msra.mxu0 0
        %4812 = vmatprep.subr.bf16.mxu0 0
        %4813 = vmatpush2.bf16.msra.mxu0 0
        %4814 = vmatprep.subr.bf16.mxu0 0
        %4815 = vmatpush2.bf16.msra.mxu0 0
        %4816 = vmatprep.subr.bf16.mxu0 0
        %4817 = vmatpush2.bf16.msra.mxu0 0
        %4818 = vmatprep.subr.bf16.mxu0 0
        %4819 = vmatpush2.bf16.msra.mxu0 0
        %4820 = vmatprep.subr.bf16.mxu0 0
        %4821 = vmatpush2.bf16.msra.mxu0 0
        %4822 = vmatprep.mubr.bf16.mxu0 0
        %4823 = vmatmul.mubr.bf16.gmra.mxu0 %v4740
        %v4824 = vpop.f32.mrf.mxu0
        %v4825 = vadd.f32 %v4610, %v4824
        %v4826 = vpop.f32.mrf.mxu0
        %v4827 = vpop.f32.mrf.mxu0
        %v4828 = vadd.f32 %v4613, %v4827
        %v4829 = vpop.f32.mrf.mxu0
        %4830 = vmatprep.mubr.bf16.mxu0 0
        %4831 = vmatmul.mubr.bf16.gmra.mxu0 %v4495
        %v4832 = vpop.f32.mrf.mxu0
        %v4833 = vadd.f32 %v4618, %v4832
        %v4834 = vpop.f32.mrf.mxu0
        %v4835 = vpop.f32.mrf.mxu0
        %v4836 = vadd.f32 %v4621, %v4835
        %v4837 = vpop.f32.mrf.mxu0
        %4838 = vmatprep.mubr.bf16.mxu0 0
        %4839 = vmatmul.mubr.bf16.gmra.mxu0 %v4496
        %v4840 = vpop.f32.mrf.mxu0
        %v4841 = vadd.f32 %v4626, %v4840
        %v4842 = vpop.f32.mrf.mxu0
        %v4843 = vpop.f32.mrf.mxu0
        %v4844 = vadd.f32 %v4629, %v4843
        %v4845 = vpop.f32.mrf.mxu0
        %4846 = vmatprep.mubr.bf16.mxu0 0
        %4847 = vmatmul.mubr.bf16.gmra.mxu0 %v4497
        %v4848 = vpop.f32.mrf.mxu0
        %v4849 = vadd.f32 %v4634, %v4848
        %v4850 = vpop.f32.mrf.mxu0
        %v4851 = vpop.f32.mrf.mxu0
        %v4852 = vadd.f32 %v4637, %v4851
        %v4853 = vpop.f32.mrf.mxu0
        %4854 = vmatprep.mubr.bf16.mxu0 0
        %4855 = vmatmul.mubr.bf16.gmra.mxu0 %v4498
        %v4856 = vpop.f32.mrf.mxu0
        %v4857 = vadd.f32 %v4642, %v4856
        %v4858 = vpop.f32.mrf.mxu0
        %v4859 = vpop.f32.mrf.mxu0
        %v4860 = vadd.f32 %v4645, %v4859
        %v4861 = vpop.f32.mrf.mxu0
        %4862 = vmatprep.mubr.bf16.mxu0 0
        %4863 = vmatmul.mubr.bf16.gmra.mxu0 %v4499
        %v4864 = vpop.f32.mrf.mxu0
        %v4865 = vadd.f32 %v4650, %v4864
        %v4866 = vpop.f32.mrf.mxu0
        %v4867 = vpop.f32.mrf.mxu0
        %v4868 = vadd.f32 %v4653, %v4867
        %v4869 = vpop.f32.mrf.mxu0
        %4870 = vmatprep.mubr.bf16.mxu0 0
        %4871 = vmatmul.mubr.bf16.gmra.mxu0 %v4500
        %v4872 = vpop.f32.mrf.mxu0
        %v4873 = vadd.f32 %v4658, %v4872
        %v4874 = vpop.f32.mrf.mxu0
        %v4875 = vpop.f32.mrf.mxu0
        %v4876 = vadd.f32 %v4661, %v4875
        %v4877 = vpop.f32.mrf.mxu0
        %4878 = vmatprep.mubr.bf16.mxu0 0
        %4879 = vmatmul.mubr.bf16.gmra.mxu0 %v4501
        %v4880 = vpop.f32.mrf.mxu0
        %v4881 = vadd.f32 %v4666, %v4880
        %v4882 = vpop.f32.mrf.mxu0
        %v4883 = vpop.f32.mrf.mxu0
        %v4884 = vadd.f32 %v4669, %v4883
        %v4885 = vpop.f32.mrf.mxu0
        %4886 = vmatprep.mubr.bf16.mxu0 0
        %4887 = vmatmul.mubr.bf16.gmra.mxu0 %v4502
        %v4888 = vpop.f32.mrf.mxu0
        %v4889 = vadd.f32 %v4674, %v4888
        %v4890 = vpop.f32.mrf.mxu0
        %v4891 = vpop.f32.mrf.mxu0
        %v4892 = vadd.f32 %v4677, %v4891
        %v4893 = vpop.f32.mrf.mxu0
        %4894 = vmatprep.mubr.bf16.mxu0 0
        %4895 = vmatmul.mubr.bf16.gmra.mxu0 %v4503
        %v4896 = vpop.f32.mrf.mxu0
        %v4897 = vadd.f32 %v4682, %v4896
        %v4898 = vpop.f32.mrf.mxu0
        %v4899 = vpop.f32.mrf.mxu0
        %v4900 = vadd.f32 %v4685, %v4899
        %v4901 = vpop.f32.mrf.mxu0
        %4902 = vmatprep.mubr.bf16.mxu0 0
        %4903 = vmatmul.mubr.bf16.gmra.mxu0 %v4504
        %v4904 = vpop.f32.mrf.mxu0
        %v4905 = vadd.f32 %v4690, %v4904
        %v4906 = vpop.f32.mrf.mxu0
        %v4907 = vpop.f32.mrf.mxu0
        %v4908 = vadd.f32 %v4693, %v4907
        %v4909 = vpop.f32.mrf.mxu0
        %4910 = vmatprep.mubr.bf16.mxu0 0
        %4911 = vmatmul.mubr.bf16.gmra.mxu0 %v4505
        %v4912 = vpop.f32.mrf.mxu0
        %v4913 = vadd.f32 %v4698, %v4912
        %v4914 = vpop.f32.mrf.mxu0
        %v4915 = vpop.f32.mrf.mxu0
        %v4916 = vadd.f32 %v4701, %v4915
        %v4917 = vpop.f32.mrf.mxu0
        %4918 = vmatprep.mubr.bf16.mxu0 0
        %4919 = vmatmul.mubr.bf16.gmra.mxu0 %v4506
        %v4920 = vpop.f32.mrf.mxu0
        %v4921 = vadd.f32 %v4706, %v4920
        %v4922 = vpop.f32.mrf.mxu0
        %v4923 = vpop.f32.mrf.mxu0
        %v4924 = vadd.f32 %v4709, %v4923
        %v4925 = vpop.f32.mrf.mxu0
        %4926 = vmatprep.mubr.bf16.mxu0 0
        %4927 = vmatmul.mubr.bf16.gmra.mxu0 %v4507
        %v4928 = vpop.f32.mrf.mxu0
        %v4929 = vadd.f32 %v4714, %v4928
        %v4930 = vpop.f32.mrf.mxu0
        %v4931 = vpop.f32.mrf.mxu0
        %v4932 = vadd.f32 %v4717, %v4931
        %v4933 = vpop.f32.mrf.mxu0
        %4934 = vmatprep.mubr.bf16.mxu0 0
        %4935 = vmatmul.mubr.bf16.gmra.mxu0 %v4508
        %v4936 = vpop.f32.mrf.mxu0
        %v4937 = vadd.f32 %v4722, %v4936
        %v4938 = vpop.f32.mrf.mxu0
        %v4939 = vpop.f32.mrf.mxu0
        %v4940 = vadd.f32 %v4725, %v4939
        %v4941 = vpop.f32.mrf.mxu0
        %4942 = vmatprep.mubr.bf16.mxu0 0
        %4943 = vmatmul.mubr.bf16.gmra.mxu0 %v4509
        %v4944 = vpop.f32.mrf.mxu0
        %v4945 = vadd.f32 %v4730, %v4944
        %v4946 = vpop.f32.mrf.mxu0
        %v4947 = vpop.f32.mrf.mxu0
        %v4948 = vadd.f32 %v4733, %v4947
        %v4949 = vpop.f32.mrf.mxu0
        %4950 = vdwg.mxu0
        %s4951 = scalar_lea.vmem [#allocation3], 384
        %v4952 = vld [vmem:[%s4951] sm:$0xf]
        %v4953 = vld [vmem:[%s4951 + $0x4] sm:$0xf]
        %v4954 = vld [vmem:[%s4951 + $0x8] sm:$0xf]
        %v4955 = vld [vmem:[%s4951 + $0xc] sm:$0xf]
        %v4956 = vld [vmem:[%s4951 + $0x10] sm:$0xf]
        %v4957 = vld [vmem:[%s4951 + $0x14] sm:$0xf]
        %v4958 = vld [vmem:[%s4951 + $0x18] sm:$0xf]
        %v4959 = vld [vmem:[%s4951 + $0x1c] sm:$0xf]
        %v4960 = vld [vmem:[%s4951 + $0x20] sm:$0xf]
        %v4961 = vld [vmem:[%s4951 + $0x24] sm:$0xf]
        %v4962 = vld [vmem:[%s4951 + $0x28] sm:$0xf]
        %v4963 = vld [vmem:[%s4951 + $0x2c] sm:$0xf]
        %v4964 = vld [vmem:[%s4951 + $0x30] sm:$0xf]
        %v4965 = vld [vmem:[%s4951 + $0x34] sm:$0xf]
        %v4966 = vld [vmem:[%s4951 + $0x38] sm:$0xf]
        %v4967 = vld [vmem:[%s4951 + $0x3c] sm:$0xf]
        %v4970 = vunpack.c.l.b16 %v4396
        %v4971 = vunpack.c.l.b16 %v4397
        %v4972 = vpack.c.b16 %v4971, %v4970
        %v4990 = vunpack.c.l.b16 %v4952
        %v4991 = vunpack.c.l.b16 %v4953
        %v4992 = vunpack.c.l.b16 %v4954
        %v4993 = vunpack.c.l.b16 %v4955
        %v4994 = vunpack.c.l.b16 %v4956
        %v4995 = vunpack.c.l.b16 %v4957
        %v4996 = vunpack.c.l.b16 %v4958
        %v4997 = vunpack.c.l.b16 %v4959
        %v4998 = vunpack.c.l.b16 %v4960
        %v4999 = vunpack.c.l.b16 %v4961
        %v5000 = vunpack.c.l.b16 %v4962
        %v5001 = vunpack.c.l.b16 %v4963
        %v5002 = vunpack.c.l.b16 %v4964
        %v5003 = vunpack.c.l.b16 %v4965
        %v5004 = vunpack.c.l.b16 %v4966
        %v5005 = vunpack.c.l.b16 %v4967
        %v5006 = vpack.c.b16 %v4991, %v4990
        %v5007 = vpack.c.b16 %v4993, %v4992
        %v5008 = vpack.c.b16 %v4995, %v4994
        %v5009 = vpack.c.b16 %v4997, %v4996
        %v5010 = vpack.c.b16 %v4999, %v4998
        %v5011 = vpack.c.b16 %v5001, %v5000
        %v5012 = vpack.c.b16 %v5003, %v5002
        %v5013 = vpack.c.b16 %v5005, %v5004
        %5022 = vmatprep.subr.bf16.mxu0 0
        %5023 = vmatpush1.bf16.msra.mxu0 %v5013
        %5024 = vmatprep.subr.bf16.mxu0 0
        %5025 = vmatpush1.bf16.msra.mxu0 %v5012
        %5026 = vmatprep.subr.bf16.mxu0 0
        %5027 = vmatpush1.bf16.msra.mxu0 %v5011
        %5028 = vmatprep.subr.bf16.mxu0 0
        %5029 = vmatpush1.bf16.msra.mxu0 %v5010
        %5030 = vmatprep.subr.bf16.mxu0 0
        %5031 = vmatpush1.bf16.msra.mxu0 %v5009
        %5032 = vmatprep.subr.bf16.mxu0 0
        %5033 = vmatpush1.bf16.msra.mxu0 %v5008
        %5034 = vmatprep.subr.bf16.mxu0 0
        %5035 = vmatpush1.bf16.msra.mxu0 %v5007
        %5036 = vmatprep.subr.bf16.mxu0 0
        %5037 = vmatpush1.bf16.msra.mxu0 %v5006
        %5038 = vmatprep.subr.bf16.mxu0 0
        %5039 = vmatpush2.bf16.msra.mxu0 0
        %5040 = vmatprep.subr.bf16.mxu0 0
        %5041 = vmatpush2.bf16.msra.mxu0 0
        %5042 = vmatprep.subr.bf16.mxu0 0
        %5043 = vmatpush2.bf16.msra.mxu0 0
        %5044 = vmatprep.subr.bf16.mxu0 0
        %5045 = vmatpush2.bf16.msra.mxu0 0
        %5046 = vmatprep.subr.bf16.mxu0 0
        %5047 = vmatpush2.bf16.msra.mxu0 0
        %5048 = vmatprep.subr.bf16.mxu0 0
        %5049 = vmatpush2.bf16.msra.mxu0 0
        %5050 = vmatprep.subr.bf16.mxu0 0
        %5051 = vmatpush2.bf16.msra.mxu0 0
        %5052 = vmatprep.subr.bf16.mxu0 0
        %5053 = vmatpush2.bf16.msra.mxu0 0
        %5054 = vmatprep.mubr.bf16.mxu0 0
        %5055 = vmatmul.mubr.bf16.gmra.mxu0 %v4496
        %v5056 = vpop.f32.mrf.mxu0
        %v5057 = vadd.f32 0.0, %v5056
        %v5058 = vpop.f32.mrf.mxu0
        %v5059 = vpop.f32.mrf.mxu0
        %v5060 = vadd.f32 0.0, %v5059
        %v5061 = vpop.f32.mrf.mxu0
        %5062 = vmatprep.mubr.bf16.mxu0 0
        %5063 = vmatmul.mubr.bf16.gmra.mxu0 %v4497
        %v5064 = vpop.f32.mrf.mxu0
        %v5065 = vadd.f32 0.0, %v5064
        %v5066 = vpop.f32.mrf.mxu0
        %v5067 = vpop.f32.mrf.mxu0
        %v5068 = vadd.f32 0.0, %v5067
        %v5069 = vpop.f32.mrf.mxu0
        %5070 = vmatprep.mubr.bf16.mxu0 0
        %5071 = vmatmul.mubr.bf16.gmra.mxu0 %v4498
        %v5072 = vpop.f32.mrf.mxu0
        %v5073 = vadd.f32 0.0, %v5072
        %v5074 = vpop.f32.mrf.mxu0
        %v5075 = vpop.f32.mrf.mxu0
        %v5076 = vadd.f32 0.0, %v5075
        %v5077 = vpop.f32.mrf.mxu0
        %5078 = vmatprep.mubr.bf16.mxu0 0
        %5079 = vmatmul.mubr.bf16.gmra.mxu0 %v4499
        %v5080 = vpop.f32.mrf.mxu0
        %v5081 = vadd.f32 0.0, %v5080
        %v5082 = vpop.f32.mrf.mxu0
        %v5083 = vpop.f32.mrf.mxu0
        %v5084 = vadd.f32 0.0, %v5083
        %v5085 = vpop.f32.mrf.mxu0
        %5086 = vmatprep.mubr.bf16.mxu0 0
        %5087 = vmatmul.mubr.bf16.gmra.mxu0 %v4500
        %v5088 = vpop.f32.mrf.mxu0
        %v5089 = vadd.f32 0.0, %v5088
        %v5090 = vpop.f32.mrf.mxu0
        %v5091 = vpop.f32.mrf.mxu0
        %v5092 = vadd.f32 0.0, %v5091
        %v5093 = vpop.f32.mrf.mxu0
        %5094 = vmatprep.mubr.bf16.mxu0 0
        %5095 = vmatmul.mubr.bf16.gmra.mxu0 %v4501
        %v5096 = vpop.f32.mrf.mxu0
        %v5097 = vadd.f32 0.0, %v5096
        %v5098 = vpop.f32.mrf.mxu0
        %v5099 = vpop.f32.mrf.mxu0
        %v5100 = vadd.f32 0.0, %v5099
        %v5101 = vpop.f32.mrf.mxu0
        %5102 = vmatprep.mubr.bf16.mxu0 0
        %5103 = vmatmul.mubr.bf16.gmra.mxu0 %v4502
        %v5104 = vpop.f32.mrf.mxu0
        %v5105 = vadd.f32 0.0, %v5104
        %v5106 = vpop.f32.mrf.mxu0
        %v5107 = vpop.f32.mrf.mxu0
        %v5108 = vadd.f32 0.0, %v5107
        %v5109 = vpop.f32.mrf.mxu0
        %5110 = vmatprep.mubr.bf16.mxu0 0
        %5111 = vmatmul.mubr.bf16.gmra.mxu0 %v4503
        %v5112 = vpop.f32.mrf.mxu0
        %v5113 = vadd.f32 0.0, %v5112
        %v5114 = vpop.f32.mrf.mxu0
        %v5115 = vpop.f32.mrf.mxu0
        %v5116 = vadd.f32 0.0, %v5115
        %v5117 = vpop.f32.mrf.mxu0
        %5118 = vmatprep.mubr.bf16.mxu0 0
        %5119 = vmatmul.mubr.bf16.gmra.mxu0 %v4504
        %v5120 = vpop.f32.mrf.mxu0
        %v5121 = vadd.f32 0.0, %v5120
        %v5122 = vpop.f32.mrf.mxu0
        %v5123 = vpop.f32.mrf.mxu0
        %v5124 = vadd.f32 0.0, %v5123
        %v5125 = vpop.f32.mrf.mxu0
        %5126 = vmatprep.mubr.bf16.mxu0 0
        %5127 = vmatmul.mubr.bf16.gmra.mxu0 %v4505
        %v5128 = vpop.f32.mrf.mxu0
        %v5129 = vadd.f32 0.0, %v5128
        %v5130 = vpop.f32.mrf.mxu0
        %v5131 = vpop.f32.mrf.mxu0
        %v5132 = vadd.f32 0.0, %v5131
        %v5133 = vpop.f32.mrf.mxu0
        %5134 = vmatprep.mubr.bf16.mxu0 0
        %5135 = vmatmul.mubr.bf16.gmra.mxu0 %v4506
        %v5136 = vpop.f32.mrf.mxu0
        %v5137 = vadd.f32 0.0, %v5136
        %v5138 = vpop.f32.mrf.mxu0
        %v5139 = vpop.f32.mrf.mxu0
        %v5140 = vadd.f32 0.0, %v5139
        %v5141 = vpop.f32.mrf.mxu0
        %5142 = vmatprep.mubr.bf16.mxu0 0
        %5143 = vmatmul.mubr.bf16.gmra.mxu0 %v4507
        %v5144 = vpop.f32.mrf.mxu0
        %v5145 = vadd.f32 0.0, %v5144
        %v5146 = vpop.f32.mrf.mxu0
        %v5147 = vpop.f32.mrf.mxu0
        %v5148 = vadd.f32 0.0, %v5147
        %v5149 = vpop.f32.mrf.mxu0
        %5150 = vmatprep.mubr.bf16.mxu0 0
        %5151 = vmatmul.mubr.bf16.gmra.mxu0 %v4508
        %v5152 = vpop.f32.mrf.mxu0
        %v5153 = vadd.f32 0.0, %v5152
        %v5154 = vpop.f32.mrf.mxu0
        %v5155 = vpop.f32.mrf.mxu0
        %v5156 = vadd.f32 0.0, %v5155
        %v5157 = vpop.f32.mrf.mxu0
        %5158 = vmatprep.mubr.bf16.mxu0 0
        %5159 = vmatmul.mubr.bf16.gmra.mxu0 %v4509
        %v5160 = vpop.f32.mrf.mxu0
        %v5161 = vadd.f32 0.0, %v5160
        %v5162 = vpop.f32.mrf.mxu0
        %v5163 = vpop.f32.mrf.mxu0
        %v5164 = vadd.f32 0.0, %v5163
        %v5165 = vpop.f32.mrf.mxu0
        %5166 = vmatprep.mubr.bf16.mxu0 0
        %5167 = vmatmul.mubr.bf16.gmra.mxu0 %v4510
        %v5168 = vpop.f32.mrf.mxu0
        %v5169 = vadd.f32 0.0, %v5168
        %v5170 = vpop.f32.mrf.mxu0
        %v5171 = vpop.f32.mrf.mxu0
        %v5172 = vadd.f32 0.0, %v5171
        %v5173 = vpop.f32.mrf.mxu0
        %5174 = vmatprep.mubr.bf16.mxu0 0
        %5175 = vmatmul.mubr.bf16.gmra.mxu0 %v4972
        %v5176 = vpop.f32.mrf.mxu0
        %v5177 = vadd.f32 0.0, %v5176
        %v5178 = vpop.f32.mrf.mxu0
        %v5179 = vpop.f32.mrf.mxu0
        %v5180 = vadd.f32 0.0, %v5179
        %v5181 = vpop.f32.mrf.mxu0
        %5182 = vdwg.mxu0
        %v5183 = vadd.f32 %v4825, %v5057
        %v5184 = vadd.f32 %v4828, %v5060
        %v5185 = vadd.f32 %v4833, %v5065
        %v5186 = vadd.f32 %v4836, %v5068
        %v5187 = vadd.f32 %v4841, %v5073
        %v5188 = vadd.f32 %v4844, %v5076
        %v5189 = vadd.f32 %v4849, %v5081
        %v5190 = vadd.f32 %v4852, %v5084
        %v5191 = vadd.f32 %v4857, %v5089
        %v5192 = vadd.f32 %v4860, %v5092
        %v5193 = vadd.f32 %v4865, %v5097
        %v5194 = vadd.f32 %v4868, %v5100
        %v5195 = vadd.f32 %v4873, %v5105
        %v5196 = vadd.f32 %v4876, %v5108
        %v5197 = vadd.f32 %v4881, %v5113
        %v5198 = vadd.f32 %v4884, %v5116
        %v5199 = vadd.f32 %v4889, %v5121
        %v5200 = vadd.f32 %v4892, %v5124
        %v5201 = vadd.f32 %v4897, %v5129
        %v5202 = vadd.f32 %v4900, %v5132
        %v5203 = vadd.f32 %v4905, %v5137
        %v5204 = vadd.f32 %v4908, %v5140
        %v5205 = vadd.f32 %v4913, %v5145
        %v5206 = vadd.f32 %v4916, %v5148
        %v5207 = vadd.f32 %v4921, %v5153
        %v5208 = vadd.f32 %v4924, %v5156
        %v5209 = vadd.f32 %v4929, %v5161
        %v5210 = vadd.f32 %v4932, %v5164
        %v5211 = vadd.f32 %v4937, %v5169
        %v5212 = vadd.f32 %v4940, %v5172
        %v5213 = vadd.f32 %v4945, %v5177
        %v5214 = vadd.f32 %v4948, %v5180
        %v5215 = vld [vmem:[#allocation2] sm:$0xf]
        %v5216 = vld [vmem:[#allocation2 + $0x4] sm:$0xf]
        %v5217 = vld [vmem:[#allocation2 + $0x8] sm:$0x1]
        %v5218 = vld [vmem:[#allocation2 + $0xc] sm:$0xf]
        %v5219 = vld [vmem:[#allocation2 + $0x10] sm:$0xf]
        %v5220 = vld [vmem:[#allocation2 + $0x14] sm:$0x1]
        %v5221 = vld [vmem:[#allocation2 + $0x18] sm:$0xf]
        %v5222 = vld [vmem:[#allocation2 + $0x1c] sm:$0xf]
        %v5223 = vld [vmem:[#allocation2 + $0x20] sm:$0x1]
        %v5224 = vld [vmem:[#allocation2 + $0x24] sm:$0xf]
        %v5225 = vld [vmem:[#allocation2 + $0x28] sm:$0xf]
        %v5226 = vld [vmem:[#allocation2 + $0x2c] sm:$0x1]
        %v5227 = vld [vmem:[#allocation2 + $0x30] sm:$0xf]
        %v5228 = vld [vmem:[#allocation2 + $0x34] sm:$0xf]
        %v5229 = vld [vmem:[#allocation2 + $0x38] sm:$0x1]
        %v5230 = vld [vmem:[#allocation2 + $0x3c] sm:$0xf]
        %v5231 = vld [vmem:[#allocation2 + $0x40] sm:$0xf]
        %v5232 = vld [vmem:[#allocation2 + $0x44] sm:$0x1]
        %v5233 = vld [vmem:[#allocation2 + $0x48] sm:$0xf]
        %v5234 = vld [vmem:[#allocation2 + $0x4c] sm:$0xf]
        %v5235 = vld [vmem:[#allocation2 + $0x50] sm:$0x1]
        %v5236 = vld [vmem:[#allocation2 + $0x54] sm:$0xf]
        %v5237 = vld [vmem:[#allocation2 + $0x58] sm:$0xf]
        %v5238 = vld [vmem:[#allocation2 + $0x5c] sm:$0x1]
        %v5239 = vld [vmem:[#allocation2 + $0x60] sm:$0xf]
        %v5240 = vld [vmem:[#allocation2 + $0x64] sm:$0xf]
        %v5241 = vld [vmem:[#allocation2 + $0x68] sm:$0x1]
        %v5242 = vld [vmem:[#allocation2 + $0x6c] sm:$0xf]
        %v5243 = vld [vmem:[#allocation2 + $0x70] sm:$0xf]
        %v5244 = vld [vmem:[#allocation2 + $0x74] sm:$0x1]
        %v5245 = vld [vmem:[#allocation2 + $0x78] sm:$0xf]
        %v5246 = vld [vmem:[#allocation2 + $0x7c] sm:$0xf]
        %v5247 = vld [vmem:[#allocation2 + $0x80] sm:$0x1]
        %v5248 = vld [vmem:[#allocation2 + $0x84] sm:$0xf]
        %v5249 = vld [vmem:[#allocation2 + $0x88] sm:$0xf]
        %v5250 = vld [vmem:[#allocation2 + $0x8c] sm:$0x1]
        %v5251 = vld [vmem:[#allocation2 + $0x90] sm:$0xf]
        %v5252 = vld [vmem:[#allocation2 + $0x94] sm:$0xf]
        %v5253 = vld [vmem:[#allocation2 + $0x98] sm:$0x1]
        %v5254 = vld [vmem:[#allocation2 + $0x9c] sm:$0xf]
        %v5255 = vld [vmem:[#allocation2 + $0xa0] sm:$0xf]
        %v5256 = vld [vmem:[#allocation2 + $0xa4] sm:$0x1]
        %v5257 = vld [vmem:[#allocation2 + $0xa8] sm:$0xf]
        %v5258 = vld [vmem:[#allocation2 + $0xac] sm:$0xf]
        %v5259 = vld [vmem:[#allocation2 + $0xb0] sm:$0x1]
        %v5260 = vld [vmem:[#allocation2 + $0xb4] sm:$0xf]
        %v5261 = vld [vmem:[#allocation2 + $0xb8] sm:$0xf]
        %v5262 = vld [vmem:[#allocation2 + $0xbc] sm:$0x1]
        %v5263 = vld [vmem:[#allocation2 + $0xc0] sm:$0xf]
        %v5264 = vld [vmem:[#allocation2 + $0xc4] sm:$0xf]
        %v5265 = vld [vmem:[#allocation2 + $0xc8] sm:$0x1]
        %v5266 = vld [vmem:[#allocation2 + $0xcc] sm:$0xf]
        %v5267 = vld [vmem:[#allocation2 + $0xd0] sm:$0xf]
        %v5268 = vld [vmem:[#allocation2 + $0xd4] sm:$0x1]
        %v5270 = vshrl.u32 %v5215, 16
        %v5272 = vrot.slane %v5270, 4
        %v5273 = vshll.u32 %v5215, 16
        %v5275 = vrot.slane %v5273, 5
        %v5276 = vor.u32 %v5272, %v5275
        %v5277 = vrot.slane %v5276, 4
        %v5279 = vshll.u32 %v5216, 16
        %v5281 = vrot.slane %v5279, 5
        %v5282 = vsel %vm1393, %v5277, %v5281
        %v5283 = vshrl.u32 %v5216, 16
        %v5285 = vrot.slane %v5283, 4
        %v5286 = vor.u32 %v5285, %v5281
        %v5287 = vrot.slane %v5286, 4
        %v5289 = vshll.u32 %v5217, 16
        %v5291 = vrot.slane %v5289, 5
        %v5292 = vsel %vm1393, %v5287, %v5291
        %v5294 = vshrl.u32 %v5218, 16
        %v5296 = vrot.slane %v5294, 4
        %v5297 = vshll.u32 %v5218, 16
        %v5299 = vrot.slane %v5297, 5
        %v5300 = vor.u32 %v5296, %v5299
        %v5301 = vrot.slane %v5300, 4
        %v5303 = vshll.u32 %v5219, 16
        %v5305 = vrot.slane %v5303, 5
        %v5306 = vsel %vm1393, %v5301, %v5305
        %v5307 = vshrl.u32 %v5219, 16
        %v5309 = vrot.slane %v5307, 4
        %v5310 = vor.u32 %v5309, %v5305
        %v5311 = vrot.slane %v5310, 4
        %v5313 = vshll.u32 %v5220, 16
        %v5315 = vrot.slane %v5313, 5
        %v5316 = vsel %vm1393, %v5311, %v5315
        %v5318 = vshrl.u32 %v5221, 16
        %v5320 = vrot.slane %v5318, 4
        %v5321 = vshll.u32 %v5221, 16
        %v5323 = vrot.slane %v5321, 5
        %v5324 = vor.u32 %v5320, %v5323
        %v5325 = vrot.slane %v5324, 4
        %v5327 = vshll.u32 %v5222, 16
        %v5329 = vrot.slane %v5327, 5
        %v5330 = vsel %vm1393, %v5325, %v5329
        %v5331 = vshrl.u32 %v5222, 16
        %v5333 = vrot.slane %v5331, 4
        %v5334 = vor.u32 %v5333, %v5329
        %v5335 = vrot.slane %v5334, 4
        %v5337 = vshll.u32 %v5223, 16
        %v5339 = vrot.slane %v5337, 5
        %v5340 = vsel %vm1393, %v5335, %v5339
        %v5342 = vshrl.u32 %v5224, 16
        %v5344 = vrot.slane %v5342, 4
        %v5345 = vshll.u32 %v5224, 16
        %v5347 = vrot.slane %v5345, 5
        %v5348 = vor.u32 %v5344, %v5347
        %v5349 = vrot.slane %v5348, 4
        %v5351 = vshll.u32 %v5225, 16
        %v5353 = vrot.slane %v5351, 5
        %v5354 = vsel %vm1393, %v5349, %v5353
        %v5355 = vshrl.u32 %v5225, 16
        %v5357 = vrot.slane %v5355, 4
        %v5358 = vor.u32 %v5357, %v5353
        %v5359 = vrot.slane %v5358, 4
        %v5361 = vshll.u32 %v5226, 16
        %v5363 = vrot.slane %v5361, 5
        %v5364 = vsel %vm1393, %v5359, %v5363
        %v5366 = vshrl.u32 %v5227, 16
        %v5368 = vrot.slane %v5366, 4
        %v5369 = vshll.u32 %v5227, 16
        %v5371 = vrot.slane %v5369, 5
        %v5372 = vor.u32 %v5368, %v5371
        %v5373 = vrot.slane %v5372, 4
        %v5375 = vshll.u32 %v5228, 16
        %v5377 = vrot.slane %v5375, 5
        %v5378 = vsel %vm1393, %v5373, %v5377
        %v5379 = vshrl.u32 %v5228, 16
        %v5381 = vrot.slane %v5379, 4
        %v5382 = vor.u32 %v5381, %v5377
        %v5383 = vrot.slane %v5382, 4
        %v5385 = vshll.u32 %v5229, 16
        %v5387 = vrot.slane %v5385, 5
        %v5388 = vsel %vm1393, %v5383, %v5387
        %v5390 = vshrl.u32 %v5230, 16
        %v5392 = vrot.slane %v5390, 4
        %v5393 = vshll.u32 %v5230, 16
        %v5395 = vrot.slane %v5393, 5
        %v5396 = vor.u32 %v5392, %v5395
        %v5397 = vrot.slane %v5396, 4
        %v5399 = vshll.u32 %v5231, 16
        %v5401 = vrot.slane %v5399, 5
        %v5402 = vsel %vm1393, %v5397, %v5401
        %v5403 = vshrl.u32 %v5231, 16
        %v5405 = vrot.slane %v5403, 4
        %v5406 = vor.u32 %v5405, %v5401
        %v5407 = vrot.slane %v5406, 4
        %v5409 = vshll.u32 %v5232, 16
        %v5411 = vrot.slane %v5409, 5
        %v5412 = vsel %vm1393, %v5407, %v5411
        %v5414 = vshrl.u32 %v5233, 16
        %v5416 = vrot.slane %v5414, 4
        %v5417 = vshll.u32 %v5233, 16
        %v5419 = vrot.slane %v5417, 5
        %v5420 = vor.u32 %v5416, %v5419
        %v5421 = vrot.slane %v5420, 4
        %v5423 = vshll.u32 %v5234, 16
        %v5425 = vrot.slane %v5423, 5
        %v5426 = vsel %vm1393, %v5421, %v5425
        %v5427 = vshrl.u32 %v5234, 16
        %v5429 = vrot.slane %v5427, 4
        %v5430 = vor.u32 %v5429, %v5425
        %v5431 = vrot.slane %v5430, 4
        %v5433 = vshll.u32 %v5235, 16
        %v5435 = vrot.slane %v5433, 5
        %v5436 = vsel %vm1393, %v5431, %v5435
        %v5438 = vshrl.u32 %v5236, 16
        %v5440 = vrot.slane %v5438, 4
        %v5441 = vshll.u32 %v5236, 16
        %v5443 = vrot.slane %v5441, 5
        %v5444 = vor.u32 %v5440, %v5443
        %v5445 = vrot.slane %v5444, 4
        %v5447 = vshll.u32 %v5237, 16
        %v5449 = vrot.slane %v5447, 5
        %v5450 = vsel %vm1393, %v5445, %v5449
        %v5451 = vshrl.u32 %v5237, 16
        %v5453 = vrot.slane %v5451, 4
        %v5454 = vor.u32 %v5453, %v5449
        %v5455 = vrot.slane %v5454, 4
        %v5457 = vshll.u32 %v5238, 16
        %v5459 = vrot.slane %v5457, 5
        %v5460 = vsel %vm1393, %v5455, %v5459
        %v5462 = vshrl.u32 %v5239, 16
        %v5464 = vrot.slane %v5462, 4
        %v5465 = vshll.u32 %v5239, 16
        %v5467 = vrot.slane %v5465, 5
        %v5468 = vor.u32 %v5464, %v5467
        %v5469 = vrot.slane %v5468, 4
        %v5471 = vshll.u32 %v5240, 16
        %v5473 = vrot.slane %v5471, 5
        %v5474 = vsel %vm1393, %v5469, %v5473
        %v5475 = vshrl.u32 %v5240, 16
        %v5477 = vrot.slane %v5475, 4
        %v5478 = vor.u32 %v5477, %v5473
        %v5479 = vrot.slane %v5478, 4
        %v5481 = vshll.u32 %v5241, 16
        %v5483 = vrot.slane %v5481, 5
        %v5484 = vsel %vm1393, %v5479, %v5483
        %v5486 = vshrl.u32 %v5242, 16
        %v5488 = vrot.slane %v5486, 4
        %v5489 = vshll.u32 %v5242, 16
        %v5491 = vrot.slane %v5489, 5
        %v5492 = vor.u32 %v5488, %v5491
        %v5493 = vrot.slane %v5492, 4
        %v5495 = vshll.u32 %v5243, 16
        %v5497 = vrot.slane %v5495, 5
        %v5498 = vsel %vm1393, %v5493, %v5497
        %v5499 = vshrl.u32 %v5243, 16
        %v5501 = vrot.slane %v5499, 4
        %v5502 = vor.u32 %v5501, %v5497
        %v5503 = vrot.slane %v5502, 4
        %v5505 = vshll.u32 %v5244, 16
        %v5507 = vrot.slane %v5505, 5
        %v5508 = vsel %vm1393, %v5503, %v5507
        %v5510 = vshrl.u32 %v5245, 16
        %v5512 = vrot.slane %v5510, 4
        %v5513 = vshll.u32 %v5245, 16
        %v5515 = vrot.slane %v5513, 5
        %v5516 = vor.u32 %v5512, %v5515
        %v5517 = vrot.slane %v5516, 4
        %v5519 = vshll.u32 %v5246, 16
        %v5521 = vrot.slane %v5519, 5
        %v5522 = vsel %vm1393, %v5517, %v5521
        %v5523 = vshrl.u32 %v5246, 16
        %v5525 = vrot.slane %v5523, 4
        %v5526 = vor.u32 %v5525, %v5521
        %v5527 = vrot.slane %v5526, 4
        %v5529 = vshll.u32 %v5247, 16
        %v5531 = vrot.slane %v5529, 5
        %v5532 = vsel %vm1393, %v5527, %v5531
        %v5534 = vshrl.u32 %v5248, 16
        %v5536 = vrot.slane %v5534, 4
        %v5537 = vshll.u32 %v5248, 16
        %v5539 = vrot.slane %v5537, 5
        %v5540 = vor.u32 %v5536, %v5539
        %v5541 = vrot.slane %v5540, 4
        %v5543 = vshll.u32 %v5249, 16
        %v5545 = vrot.slane %v5543, 5
        %v5546 = vsel %vm1393, %v5541, %v5545
        %v5547 = vshrl.u32 %v5249, 16
        %v5549 = vrot.slane %v5547, 4
        %v5550 = vor.u32 %v5549, %v5545
        %v5551 = vrot.slane %v5550, 4
        %v5553 = vshll.u32 %v5250, 16
        %v5555 = vrot.slane %v5553, 5
        %v5556 = vsel %vm1393, %v5551, %v5555
        %v5558 = vshrl.u32 %v5251, 16
        %v5560 = vrot.slane %v5558, 4
        %v5561 = vshll.u32 %v5251, 16
        %v5563 = vrot.slane %v5561, 5
        %v5564 = vor.u32 %v5560, %v5563
        %v5565 = vrot.slane %v5564, 4
        %v5567 = vshll.u32 %v5252, 16
        %v5569 = vrot.slane %v5567, 5
        %v5570 = vsel %vm1393, %v5565, %v5569
        %v5571 = vshrl.u32 %v5252, 16
        %v5573 = vrot.slane %v5571, 4
        %v5574 = vor.u32 %v5573, %v5569
        %v5575 = vrot.slane %v5574, 4
        %v5577 = vshll.u32 %v5253, 16
        %v5579 = vrot.slane %v5577, 5
        %v5580 = vsel %vm1393, %v5575, %v5579
        %v5582 = vshrl.u32 %v5254, 16
        %v5584 = vrot.slane %v5582, 4
        %v5585 = vshll.u32 %v5254, 16
        %v5587 = vrot.slane %v5585, 5
        %v5588 = vor.u32 %v5584, %v5587
        %v5589 = vrot.slane %v5588, 4
        %v5591 = vshll.u32 %v5255, 16
        %v5593 = vrot.slane %v5591, 5
        %v5594 = vsel %vm1393, %v5589, %v5593
        %v5595 = vshrl.u32 %v5255, 16
        %v5597 = vrot.slane %v5595, 4
        %v5598 = vor.u32 %v5597, %v5593
        %v5599 = vrot.slane %v5598, 4
        %v5601 = vshll.u32 %v5256, 16
        %v5603 = vrot.slane %v5601, 5
        %v5604 = vsel %vm1393, %v5599, %v5603
        %v5606 = vshrl.u32 %v5257, 16
        %v5608 = vrot.slane %v5606, 4
        %v5609 = vshll.u32 %v5257, 16
        %v5611 = vrot.slane %v5609, 5
        %v5612 = vor.u32 %v5608, %v5611
        %v5613 = vrot.slane %v5612, 4
        %v5615 = vshll.u32 %v5258, 16
        %v5617 = vrot.slane %v5615, 5
        %v5618 = vsel %vm1393, %v5613, %v5617
        %v5619 = vshrl.u32 %v5258, 16
        %v5621 = vrot.slane %v5619, 4
        %v5622 = vor.u32 %v5621, %v5617
        %v5623 = vrot.slane %v5622, 4
        %v5625 = vshll.u32 %v5259, 16
        %v5627 = vrot.slane %v5625, 5
        %v5628 = vsel %vm1393, %v5623, %v5627
        %v5630 = vshrl.u32 %v5260, 16
        %v5632 = vrot.slane %v5630, 4
        %v5633 = vshll.u32 %v5260, 16
        %v5635 = vrot.slane %v5633, 5
        %v5636 = vor.u32 %v5632, %v5635
        %v5637 = vrot.slane %v5636, 4
        %v5639 = vshll.u32 %v5261, 16
        %v5641 = vrot.slane %v5639, 5
        %v5642 = vsel %vm1393, %v5637, %v5641
        %v5643 = vshrl.u32 %v5261, 16
        %v5645 = vrot.slane %v5643, 4
        %v5646 = vor.u32 %v5645, %v5641
        %v5647 = vrot.slane %v5646, 4
        %v5649 = vshll.u32 %v5262, 16
        %v5651 = vrot.slane %v5649, 5
        %v5652 = vsel %vm1393, %v5647, %v5651
        %v5654 = vshrl.u32 %v5263, 16
        %v5656 = vrot.slane %v5654, 4
        %v5657 = vshll.u32 %v5263, 16
        %v5659 = vrot.slane %v5657, 5
        %v5660 = vor.u32 %v5656, %v5659
        %v5661 = vrot.slane %v5660, 4
        %v5663 = vshll.u32 %v5264, 16
        %v5665 = vrot.slane %v5663, 5
        %v5666 = vsel %vm1393, %v5661, %v5665
        %v5667 = vshrl.u32 %v5264, 16
        %v5669 = vrot.slane %v5667, 4
        %v5670 = vor.u32 %v5669, %v5665
        %v5671 = vrot.slane %v5670, 4
        %v5673 = vshll.u32 %v5265, 16
        %v5675 = vrot.slane %v5673, 5
        %v5676 = vsel %vm1393, %v5671, %v5675
        %v5678 = vshrl.u32 %v5266, 16
        %v5680 = vrot.slane %v5678, 4
        %v5681 = vshll.u32 %v5266, 16
        %v5683 = vrot.slane %v5681, 5
        %v5684 = vor.u32 %v5680, %v5683
        %v5685 = vrot.slane %v5684, 4
        %v5687 = vshll.u32 %v5267, 16
        %v5689 = vrot.slane %v5687, 5
        %v5690 = vsel %vm1393, %v5685, %v5689
        %v5691 = vshrl.u32 %v5267, 16
        %v5693 = vrot.slane %v5691, 4
        %v5694 = vor.u32 %v5693, %v5689
        %v5695 = vrot.slane %v5694, 4
        %v5697 = vshll.u32 %v5268, 16
        %v5699 = vrot.slane %v5697, 5
        %v5700 = vsel %vm1393, %v5695, %v5699
        %s5701 = scalar_lea.vmem [#allocation3], 64
        %v5702 = vld [vmem:[%s5701] sm:$0xf]
        %v5703 = vld [vmem:[%s5701 + $0x4] sm:$0xf]
        %v5704 = vld [vmem:[%s5701 + $0x8] sm:$0xf]
        %v5705 = vld [vmem:[%s5701 + $0xc] sm:$0xf]
        %v5706 = vld [vmem:[%s5701 + $0x10] sm:$0xf]
        %v5707 = vld [vmem:[%s5701 + $0x14] sm:$0xf]
        %v5708 = vld [vmem:[%s5701 + $0x18] sm:$0xf]
        %v5709 = vld [vmem:[%s5701 + $0x1c] sm:$0xf]
        %v5710 = vld [vmem:[%s5701 + $0x20] sm:$0xf]
        %v5711 = vld [vmem:[%s5701 + $0x24] sm:$0xf]
        %v5712 = vld [vmem:[%s5701 + $0x28] sm:$0xf]
        %v5713 = vld [vmem:[%s5701 + $0x2c] sm:$0xf]
        %v5714 = vld [vmem:[%s5701 + $0x30] sm:$0xf]
        %v5715 = vld [vmem:[%s5701 + $0x34] sm:$0xf]
        %v5716 = vld [vmem:[%s5701 + $0x38] sm:$0xf]
        %v5717 = vld [vmem:[%s5701 + $0x3c] sm:$0xf]
        %v5718 = vunpack.c.l.b16 %v5282
        %v5719 = vunpack.c.l.b16 %v5292
        %v5720 = vunpack.c.l.b16 %v5306
        %v5721 = vunpack.c.l.b16 %v5316
        %v5722 = vunpack.c.l.b16 %v5330
        %v5723 = vunpack.c.l.b16 %v5340
        %v5724 = vunpack.c.l.b16 %v5354
        %v5725 = vunpack.c.l.b16 %v5364
        %v5726 = vunpack.c.l.b16 %v5378
        %v5727 = vunpack.c.l.b16 %v5388
        %v5728 = vunpack.c.l.b16 %v5402
        %v5729 = vunpack.c.l.b16 %v5412
        %v5730 = vunpack.c.l.b16 %v5426
        %v5731 = vunpack.c.l.b16 %v5436
        %v5732 = vunpack.c.l.b16 %v5450
        %v5733 = vunpack.c.l.b16 %v5460
        %v5734 = vunpack.c.l.b16 %v5474
        %v5735 = vunpack.c.l.b16 %v5484
        %v5736 = vunpack.c.l.b16 %v5498
        %v5737 = vunpack.c.l.b16 %v5508
        %v5738 = vunpack.c.l.b16 %v5522
        %v5739 = vunpack.c.l.b16 %v5532
        %v5740 = vunpack.c.l.b16 %v5546
        %v5741 = vunpack.c.l.b16 %v5556
        %v5742 = vunpack.c.l.b16 %v5570
        %v5743 = vunpack.c.l.b16 %v5580
        %v5744 = vunpack.c.l.b16 %v5594
        %v5745 = vunpack.c.l.b16 %v5604
        %v5746 = vunpack.c.l.b16 %v5618
        %v5747 = vunpack.c.l.b16 %v5628
        %v5748 = vunpack.c.l.b16 %v5642
        %v5749 = vunpack.c.l.b16 %v5652
        %v5750 = vpack.c.b16 %v5719, %v5718
        %v5751 = vpack.c.b16 %v5721, %v5720
        %v5752 = vpack.c.b16 %v5723, %v5722
        %v5753 = vpack.c.b16 %v5725, %v5724
        %v5754 = vpack.c.b16 %v5727, %v5726
        %v5755 = vpack.c.b16 %v5729, %v5728
        %v5756 = vpack.c.b16 %v5731, %v5730
        %v5757 = vpack.c.b16 %v5733, %v5732
        %v5758 = vpack.c.b16 %v5735, %v5734
        %v5759 = vpack.c.b16 %v5737, %v5736
        %v5760 = vpack.c.b16 %v5739, %v5738
        %v5761 = vpack.c.b16 %v5741, %v5740
        %v5762 = vpack.c.b16 %v5743, %v5742
        %v5763 = vpack.c.b16 %v5745, %v5744
        %v5764 = vpack.c.b16 %v5747, %v5746
        %v5765 = vpack.c.b16 %v5749, %v5748
        %v5798 = vunpack.c.l.b16 %v5702
        %v5799 = vunpack.c.l.b16 %v5703
        %v5800 = vunpack.c.l.b16 %v5704
        %v5801 = vunpack.c.l.b16 %v5705
        %v5802 = vunpack.c.l.b16 %v5706
        %v5803 = vunpack.c.l.b16 %v5707
        %v5804 = vunpack.c.l.b16 %v5708
        %v5805 = vunpack.c.l.b16 %v5709
        %v5806 = vunpack.c.l.b16 %v5710
        %v5807 = vunpack.c.l.b16 %v5711
        %v5808 = vunpack.c.l.b16 %v5712
        %v5809 = vunpack.c.l.b16 %v5713
        %v5810 = vunpack.c.l.b16 %v5714
        %v5811 = vunpack.c.l.b16 %v5715
        %v5812 = vunpack.c.l.b16 %v5716
        %v5813 = vunpack.c.l.b16 %v5717
        %v5814 = vpack.c.b16 %v5799, %v5798
        %v5815 = vpack.c.b16 %v5801, %v5800
        %v5816 = vpack.c.b16 %v5803, %v5802
        %v5817 = vpack.c.b16 %v5805, %v5804
        %v5818 = vpack.c.b16 %v5807, %v5806
        %v5819 = vpack.c.b16 %v5809, %v5808
        %v5820 = vpack.c.b16 %v5811, %v5810
        %v5821 = vpack.c.b16 %v5813, %v5812
        %5830 = vmatprep.subr.bf16.mxu0 0
        %5831 = vmatpush1.bf16.msra.mxu0 %v5821
        %5832 = vmatprep.subr.bf16.mxu0 0
        %5833 = vmatpush1.bf16.msra.mxu0 %v5820
        %5834 = vmatprep.subr.bf16.mxu0 0
        %5835 = vmatpush1.bf16.msra.mxu0 %v5819
        %5836 = vmatprep.subr.bf16.mxu0 0
        %5837 = vmatpush1.bf16.msra.mxu0 %v5818
        %5838 = vmatprep.subr.bf16.mxu0 0
        %5839 = vmatpush1.bf16.msra.mxu0 %v5817
        %5840 = vmatprep.subr.bf16.mxu0 0
        %5841 = vmatpush1.bf16.msra.mxu0 %v5816
        %5842 = vmatprep.subr.bf16.mxu0 0
        %5843 = vmatpush1.bf16.msra.mxu0 %v5815
        %5844 = vmatprep.subr.bf16.mxu0 0
        %5845 = vmatpush1.bf16.msra.mxu0 %v5814
        %5846 = vmatprep.subr.bf16.mxu0 0
        %5847 = vmatpush2.bf16.msra.mxu0 0
        %5848 = vmatprep.subr.bf16.mxu0 0
        %5849 = vmatpush2.bf16.msra.mxu0 0
        %5850 = vmatprep.subr.bf16.mxu0 0
        %5851 = vmatpush2.bf16.msra.mxu0 0
        %5852 = vmatprep.subr.bf16.mxu0 0
        %5853 = vmatpush2.bf16.msra.mxu0 0
        %5854 = vmatprep.subr.bf16.mxu0 0
        %5855 = vmatpush2.bf16.msra.mxu0 0
        %5856 = vmatprep.subr.bf16.mxu0 0
        %5857 = vmatpush2.bf16.msra.mxu0 0
        %5858 = vmatprep.subr.bf16.mxu0 0
        %5859 = vmatpush2.bf16.msra.mxu0 0
        %5860 = vmatprep.subr.bf16.mxu0 0
        %5861 = vmatpush2.bf16.msra.mxu0 0
        %5862 = vmatprep.mubr.bf16.mxu0 0
        %5863 = vmatmul.mubr.bf16.gmra.mxu0 %v5750
        %v5864 = vpop.f32.mrf.mxu0
        %v5865 = vadd.f32 0.0, %v5864
        %v5866 = vpop.f32.mrf.mxu0
        %v5867 = vpop.f32.mrf.mxu0
        %v5868 = vadd.f32 0.0, %v5867
        %v5869 = vpop.f32.mrf.mxu0
        %5870 = vmatprep.mubr.bf16.mxu0 0
        %5871 = vmatmul.mubr.bf16.gmra.mxu0 %v5751
        %v5872 = vpop.f32.mrf.mxu0
        %v5873 = vadd.f32 0.0, %v5872
        %v5874 = vpop.f32.mrf.mxu0
        %v5875 = vpop.f32.mrf.mxu0
        %v5876 = vadd.f32 0.0, %v5875
        %v5877 = vpop.f32.mrf.mxu0
        %5878 = vmatprep.mubr.bf16.mxu0 0
        %5879 = vmatmul.mubr.bf16.gmra.mxu0 %v5752
        %v5880 = vpop.f32.mrf.mxu0
        %v5881 = vadd.f32 0.0, %v5880
        %v5882 = vpop.f32.mrf.mxu0
        %v5883 = vpop.f32.mrf.mxu0
        %v5884 = vadd.f32 0.0, %v5883
        %v5885 = vpop.f32.mrf.mxu0
        %5886 = vmatprep.mubr.bf16.mxu0 0
        %5887 = vmatmul.mubr.bf16.gmra.mxu0 %v5753
        %v5888 = vpop.f32.mrf.mxu0
        %v5889 = vadd.f32 0.0, %v5888
        %v5890 = vpop.f32.mrf.mxu0
        %v5891 = vpop.f32.mrf.mxu0
        %v5892 = vadd.f32 0.0, %v5891
        %v5893 = vpop.f32.mrf.mxu0
        %5894 = vmatprep.mubr.bf16.mxu0 0
        %5895 = vmatmul.mubr.bf16.gmra.mxu0 %v5754
        %v5896 = vpop.f32.mrf.mxu0
        %v5897 = vadd.f32 0.0, %v5896
        %v5898 = vpop.f32.mrf.mxu0
        %v5899 = vpop.f32.mrf.mxu0
        %v5900 = vadd.f32 0.0, %v5899
        %v5901 = vpop.f32.mrf.mxu0
        %5902 = vmatprep.mubr.bf16.mxu0 0
        %5903 = vmatmul.mubr.bf16.gmra.mxu0 %v5755
        %v5904 = vpop.f32.mrf.mxu0
        %v5905 = vadd.f32 0.0, %v5904
        %v5906 = vpop.f32.mrf.mxu0
        %v5907 = vpop.f32.mrf.mxu0
        %v5908 = vadd.f32 0.0, %v5907
        %v5909 = vpop.f32.mrf.mxu0
        %5910 = vmatprep.mubr.bf16.mxu0 0
        %5911 = vmatmul.mubr.bf16.gmra.mxu0 %v5756
        %v5912 = vpop.f32.mrf.mxu0
        %v5913 = vadd.f32 0.0, %v5912
        %v5914 = vpop.f32.mrf.mxu0
        %v5915 = vpop.f32.mrf.mxu0
        %v5916 = vadd.f32 0.0, %v5915
        %v5917 = vpop.f32.mrf.mxu0
        %5918 = vmatprep.mubr.bf16.mxu0 0
        %5919 = vmatmul.mubr.bf16.gmra.mxu0 %v5757
        %v5920 = vpop.f32.mrf.mxu0
        %v5921 = vadd.f32 0.0, %v5920
        %v5922 = vpop.f32.mrf.mxu0
        %v5923 = vpop.f32.mrf.mxu0
        %v5924 = vadd.f32 0.0, %v5923
        %v5925 = vpop.f32.mrf.mxu0
        %5926 = vmatprep.mubr.bf16.mxu0 0
        %5927 = vmatmul.mubr.bf16.gmra.mxu0 %v5758
        %v5928 = vpop.f32.mrf.mxu0
        %v5929 = vadd.f32 0.0, %v5928
        %v5930 = vpop.f32.mrf.mxu0
        %v5931 = vpop.f32.mrf.mxu0
        %v5932 = vadd.f32 0.0, %v5931
        %v5933 = vpop.f32.mrf.mxu0
        %5934 = vmatprep.mubr.bf16.mxu0 0
        %5935 = vmatmul.mubr.bf16.gmra.mxu0 %v5759
        %v5936 = vpop.f32.mrf.mxu0
        %v5937 = vadd.f32 0.0, %v5936
        %v5938 = vpop.f32.mrf.mxu0
        %v5939 = vpop.f32.mrf.mxu0
        %v5940 = vadd.f32 0.0, %v5939
        %v5941 = vpop.f32.mrf.mxu0
        %5942 = vmatprep.mubr.bf16.mxu0 0
        %5943 = vmatmul.mubr.bf16.gmra.mxu0 %v5760
        %v5944 = vpop.f32.mrf.mxu0
        %v5945 = vadd.f32 0.0, %v5944
        %v5946 = vpop.f32.mrf.mxu0
        %v5947 = vpop.f32.mrf.mxu0
        %v5948 = vadd.f32 0.0, %v5947
        %v5949 = vpop.f32.mrf.mxu0
        %5950 = vmatprep.mubr.bf16.mxu0 0
        %5951 = vmatmul.mubr.bf16.gmra.mxu0 %v5761
        %v5952 = vpop.f32.mrf.mxu0
        %v5953 = vadd.f32 0.0, %v5952
        %v5954 = vpop.f32.mrf.mxu0
        %v5955 = vpop.f32.mrf.mxu0
        %v5956 = vadd.f32 0.0, %v5955
        %v5957 = vpop.f32.mrf.mxu0
        %5958 = vmatprep.mubr.bf16.mxu0 0
        %5959 = vmatmul.mubr.bf16.gmra.mxu0 %v5762
        %v5960 = vpop.f32.mrf.mxu0
        %v5961 = vadd.f32 0.0, %v5960
        %v5962 = vpop.f32.mrf.mxu0
        %v5963 = vpop.f32.mrf.mxu0
        %v5964 = vadd.f32 0.0, %v5963
        %v5965 = vpop.f32.mrf.mxu0
        %5966 = vmatprep.mubr.bf16.mxu0 0
        %5967 = vmatmul.mubr.bf16.gmra.mxu0 %v5763
        %v5968 = vpop.f32.mrf.mxu0
        %v5969 = vadd.f32 0.0, %v5968
        %v5970 = vpop.f32.mrf.mxu0
        %v5971 = vpop.f32.mrf.mxu0
        %v5972 = vadd.f32 0.0, %v5971
        %v5973 = vpop.f32.mrf.mxu0
        %5974 = vmatprep.mubr.bf16.mxu0 0
        %5975 = vmatmul.mubr.bf16.gmra.mxu0 %v5764
        %v5976 = vpop.f32.mrf.mxu0
        %v5977 = vadd.f32 0.0, %v5976
        %v5978 = vpop.f32.mrf.mxu0
        %v5979 = vpop.f32.mrf.mxu0
        %v5980 = vadd.f32 0.0, %v5979
        %v5981 = vpop.f32.mrf.mxu0
        %5982 = vmatprep.mubr.bf16.mxu0 0
        %5983 = vmatmul.mubr.bf16.gmra.mxu0 %v5765
        %v5984 = vpop.f32.mrf.mxu0
        %v5985 = vadd.f32 0.0, %v5984
        %v5986 = vpop.f32.mrf.mxu0
        %v5987 = vpop.f32.mrf.mxu0
        %v5988 = vadd.f32 0.0, %v5987
        %v5989 = vpop.f32.mrf.mxu0
        %5990 = vdwg.mxu0
        %v5991 = vadd.f32 %v5183, %v5865
        %v5992 = vadd.f32 %v5184, %v5868
        %v5993 = vadd.f32 %v5185, %v5873
        %v5994 = vadd.f32 %v5186, %v5876
        %v5995 = vadd.f32 %v5187, %v5881
        %v5996 = vadd.f32 %v5188, %v5884
        %v5997 = vadd.f32 %v5189, %v5889
        %v5998 = vadd.f32 %v5190, %v5892
        %v5999 = vadd.f32 %v5191, %v5897
        %v6000 = vadd.f32 %v5192, %v5900
        %v6001 = vadd.f32 %v5193, %v5905
        %v6002 = vadd.f32 %v5194, %v5908
        %v6003 = vadd.f32 %v5195, %v5913
        %v6004 = vadd.f32 %v5196, %v5916
        %v6005 = vadd.f32 %v5197, %v5921
        %v6006 = vadd.f32 %v5198, %v5924
        %v6007 = vadd.f32 %v5199, %v5929
        %v6008 = vadd.f32 %v5200, %v5932
        %v6009 = vadd.f32 %v5201, %v5937
        %v6010 = vadd.f32 %v5202, %v5940
        %v6011 = vadd.f32 %v5203, %v5945
        %v6012 = vadd.f32 %v5204, %v5948
        %v6013 = vadd.f32 %v5205, %v5953
        %v6014 = vadd.f32 %v5206, %v5956
        %v6015 = vadd.f32 %v5207, %v5961
        %v6016 = vadd.f32 %v5208, %v5964
        %v6017 = vadd.f32 %v5209, %v5969
        %v6018 = vadd.f32 %v5210, %v5972
        %v6019 = vadd.f32 %v5211, %v5977
        %v6020 = vadd.f32 %v5212, %v5980
        %v6021 = vadd.f32 %v5213, %v5985
        %v6022 = vadd.f32 %v5214, %v5988
        %s6023 = scalar_lea.vmem [#allocation3], 256
        %v6024 = vld [vmem:[%s6023] sm:$0xf]
        %v6025 = vld [vmem:[%s6023 + $0x4] sm:$0xf]
        %v6026 = vld [vmem:[%s6023 + $0x8] sm:$0xf]
        %v6027 = vld [vmem:[%s6023 + $0xc] sm:$0xf]
        %v6028 = vld [vmem:[%s6023 + $0x10] sm:$0xf]
        %v6029 = vld [vmem:[%s6023 + $0x14] sm:$0xf]
        %v6030 = vld [vmem:[%s6023 + $0x18] sm:$0xf]
        %v6031 = vld [vmem:[%s6023 + $0x1c] sm:$0xf]
        %v6032 = vld [vmem:[%s6023 + $0x20] sm:$0xf]
        %v6033 = vld [vmem:[%s6023 + $0x24] sm:$0xf]
        %v6034 = vld [vmem:[%s6023 + $0x28] sm:$0xf]
        %v6035 = vld [vmem:[%s6023 + $0x2c] sm:$0xf]
        %v6036 = vld [vmem:[%s6023 + $0x30] sm:$0xf]
        %v6037 = vld [vmem:[%s6023 + $0x34] sm:$0xf]
        %v6038 = vld [vmem:[%s6023 + $0x38] sm:$0xf]
        %v6039 = vld [vmem:[%s6023 + $0x3c] sm:$0xf]
        %v6040 = vunpack.c.l.b16 %v5666
        %v6041 = vunpack.c.l.b16 %v5676
        %v6042 = vpack.c.b16 %v6041, %v6040
        %v6060 = vunpack.c.l.b16 %v6024
        %v6061 = vunpack.c.l.b16 %v6025
        %v6062 = vunpack.c.l.b16 %v6026
        %v6063 = vunpack.c.l.b16 %v6027
        %v6064 = vunpack.c.l.b16 %v6028
        %v6065 = vunpack.c.l.b16 %v6029
        %v6066 = vunpack.c.l.b16 %v6030
        %v6067 = vunpack.c.l.b16 %v6031
        %v6068 = vunpack.c.l.b16 %v6032
        %v6069 = vunpack.c.l.b16 %v6033
        %v6070 = vunpack.c.l.b16 %v6034
        %v6071 = vunpack.c.l.b16 %v6035
        %v6072 = vunpack.c.l.b16 %v6036
        %v6073 = vunpack.c.l.b16 %v6037
        %v6074 = vunpack.c.l.b16 %v6038
        %v6075 = vunpack.c.l.b16 %v6039
        %v6076 = vpack.c.b16 %v6061, %v6060
        %v6077 = vpack.c.b16 %v6063, %v6062
        %v6078 = vpack.c.b16 %v6065, %v6064
        %v6079 = vpack.c.b16 %v6067, %v6066
        %v6080 = vpack.c.b16 %v6069, %v6068
        %v6081 = vpack.c.b16 %v6071, %v6070
        %v6082 = vpack.c.b16 %v6073, %v6072
        %v6083 = vpack.c.b16 %v6075, %v6074
        %6092 = vmatprep.subr.bf16.mxu0 0
        %6093 = vmatpush1.bf16.msra.mxu0 %v6083
        %6094 = vmatprep.subr.bf16.mxu0 0
        %6095 = vmatpush1.bf16.msra.mxu0 %v6082
        %6096 = vmatprep.subr.bf16.mxu0 0
        %6097 = vmatpush1.bf16.msra.mxu0 %v6081
        %6098 = vmatprep.subr.bf16.mxu0 0
        %6099 = vmatpush1.bf16.msra.mxu0 %v6080
        %6100 = vmatprep.subr.bf16.mxu0 0
        %6101 = vmatpush1.bf16.msra.mxu0 %v6079
        %6102 = vmatprep.subr.bf16.mxu0 0
        %6103 = vmatpush1.bf16.msra.mxu0 %v6078
        %6104 = vmatprep.subr.bf16.mxu0 0
        %6105 = vmatpush1.bf16.msra.mxu0 %v6077
        %6106 = vmatprep.subr.bf16.mxu0 0
        %6107 = vmatpush1.bf16.msra.mxu0 %v6076
        %6108 = vmatprep.subr.bf16.mxu0 0
        %6109 = vmatpush2.bf16.msra.mxu0 0
        %6110 = vmatprep.subr.bf16.mxu0 0
        %6111 = vmatpush2.bf16.msra.mxu0 0
        %6112 = vmatprep.subr.bf16.mxu0 0
        %6113 = vmatpush2.bf16.msra.mxu0 0
        %6114 = vmatprep.subr.bf16.mxu0 0
        %6115 = vmatpush2.bf16.msra.mxu0 0
        %6116 = vmatprep.subr.bf16.mxu0 0
        %6117 = vmatpush2.bf16.msra.mxu0 0
        %6118 = vmatprep.subr.bf16.mxu0 0
        %6119 = vmatpush2.bf16.msra.mxu0 0
        %6120 = vmatprep.subr.bf16.mxu0 0
        %6121 = vmatpush2.bf16.msra.mxu0 0
        %6122 = vmatprep.subr.bf16.mxu0 0
        %6123 = vmatpush2.bf16.msra.mxu0 0
        %6124 = vmatprep.mubr.bf16.mxu0 0
        %6125 = vmatmul.mubr.bf16.gmra.mxu0 %v5751
        %v6126 = vpop.f32.mrf.mxu0
        %v6127 = vadd.f32 0.0, %v6126
        %v6128 = vpop.f32.mrf.mxu0
        %v6129 = vpop.f32.mrf.mxu0
        %v6130 = vadd.f32 0.0, %v6129
        %v6131 = vpop.f32.mrf.mxu0
        %6132 = vmatprep.mubr.bf16.mxu0 0
        %6133 = vmatmul.mubr.bf16.gmra.mxu0 %v5752
        %v6134 = vpop.f32.mrf.mxu0
        %v6135 = vadd.f32 0.0, %v6134
        %v6136 = vpop.f32.mrf.mxu0
        %v6137 = vpop.f32.mrf.mxu0
        %v6138 = vadd.f32 0.0, %v6137
        %v6139 = vpop.f32.mrf.mxu0
        %6140 = vmatprep.mubr.bf16.mxu0 0
        %6141 = vmatmul.mubr.bf16.gmra.mxu0 %v5753
        %v6142 = vpop.f32.mrf.mxu0
        %v6143 = vadd.f32 0.0, %v6142
        %v6144 = vpop.f32.mrf.mxu0
        %v6145 = vpop.f32.mrf.mxu0
        %v6146 = vadd.f32 0.0, %v6145
        %v6147 = vpop.f32.mrf.mxu0
        %6148 = vmatprep.mubr.bf16.mxu0 0
        %6149 = vmatmul.mubr.bf16.gmra.mxu0 %v5754
        %v6150 = vpop.f32.mrf.mxu0
        %v6151 = vadd.f32 0.0, %v6150
        %v6152 = vpop.f32.mrf.mxu0
        %v6153 = vpop.f32.mrf.mxu0
        %v6154 = vadd.f32 0.0, %v6153
        %v6155 = vpop.f32.mrf.mxu0
        %6156 = vmatprep.mubr.bf16.mxu0 0
        %6157 = vmatmul.mubr.bf16.gmra.mxu0 %v5755
        %v6158 = vpop.f32.mrf.mxu0
        %v6159 = vadd.f32 0.0, %v6158
        %v6160 = vpop.f32.mrf.mxu0
        %v6161 = vpop.f32.mrf.mxu0
        %v6162 = vadd.f32 0.0, %v6161
        %v6163 = vpop.f32.mrf.mxu0
        %6164 = vmatprep.mubr.bf16.mxu0 0
        %6165 = vmatmul.mubr.bf16.gmra.mxu0 %v5756
        %v6166 = vpop.f32.mrf.mxu0
        %v6167 = vadd.f32 0.0, %v6166
        %v6168 = vpop.f32.mrf.mxu0
        %v6169 = vpop.f32.mrf.mxu0
        %v6170 = vadd.f32 0.0, %v6169
        %v6171 = vpop.f32.mrf.mxu0
        %6172 = vmatprep.mubr.bf16.mxu0 0
        %6173 = vmatmul.mubr.bf16.gmra.mxu0 %v5757
        %v6174 = vpop.f32.mrf.mxu0
        %v6175 = vadd.f32 0.0, %v6174
        %v6176 = vpop.f32.mrf.mxu0
        %v6177 = vpop.f32.mrf.mxu0
        %v6178 = vadd.f32 0.0, %v6177
        %v6179 = vpop.f32.mrf.mxu0
        %6180 = vmatprep.mubr.bf16.mxu0 0
        %6181 = vmatmul.mubr.bf16.gmra.mxu0 %v5758
        %v6182 = vpop.f32.mrf.mxu0
        %v6183 = vadd.f32 0.0, %v6182
        %v6184 = vpop.f32.mrf.mxu0
        %v6185 = vpop.f32.mrf.mxu0
        %v6186 = vadd.f32 0.0, %v6185
        %v6187 = vpop.f32.mrf.mxu0
        %6188 = vmatprep.mubr.bf16.mxu0 0
        %6189 = vmatmul.mubr.bf16.gmra.mxu0 %v5759
        %v6190 = vpop.f32.mrf.mxu0
        %v6191 = vadd.f32 0.0, %v6190
        %v6192 = vpop.f32.mrf.mxu0
        %v6193 = vpop.f32.mrf.mxu0
        %v6194 = vadd.f32 0.0, %v6193
        %v6195 = vpop.f32.mrf.mxu0
        %6196 = vmatprep.mubr.bf16.mxu0 0
        %6197 = vmatmul.mubr.bf16.gmra.mxu0 %v5760
        %v6198 = vpop.f32.mrf.mxu0
        %v6199 = vadd.f32 0.0, %v6198
        %v6200 = vpop.f32.mrf.mxu0
        %v6201 = vpop.f32.mrf.mxu0
        %v6202 = vadd.f32 0.0, %v6201
        %v6203 = vpop.f32.mrf.mxu0
        %6204 = vmatprep.mubr.bf16.mxu0 0
        %6205 = vmatmul.mubr.bf16.gmra.mxu0 %v5761
        %v6206 = vpop.f32.mrf.mxu0
        %v6207 = vadd.f32 0.0, %v6206
        %v6208 = vpop.f32.mrf.mxu0
        %v6209 = vpop.f32.mrf.mxu0
        %v6210 = vadd.f32 0.0, %v6209
        %v6211 = vpop.f32.mrf.mxu0
        %6212 = vmatprep.mubr.bf16.mxu0 0
        %6213 = vmatmul.mubr.bf16.gmra.mxu0 %v5762
        %v6214 = vpop.f32.mrf.mxu0
        %v6215 = vadd.f32 0.0, %v6214
        %v6216 = vpop.f32.mrf.mxu0
        %v6217 = vpop.f32.mrf.mxu0
        %v6218 = vadd.f32 0.0, %v6217
        %v6219 = vpop.f32.mrf.mxu0
        %6220 = vmatprep.mubr.bf16.mxu0 0
        %6221 = vmatmul.mubr.bf16.gmra.mxu0 %v5763
        %v6222 = vpop.f32.mrf.mxu0
        %v6223 = vadd.f32 0.0, %v6222
        %v6224 = vpop.f32.mrf.mxu0
        %v6225 = vpop.f32.mrf.mxu0
        %v6226 = vadd.f32 0.0, %v6225
        %v6227 = vpop.f32.mrf.mxu0
        %6228 = vmatprep.mubr.bf16.mxu0 0
        %6229 = vmatmul.mubr.bf16.gmra.mxu0 %v5764
        %v6230 = vpop.f32.mrf.mxu0
        %v6231 = vadd.f32 0.0, %v6230
        %v6232 = vpop.f32.mrf.mxu0
        %v6233 = vpop.f32.mrf.mxu0
        %v6234 = vadd.f32 0.0, %v6233
        %v6235 = vpop.f32.mrf.mxu0
        %6236 = vmatprep.mubr.bf16.mxu0 0
        %6237 = vmatmul.mubr.bf16.gmra.mxu0 %v5765
        %v6238 = vpop.f32.mrf.mxu0
        %v6239 = vadd.f32 0.0, %v6238
        %v6240 = vpop.f32.mrf.mxu0
        %v6241 = vpop.f32.mrf.mxu0
        %v6242 = vadd.f32 0.0, %v6241
        %v6243 = vpop.f32.mrf.mxu0
        %6244 = vmatprep.mubr.bf16.mxu0 0
        %6245 = vmatmul.mubr.bf16.gmra.mxu0 %v6042
        %v6246 = vpop.f32.mrf.mxu0
        %v6247 = vadd.f32 0.0, %v6246
        %v6248 = vpop.f32.mrf.mxu0
        %v6249 = vpop.f32.mrf.mxu0
        %v6250 = vadd.f32 0.0, %v6249
        %v6251 = vpop.f32.mrf.mxu0
        %6252 = vdwg.mxu0
        %v6253 = vadd.f32 %v5991, %v6127
        %v6254 = vadd.f32 %v5992, %v6130
        %v6255 = vadd.f32 %v5993, %v6135
        %v6256 = vadd.f32 %v5994, %v6138
        %v6257 = vadd.f32 %v5995, %v6143
        %v6258 = vadd.f32 %v5996, %v6146
        %v6259 = vadd.f32 %v5997, %v6151
        %v6260 = vadd.f32 %v5998, %v6154
        %v6261 = vadd.f32 %v5999, %v6159
        %v6262 = vadd.f32 %v6000, %v6162
        %v6263 = vadd.f32 %v6001, %v6167
        %v6264 = vadd.f32 %v6002, %v6170
        %v6265 = vadd.f32 %v6003, %v6175
        %v6266 = vadd.f32 %v6004, %v6178
        %v6267 = vadd.f32 %v6005, %v6183
        %v6268 = vadd.f32 %v6006, %v6186
        %v6269 = vadd.f32 %v6007, %v6191
        %v6270 = vadd.f32 %v6008, %v6194
        %v6271 = vadd.f32 %v6009, %v6199
        %v6272 = vadd.f32 %v6010, %v6202
        %v6273 = vadd.f32 %v6011, %v6207
        %v6274 = vadd.f32 %v6012, %v6210
        %v6275 = vadd.f32 %v6013, %v6215
        %v6276 = vadd.f32 %v6014, %v6218
        %v6277 = vadd.f32 %v6015, %v6223
        %v6278 = vadd.f32 %v6016, %v6226
        %v6279 = vadd.f32 %v6017, %v6231
        %v6280 = vadd.f32 %v6018, %v6234
        %v6281 = vadd.f32 %v6019, %v6239
        %v6282 = vadd.f32 %v6020, %v6242
        %v6283 = vadd.f32 %v6021, %v6247
        %v6284 = vadd.f32 %v6022, %v6250
        %s6285 = scalar_lea.vmem [#allocation3], 448
        %v6286 = vld [vmem:[%s6285] sm:$0xf]
        %v6287 = vld [vmem:[%s6285 + $0x4] sm:$0xf]
        %v6288 = vld [vmem:[%s6285 + $0x8] sm:$0xf]
        %v6289 = vld [vmem:[%s6285 + $0xc] sm:$0xf]
        %v6290 = vld [vmem:[%s6285 + $0x10] sm:$0xf]
        %v6291 = vld [vmem:[%s6285 + $0x14] sm:$0xf]
        %v6292 = vld [vmem:[%s6285 + $0x18] sm:$0xf]
        %v6293 = vld [vmem:[%s6285 + $0x1c] sm:$0xf]
        %v6294 = vld [vmem:[%s6285 + $0x20] sm:$0xf]
        %v6295 = vld [vmem:[%s6285 + $0x24] sm:$0xf]
        %v6296 = vld [vmem:[%s6285 + $0x28] sm:$0xf]
        %v6297 = vld [vmem:[%s6285 + $0x2c] sm:$0xf]
        %v6298 = vld [vmem:[%s6285 + $0x30] sm:$0xf]
        %v6299 = vld [vmem:[%s6285 + $0x34] sm:$0xf]
        %v6300 = vld [vmem:[%s6285 + $0x38] sm:$0xf]
        %v6301 = vld [vmem:[%s6285 + $0x3c] sm:$0xf]
        %v6302 = vunpack.c.l.b16 %v5690
        %v6303 = vunpack.c.l.b16 %v5700
        %v6304 = vpack.c.b16 %v6303, %v6302
        %v6322 = vunpack.c.l.b16 %v6286
        %v6323 = vunpack.c.l.b16 %v6287
        %v6324 = vunpack.c.l.b16 %v6288
        %v6325 = vunpack.c.l.b16 %v6289
        %v6326 = vunpack.c.l.b16 %v6290
        %v6327 = vunpack.c.l.b16 %v6291
        %v6328 = vunpack.c.l.b16 %v6292
        %v6329 = vunpack.c.l.b16 %v6293
        %v6330 = vunpack.c.l.b16 %v6294
        %v6331 = vunpack.c.l.b16 %v6295
        %v6332 = vunpack.c.l.b16 %v6296
        %v6333 = vunpack.c.l.b16 %v6297
        %v6334 = vunpack.c.l.b16 %v6298
        %v6335 = vunpack.c.l.b16 %v6299
        %v6336 = vunpack.c.l.b16 %v6300
        %v6337 = vunpack.c.l.b16 %v6301
        %v6338 = vpack.c.b16 %v6323, %v6322
        %v6339 = vpack.c.b16 %v6325, %v6324
        %v6340 = vpack.c.b16 %v6327, %v6326
        %v6341 = vpack.c.b16 %v6329, %v6328
        %v6342 = vpack.c.b16 %v6331, %v6330
        %v6343 = vpack.c.b16 %v6333, %v6332
        %v6344 = vpack.c.b16 %v6335, %v6334
        %v6345 = vpack.c.b16 %v6337, %v6336
        %6354 = vmatprep.subr.bf16.mxu0 0
        %6355 = vmatpush1.bf16.msra.mxu0 %v6345
        %6356 = vmatprep.subr.bf16.mxu0 0
        %6357 = vmatpush1.bf16.msra.mxu0 %v6344
        %6358 = vmatprep.subr.bf16.mxu0 0
        %6359 = vmatpush1.bf16.msra.mxu0 %v6343
        %6360 = vmatprep.subr.bf16.mxu0 0
        %6361 = vmatpush1.bf16.msra.mxu0 %v6342
        %6362 = vmatprep.subr.bf16.mxu0 0
        %6363 = vmatpush1.bf16.msra.mxu0 %v6341
        %6364 = vmatprep.subr.bf16.mxu0 0
        %6365 = vmatpush1.bf16.msra.mxu0 %v6340
        %6366 = vmatprep.subr.bf16.mxu0 0
        %6367 = vmatpush1.bf16.msra.mxu0 %v6339
        %6368 = vmatprep.subr.bf16.mxu0 0
        %6369 = vmatpush1.bf16.msra.mxu0 %v6338
        %6370 = vmatprep.subr.bf16.mxu0 0
        %6371 = vmatpush2.bf16.msra.mxu0 0
        %6372 = vmatprep.subr.bf16.mxu0 0
        %6373 = vmatpush2.bf16.msra.mxu0 0
        %6374 = vmatprep.subr.bf16.mxu0 0
        %6375 = vmatpush2.bf16.msra.mxu0 0
        %6376 = vmatprep.subr.bf16.mxu0 0
        %6377 = vmatpush2.bf16.msra.mxu0 0
        %6378 = vmatprep.subr.bf16.mxu0 0
        %6379 = vmatpush2.bf16.msra.mxu0 0
        %6380 = vmatprep.subr.bf16.mxu0 0
        %6381 = vmatpush2.bf16.msra.mxu0 0
        %6382 = vmatprep.subr.bf16.mxu0 0
        %6383 = vmatpush2.bf16.msra.mxu0 0
        %6384 = vmatprep.subr.bf16.mxu0 0
        %6385 = vmatpush2.bf16.msra.mxu0 0
        %6386 = vmatprep.mubr.bf16.mxu0 0
        %6387 = vmatmul.mubr.bf16.gmra.mxu0 %v5752
        %v6388 = vpop.f32.mrf.mxu0
        %v6389 = vadd.f32 0.0, %v6388
        %v6390 = vpop.f32.mrf.mxu0
        %v6391 = vpop.f32.mrf.mxu0
        %v6392 = vadd.f32 0.0, %v6391
        %v6393 = vpop.f32.mrf.mxu0
        %6394 = vmatprep.mubr.bf16.mxu0 0
        %6395 = vmatmul.mubr.bf16.gmra.mxu0 %v5753
        %v6396 = vpop.f32.mrf.mxu0
        %v6397 = vadd.f32 0.0, %v6396
        %v6398 = vpop.f32.mrf.mxu0
        %v6399 = vpop.f32.mrf.mxu0
        %v6400 = vadd.f32 0.0, %v6399
        %v6401 = vpop.f32.mrf.mxu0
        %6402 = vmatprep.mubr.bf16.mxu0 0
        %6403 = vmatmul.mubr.bf16.gmra.mxu0 %v5754
        %v6404 = vpop.f32.mrf.mxu0
        %v6405 = vadd.f32 0.0, %v6404
        %v6406 = vpop.f32.mrf.mxu0
        %v6407 = vpop.f32.mrf.mxu0
        %v6408 = vadd.f32 0.0, %v6407
        %v6409 = vpop.f32.mrf.mxu0
        %6410 = vmatprep.mubr.bf16.mxu0 0
        %6411 = vmatmul.mubr.bf16.gmra.mxu0 %v5755
        %v6412 = vpop.f32.mrf.mxu0
        %v6413 = vadd.f32 0.0, %v6412
        %v6414 = vpop.f32.mrf.mxu0
        %v6415 = vpop.f32.mrf.mxu0
        %v6416 = vadd.f32 0.0, %v6415
        %v6417 = vpop.f32.mrf.mxu0
        %6418 = vmatprep.mubr.bf16.mxu0 0
        %6419 = vmatmul.mubr.bf16.gmra.mxu0 %v5756
        %v6420 = vpop.f32.mrf.mxu0
        %v6421 = vadd.f32 0.0, %v6420
        %v6422 = vpop.f32.mrf.mxu0
        %v6423 = vpop.f32.mrf.mxu0
        %v6424 = vadd.f32 0.0, %v6423
        %v6425 = vpop.f32.mrf.mxu0
        %6426 = vmatprep.mubr.bf16.mxu0 0
        %6427 = vmatmul.mubr.bf16.gmra.mxu0 %v5757
        %v6428 = vpop.f32.mrf.mxu0
        %v6429 = vadd.f32 0.0, %v6428
        %v6430 = vpop.f32.mrf.mxu0
        %v6431 = vpop.f32.mrf.mxu0
        %v6432 = vadd.f32 0.0, %v6431
        %v6433 = vpop.f32.mrf.mxu0
        %6434 = vmatprep.mubr.bf16.mxu0 0
        %6435 = vmatmul.mubr.bf16.gmra.mxu0 %v5758
        %v6436 = vpop.f32.mrf.mxu0
        %v6437 = vadd.f32 0.0, %v6436
        %v6438 = vpop.f32.mrf.mxu0
        %v6439 = vpop.f32.mrf.mxu0
        %v6440 = vadd.f32 0.0, %v6439
        %v6441 = vpop.f32.mrf.mxu0
        %6442 = vmatprep.mubr.bf16.mxu0 0
        %6443 = vmatmul.mubr.bf16.gmra.mxu0 %v5759
        %v6444 = vpop.f32.mrf.mxu0
        %v6445 = vadd.f32 0.0, %v6444
        %v6446 = vpop.f32.mrf.mxu0
        %v6447 = vpop.f32.mrf.mxu0
        %v6448 = vadd.f32 0.0, %v6447
        %v6449 = vpop.f32.mrf.mxu0
        %6450 = vmatprep.mubr.bf16.mxu0 0
        %6451 = vmatmul.mubr.bf16.gmra.mxu0 %v5760
        %v6452 = vpop.f32.mrf.mxu0
        %v6453 = vadd.f32 0.0, %v6452
        %v6454 = vpop.f32.mrf.mxu0
        %v6455 = vpop.f32.mrf.mxu0
        %v6456 = vadd.f32 0.0, %v6455
        %v6457 = vpop.f32.mrf.mxu0
        %6458 = vmatprep.mubr.bf16.mxu0 0
        %6459 = vmatmul.mubr.bf16.gmra.mxu0 %v5761
        %v6460 = vpop.f32.mrf.mxu0
        %v6461 = vadd.f32 0.0, %v6460
        %v6462 = vpop.f32.mrf.mxu0
        %v6463 = vpop.f32.mrf.mxu0
        %v6464 = vadd.f32 0.0, %v6463
        %v6465 = vpop.f32.mrf.mxu0
        %6466 = vmatprep.mubr.bf16.mxu0 0
        %6467 = vmatmul.mubr.bf16.gmra.mxu0 %v5762
        %v6468 = vpop.f32.mrf.mxu0
        %v6469 = vadd.f32 0.0, %v6468
        %v6470 = vpop.f32.mrf.mxu0
        %v6471 = vpop.f32.mrf.mxu0
        %v6472 = vadd.f32 0.0, %v6471
        %v6473 = vpop.f32.mrf.mxu0
        %6474 = vmatprep.mubr.bf16.mxu0 0
        %6475 = vmatmul.mubr.bf16.gmra.mxu0 %v5763
        %v6476 = vpop.f32.mrf.mxu0
        %v6477 = vadd.f32 0.0, %v6476
        %v6478 = vpop.f32.mrf.mxu0
        %v6479 = vpop.f32.mrf.mxu0
        %v6480 = vadd.f32 0.0, %v6479
        %v6481 = vpop.f32.mrf.mxu0
        %6482 = vmatprep.mubr.bf16.mxu0 0
        %6483 = vmatmul.mubr.bf16.gmra.mxu0 %v5764
        %v6484 = vpop.f32.mrf.mxu0
        %v6485 = vadd.f32 0.0, %v6484
        %v6486 = vpop.f32.mrf.mxu0
        %v6487 = vpop.f32.mrf.mxu0
        %v6488 = vadd.f32 0.0, %v6487
        %v6489 = vpop.f32.mrf.mxu0
        %6490 = vmatprep.mubr.bf16.mxu0 0
        %6491 = vmatmul.mubr.bf16.gmra.mxu0 %v5765
        %v6492 = vpop.f32.mrf.mxu0
        %v6493 = vadd.f32 0.0, %v6492
        %v6494 = vpop.f32.mrf.mxu0
        %v6495 = vpop.f32.mrf.mxu0
        %v6496 = vadd.f32 0.0, %v6495
        %v6497 = vpop.f32.mrf.mxu0
        %6498 = vmatprep.mubr.bf16.mxu0 0
        %6499 = vmatmul.mubr.bf16.gmra.mxu0 %v6042
        %v6500 = vpop.f32.mrf.mxu0
        %v6501 = vadd.f32 0.0, %v6500
        %v6502 = vpop.f32.mrf.mxu0
        %v6503 = vpop.f32.mrf.mxu0
        %v6504 = vadd.f32 0.0, %v6503
        %v6505 = vpop.f32.mrf.mxu0
        %6506 = vmatprep.mubr.bf16.mxu0 0
        %6507 = vmatmul.mubr.bf16.gmra.mxu0 %v6304
        %v6508 = vpop.f32.mrf.mxu0
        %v6509 = vadd.f32 0.0, %v6508
        %v6510 = vpop.f32.mrf.mxu0
        %v6511 = vpop.f32.mrf.mxu0
        %v6512 = vadd.f32 0.0, %v6511
        %v6513 = vpop.f32.mrf.mxu0
        %6514 = vdwg.mxu0
        %v6515 = vadd.f32 %v6253, %v6389
        %v6516 = vadd.f32 %v6254, %v6392
        %v6517 = vadd.f32 %v6255, %v6397
        %v6518 = vadd.f32 %v6256, %v6400
        %v6519 = vadd.f32 %v6257, %v6405
        %v6520 = vadd.f32 %v6258, %v6408
        %v6521 = vadd.f32 %v6259, %v6413
        %v6522 = vadd.f32 %v6260, %v6416
        %v6523 = vadd.f32 %v6261, %v6421
        %v6524 = vadd.f32 %v6262, %v6424
        %v6525 = vadd.f32 %v6263, %v6429
        %v6526 = vadd.f32 %v6264, %v6432
        %v6527 = vadd.f32 %v6265, %v6437
        %v6528 = vadd.f32 %v6266, %v6440
        %v6529 = vadd.f32 %v6267, %v6445
        %v6530 = vadd.f32 %v6268, %v6448
        %v6531 = vadd.f32 %v6269, %v6453
        %v6532 = vadd.f32 %v6270, %v6456
        %v6533 = vadd.f32 %v6271, %v6461
        %v6534 = vadd.f32 %v6272, %v6464
        %v6535 = vadd.f32 %v6273, %v6469
        %v6536 = vadd.f32 %v6274, %v6472
        %v6537 = vadd.f32 %v6275, %v6477
        %v6538 = vadd.f32 %v6276, %v6480
        %v6539 = vadd.f32 %v6277, %v6485
        %v6540 = vadd.f32 %v6278, %v6488
        %v6541 = vadd.f32 %v6279, %v6493
        %v6542 = vadd.f32 %v6280, %v6496
        %v6543 = vadd.f32 %v6281, %v6501
        %v6544 = vadd.f32 %v6282, %v6504
        %v6545 = vadd.f32 %v6283, %v6509
        %v6546 = vadd.f32 %v6284, %v6512
        %v6547 = vld [vmem:[#allocation2] sm:$0xe]
        %v6548 = vld [vmem:[#allocation2 + $0xc] sm:$0xe]
        %v6549 = vld [vmem:[#allocation2 + $0x18] sm:$0xe]
        %v6550 = vld [vmem:[#allocation2 + $0x24] sm:$0xe]
        %v6551 = vld [vmem:[#allocation2 + $0x30] sm:$0xe]
        %v6552 = vld [vmem:[#allocation2 + $0x3c] sm:$0xe]
        %v6553 = vld [vmem:[#allocation2 + $0x48] sm:$0xe]
        %v6554 = vld [vmem:[#allocation2 + $0x54] sm:$0xe]
        %v6555 = vld [vmem:[#allocation2 + $0x60] sm:$0xe]
        %v6556 = vld [vmem:[#allocation2 + $0x6c] sm:$0xe]
        %v6557 = vld [vmem:[#allocation2 + $0x78] sm:$0xe]
        %v6558 = vld [vmem:[#allocation2 + $0x84] sm:$0xe]
        %v6559 = vld [vmem:[#allocation2 + $0x90] sm:$0xe]
        %v6560 = vld [vmem:[#allocation2 + $0x9c] sm:$0xe]
        %v6561 = vld [vmem:[#allocation2 + $0xa8] sm:$0xe]
        %v6562 = vld [vmem:[#allocation2 + $0xb4] sm:$0xe]
        %v6563 = vld [vmem:[#allocation2 + $0xc0] sm:$0xe]
        %v6564 = vld [vmem:[#allocation2 + $0xcc] sm:$0xe]
        %v6619 = vrot.slane %v6547, 5
        %v6620 = vrot.slane %v6619, 4
        %v6621 = vrot.slane %v5216, 5
        %v6622 = vsel %vm2746, %v6620, %v6621
        %v6623 = vrot.slane %v6621, 4
        %v6624 = vrot.slane %v5217, 5
        %v6625 = vsel %vm2746, %v6623, %v6624
        %v6626 = vrot.slane %v6548, 5
        %v6627 = vrot.slane %v6626, 4
        %v6628 = vrot.slane %v5219, 5
        %v6629 = vsel %vm2746, %v6627, %v6628
        %v6630 = vrot.slane %v6628, 4
        %v6631 = vrot.slane %v5220, 5
        %v6632 = vsel %vm2746, %v6630, %v6631
        %v6633 = vrot.slane %v6549, 5
        %v6634 = vrot.slane %v6633, 4
        %v6635 = vrot.slane %v5222, 5
        %v6636 = vsel %vm2746, %v6634, %v6635
        %v6637 = vrot.slane %v6635, 4
        %v6638 = vrot.slane %v5223, 5
        %v6639 = vsel %vm2746, %v6637, %v6638
        %v6640 = vrot.slane %v6550, 5
        %v6641 = vrot.slane %v6640, 4
        %v6642 = vrot.slane %v5225, 5
        %v6643 = vsel %vm2746, %v6641, %v6642
        %v6644 = vrot.slane %v6642, 4
        %v6645 = vrot.slane %v5226, 5
        %v6646 = vsel %vm2746, %v6644, %v6645
        %v6647 = vrot.slane %v6551, 5
        %v6648 = vrot.slane %v6647, 4
        %v6649 = vrot.slane %v5228, 5
        %v6650 = vsel %vm2746, %v6648, %v6649
        %v6651 = vrot.slane %v6649, 4
        %v6652 = vrot.slane %v5229, 5
        %v6653 = vsel %vm2746, %v6651, %v6652
        %v6654 = vrot.slane %v6552, 5
        %v6655 = vrot.slane %v6654, 4
        %v6656 = vrot.slane %v5231, 5
        %v6657 = vsel %vm2746, %v6655, %v6656
        %v6658 = vrot.slane %v6656, 4
        %v6659 = vrot.slane %v5232, 5
        %v6660 = vsel %vm2746, %v6658, %v6659
        %v6661 = vrot.slane %v6553, 5
        %v6662 = vrot.slane %v6661, 4
        %v6663 = vrot.slane %v5234, 5
        %v6664 = vsel %vm2746, %v6662, %v6663
        %v6665 = vrot.slane %v6663, 4
        %v6666 = vrot.slane %v5235, 5
        %v6667 = vsel %vm2746, %v6665, %v6666
        %v6668 = vrot.slane %v6554, 5
        %v6669 = vrot.slane %v6668, 4
        %v6670 = vrot.slane %v5237, 5
        %v6671 = vsel %vm2746, %v6669, %v6670
        %v6672 = vrot.slane %v6670, 4
        %v6673 = vrot.slane %v5238, 5
        %v6674 = vsel %vm2746, %v6672, %v6673
        %v6675 = vrot.slane %v6555, 5
        %v6676 = vrot.slane %v6675, 4
        %v6677 = vrot.slane %v5240, 5
        %v6678 = vsel %vm2746, %v6676, %v6677
        %v6679 = vrot.slane %v6677, 4
        %v6680 = vrot.slane %v5241, 5
        %v6681 = vsel %vm2746, %v6679, %v6680
        %v6682 = vrot.slane %v6556, 5
        %v6683 = vrot.slane %v6682, 4
        %v6684 = vrot.slane %v5243, 5
        %v6685 = vsel %vm2746, %v6683, %v6684
        %v6686 = vrot.slane %v6684, 4
        %v6687 = vrot.slane %v5244, 5
        %v6688 = vsel %vm2746, %v6686, %v6687
        %v6689 = vrot.slane %v6557, 5
        %v6690 = vrot.slane %v6689, 4
        %v6691 = vrot.slane %v5246, 5
        %v6692 = vsel %vm2746, %v6690, %v6691
        %v6693 = vrot.slane %v6691, 4
        %v6694 = vrot.slane %v5247, 5
        %v6695 = vsel %vm2746, %v6693, %v6694
        %v6696 = vrot.slane %v6558, 5
        %v6697 = vrot.slane %v6696, 4
        %v6698 = vrot.slane %v5249, 5
        %v6699 = vsel %vm2746, %v6697, %v6698
        %v6700 = vrot.slane %v6698, 4
        %v6701 = vrot.slane %v5250, 5
        %v6702 = vsel %vm2746, %v6700, %v6701
        %v6703 = vrot.slane %v6559, 5
        %v6704 = vrot.slane %v6703, 4
        %v6705 = vrot.slane %v5252, 5
        %v6706 = vsel %vm2746, %v6704, %v6705
        %v6707 = vrot.slane %v6705, 4
        %v6708 = vrot.slane %v5253, 5
        %v6709 = vsel %vm2746, %v6707, %v6708
        %v6710 = vrot.slane %v6560, 5
        %v6711 = vrot.slane %v6710, 4
        %v6712 = vrot.slane %v5255, 5
        %v6713 = vsel %vm2746, %v6711, %v6712
        %v6714 = vrot.slane %v6712, 4
        %v6715 = vrot.slane %v5256, 5
        %v6716 = vsel %vm2746, %v6714, %v6715
        %v6717 = vrot.slane %v6561, 5
        %v6718 = vrot.slane %v6717, 4
        %v6719 = vrot.slane %v5258, 5
        %v6720 = vsel %vm2746, %v6718, %v6719
        %v6721 = vrot.slane %v6719, 4
        %v6722 = vrot.slane %v5259, 5
        %v6723 = vsel %vm2746, %v6721, %v6722
        %v6724 = vrot.slane %v6562, 5
        %v6725 = vrot.slane %v6724, 4
        %v6726 = vrot.slane %v5261, 5
        %v6727 = vsel %vm2746, %v6725, %v6726
        %v6728 = vrot.slane %v6726, 4
        %v6729 = vrot.slane %v5262, 5
        %v6730 = vsel %vm2746, %v6728, %v6729
        %v6731 = vrot.slane %v6563, 5
        %v6732 = vrot.slane %v6731, 4
        %v6733 = vrot.slane %v5264, 5
        %v6734 = vsel %vm2746, %v6732, %v6733
        %v6735 = vrot.slane %v6733, 4
        %v6736 = vrot.slane %v5265, 5
        %v6737 = vsel %vm2746, %v6735, %v6736
        %v6738 = vrot.slane %v6564, 5
        %v6739 = vrot.slane %v6738, 4
        %v6740 = vrot.slane %v5267, 5
        %v6741 = vsel %vm2746, %v6739, %v6740
        %v6742 = vrot.slane %v6740, 4
        %v6743 = vrot.slane %v5268, 5
        %v6744 = vsel %vm2746, %v6742, %v6743
        %s6745 = scalar_lea.vmem [#allocation3], 128
        %v6746 = vld [vmem:[%s6745] sm:$0xf]
        %v6747 = vld [vmem:[%s6745 + $0x4] sm:$0xf]
        %v6748 = vld [vmem:[%s6745 + $0x8] sm:$0xf]
        %v6749 = vld [vmem:[%s6745 + $0xc] sm:$0xf]
        %v6750 = vld [vmem:[%s6745 + $0x10] sm:$0xf]
        %v6751 = vld [vmem:[%s6745 + $0x14] sm:$0xf]
        %v6752 = vld [vmem:[%s6745 + $0x18] sm:$0xf]
        %v6753 = vld [vmem:[%s6745 + $0x1c] sm:$0xf]
        %v6754 = vld [vmem:[%s6745 + $0x20] sm:$0xf]
        %v6755 = vld [vmem:[%s6745 + $0x24] sm:$0xf]
        %v6756 = vld [vmem:[%s6745 + $0x28] sm:$0xf]
        %v6757 = vld [vmem:[%s6745 + $0x2c] sm:$0xf]
        %v6758 = vld [vmem:[%s6745 + $0x30] sm:$0xf]
        %v6759 = vld [vmem:[%s6745 + $0x34] sm:$0xf]
        %v6760 = vld [vmem:[%s6745 + $0x38] sm:$0xf]
        %v6761 = vld [vmem:[%s6745 + $0x3c] sm:$0xf]
        %v6762 = vunpack.c.l.b16 %v6622
        %v6763 = vunpack.c.l.b16 %v6625
        %v6764 = vunpack.c.l.b16 %v6629
        %v6765 = vunpack.c.l.b16 %v6632
        %v6766 = vunpack.c.l.b16 %v6636
        %v6767 = vunpack.c.l.b16 %v6639
        %v6768 = vunpack.c.l.b16 %v6643
        %v6769 = vunpack.c.l.b16 %v6646
        %v6770 = vunpack.c.l.b16 %v6650
        %v6771 = vunpack.c.l.b16 %v6653
        %v6772 = vunpack.c.l.b16 %v6657
        %v6773 = vunpack.c.l.b16 %v6660
        %v6774 = vunpack.c.l.b16 %v6664
        %v6775 = vunpack.c.l.b16 %v6667
        %v6776 = vunpack.c.l.b16 %v6671
        %v6777 = vunpack.c.l.b16 %v6674
        %v6778 = vunpack.c.l.b16 %v6678
        %v6779 = vunpack.c.l.b16 %v6681
        %v6780 = vunpack.c.l.b16 %v6685
        %v6781 = vunpack.c.l.b16 %v6688
        %v6782 = vunpack.c.l.b16 %v6692
        %v6783 = vunpack.c.l.b16 %v6695
        %v6784 = vunpack.c.l.b16 %v6699
        %v6785 = vunpack.c.l.b16 %v6702
        %v6786 = vunpack.c.l.b16 %v6706
        %v6787 = vunpack.c.l.b16 %v6709
        %v6788 = vunpack.c.l.b16 %v6713
        %v6789 = vunpack.c.l.b16 %v6716
        %v6790 = vunpack.c.l.b16 %v6720
        %v6791 = vunpack.c.l.b16 %v6723
        %v6792 = vunpack.c.l.b16 %v6727
        %v6793 = vunpack.c.l.b16 %v6730
        %v6794 = vpack.c.b16 %v6763, %v6762
        %v6795 = vpack.c.b16 %v6765, %v6764
        %v6796 = vpack.c.b16 %v6767, %v6766
        %v6797 = vpack.c.b16 %v6769, %v6768
        %v6798 = vpack.c.b16 %v6771, %v6770
        %v6799 = vpack.c.b16 %v6773, %v6772
        %v6800 = vpack.c.b16 %v6775, %v6774
        %v6801 = vpack.c.b16 %v6777, %v6776
        %v6802 = vpack.c.b16 %v6779, %v6778
        %v6803 = vpack.c.b16 %v6781, %v6780
        %v6804 = vpack.c.b16 %v6783, %v6782
        %v6805 = vpack.c.b16 %v6785, %v6784
        %v6806 = vpack.c.b16 %v6787, %v6786
        %v6807 = vpack.c.b16 %v6789, %v6788
        %v6808 = vpack.c.b16 %v6791, %v6790
        %v6809 = vpack.c.b16 %v6793, %v6792
        %v6842 = vunpack.c.l.b16 %v6746
        %v6843 = vunpack.c.l.b16 %v6747
        %v6844 = vunpack.c.l.b16 %v6748
        %v6845 = vunpack.c.l.b16 %v6749
        %v6846 = vunpack.c.l.b16 %v6750
        %v6847 = vunpack.c.l.b16 %v6751
        %v6848 = vunpack.c.l.b16 %v6752
        %v6849 = vunpack.c.l.b16 %v6753
        %v6850 = vunpack.c.l.b16 %v6754
        %v6851 = vunpack.c.l.b16 %v6755
        %v6852 = vunpack.c.l.b16 %v6756
        %v6853 = vunpack.c.l.b16 %v6757
        %v6854 = vunpack.c.l.b16 %v6758
        %v6855 = vunpack.c.l.b16 %v6759
        %v6856 = vunpack.c.l.b16 %v6760
        %v6857 = vunpack.c.l.b16 %v6761
        %v6858 = vpack.c.b16 %v6843, %v6842
        %v6859 = vpack.c.b16 %v6845, %v6844
        %v6860 = vpack.c.b16 %v6847, %v6846
        %v6861 = vpack.c.b16 %v6849, %v6848
        %v6862 = vpack.c.b16 %v6851, %v6850
        %v6863 = vpack.c.b16 %v6853, %v6852
        %v6864 = vpack.c.b16 %v6855, %v6854
        %v6865 = vpack.c.b16 %v6857, %v6856
        %6874 = vmatprep.subr.bf16.mxu0 0
        %6875 = vmatpush1.bf16.msra.mxu0 %v6865
        %6876 = vmatprep.subr.bf16.mxu0 0
        %6877 = vmatpush1.bf16.msra.mxu0 %v6864
        %6878 = vmatprep.subr.bf16.mxu0 0
        %6879 = vmatpush1.bf16.msra.mxu0 %v6863
        %6880 = vmatprep.subr.bf16.mxu0 0
        %6881 = vmatpush1.bf16.msra.mxu0 %v6862
        %6882 = vmatprep.subr.bf16.mxu0 0
        %6883 = vmatpush1.bf16.msra.mxu0 %v6861
        %6884 = vmatprep.subr.bf16.mxu0 0
        %6885 = vmatpush1.bf16.msra.mxu0 %v6860
        %6886 = vmatprep.subr.bf16.mxu0 0
        %6887 = vmatpush1.bf16.msra.mxu0 %v6859
        %6888 = vmatprep.subr.bf16.mxu0 0
        %6889 = vmatpush1.bf16.msra.mxu0 %v6858
        %6890 = vmatprep.subr.bf16.mxu0 0
        %6891 = vmatpush2.bf16.msra.mxu0 0
        %6892 = vmatprep.subr.bf16.mxu0 0
        %6893 = vmatpush2.bf16.msra.mxu0 0
        %6894 = vmatprep.subr.bf16.mxu0 0
        %6895 = vmatpush2.bf16.msra.mxu0 0
        %6896 = vmatprep.subr.bf16.mxu0 0
        %6897 = vmatpush2.bf16.msra.mxu0 0
        %6898 = vmatprep.subr.bf16.mxu0 0
        %6899 = vmatpush2.bf16.msra.mxu0 0
        %6900 = vmatprep.subr.bf16.mxu0 0
        %6901 = vmatpush2.bf16.msra.mxu0 0
        %6902 = vmatprep.subr.bf16.mxu0 0
        %6903 = vmatpush2.bf16.msra.mxu0 0
        %6904 = vmatprep.subr.bf16.mxu0 0
        %6905 = vmatpush2.bf16.msra.mxu0 0
        %6906 = vmatprep.mubr.bf16.mxu0 0
        %6907 = vmatmul.mubr.bf16.gmra.mxu0 %v6794
        %v6908 = vpop.f32.mrf.mxu0
        %v6909 = vadd.f32 0.0, %v6908
        %v6910 = vpop.f32.mrf.mxu0
        %v6911 = vpop.f32.mrf.mxu0
        %v6912 = vadd.f32 0.0, %v6911
        %v6913 = vpop.f32.mrf.mxu0
        %6914 = vmatprep.mubr.bf16.mxu0 0
        %6915 = vmatmul.mubr.bf16.gmra.mxu0 %v6795
        %v6916 = vpop.f32.mrf.mxu0
        %v6917 = vadd.f32 0.0, %v6916
        %v6918 = vpop.f32.mrf.mxu0
        %v6919 = vpop.f32.mrf.mxu0
        %v6920 = vadd.f32 0.0, %v6919
        %v6921 = vpop.f32.mrf.mxu0
        %6922 = vmatprep.mubr.bf16.mxu0 0
        %6923 = vmatmul.mubr.bf16.gmra.mxu0 %v6796
        %v6924 = vpop.f32.mrf.mxu0
        %v6925 = vadd.f32 0.0, %v6924
        %v6926 = vpop.f32.mrf.mxu0
        %v6927 = vpop.f32.mrf.mxu0
        %v6928 = vadd.f32 0.0, %v6927
        %v6929 = vpop.f32.mrf.mxu0
        %6930 = vmatprep.mubr.bf16.mxu0 0
        %6931 = vmatmul.mubr.bf16.gmra.mxu0 %v6797
        %v6932 = vpop.f32.mrf.mxu0
        %v6933 = vadd.f32 0.0, %v6932
        %v6934 = vpop.f32.mrf.mxu0
        %v6935 = vpop.f32.mrf.mxu0
        %v6936 = vadd.f32 0.0, %v6935
        %v6937 = vpop.f32.mrf.mxu0
        %6938 = vmatprep.mubr.bf16.mxu0 0
        %6939 = vmatmul.mubr.bf16.gmra.mxu0 %v6798
        %v6940 = vpop.f32.mrf.mxu0
        %v6941 = vadd.f32 0.0, %v6940
        %v6942 = vpop.f32.mrf.mxu0
        %v6943 = vpop.f32.mrf.mxu0
        %v6944 = vadd.f32 0.0, %v6943
        %v6945 = vpop.f32.mrf.mxu0
        %6946 = vmatprep.mubr.bf16.mxu0 0
        %6947 = vmatmul.mubr.bf16.gmra.mxu0 %v6799
        %v6948 = vpop.f32.mrf.mxu0
        %v6949 = vadd.f32 0.0, %v6948
        %v6950 = vpop.f32.mrf.mxu0
        %v6951 = vpop.f32.mrf.mxu0
        %v6952 = vadd.f32 0.0, %v6951
        %v6953 = vpop.f32.mrf.mxu0
        %6954 = vmatprep.mubr.bf16.mxu0 0
        %6955 = vmatmul.mubr.bf16.gmra.mxu0 %v6800
        %v6956 = vpop.f32.mrf.mxu0
        %v6957 = vadd.f32 0.0, %v6956
        %v6958 = vpop.f32.mrf.mxu0
        %v6959 = vpop.f32.mrf.mxu0
        %v6960 = vadd.f32 0.0, %v6959
        %v6961 = vpop.f32.mrf.mxu0
        %6962 = vmatprep.mubr.bf16.mxu0 0
        %6963 = vmatmul.mubr.bf16.gmra.mxu0 %v6801
        %v6964 = vpop.f32.mrf.mxu0
        %v6965 = vadd.f32 0.0, %v6964
        %v6966 = vpop.f32.mrf.mxu0
        %v6967 = vpop.f32.mrf.mxu0
        %v6968 = vadd.f32 0.0, %v6967
        %v6969 = vpop.f32.mrf.mxu0
        %6970 = vmatprep.mubr.bf16.mxu0 0
        %6971 = vmatmul.mubr.bf16.gmra.mxu0 %v6802
        %v6972 = vpop.f32.mrf.mxu0
        %v6973 = vadd.f32 0.0, %v6972
        %v6974 = vpop.f32.mrf.mxu0
        %v6975 = vpop.f32.mrf.mxu0
        %v6976 = vadd.f32 0.0, %v6975
        %v6977 = vpop.f32.mrf.mxu0
        %6978 = vmatprep.mubr.bf16.mxu0 0
        %6979 = vmatmul.mubr.bf16.gmra.mxu0 %v6803
        %v6980 = vpop.f32.mrf.mxu0
        %v6981 = vadd.f32 0.0, %v6980
        %v6982 = vpop.f32.mrf.mxu0
        %v6983 = vpop.f32.mrf.mxu0
        %v6984 = vadd.f32 0.0, %v6983
        %v6985 = vpop.f32.mrf.mxu0
        %6986 = vmatprep.mubr.bf16.mxu0 0
        %6987 = vmatmul.mubr.bf16.gmra.mxu0 %v6804
        %v6988 = vpop.f32.mrf.mxu0
        %v6989 = vadd.f32 0.0, %v6988
        %v6990 = vpop.f32.mrf.mxu0
        %v6991 = vpop.f32.mrf.mxu0
        %v6992 = vadd.f32 0.0, %v6991
        %v6993 = vpop.f32.mrf.mxu0
        %6994 = vmatprep.mubr.bf16.mxu0 0
        %6995 = vmatmul.mubr.bf16.gmra.mxu0 %v6805
        %v6996 = vpop.f32.mrf.mxu0
        %v6997 = vadd.f32 0.0, %v6996
        %v6998 = vpop.f32.mrf.mxu0
        %v6999 = vpop.f32.mrf.mxu0
        %v7000 = vadd.f32 0.0, %v6999
        %v7001 = vpop.f32.mrf.mxu0
        %7002 = vmatprep.mubr.bf16.mxu0 0
        %7003 = vmatmul.mubr.bf16.gmra.mxu0 %v6806
        %v7004 = vpop.f32.mrf.mxu0
        %v7005 = vadd.f32 0.0, %v7004
        %v7006 = vpop.f32.mrf.mxu0
        %v7007 = vpop.f32.mrf.mxu0
        %v7008 = vadd.f32 0.0, %v7007
        %v7009 = vpop.f32.mrf.mxu0
        %7010 = vmatprep.mubr.bf16.mxu0 0
        %7011 = vmatmul.mubr.bf16.gmra.mxu0 %v6807
        %v7012 = vpop.f32.mrf.mxu0
        %v7013 = vadd.f32 0.0, %v7012
        %v7014 = vpop.f32.mrf.mxu0
        %v7015 = vpop.f32.mrf.mxu0
        %v7016 = vadd.f32 0.0, %v7015
        %v7017 = vpop.f32.mrf.mxu0
        %7018 = vmatprep.mubr.bf16.mxu0 0
        %7019 = vmatmul.mubr.bf16.gmra.mxu0 %v6808
        %v7020 = vpop.f32.mrf.mxu0
        %v7021 = vadd.f32 0.0, %v7020
        %v7022 = vpop.f32.mrf.mxu0
        %v7023 = vpop.f32.mrf.mxu0
        %v7024 = vadd.f32 0.0, %v7023
        %v7025 = vpop.f32.mrf.mxu0
        %7026 = vmatprep.mubr.bf16.mxu0 0
        %7027 = vmatmul.mubr.bf16.gmra.mxu0 %v6809
        %v7028 = vpop.f32.mrf.mxu0
        %v7029 = vadd.f32 0.0, %v7028
        %v7030 = vpop.f32.mrf.mxu0
        %v7031 = vpop.f32.mrf.mxu0
        %v7032 = vadd.f32 0.0, %v7031
        %v7033 = vpop.f32.mrf.mxu0
        %7034 = vdwg.mxu0
        %v7035 = vadd.f32 %v6515, %v6909
        %v7036 = vadd.f32 %v6516, %v6912
        %v7037 = vadd.f32 %v6517, %v6917
        %v7038 = vadd.f32 %v6518, %v6920
        %v7039 = vadd.f32 %v6519, %v6925
        %v7040 = vadd.f32 %v6520, %v6928
        %v7041 = vadd.f32 %v6521, %v6933
        %v7042 = vadd.f32 %v6522, %v6936
        %v7043 = vadd.f32 %v6523, %v6941
        %v7044 = vadd.f32 %v6524, %v6944
        %v7045 = vadd.f32 %v6525, %v6949
        %v7046 = vadd.f32 %v6526, %v6952
        %v7047 = vadd.f32 %v6527, %v6957
        %v7048 = vadd.f32 %v6528, %v6960
        %v7049 = vadd.f32 %v6529, %v6965
        %v7050 = vadd.f32 %v6530, %v6968
        %v7051 = vadd.f32 %v6531, %v6973
        %v7052 = vadd.f32 %v6532, %v6976
        %v7053 = vadd.f32 %v6533, %v6981
        %v7054 = vadd.f32 %v6534, %v6984
        %v7055 = vadd.f32 %v6535, %v6989
        %v7056 = vadd.f32 %v6536, %v6992
        %v7057 = vadd.f32 %v6537, %v6997
        %v7058 = vadd.f32 %v6538, %v7000
        %v7059 = vadd.f32 %v6539, %v7005
        %v7060 = vadd.f32 %v6540, %v7008
        %v7061 = vadd.f32 %v6541, %v7013
        %v7062 = vadd.f32 %v6542, %v7016
        %v7063 = vadd.f32 %v6543, %v7021
        %v7064 = vadd.f32 %v6544, %v7024
        %v7065 = vadd.f32 %v6545, %v7029
        %v7066 = vadd.f32 %v6546, %v7032
        %s7067 = scalar_lea.vmem [#allocation3], 320
        %v7068 = vld [vmem:[%s7067] sm:$0xf]
        %v7069 = vld [vmem:[%s7067 + $0x4] sm:$0xf]
        %v7070 = vld [vmem:[%s7067 + $0x8] sm:$0xf]
        %v7071 = vld [vmem:[%s7067 + $0xc] sm:$0xf]
        %v7072 = vld [vmem:[%s7067 + $0x10] sm:$0xf]
        %v7073 = vld [vmem:[%s7067 + $0x14] sm:$0xf]
        %v7074 = vld [vmem:[%s7067 + $0x18] sm:$0xf]
        %v7075 = vld [vmem:[%s7067 + $0x1c] sm:$0xf]
        %v7076 = vld [vmem:[%s7067 + $0x20] sm:$0xf]
        %v7077 = vld [vmem:[%s7067 + $0x24] sm:$0xf]
        %v7078 = vld [vmem:[%s7067 + $0x28] sm:$0xf]
        %v7079 = vld [vmem:[%s7067 + $0x2c] sm:$0xf]
        %v7080 = vld [vmem:[%s7067 + $0x30] sm:$0xf]
        %v7081 = vld [vmem:[%s7067 + $0x34] sm:$0xf]
        %v7082 = vld [vmem:[%s7067 + $0x38] sm:$0xf]
        %v7083 = vld [vmem:[%s7067 + $0x3c] sm:$0xf]
        %v7084 = vunpack.c.l.b16 %v6734
        %v7085 = vunpack.c.l.b16 %v6737
        %v7086 = vpack.c.b16 %v7085, %v7084
        %v7104 = vunpack.c.l.b16 %v7068
        %v7105 = vunpack.c.l.b16 %v7069
        %v7106 = vunpack.c.l.b16 %v7070
        %v7107 = vunpack.c.l.b16 %v7071
        %v7108 = vunpack.c.l.b16 %v7072
        %v7109 = vunpack.c.l.b16 %v7073
        %v7110 = vunpack.c.l.b16 %v7074
        %v7111 = vunpack.c.l.b16 %v7075
        %v7112 = vunpack.c.l.b16 %v7076
        %v7113 = vunpack.c.l.b16 %v7077
        %v7114 = vunpack.c.l.b16 %v7078
        %v7115 = vunpack.c.l.b16 %v7079
        %v7116 = vunpack.c.l.b16 %v7080
        %v7117 = vunpack.c.l.b16 %v7081
        %v7118 = vunpack.c.l.b16 %v7082
        %v7119 = vunpack.c.l.b16 %v7083
        %v7120 = vpack.c.b16 %v7105, %v7104
        %v7121 = vpack.c.b16 %v7107, %v7106
        %v7122 = vpack.c.b16 %v7109, %v7108
        %v7123 = vpack.c.b16 %v7111, %v7110
        %v7124 = vpack.c.b16 %v7113, %v7112
        %v7125 = vpack.c.b16 %v7115, %v7114
        %v7126 = vpack.c.b16 %v7117, %v7116
        %v7127 = vpack.c.b16 %v7119, %v7118
        %7136 = vmatprep.subr.bf16.mxu0 0
        %7137 = vmatpush1.bf16.msra.mxu0 %v7127
        %7138 = vmatprep.subr.bf16.mxu0 0
        %7139 = vmatpush1.bf16.msra.mxu0 %v7126
        %7140 = vmatprep.subr.bf16.mxu0 0
        %7141 = vmatpush1.bf16.msra.mxu0 %v7125
        %7142 = vmatprep.subr.bf16.mxu0 0
        %7143 = vmatpush1.bf16.msra.mxu0 %v7124
        %7144 = vmatprep.subr.bf16.mxu0 0
        %7145 = vmatpush1.bf16.msra.mxu0 %v7123
        %7146 = vmatprep.subr.bf16.mxu0 0
        %7147 = vmatpush1.bf16.msra.mxu0 %v7122
        %7148 = vmatprep.subr.bf16.mxu0 0
        %7149 = vmatpush1.bf16.msra.mxu0 %v7121
        %7150 = vmatprep.subr.bf16.mxu0 0
        %7151 = vmatpush1.bf16.msra.mxu0 %v7120
        %7152 = vmatprep.subr.bf16.mxu0 0
        %7153 = vmatpush2.bf16.msra.mxu0 0
        %7154 = vmatprep.subr.bf16.mxu0 0
        %7155 = vmatpush2.bf16.msra.mxu0 0
        %7156 = vmatprep.subr.bf16.mxu0 0
        %7157 = vmatpush2.bf16.msra.mxu0 0
        %7158 = vmatprep.subr.bf16.mxu0 0
        %7159 = vmatpush2.bf16.msra.mxu0 0
        %7160 = vmatprep.subr.bf16.mxu0 0
        %7161 = vmatpush2.bf16.msra.mxu0 0
        %7162 = vmatprep.subr.bf16.mxu0 0
        %7163 = vmatpush2.bf16.msra.mxu0 0
        %7164 = vmatprep.subr.bf16.mxu0 0
        %7165 = vmatpush2.bf16.msra.mxu0 0
        %7166 = vmatprep.subr.bf16.mxu0 0
        %7167 = vmatpush2.bf16.msra.mxu0 0
        %7168 = vmatprep.mubr.bf16.mxu0 0
        %7169 = vmatmul.mubr.bf16.gmra.mxu0 %v6795
        %v7170 = vpop.f32.mrf.mxu0
        %v7171 = vadd.f32 0.0, %v7170
        %v7172 = vpop.f32.mrf.mxu0
        %v7173 = vpop.f32.mrf.mxu0
        %v7174 = vadd.f32 0.0, %v7173
        %v7175 = vpop.f32.mrf.mxu0
        %7176 = vmatprep.mubr.bf16.mxu0 0
        %7177 = vmatmul.mubr.bf16.gmra.mxu0 %v6796
        %v7178 = vpop.f32.mrf.mxu0
        %v7179 = vadd.f32 0.0, %v7178
        %v7180 = vpop.f32.mrf.mxu0
        %v7181 = vpop.f32.mrf.mxu0
        %v7182 = vadd.f32 0.0, %v7181
        %v7183 = vpop.f32.mrf.mxu0
        %7184 = vmatprep.mubr.bf16.mxu0 0
        %7185 = vmatmul.mubr.bf16.gmra.mxu0 %v6797
        %v7186 = vpop.f32.mrf.mxu0
        %v7187 = vadd.f32 0.0, %v7186
        %v7188 = vpop.f32.mrf.mxu0
        %v7189 = vpop.f32.mrf.mxu0
        %v7190 = vadd.f32 0.0, %v7189
        %v7191 = vpop.f32.mrf.mxu0
        %7192 = vmatprep.mubr.bf16.mxu0 0
        %7193 = vmatmul.mubr.bf16.gmra.mxu0 %v6798
        %v7194 = vpop.f32.mrf.mxu0
        %v7195 = vadd.f32 0.0, %v7194
        %v7196 = vpop.f32.mrf.mxu0
        %v7197 = vpop.f32.mrf.mxu0
        %v7198 = vadd.f32 0.0, %v7197
        %v7199 = vpop.f32.mrf.mxu0
        %7200 = vmatprep.mubr.bf16.mxu0 0
        %7201 = vmatmul.mubr.bf16.gmra.mxu0 %v6799
        %v7202 = vpop.f32.mrf.mxu0
        %v7203 = vadd.f32 0.0, %v7202
        %v7204 = vpop.f32.mrf.mxu0
        %v7205 = vpop.f32.mrf.mxu0
        %v7206 = vadd.f32 0.0, %v7205
        %v7207 = vpop.f32.mrf.mxu0
        %7208 = vmatprep.mubr.bf16.mxu0 0
        %7209 = vmatmul.mubr.bf16.gmra.mxu0 %v6800
        %v7210 = vpop.f32.mrf.mxu0
        %v7211 = vadd.f32 0.0, %v7210
        %v7212 = vpop.f32.mrf.mxu0
        %v7213 = vpop.f32.mrf.mxu0
        %v7214 = vadd.f32 0.0, %v7213
        %v7215 = vpop.f32.mrf.mxu0
        %7216 = vmatprep.mubr.bf16.mxu0 0
        %7217 = vmatmul.mubr.bf16.gmra.mxu0 %v6801
        %v7218 = vpop.f32.mrf.mxu0
        %v7219 = vadd.f32 0.0, %v7218
        %v7220 = vpop.f32.mrf.mxu0
        %v7221 = vpop.f32.mrf.mxu0
        %v7222 = vadd.f32 0.0, %v7221
        %v7223 = vpop.f32.mrf.mxu0
        %7224 = vmatprep.mubr.bf16.mxu0 0
        %7225 = vmatmul.mubr.bf16.gmra.mxu0 %v6802
        %v7226 = vpop.f32.mrf.mxu0
        %v7227 = vadd.f32 0.0, %v7226
        %v7228 = vpop.f32.mrf.mxu0
        %v7229 = vpop.f32.mrf.mxu0
        %v7230 = vadd.f32 0.0, %v7229
        %v7231 = vpop.f32.mrf.mxu0
        %7232 = vmatprep.mubr.bf16.mxu0 0
        %7233 = vmatmul.mubr.bf16.gmra.mxu0 %v6803
        %v7234 = vpop.f32.mrf.mxu0
        %v7235 = vadd.f32 0.0, %v7234
        %v7236 = vpop.f32.mrf.mxu0
        %v7237 = vpop.f32.mrf.mxu0
        %v7238 = vadd.f32 0.0, %v7237
        %v7239 = vpop.f32.mrf.mxu0
        %7240 = vmatprep.mubr.bf16.mxu0 0
        %7241 = vmatmul.mubr.bf16.gmra.mxu0 %v6804
        %v7242 = vpop.f32.mrf.mxu0
        %v7243 = vadd.f32 0.0, %v7242
        %v7244 = vpop.f32.mrf.mxu0
        %v7245 = vpop.f32.mrf.mxu0
        %v7246 = vadd.f32 0.0, %v7245
        %v7247 = vpop.f32.mrf.mxu0
        %7248 = vmatprep.mubr.bf16.mxu0 0
        %7249 = vmatmul.mubr.bf16.gmra.mxu0 %v6805
        %v7250 = vpop.f32.mrf.mxu0
        %v7251 = vadd.f32 0.0, %v7250
        %v7252 = vpop.f32.mrf.mxu0
        %v7253 = vpop.f32.mrf.mxu0
        %v7254 = vadd.f32 0.0, %v7253
        %v7255 = vpop.f32.mrf.mxu0
        %7256 = vmatprep.mubr.bf16.mxu0 0
        %7257 = vmatmul.mubr.bf16.gmra.mxu0 %v6806
        %v7258 = vpop.f32.mrf.mxu0
        %v7259 = vadd.f32 0.0, %v7258
        %v7260 = vpop.f32.mrf.mxu0
        %v7261 = vpop.f32.mrf.mxu0
        %v7262 = vadd.f32 0.0, %v7261
        %v7263 = vpop.f32.mrf.mxu0
        %7264 = vmatprep.mubr.bf16.mxu0 0
        %7265 = vmatmul.mubr.bf16.gmra.mxu0 %v6807
        %v7266 = vpop.f32.mrf.mxu0
        %v7267 = vadd.f32 0.0, %v7266
        %v7268 = vpop.f32.mrf.mxu0
        %v7269 = vpop.f32.mrf.mxu0
        %v7270 = vadd.f32 0.0, %v7269
        %v7271 = vpop.f32.mrf.mxu0
        %7272 = vmatprep.mubr.bf16.mxu0 0
        %7273 = vmatmul.mubr.bf16.gmra.mxu0 %v6808
        %v7274 = vpop.f32.mrf.mxu0
        %v7275 = vadd.f32 0.0, %v7274
        %v7276 = vpop.f32.mrf.mxu0
        %v7277 = vpop.f32.mrf.mxu0
        %v7278 = vadd.f32 0.0, %v7277
        %v7279 = vpop.f32.mrf.mxu0
        %7280 = vmatprep.mubr.bf16.mxu0 0
        %7281 = vmatmul.mubr.bf16.gmra.mxu0 %v6809
        %v7282 = vpop.f32.mrf.mxu0
        %v7283 = vadd.f32 0.0, %v7282
        %v7284 = vpop.f32.mrf.mxu0
        %v7285 = vpop.f32.mrf.mxu0
        %v7286 = vadd.f32 0.0, %v7285
        %v7287 = vpop.f32.mrf.mxu0
        %7288 = vmatprep.mubr.bf16.mxu0 0
        %7289 = vmatmul.mubr.bf16.gmra.mxu0 %v7086
        %v7290 = vpop.f32.mrf.mxu0
        %v7291 = vadd.f32 0.0, %v7290
        %v7292 = vpop.f32.mrf.mxu0
        %v7293 = vpop.f32.mrf.mxu0
        %v7294 = vadd.f32 0.0, %v7293
        %v7295 = vpop.f32.mrf.mxu0
        %7296 = vdwg.mxu0
        %v7297 = vadd.f32 %v7035, %v7171
        %v7298 = vadd.f32 %v7036, %v7174
        %v7299 = vadd.f32 %v7037, %v7179
        %v7300 = vadd.f32 %v7038, %v7182
        %v7301 = vadd.f32 %v7039, %v7187
        %v7302 = vadd.f32 %v7040, %v7190
        %v7303 = vadd.f32 %v7041, %v7195
        %v7304 = vadd.f32 %v7042, %v7198
        %v7305 = vadd.f32 %v7043, %v7203
        %v7306 = vadd.f32 %v7044, %v7206
        %v7307 = vadd.f32 %v7045, %v7211
        %v7308 = vadd.f32 %v7046, %v7214
        %v7309 = vadd.f32 %v7047, %v7219
        %v7310 = vadd.f32 %v7048, %v7222
        %v7311 = vadd.f32 %v7049, %v7227
        %v7312 = vadd.f32 %v7050, %v7230
        %v7313 = vadd.f32 %v7051, %v7235
        %v7314 = vadd.f32 %v7052, %v7238
        %v7315 = vadd.f32 %v7053, %v7243
        %v7316 = vadd.f32 %v7054, %v7246
        %v7317 = vadd.f32 %v7055, %v7251
        %v7318 = vadd.f32 %v7056, %v7254
        %v7319 = vadd.f32 %v7057, %v7259
        %v7320 = vadd.f32 %v7058, %v7262
        %v7321 = vadd.f32 %v7059, %v7267
        %v7322 = vadd.f32 %v7060, %v7270
        %v7323 = vadd.f32 %v7061, %v7275
        %v7324 = vadd.f32 %v7062, %v7278
        %v7325 = vadd.f32 %v7063, %v7283
        %v7326 = vadd.f32 %v7064, %v7286
        %v7327 = vadd.f32 %v7065, %v7291
        %v7328 = vadd.f32 %v7066, %v7294
        %s7329 = scalar_lea.vmem [#allocation3], 512
        %v7330 = vld [vmem:[%s7329] sm:$0xf]
        %v7331 = vld [vmem:[%s7329 + $0x4] sm:$0xf]
        %v7332 = vld [vmem:[%s7329 + $0x8] sm:$0xf]
        %v7333 = vld [vmem:[%s7329 + $0xc] sm:$0xf]
        %v7334 = vld [vmem:[%s7329 + $0x10] sm:$0xf]
        %v7335 = vld [vmem:[%s7329 + $0x14] sm:$0xf]
        %v7336 = vld [vmem:[%s7329 + $0x18] sm:$0xf]
        %v7337 = vld [vmem:[%s7329 + $0x1c] sm:$0xf]
        %v7338 = vld [vmem:[%s7329 + $0x20] sm:$0xf]
        %v7339 = vld [vmem:[%s7329 + $0x24] sm:$0xf]
        %v7340 = vld [vmem:[%s7329 + $0x28] sm:$0xf]
        %v7341 = vld [vmem:[%s7329 + $0x2c] sm:$0xf]
        %v7342 = vld [vmem:[%s7329 + $0x30] sm:$0xf]
        %v7343 = vld [vmem:[%s7329 + $0x34] sm:$0xf]
        %v7344 = vld [vmem:[%s7329 + $0x38] sm:$0xf]
        %v7345 = vld [vmem:[%s7329 + $0x3c] sm:$0xf]
        %v7346 = vunpack.c.l.b16 %v6741
        %v7347 = vunpack.c.l.b16 %v6744
        %v7348 = vpack.c.b16 %v7347, %v7346
        %v7366 = vunpack.c.l.b16 %v7330
        %v7367 = vunpack.c.l.b16 %v7331
        %v7368 = vunpack.c.l.b16 %v7332
        %v7369 = vunpack.c.l.b16 %v7333
        %v7370 = vunpack.c.l.b16 %v7334
        %v7371 = vunpack.c.l.b16 %v7335
        %v7372 = vunpack.c.l.b16 %v7336
        %v7373 = vunpack.c.l.b16 %v7337
        %v7374 = vunpack.c.l.b16 %v7338
        %v7375 = vunpack.c.l.b16 %v7339
        %v7376 = vunpack.c.l.b16 %v7340
        %v7377 = vunpack.c.l.b16 %v7341
        %v7378 = vunpack.c.l.b16 %v7342
        %v7379 = vunpack.c.l.b16 %v7343
        %v7380 = vunpack.c.l.b16 %v7344
        %v7381 = vunpack.c.l.b16 %v7345
        %v7382 = vpack.c.b16 %v7367, %v7366
        %v7383 = vpack.c.b16 %v7369, %v7368
        %v7384 = vpack.c.b16 %v7371, %v7370
        %v7385 = vpack.c.b16 %v7373, %v7372
        %v7386 = vpack.c.b16 %v7375, %v7374
        %v7387 = vpack.c.b16 %v7377, %v7376
        %v7388 = vpack.c.b16 %v7379, %v7378
        %v7389 = vpack.c.b16 %v7381, %v7380
        %7398 = vmatprep.subr.bf16.mxu0 0
        %7399 = vmatpush1.bf16.msra.mxu0 %v7389
        %7400 = vmatprep.subr.bf16.mxu0 0
        %7401 = vmatpush1.bf16.msra.mxu0 %v7388
        %7402 = vmatprep.subr.bf16.mxu0 0
        %7403 = vmatpush1.bf16.msra.mxu0 %v7387
        %7404 = vmatprep.subr.bf16.mxu0 0
        %7405 = vmatpush1.bf16.msra.mxu0 %v7386
        %7406 = vmatprep.subr.bf16.mxu0 0
        %7407 = vmatpush1.bf16.msra.mxu0 %v7385
        %7408 = vmatprep.subr.bf16.mxu0 0
        %7409 = vmatpush1.bf16.msra.mxu0 %v7384
        %7410 = vmatprep.subr.bf16.mxu0 0
        %7411 = vmatpush1.bf16.msra.mxu0 %v7383
        %7412 = vmatprep.subr.bf16.mxu0 0
        %7413 = vmatpush1.bf16.msra.mxu0 %v7382
        %7414 = vmatprep.subr.bf16.mxu0 0
        %7415 = vmatpush2.bf16.msra.mxu0 0
        %7416 = vmatprep.subr.bf16.mxu0 0
        %7417 = vmatpush2.bf16.msra.mxu0 0
        %7418 = vmatprep.subr.bf16.mxu0 0
        %7419 = vmatpush2.bf16.msra.mxu0 0
        %7420 = vmatprep.subr.bf16.mxu0 0
        %7421 = vmatpush2.bf16.msra.mxu0 0
        %7422 = vmatprep.subr.bf16.mxu0 0
        %7423 = vmatpush2.bf16.msra.mxu0 0
        %7424 = vmatprep.subr.bf16.mxu0 0
        %7425 = vmatpush2.bf16.msra.mxu0 0
        %7426 = vmatprep.subr.bf16.mxu0 0
        %7427 = vmatpush2.bf16.msra.mxu0 0
        %7428 = vmatprep.subr.bf16.mxu0 0
        %7429 = vmatpush2.bf16.msra.mxu0 0
        %7430 = vmatprep.mubr.bf16.mxu0 0
        %7431 = vmatmul.mubr.bf16.gmra.mxu0 %v6796
        %v7432 = vpop.f32.mrf.mxu0
        %v7433 = vadd.f32 0.0, %v7432
        %v7434 = vpop.f32.mrf.mxu0
        %v7435 = vpop.f32.mrf.mxu0
        %v7436 = vadd.f32 0.0, %v7435
        %v7437 = vpop.f32.mrf.mxu0
        %7438 = vmatprep.mubr.bf16.mxu0 0
        %7439 = vmatmul.mubr.bf16.gmra.mxu0 %v6797
        %v7440 = vpop.f32.mrf.mxu0
        %v7441 = vadd.f32 0.0, %v7440
        %v7442 = vpop.f32.mrf.mxu0
        %v7443 = vpop.f32.mrf.mxu0
        %v7444 = vadd.f32 0.0, %v7443
        %v7445 = vpop.f32.mrf.mxu0
        %7446 = vmatprep.mubr.bf16.mxu0 0
        %7447 = vmatmul.mubr.bf16.gmra.mxu0 %v6798
        %v7448 = vpop.f32.mrf.mxu0
        %v7449 = vadd.f32 0.0, %v7448
        %v7450 = vpop.f32.mrf.mxu0
        %v7451 = vpop.f32.mrf.mxu0
        %v7452 = vadd.f32 0.0, %v7451
        %v7453 = vpop.f32.mrf.mxu0
        %7454 = vmatprep.mubr.bf16.mxu0 0
        %7455 = vmatmul.mubr.bf16.gmra.mxu0 %v6799
        %v7456 = vpop.f32.mrf.mxu0
        %v7457 = vadd.f32 0.0, %v7456
        %v7458 = vpop.f32.mrf.mxu0
        %v7459 = vpop.f32.mrf.mxu0
        %v7460 = vadd.f32 0.0, %v7459
        %v7461 = vpop.f32.mrf.mxu0
        %7462 = vmatprep.mubr.bf16.mxu0 0
        %7463 = vmatmul.mubr.bf16.gmra.mxu0 %v6800
        %v7464 = vpop.f32.mrf.mxu0
        %v7465 = vadd.f32 0.0, %v7464
        %v7466 = vpop.f32.mrf.mxu0
        %v7467 = vpop.f32.mrf.mxu0
        %v7468 = vadd.f32 0.0, %v7467
        %v7469 = vpop.f32.mrf.mxu0
        %7470 = vmatprep.mubr.bf16.mxu0 0
        %7471 = vmatmul.mubr.bf16.gmra.mxu0 %v6801
        %v7472 = vpop.f32.mrf.mxu0
        %v7473 = vadd.f32 0.0, %v7472
        %v7474 = vpop.f32.mrf.mxu0
        %v7475 = vpop.f32.mrf.mxu0
        %v7476 = vadd.f32 0.0, %v7475
        %v7477 = vpop.f32.mrf.mxu0
        %7478 = vmatprep.mubr.bf16.mxu0 0
        %7479 = vmatmul.mubr.bf16.gmra.mxu0 %v6802
        %v7480 = vpop.f32.mrf.mxu0
        %v7481 = vadd.f32 0.0, %v7480
        %v7482 = vpop.f32.mrf.mxu0
        %v7483 = vpop.f32.mrf.mxu0
        %v7484 = vadd.f32 0.0, %v7483
        %v7485 = vpop.f32.mrf.mxu0
        %7486 = vmatprep.mubr.bf16.mxu0 0
        %7487 = vmatmul.mubr.bf16.gmra.mxu0 %v6803
        %v7488 = vpop.f32.mrf.mxu0
        %v7489 = vadd.f32 0.0, %v7488
        %v7490 = vpop.f32.mrf.mxu0
        %v7491 = vpop.f32.mrf.mxu0
        %v7492 = vadd.f32 0.0, %v7491
        %v7493 = vpop.f32.mrf.mxu0
        %7494 = vmatprep.mubr.bf16.mxu0 0
        %7495 = vmatmul.mubr.bf16.gmra.mxu0 %v6804
        %v7496 = vpop.f32.mrf.mxu0
        %v7497 = vadd.f32 0.0, %v7496
        %v7498 = vpop.f32.mrf.mxu0
        %v7499 = vpop.f32.mrf.mxu0
        %v7500 = vadd.f32 0.0, %v7499
        %v7501 = vpop.f32.mrf.mxu0
        %7502 = vmatprep.mubr.bf16.mxu0 0
        %7503 = vmatmul.mubr.bf16.gmra.mxu0 %v6805
        %v7504 = vpop.f32.mrf.mxu0
        %v7505 = vadd.f32 0.0, %v7504
        %v7506 = vpop.f32.mrf.mxu0
        %v7507 = vpop.f32.mrf.mxu0
        %v7508 = vadd.f32 0.0, %v7507
        %v7509 = vpop.f32.mrf.mxu0
        %7510 = vmatprep.mubr.bf16.mxu0 0
        %7511 = vmatmul.mubr.bf16.gmra.mxu0 %v6806
        %v7512 = vpop.f32.mrf.mxu0
        %v7513 = vadd.f32 0.0, %v7512
        %v7514 = vpop.f32.mrf.mxu0
        %v7515 = vpop.f32.mrf.mxu0
        %v7516 = vadd.f32 0.0, %v7515
        %v7517 = vpop.f32.mrf.mxu0
        %7518 = vmatprep.mubr.bf16.mxu0 0
        %7519 = vmatmul.mubr.bf16.gmra.mxu0 %v6807
        %v7520 = vpop.f32.mrf.mxu0
        %v7521 = vadd.f32 0.0, %v7520
        %v7522 = vpop.f32.mrf.mxu0
        %v7523 = vpop.f32.mrf.mxu0
        %v7524 = vadd.f32 0.0, %v7523
        %v7525 = vpop.f32.mrf.mxu0
        %7526 = vmatprep.mubr.bf16.mxu0 0
        %7527 = vmatmul.mubr.bf16.gmra.mxu0 %v6808
        %v7528 = vpop.f32.mrf.mxu0
        %v7529 = vadd.f32 0.0, %v7528
        %v7530 = vpop.f32.mrf.mxu0
        %v7531 = vpop.f32.mrf.mxu0
        %v7532 = vadd.f32 0.0, %v7531
        %v7533 = vpop.f32.mrf.mxu0
        %7534 = vmatprep.mubr.bf16.mxu0 0
        %7535 = vmatmul.mubr.bf16.gmra.mxu0 %v6809
        %v7536 = vpop.f32.mrf.mxu0
        %v7537 = vadd.f32 0.0, %v7536
        %v7538 = vpop.f32.mrf.mxu0
        %v7539 = vpop.f32.mrf.mxu0
        %v7540 = vadd.f32 0.0, %v7539
        %v7541 = vpop.f32.mrf.mxu0
        %7542 = vmatprep.mubr.bf16.mxu0 0
        %7543 = vmatmul.mubr.bf16.gmra.mxu0 %v7086
        %v7544 = vpop.f32.mrf.mxu0
        %v7545 = vadd.f32 0.0, %v7544
        %v7546 = vpop.f32.mrf.mxu0
        %v7547 = vpop.f32.mrf.mxu0
        %v7548 = vadd.f32 0.0, %v7547
        %v7549 = vpop.f32.mrf.mxu0
        %7550 = vmatprep.mubr.bf16.mxu0 0
        %7551 = vmatmul.mubr.bf16.gmra.mxu0 %v7348
        %v7552 = vpop.f32.mrf.mxu0
        %v7553 = vadd.f32 0.0, %v7552
        %v7554 = vpop.f32.mrf.mxu0
        %v7555 = vpop.f32.mrf.mxu0
        %v7556 = vadd.f32 0.0, %v7555
        %v7557 = vpop.f32.mrf.mxu0
        %7558 = vdwg.mxu0
        %v7559 = vadd.f32 %v7297, %v7433
        %v7560 = vadd.f32 %v7298, %v7436
        %v7561 = vadd.f32 %v7299, %v7441
        %v7562 = vadd.f32 %v7300, %v7444
        %v7563 = vadd.f32 %v7301, %v7449
        %v7564 = vadd.f32 %v7302, %v7452
        %v7565 = vadd.f32 %v7303, %v7457
        %v7566 = vadd.f32 %v7304, %v7460
        %v7567 = vadd.f32 %v7305, %v7465
        %v7568 = vadd.f32 %v7306, %v7468
        %v7569 = vadd.f32 %v7307, %v7473
        %v7570 = vadd.f32 %v7308, %v7476
        %v7571 = vadd.f32 %v7309, %v7481
        %v7572 = vadd.f32 %v7310, %v7484
        %v7573 = vadd.f32 %v7311, %v7489
        %v7574 = vadd.f32 %v7312, %v7492
        %v7575 = vadd.f32 %v7313, %v7497
        %v7576 = vadd.f32 %v7314, %v7500
        %v7577 = vadd.f32 %v7315, %v7505
        %v7578 = vadd.f32 %v7316, %v7508
        %v7579 = vadd.f32 %v7317, %v7513
        %v7580 = vadd.f32 %v7318, %v7516
        %v7581 = vadd.f32 %v7319, %v7521
        %v7582 = vadd.f32 %v7320, %v7524
        %v7583 = vadd.f32 %v7321, %v7529
        %v7584 = vadd.f32 %v7322, %v7532
        %v7585 = vadd.f32 %v7323, %v7537
        %v7586 = vadd.f32 %v7324, %v7540
        %v7587 = vadd.f32 %v7325, %v7545
        %v7588 = vadd.f32 %v7326, %v7548
        %v7589 = vadd.f32 %v7327, %v7553
        %v7590 = vadd.f32 %v7328, %v7556
        %v7592 = vlaneseq
        %v7593 = vshrl.u32 %v7592, 7
        %v7594 = vsub.s32 0, %v7593
        %v7595 = vrot.slane %v483, %v7594
        %v7597 = vadd.f32 %v7559, %v7595
        %v7598 = vadd.f32 %v7560, %v7595
        %v7599 = vadd.f32 %v7561, %v7595
        %v7600 = vadd.f32 %v7562, %v7595
        %v7601 = vadd.f32 %v7563, %v7595
        %v7602 = vadd.f32 %v7564, %v7595
        %v7603 = vadd.f32 %v7565, %v7595
        %v7604 = vadd.f32 %v7566, %v7595
        %v7605 = vadd.f32 %v7567, %v7595
        %v7606 = vadd.f32 %v7568, %v7595
        %v7607 = vadd.f32 %v7569, %v7595
        %v7608 = vadd.f32 %v7570, %v7595
        %v7609 = vadd.f32 %v7571, %v7595
        %v7610 = vadd.f32 %v7572, %v7595
        %v7611 = vadd.f32 %v7573, %v7595
        %v7612 = vadd.f32 %v7574, %v7595
        %v7613 = vadd.f32 %v7575, %v7595
        %v7614 = vadd.f32 %v7576, %v7595
        %v7615 = vadd.f32 %v7577, %v7595
        %v7616 = vadd.f32 %v7578, %v7595
        %v7617 = vadd.f32 %v7579, %v7595
        %v7618 = vadd.f32 %v7580, %v7595
        %v7619 = vadd.f32 %v7581, %v7595
        %v7620 = vadd.f32 %v7582, %v7595
        %v7621 = vadd.f32 %v7583, %v7595
        %v7622 = vadd.f32 %v7584, %v7595
        %v7623 = vadd.f32 %v7585, %v7595
        %v7624 = vadd.f32 %v7586, %v7595
        %v7625 = vadd.f32 %v7587, %v7595
        %v7626 = vadd.f32 %v7588, %v7595
        %v7627 = vadd.f32 %v7589, %v7595
        %v7628 = vadd.f32 %v7590, %v7595
        %v7629 = vmax.f32 %v7597, 0.0
        %v7630 = vmax.f32 %v7598, 0.0
        %v7631 = vmax.f32 %v7599, 0.0
        %v7632 = vmax.f32 %v7600, 0.0
        %v7633 = vmax.f32 %v7601, 0.0
        %v7634 = vmax.f32 %v7602, 0.0
        %v7635 = vmax.f32 %v7603, 0.0
        %v7636 = vmax.f32 %v7604, 0.0
        %v7637 = vmax.f32 %v7605, 0.0
        %v7638 = vmax.f32 %v7606, 0.0
        %v7639 = vmax.f32 %v7607, 0.0
        %v7640 = vmax.f32 %v7608, 0.0
        %v7641 = vmax.f32 %v7609, 0.0
        %v7642 = vmax.f32 %v7610, 0.0
        %v7643 = vmax.f32 %v7611, 0.0
        %v7644 = vmax.f32 %v7612, 0.0
        %v7645 = vmax.f32 %v7613, 0.0
        %v7646 = vmax.f32 %v7614, 0.0
        %v7647 = vmax.f32 %v7615, 0.0
        %v7648 = vmax.f32 %v7616, 0.0
        %v7649 = vmax.f32 %v7617, 0.0
        %v7650 = vmax.f32 %v7618, 0.0
        %v7651 = vmax.f32 %v7619, 0.0
        %v7652 = vmax.f32 %v7620, 0.0
        %v7653 = vmax.f32 %v7621, 0.0
        %v7654 = vmax.f32 %v7622, 0.0
        %v7655 = vmax.f32 %v7623, 0.0
        %v7656 = vmax.f32 %v7624, 0.0
        %v7657 = vmax.f32 %v7625, 0.0
        %v7658 = vmax.f32 %v7626, 0.0
        %v7659 = vmax.f32 %v7627, 0.0
        %v7660 = vmax.f32 %v7628, 0.0
        %v7661 = vadd.f32 %v7629, %v7630
        %v7662 = vadd.f32 %v7661, %v7631
        %v7663 = vadd.f32 %v7662, %v7632
        %v7664 = vadd.f32 %v7663, %v7633
        %v7665 = vadd.f32 %v7664, %v7634
        %v7666 = vadd.f32 %v7665, %v7635
        %v7667 = vadd.f32 %v7666, %v7636
        %v7668 = vadd.f32 %v7667, %v7637
        %v7669 = vadd.f32 %v7668, %v7638
        %v7670 = vadd.f32 %v7669, %v7639
        %v7671 = vadd.f32 %v7670, %v7640
        %v7672 = vadd.f32 %v7671, %v7641
        %v7673 = vadd.f32 %v7672, %v7642
        %v7674 = vadd.f32 %v7673, %v7643
        %v7675 = vadd.f32 %v7674, %v7644
        %v7676 = vadd.f32 %v7675, %v7645
        %v7677 = vadd.f32 %v7676, %v7646
        %v7678 = vadd.f32 %v7677, %v7647
        %v7679 = vadd.f32 %v7678, %v7648
        %v7680 = vadd.f32 %v7679, %v7649
        %v7681 = vadd.f32 %v7680, %v7650
        %v7682 = vadd.f32 %v7681, %v7651
        %v7683 = vadd.f32 %v7682, %v7652
        %v7684 = vadd.f32 %v7683, %v7653
        %v7685 = vadd.f32 %v7684, %v7654
        %v7686 = vadd.f32 %v7685, %v7655
        %v7687 = vadd.f32 %v7686, %v7656
        %v7688 = vadd.f32 %v7687, %v7657
        %v7689 = vadd.f32 %v7688, %v7658
        %v7690 = vadd.f32 %v7689, %v7659
        %v7691 = vadd.f32 %v7690, %v7660
        %v7692 = vrot.slane %v7691, 4
        %v7693 = vadd.f32 %v7691, %v7692
        %v7694 = vrot.slane %v7693, 2
        %v7695 = vadd.f32 %v7693, %v7694
        %v7696 = vrot.slane %v7695, 1
        %v7697 = vadd.f32 %v7695, %v7696
        %v7698 = vadd.f32 %v7697, 0.0
        %v7699 = vmul.f32 %v7698, 0.00390625
        %7700 = vst [vmem:[%s349] sm:$0x1] %v7699
        %v7701 = vpack.c.bf16 %v7699, %v7699
        %v7702 = vld [vmem:[%s5] sm:$0xf]
        %v7703 = vld [vmem:[%s5 + $0x4] sm:$0xf]
        %v7704 = vld [vmem:[%s5 + $0x8] sm:$0xf]
        %v7705 = vld [vmem:[%s5 + $0xc] sm:$0xf]
        %v7706 = vld [vmem:[%s5 + $0x10] sm:$0xf]
        %v7707 = vld [vmem:[%s5 + $0x14] sm:$0xf]
        %v7708 = vld [vmem:[%s5 + $0x18] sm:$0xf]
        %v7709 = vld [vmem:[%s5 + $0x1c] sm:$0xf]
        %v7710 = vld [vmem:[%s5 + $0x20] sm:$0xf]
        %v7711 = vld [vmem:[%s5 + $0x24] sm:$0xf]
        %v7712 = vld [vmem:[%s5 + $0x28] sm:$0xf]
        %v7713 = vld [vmem:[%s5 + $0x2c] sm:$0xf]
        %v7714 = vld [vmem:[%s5 + $0x30] sm:$0xf]
        %v7715 = vld [vmem:[%s5 + $0x34] sm:$0xf]
        %v7716 = vld [vmem:[%s5 + $0x38] sm:$0xf]
        %v7717 = vld [vmem:[%s5 + $0x3c] sm:$0xf]
        %v7718 = vld [vmem:[%s6] sm:$0x1]
        %v7735 = vunpack.c.l.b16 %v7702
        %v7736 = vunpack.c.l.b16 %v7703
        %v7737 = vunpack.c.l.b16 %v7704
        %v7738 = vunpack.c.l.b16 %v7705
        %v7739 = vunpack.c.l.b16 %v7706
        %v7740 = vunpack.c.l.b16 %v7707
        %v7741 = vunpack.c.l.b16 %v7708
        %v7742 = vunpack.c.l.b16 %v7709
        %v7743 = vunpack.c.l.b16 %v7710
        %v7744 = vunpack.c.l.b16 %v7711
        %v7745 = vunpack.c.l.b16 %v7712
        %v7746 = vunpack.c.l.b16 %v7713
        %v7747 = vunpack.c.l.b16 %v7714
        %v7748 = vunpack.c.l.b16 %v7715
        %v7749 = vunpack.c.l.b16 %v7716
        %v7750 = vunpack.c.l.b16 %v7717
        %v7751 = vpack.c.b16 %v7736, %v7735
        %v7752 = vpack.c.b16 %v7738, %v7737
        %v7753 = vpack.c.b16 %v7740, %v7739
        %v7754 = vpack.c.b16 %v7742, %v7741
        %v7755 = vpack.c.b16 %v7744, %v7743
        %v7756 = vpack.c.b16 %v7746, %v7745
        %v7757 = vpack.c.b16 %v7748, %v7747
        %v7758 = vpack.c.b16 %v7750, %v7749
        %7767 = vmatprep.subr.bf16.mxu0 0
        %7768 = vmatpush1.bf16.msra.mxu0 %v7758
        %7769 = vmatprep.subr.bf16.mxu0 0
        %7770 = vmatpush1.bf16.msra.mxu0 %v7757
        %7771 = vmatprep.subr.bf16.mxu0 0
        %7772 = vmatpush1.bf16.msra.mxu0 %v7756
        %7773 = vmatprep.subr.bf16.mxu0 0
        %7774 = vmatpush1.bf16.msra.mxu0 %v7755
        %7775 = vmatprep.subr.bf16.mxu0 0
        %7776 = vmatpush1.bf16.msra.mxu0 %v7754
        %7777 = vmatprep.subr.bf16.mxu0 0
        %7778 = vmatpush1.bf16.msra.mxu0 %v7753
        %7779 = vmatprep.subr.bf16.mxu0 0
        %7780 = vmatpush1.bf16.msra.mxu0 %v7752
        %7781 = vmatprep.subr.bf16.mxu0 0
        %7782 = vmatpush1.bf16.msra.mxu0 %v7751
        %7783 = vmatprep.subr.bf16.mxu0 0
        %7784 = vmatpush2.bf16.msra.mxu0 0
        %7785 = vmatprep.subr.bf16.mxu0 0
        %7786 = vmatpush2.bf16.msra.mxu0 0
        %7787 = vmatprep.subr.bf16.mxu0 0
        %7788 = vmatpush2.bf16.msra.mxu0 0
        %7789 = vmatprep.subr.bf16.mxu0 0
        %7790 = vmatpush2.bf16.msra.mxu0 0
        %7791 = vmatprep.subr.bf16.mxu0 0
        %7792 = vmatpush2.bf16.msra.mxu0 0
        %7793 = vmatprep.subr.bf16.mxu0 0
        %7794 = vmatpush2.bf16.msra.mxu0 0
        %7795 = vmatprep.subr.bf16.mxu0 0
        %7796 = vmatpush2.bf16.msra.mxu0 0
        %7797 = vmatprep.subr.bf16.mxu0 0
        %7798 = vmatpush2.bf16.msra.mxu0 0
        %7799 = vmatprep.mubr.bf16.mxu0 0
        %7800 = vmatmul.mubr.bf16.gmra.mxu0 %v7701
        %v7801 = vpop.f32.mrf.mxu0
        %v7802 = vadd.f32 %v7718, %v7801
        %v7803 = vpop.f32.mrf.mxu0
        %v7804 = vpop.f32.mrf.mxu0
        %v7805 = vpop.f32.mrf.mxu0
        %7806 = vdwg.mxu0
        %7807 = vst [vmem:[%s355] sm:$0x1] %v7802
        %s7808 = sand.u32 %s188, 1
        %s7809 = scalar_lea.sflag [#allocation5], %s7808
        %s7810 = sand.u32 %s188, 1
        %s7811 = scalar_lea.vmem [#allocation6], %s7810
        %s7812 = sand.u32 %s28, 1
        %s7813 = scalar_lea.sflag [#allocation8], %s7812
        %s7814 = sand.u32 %s214, 1
        %s7815 = scalar_lea.vmem [#allocation7], %s7814
        %s7816 = sand.u32 %s28, 1
        %s7817 = scalar_lea.sflag [#allocation8], %s7816
        %s7818 = sand.u32 %s240, 1
        %s7819 = scalar_lea.vmem [#allocation9], %s7818
        // Predicated region
        $region53: #{tpu_custom_call.1} parent=47 // pred_check
          %p7820 = pneg %p198
        $region54: #{tpu_custom_call.1} parent=47 // pred_check_branch
          %7822 = sbr.rel (%p7820) target = $region56
        $region55: #{tpu_custom_call.1} parent=47 // pred_region
          %s7824 = ssub.s32 16, 16
          %7825 = vsyncadd %s7809, %s7824
          %s7826 = smul.addr %s28, 16
          %s7827 = scalar_lea.hbm %s7, %s7826
          %s7829 = sshll.u32 %s7811, 4
          %s7830 = int_to_ptr.vmem [resolvable:$true] %s7829
          %7832 = dma.vmem_to_hbm [thread:$0]  %s7830, 16, %s7827, %s7809
        $region56: #{tpu_custom_call.1} parent=47 // pred_fallthru
          _
        // Predicated region
        $region57: #{tpu_custom_call.1} parent=47 // pred_check
          %p7833 = pneg %p224
        $region58: #{tpu_custom_call.1} parent=47 // pred_check_branch
          %7835 = sbr.rel (%p7833) target = $region60
        $region59: #{tpu_custom_call.1} parent=47 // pred_region
          %s7837 = ssub.s32 16, 16
          %7838 = vsyncadd %s7813, %s7837
          %s7839 = smul.addr %s28, 16
          %s7840 = scalar_lea.hbm %s8, %s7839
          %s7842 = sshll.u32 %s7815, 4
          %s7843 = int_to_ptr.vmem [resolvable:$true] %s7842
          %7845 = dma.vmem_to_hbm [thread:$0]  %s7843, 16, %s7840, %s7813
        $region60: #{tpu_custom_call.1} parent=47 // pred_fallthru
          _
        // Predicated region
        $region61: #{tpu_custom_call.1} parent=47 // pred_check
          %p7846 = pneg %p250
        $region62: #{tpu_custom_call.1} parent=47 // pred_check_branch
          %7848 = sbr.rel (%p7846) target = $region64
        $region63: #{tpu_custom_call.1} parent=47 // pred_region
          %s7850 = ssub.s32 16, 16
          %7851 = vsyncadd %s7817, %s7850
          %s7852 = smul.addr %s28, 16
          %s7853 = scalar_lea.hbm %s9, %s7852
          %s7855 = sshll.u32 %s7819, 4
          %s7856 = int_to_ptr.vmem [resolvable:$true] %s7855
          %7858 = dma.vmem_to_hbm [thread:$0]  %s7856, 16, %s7853, %s7817
        $region64: #{tpu_custom_call.1} parent=47 // pred_fallthru
          _
      $region48: #{tpu_custom_call.1} parent=5 // pred_fallthru
        _
      %p7859 = scmp.le.s32.totalorder 2, %s23
      // Predicated region
      $region65: #{tpu_custom_call.1} parent=5 // pred_check
        %p7860 = pneg %p7859
      $region66: #{tpu_custom_call.1} parent=5 // pred_check_branch
        %7862 = sbr.rel (%p7860) target = $region68
      $region67: #{tpu_custom_call.1} parent=5 // pred_region
        %s7863 = ssub.s32 %s23, 2
        // Predicated region
        $region69: #{tpu_custom_call.1} parent=67 // pred_check
          %p7864 = pneg %p204
        $region70: #{tpu_custom_call.1} parent=67 // pred_check_branch
          %7866 = sbr.rel (%p7864) target = $region72
        $region71: #{tpu_custom_call.1} parent=67 // pred_region
          %s7867 = sand.u32 %s189, 1
          %s7868 = scalar_lea.sflag [#allocation5], %s7867
          %s7869 = sand.u32 %s189, 1
          %s7870 = scalar_lea.vmem [#allocation6], %s7869
          %7871 = dma.done %s7868, 16
        $region72: #{tpu_custom_call.1} parent=67 // pred_fallthru
          _
        // Predicated region
        $region73: #{tpu_custom_call.1} parent=67 // pred_check
          %p7872 = pneg %p230
        $region74: #{tpu_custom_call.1} parent=67 // pred_check_branch
          %7874 = sbr.rel (%p7872) target = $region76
        $region75: #{tpu_custom_call.1} parent=67 // pred_region
          %s7875 = sand.u32 %s29, 1
          %s7876 = scalar_lea.sflag [#allocation8], %s7875
          %s7877 = sand.u32 %s215, 1
          %s7878 = scalar_lea.vmem [#allocation7], %s7877
          %7879 = dma.done %s7876, 16
        $region76: #{tpu_custom_call.1} parent=67 // pred_fallthru
          _
        // Predicated region
        $region77: #{tpu_custom_call.1} parent=67 // pred_check
          %p7880 = pneg %p256
        $region78: #{tpu_custom_call.1} parent=67 // pred_check_branch
          %7882 = sbr.rel (%p7880) target = $region80
        $region79: #{tpu_custom_call.1} parent=67 // pred_region
          %s7883 = sand.u32 %s29, 1
          %s7884 = scalar_lea.sflag [#allocation8], %s7883
          %s7885 = sand.u32 %s241, 1
          %s7886 = scalar_lea.vmem [#allocation9], %s7885
          %7887 = dma.done %s7884, 16
        $region80: #{tpu_custom_call.1} parent=67 // pred_fallthru
          _
      $region68: #{tpu_custom_call.1} parent=5 // pred_fallthru
        _
    $region6: #{tpu_custom_call.1} parent=1 // loop_footer
      %s27 = sadd.s32 1, %s23
    $region7: #{tpu_custom_call.1} parent=1 // loop_footer_branch
      %22 = sbr.rel target = $region3
    $region8: #{tpu_custom_call.1} parent=1 // loop_exit
      _
    %7888 = vsyncpa [#allocation4], 1
    %s7889 = scalar_lea.sflag [#allocation4], 1
    %7890 = vsyncpa %s7889, 1
    %7891 = vsyncpa [#allocation5], 1
    %s7892 = scalar_lea.sflag [#allocation5], 1
    %7893 = vsyncpa %s7892, 1
    %7894 = vsyncpa [#allocation8], 1
    %s7895 = scalar_lea.sflag [#allocation8], 1
    %7896 = vsyncpa %s7895, 1

</llo_original>
